<compile_context>
chip_gen: v6e
topology: v6e:2x2x1
jax: 0.10.0
libtpu: 0.0.40
codegen_flags: <defaults>
</compile_context>

<pallas_src>
import jax
import jax.numpy as jnp
from jax.experimental import pallas as pl
from jax.experimental.pallas import tpu as pltpu

VMEM_SPEC = pl.BlockSpec(memory_space=pltpu.MemorySpace.VMEM)

BOS = 1
MAX_LEN = 6
LANE = 128
NEG_INF = -1e30


def _round_up(x, m):
    return ((x + m - 1) // m) * m


def _gru_cell(gi, gh, h, H):
    """PyTorch nn.GRU gate semantics (r, z, n ordering); f32 math."""
    i_r, i_z, i_n = gi[:, :H], gi[:, H:2 * H], gi[:, 2 * H:]
    h_r, h_z, h_n = gh[:, :H], gh[:, H:2 * H], gh[:, 2 * H:]
    r = jax.nn.sigmoid(i_r + h_r)
    z = jax.nn.sigmoid(i_z + h_z)
    n = jnp.tanh(i_n + r * h_n)
    return (1.0 - z) * n + z * h


def _log_softmax_and_argmax(logits, Vp):
    lm = jnp.max(logits, axis=-1, keepdims=True)
    lse = lm + jnp.log(jnp.sum(jnp.exp(logits - lm), axis=-1, keepdims=True))
    logp = logits - lse
    idx = jax.lax.broadcasted_iota(jnp.int32, logits.shape, 1)
    pred = jnp.min(jnp.where(logits == lm, idx, jnp.int32(Vp)),
                   axis=-1, keepdims=True).astype(jnp.int32)
    return logp, pred


# --------------------------------------------------------------------------
# Fused encoder + decoder kernel (single pallas_call, everything VMEM-resident)
# --------------------------------------------------------------------------
def make_fused_kernel(teacher_forcing, T, S):
    f32, bf16 = jnp.float32, jnp.bfloat16

    def kernel(x_ref, encw_ref, encb_ref, encwhh_ref, encbhh_ref,
               tok_ref, emb_ref, we_ref, wc_ref, dwhh_ref,
               dbih_ref, dbhh_ref, wo_ref, bo_ref,
               logp_ref, pred_ref,
               egi_scr, enc_scr, *mode_scr):
        Hp = encwhh_ref.shape[0]
        H3 = 3 * Hp
        Vp = wo_ref.shape[1]
        B = enc_scr.shape[1]

        # ---------------- encoder ----------------
        # Folded Linear+input-gate: one (T*B,F)@(F,3Hp) MXU pass for all frames.
        gi_all = jnp.dot(x_ref[...], encw_ref[...],
                         preferred_element_type=f32) + encb_ref[...]
        egi_scr[...] = gi_all.reshape(T, B, H3).astype(bf16)

        enc_bhh = encbhh_ref[...]                              # hoisted invariant

        def enc_body(t, h):
            gh = jnp.dot(h.astype(bf16), encwhh_ref[...],
                         preferred_element_type=f32) + enc_bhh
            h_new = _gru_cell(egi_scr[t].astype(f32), gh, h, Hp)
            enc_scr[t] = h_new.astype(bf16)
            return h_new

        enc_h = jax.lax.fori_loop(0, T, enc_body,
                                  jnp.zeros((B, Hp), f32), unroll=True)

        # ---------------- decoder ----------------
        # Fold embedding @ We once: (Vp, 3Hp).
        # TODO(synk): at production vocab sizes gather only the needed rows
        # instead of the full-vocab precompute (v7x VMEM budget).
        ep = jnp.dot(emb_ref[...], we_ref[...],
                     preferred_element_type=f32).astype(bf16)

        dec_bih = dbih_ref[...]                                # hoisted invariants
        dec_bhh = dbhh_ref[...]
        enc_f = enc_scr[...].astype(f32)                       # (T,B,Hp)

        def attend(h):
            # VPU multiply + reduces (no tiny batched MXU ops).
            prod = enc_f * h[None, :, :]                        # (T,B,Hp)
            scores = jnp.sum(prod, axis=-1, keepdims=True)      # (T,B,1)
            m = jnp.max(scores, axis=0, keepdims=True)          # (1,B,1)
            e = jnp.exp(scores - m)
            alpha = e * pl.reciprocal(
                jnp.sum(e, axis=0, keepdims=True), approx=True)
            return jnp.sum(alpha * enc_f, axis=0)               # (B,Hp)

        def gru_step(gi_emb, h):
            ctx = attend(h)
            gi = (gi_emb
                  + jnp.dot(ctx.astype(bf16), wc_ref[...],
                            preferred_element_type=f32)
                  + dec_bih)
            gh = jnp.dot(h.astype(bf16), dwhh_ref[...],
                         preferred_element_type=f32) + dec_bhh
            return _gru_cell(gi, gh, h, Hp)

        if teacher_forcing:
            dgi_scr, h_scr = mode_scr
            # All teacher-forcing input-gate terms with one fat matmul.
            iota_v = jax.lax.broadcasted_iota(jnp.int32, (S * B, Vp), 1)
            onehot = (iota_v == tok_ref[...]).astype(bf16)      # (S*B,Vp)
            dgi_scr[...] = jnp.dot(onehot, ep, preferred_element_type=f32
                                   ).reshape(S, B, H3).astype(bf16)

            def body(s, h):
                h_new = gru_step(dgi_scr[s].astype(f32), h)
                h_scr[s] = h_new
                return h_new

            jax.lax.fori_loop(0, S, body, enc_h, unroll=True)

            # Deferred vocab projection / log-softmax / argmax for ALL steps.
            hs = h_scr[...].reshape(S * B, Hp).astype(bf16)
            logits = jnp.dot(hs, wo_ref[...],
                             preferred_element_type=f32) + bo_ref[...]
            logp, pred = _log_softmax_and_argmax(logits, Vp)
            logp_ref[...] = logp                                # (S*B,Vp)
            pred_ref[...] = pred                                # (S*B,1)
        else:
            (embproj_scr,) = mode_scr
            embproj_scr[...] = ep
            bo = bo_ref[...]

            def body(s, carry):
                tok, h = carry                                  # tok (B,1) int32
                iv = jax.lax.broadcasted_iota(jnp.int32, (B, Vp), 1)
                oh = (iv == tok).astype(bf16)
                gi_emb = jnp.dot(oh, embproj_scr[...],
                                 preferred_element_type=f32)
                h_new = gru_step(gi_emb, h)
                logits = jnp.dot(h_new.astype(bf16), wo_ref[...],
                                 preferred_element_type=f32) + bo
                logp, pred = _log_softmax_and_argmax(logits, Vp)
                logp_ref[s] = logp
                pred_ref[s] = pred
                return pred, h_new

            jax.lax.fori_loop(0, S, body, (tok_ref[...], enc_h), unroll=True)

    return kernel


# --------------------------------------------------------------------------
# Parameter folding + per-gate padding to lane-dense shapes + bf16 cast (MXU)
# --------------------------------------------------------------------------
def _pad_axis(x, axis, new, fill=0.0):
    d = new - x.shape[axis]
    if d == 0:
        return x
    widths = [(0, 0)] * x.ndim
    widths[axis] = (0, d)
    return jnp.pad(x, widths, constant_values=fill)


def prepare_padded_params(p):
    H = p['enc_whh'].shape[0]
    V = p['dec_wo'].shape[1]
    Hp = _round_up(H, LANE)
    Vp = _round_up(V, LANE)
    bf16, f32 = jnp.bfloat16, jnp.float32

    def pad_gates(x):
        # last dim holds [r | z | n] blocks of width H -> pad each block to Hp
        r, z, n = x[..., :H], x[..., H:2 * H], x[..., 2 * H:]
        return jnp.concatenate([_pad_axis(r, -1, Hp), _pad_axis(z, -1, Hp),
                                _pad_axis(n, -1, Hp)], axis=-1)

    # Fold the encoder's Linear(F->H) into the GRU input-gate weights (exact).
    enc_w = p['enc_wp'] @ p['enc_wih']                     # (F, 3H) f32
    enc_b = p['enc_bp'] @ p['enc_wih'] + p['enc_bih']      # (1, 3H) f32

    q = {
        'enc_w':     pad_gates(enc_w).astype(bf16),
        'enc_b':     pad_gates(enc_b).astype(f32),
        'enc_whh':   pad_gates(_pad_axis(p['enc_whh'], 0, Hp)).astype(bf16),
        'enc_bhh':   pad_gates(p['enc_bhh']).astype(f32),
        'embedding': _pad_axis(_pad_axis(p['embedding'], 0, Vp), 1, Hp
                               ).astype(bf16),
        'dec_we':    pad_gates(_pad_axis(p['dec_we'], 0, Hp)).astype(bf16),
        'dec_wc':    pad_gates(_pad_axis(p['dec_wc'], 0, Hp)).astype(bf16),
        'dec_whh':   pad_gates(_pad_axis(p['dec_whh'], 0, Hp)).astype(bf16),
        'dec_bih':   pad_gates(p['dec_bih']).astype(f32),
        'dec_bhh':   pad_gates(p['dec_bhh']).astype(f32),
        'dec_wo':    _pad_axis(_pad_axis(p['dec_wo'], 0, Hp), 1, Vp
                               ).astype(bf16),
        'dec_bo':    _pad_axis(p['dec_bo'], 1, Vp, fill=NEG_INF).astype(f32),
    }
    return q, H, V, Hp, Vp


# --------------------------------------------------------------------------
# ModelMain.forward equivalent
# --------------------------------------------------------------------------
def model_main_forward(params, avi_feat, mode, target_sentences=None,
                       tr_steps=None):
    # TODO(synk): tr_steps drove scheduled sampling in the original
    # (unspecified) decoder; pure teacher forcing is used in train mode.
    p, H, V, Hp, Vp = prepare_padded_params(params)
    B, T, F = avi_feat.shape
    H3 = 3 * Hp

    x_flat = jnp.transpose(avi_feat, (1, 0, 2)).reshape(T * B, F)
    x_flat = x_flat.astype(jnp.bfloat16)

    if mode == 'train':
        S = target_sentences.shape[1] - 1
        tok = jnp.transpose(target_sentences[:, :S]).reshape(S * B, 1)
        tok = tok.astype(jnp.int32)
        teacher_forcing = True
        out_shape = (jax.ShapeDtypeStruct((S * B, Vp), jnp.float32),
                     jax.ShapeDtypeStruct((S * B, 1), jnp.int32))
        mode_scratch = [pltpu.VMEM((S, B, H3), jnp.bfloat16),   # TF emb gates
                        pltpu.VMEM((S, B, Hp), jnp.float32)]    # per-step hidden
    elif mode == 'inference':
        S = MAX_LEN
        tok = jnp.full((B, 1), BOS, dtype=jnp.int32)
        teacher_forcing = False
        out_shape = (jax.ShapeDtypeStruct((S, B, Vp), jnp.float32),
                     jax.ShapeDtypeStruct((S, B, 1), jnp.int32))
        mode_scratch = [pltpu.VMEM((Vp, H3), jnp.bfloat16)]     # embedding @ We
    else:
        raise ValueError(mode)

    logp_p, pred_p = pl.pallas_call(
        make_fused_kernel(teacher_forcing, T, S),
        out_shape=out_shape,
        in_specs=[VMEM_SPEC] * 14,
        out_specs=(VMEM_SPEC, VMEM_SPEC),
        scratch_shapes=[pltpu.VMEM((T, B, H3), jnp.bfloat16),   # enc input gates
                        pltpu.VMEM((T, B, Hp), jnp.bfloat16)]   # enc outputs
                       + mode_scratch,
    )(x_flat, p['enc_w'], p['enc_b'], p['enc_whh'], p['enc_bhh'],
      tok, p['embedding'], p['dec_we'], p['dec_wc'], p['dec_whh'],
      p['dec_bih'], p['dec_bhh'], p['dec_wo'], p['dec_bo'])

    if teacher_forcing:
        logp_sb = logp_p.reshape(S, B, Vp)
        pred_sb = pred_p.reshape(S, B)
    else:
        logp_sb = logp_p
        pred_sb = pred_p[:, :, 0]

    seq_logProb = jnp.transpose(logp_sb, (1, 0, 2))[:, :, :V]   # (B, S, V)
    seq_predictions = jnp.transpose(pred_sb, (1, 0))            # (B, S)
    return seq_logProb, seq_predictions


# --------------------------------------------------------------------------
# Deterministic parameter init (logical, un-padded shapes)
# --------------------------------------------------------------------------
def init_params(key, feat_dim, hidden, vocab):
    ks = jax.random.split(key, 12)
    s = 0.1
    f32 = jnp.float32
    return {
        'enc_wp':  s * jax.random.normal(ks[0], (feat_dim, hidden), f32),
        'enc_bp':  jnp.zeros((1, hidden), f32),
        'enc_wih': s * jax.random.normal(ks[1], (hidden, 3 * hidden), f32),
        'enc_whh': s * jax.random.normal(ks[2], (hidden, 3 * hidden), f32),
        'enc_bih': jnp.zeros((1, 3 * hidden), f32),
        'enc_bhh': jnp.zeros((1, 3 * hidden), f32),
        'embedding': s * jax.random.normal(ks[3], (vocab, hidden), f32),
        'dec_we':  s * jax.random.normal(ks[4], (hidden, 3 * hidden), f32),
        'dec_wc':  s * jax.random.normal(ks[5], (hidden, 3 * hidden), f32),
        'dec_whh': s * jax.random.normal(ks[6], (hidden, 3 * hidden), f32),
        'dec_bih': jnp.zeros((1, 3 * hidden), f32),
        'dec_bhh': jnp.zeros((1, 3 * hidden), f32),
        'dec_wo':  s * jax.random.normal(ks[7], (hidden, vocab), f32),
        'dec_bo':  jnp.zeros((1, vocab), f32),
    }


if __name__ == "__main__":
    B, T, F = 2, 8, 32
    H, V = 32, 40

    key = jax.random.PRNGKey(0)
    k_feat, k_tgt, k_par = jax.random.split(key, 3)

    avi_feat = jax.random.normal(k_feat, (B, T, F), jnp.float32)
    target_sentences = jax.random.randint(k_tgt, (B, MAX_LEN + 1), 0, V,
                                          dtype=jnp.int32)
    params = init_params(k_par, F, H, V)

    # inference mode (greedy decode)
    lp_inf, pred_inf = model_main_forward(params, avi_feat, 'inference')
    # train mode (teacher forcing)
    lp_tr, pred_tr = model_main_forward(params, avi_feat, 'train',
                                        target_sentences=target_sentences,
                                        tr_steps=1)

    jax.block_until_ready((lp_inf, pred_inf, lp_tr, pred_tr))

    assert lp_inf.shape == (B, MAX_LEN, V) and pred_inf.shape == (B, MAX_LEN)
    assert lp_tr.shape == (B, MAX_LEN, V) and pred_tr.shape == (B, MAX_LEN)
    assert bool(jnp.all(jnp.isfinite(lp_inf)))
    assert bool(jnp.all(jnp.isfinite(lp_tr)))
    assert bool(jnp.all((pred_inf >= 0) & (pred_inf < V)))
    assert bool(jnp.all((pred_tr >= 0) & (pred_tr < V)))
    print("KERNEL_OK")
</pallas_src>

<mosaic_0001>
module attributes {stable_mosaic.version = 11 : i64} {
  func.func @kernel(%arg0: memref<16x32xbf16, #tpu.memory_space<vmem>>, %arg1: memref<32x384xbf16, #tpu.memory_space<vmem>>, %arg2: memref<1x384xf32, #tpu.memory_space<vmem>>, %arg3: memref<128x384xbf16, #tpu.memory_space<vmem>>, %arg4: memref<1x384xf32, #tpu.memory_space<vmem>>, %arg5: memref<2x1xi32, #tpu.memory_space<vmem>>, %arg6: memref<128x128xbf16, #tpu.memory_space<vmem>>, %arg7: memref<128x384xbf16, #tpu.memory_space<vmem>>, %arg8: memref<128x384xbf16, #tpu.memory_space<vmem>>, %arg9: memref<128x384xbf16, #tpu.memory_space<vmem>>, %arg10: memref<1x384xf32, #tpu.memory_space<vmem>>, %arg11: memref<1x384xf32, #tpu.memory_space<vmem>>, %arg12: memref<128x128xbf16, #tpu.memory_space<vmem>>, %arg13: memref<1x128xf32, #tpu.memory_space<vmem>>, %arg14: memref<6x2x128xf32, #tpu.memory_space<vmem>>, %arg15: memref<6x2x1xi32, #tpu.memory_space<vmem>>, %arg16: memref<8x2x384xbf16, #tpu.memory_space<vmem>>, %arg17: memref<8x2x128xbf16, #tpu.memory_space<vmem>>, %arg18: memref<128x384xbf16, #tpu.memory_space<vmem>>) attributes {dimension_semantics = [], scalar_prefetch = 0 : i64, scratch_operands = 3 : i64, tpu.core_type = #tpu.core_type<tc>} {
    %c0 = arith.constant 0 : index
    %c0_0 = arith.constant 0 : index
    %0 = vector.load %arg0[%c0, %c0_0] : memref<16x32xbf16, #tpu.memory_space<vmem>>, vector<16x32xbf16>
    %c0_1 = arith.constant 0 : index
    %c0_2 = arith.constant 0 : index
    %1 = vector.load %arg1[%c0_1, %c0_2] : memref<32x384xbf16, #tpu.memory_space<vmem>>, vector<32x384xbf16>
    %cst = arith.constant dense<0.000000e+00> : vector<16x384xf32>
    %2 = tpu.matmul %0, %1, %cst {dimension_numbers = #tpu.dot_dimension_numbers<[1], [0], [0], [1], [0, 0, 1, 1], [], []>} : vector<16x32xbf16>, vector<32x384xbf16>, vector<16x384xf32> -> vector<16x384xf32>
    %c0_3 = arith.constant 0 : index
    %c0_4 = arith.constant 0 : index
    %3 = vector.load %arg2[%c0_3, %c0_4] : memref<1x384xf32, #tpu.memory_space<vmem>>, vector<1x384xf32>
    %4 = vector.broadcast %3 : vector<1x384xf32> to vector<16x384xf32>
    %5 = arith.addf %2, %4 : vector<16x384xf32>
    %6 = vector.shape_cast %5 : vector<16x384xf32> to vector<8x2x384xf32>
    %7 = arith.truncf %6 : vector<8x2x384xf32> to vector<8x2x384xbf16>
    %c0_5 = arith.constant 0 : index
    %c0_6 = arith.constant 0 : index
    %c0_7 = arith.constant 0 : index
    %8 = vector.load %arg16[%c0_5, %c0_6, %c0_7] : memref<8x2x384xbf16, #tpu.memory_space<vmem>>, vector<8x2x384xbf16>
    tpu.vector_store %arg16[%c0_5, %c0_6, %c0_7], %7 {strides = array<i32>} : memref<8x2x384xbf16, #tpu.memory_space<vmem>>, vector<8x2x384xbf16>,
    %c0_8 = arith.constant 0 : index
    %c0_9 = arith.constant 0 : index
    %9 = vector.load %arg4[%c0_8, %c0_9] : memref<1x384xf32, #tpu.memory_space<vmem>>, vector<1x384xf32>
    %cst_10 = arith.constant 0.000000e+00 : f32
    %10 = vector.broadcast %cst_10 : f32 to vector<2x128xf32>
    %c0_i32 = arith.constant 0 : i32
    %11 = arith.truncf %10 : vector<2x128xf32> to vector<2x128xbf16>
    %c0_11 = arith.constant 0 : index
    %c0_12 = arith.constant 0 : index
    %12 = vector.load %arg3[%c0_11, %c0_12] : memref<128x384xbf16, #tpu.memory_space<vmem>>, vector<128x384xbf16>
    %cst_13 = arith.constant dense<0.000000e+00> : vector<2x384xf32>
    %13 = tpu.matmul %11, %12, %cst_13 {dimension_numbers = #tpu.dot_dimension_numbers<[1], [0], [0], [1], [0, 0, 1, 1], [], []>} : vector<2x128xbf16>, vector<128x384xbf16>, vector<2x384xf32> -> vector<2x384xf32>
    %14 = vector.broadcast %9 : vector<1x384xf32> to vector<2x384xf32>
    %15 = arith.addf %13, %14 : vector<2x384xf32>
    %16 = arith.index_cast %c0_i32 : i32 to index
    %c0_14 = arith.constant 0 : index
    %c0_15 = arith.constant 0 : index
    %17 = vector.load %arg16[%16, %c0_14, %c0_15] : memref<8x2x384xbf16, #tpu.memory_space<vmem>>, vector<1x2x384xbf16>
    %18 = vector.shape_cast %17 : vector<1x2x384xbf16> to vector<2x384xbf16>
    %19 = arith.extf %18 : vector<2x384xbf16> to vector<2x384xf32>
    %20 = vector.extract_strided_slice %19 {offsets = [0, 0], sizes = [2, 128], strides = [1, 1]} : vector<2x384xf32> to vector<2x128xf32>
    %21 = vector.extract_strided_slice %19 {offsets = [0, 128], sizes = [2, 128], strides = [1, 1]} : vector<2x384xf32> to vector<2x128xf32>
    %22 = vector.extract_strided_slice %19 {offsets = [0, 256], sizes = [2, 128], strides = [1, 1]} : vector<2x384xf32> to vector<2x128xf32>
    %23 = vector.extract_strided_slice %15 {offsets = [0, 0], sizes = [2, 128], strides = [1, 1]} : vector<2x384xf32> to vector<2x128xf32>
    %24 = vector.extract_strided_slice %15 {offsets = [0, 128], sizes = [2, 128], strides = [1, 1]} : vector<2x384xf32> to vector<2x128xf32>
    %25 = vector.extract_strided_slice %15 {offsets = [0, 256], sizes = [2, 128], strides = [1, 1]} : vector<2x384xf32> to vector<2x128xf32>
    %26 = arith.addf %20, %23 : vector<2x128xf32>
    %27 = arith.negf %26 : vector<2x128xf32>
    %28 = math.exp %27 : vector<2x128xf32>
    %cst_16 = arith.constant 1.000000e+00 : f32
    %29 = vector.broadcast %cst_16 : f32 to vector<2x128xf32>
    %30 = arith.addf %29, %28 : vector<2x128xf32>
    %31 = arith.divf %29, %30 : vector<2x128xf32>
    %32 = arith.addf %21, %24 : vector<2x128xf32>
    %33 = arith.negf %32 : vector<2x128xf32>
    %34 = math.exp %33 : vector<2x128xf32>
    %cst_17 = arith.constant 1.000000e+00 : f32
    %35 = vector.broadcast %cst_17 : f32 to vector<2x128xf32>
    %36 = arith.addf %35, %34 : vector<2x128xf32>
    %37 = arith.divf %35, %36 : vector<2x128xf32>
    %38 = arith.mulf %31, %25 : vector<2x128xf32>
    %39 = arith.addf %22, %38 : vector<2x128xf32>
    %40 = math.tanh %39 : vector<2x128xf32>
    %cst_18 = arith.constant 1.000000e+00 : f32
    %41 = vector.broadcast %cst_18 : f32 to vector<2x128xf32>
    %42 = arith.subf %41, %37 : vector<2x128xf32>
    %43 = arith.mulf %42, %40 : vector<2x128xf32>
    %44 = arith.mulf %37, %10 : vector<2x128xf32>
    %45 = arith.addf %43, %44 : vector<2x128xf32>
    %46 = arith.truncf %45 : vector<2x128xf32> to vector<2x128xbf16>
    %47 = arith.index_cast %c0_i32 : i32 to index
    %c0_19 = arith.constant 0 : index
    %c0_20 = arith.constant 0 : index
    %48 = vector.load %arg17[%47, %c0_19, %c0_20] : memref<8x2x128xbf16, #tpu.memory_space<vmem>>, vector<1x2x128xbf16>
    %49 = vector.shape_cast %48 : vector<1x2x128xbf16> to vector<2x128xbf16>
    %50 = vector.shape_cast %46 : vector<2x128xbf16> to vector<1x2x128xbf16>
    tpu.vector_store %arg17[%47, %c0_19, %c0_20], %50 {strides = array<i32>} : memref<8x2x128xbf16, #tpu.memory_space<vmem>>, vector<1x2x128xbf16>,
    %c1_i32 = arith.constant 1 : i32
    %51 = arith.truncf %45 : vector<2x128xf32> to vector<2x128xbf16>
    %c0_21 = arith.constant 0 : index
    %c0_22 = arith.constant 0 : index
    %52 = vector.load %arg3[%c0_21, %c0_22] : memref<128x384xbf16, #tpu.memory_space<vmem>>, vector<128x384xbf16>
    %cst_23 = arith.constant dense<0.000000e+00> : vector<2x384xf32>
    %53 = tpu.matmul %51, %52, %cst_23 {dimension_numbers = #tpu.dot_dimension_numbers<[1], [0], [0], [1], [0, 0, 1, 1], [], []>} : vector<2x128xbf16>, vector<128x384xbf16>, vector<2x384xf32> -> vector<2x384xf32>
    %54 = vector.broadcast %9 : vector<1x384xf32> to vector<2x384xf32>
    %55 = arith.addf %53, %54 : vector<2x384xf32>
    %56 = arith.index_cast %c1_i32 : i32 to index
    %c0_24 = arith.constant 0 : index
    %c0_25 = arith.constant 0 : index
    %57 = vector.load %arg16[%56, %c0_24, %c0_25] : memref<8x2x384xbf16, #tpu.memory_space<vmem>>, vector<1x2x384xbf16>
    %58 = vector.shape_cast %57 : vector<1x2x384xbf16> to vector<2x384xbf16>
    %59 = arith.extf %58 : vector<2x384xbf16> to vector<2x384xf32>
    %60 = vector.extract_strided_slice %59 {offsets = [0, 0], sizes = [2, 128], strides = [1, 1]} : vector<2x384xf32> to vector<2x128xf32>
    %61 = vector.extract_strided_slice %59 {offsets = [0, 128], sizes = [2, 128], strides = [1, 1]} : vector<2x384xf32> to vector<2x128xf32>
    %62 = vector.extract_strided_slice %59 {offsets = [0, 256], sizes = [2, 128], strides = [1, 1]} : vector<2x384xf32> to vector<2x128xf32>
    %63 = vector.extract_strided_slice %55 {offsets = [0, 0], sizes = [2, 128], strides = [1, 1]} : vector<2x384xf32> to vector<2x128xf32>
    %64 = vector.extract_strided_slice %55 {offsets = [0, 128], sizes = [2, 128], strides = [1, 1]} : vector<2x384xf32> to vector<2x128xf32>
    %65 = vector.extract_strided_slice %55 {offsets = [0, 256], sizes = [2, 128], strides = [1, 1]} : vector<2x384xf32> to vector<2x128xf32>
    %66 = arith.addf %60, %63 : vector<2x128xf32>
    %67 = arith.negf %66 : vector<2x128xf32>
    %68 = math.exp %67 : vector<2x128xf32>
    %cst_26 = arith.constant 1.000000e+00 : f32
    %69 = vector.broadcast %cst_26 : f32 to vector<2x128xf32>
    %70 = arith.addf %69, %68 : vector<2x128xf32>
    %71 = arith.divf %69, %70 : vector<2x128xf32>
    %72 = arith.addf %61, %64 : vector<2x128xf32>
    %73 = arith.negf %72 : vector<2x128xf32>
    %74 = math.exp %73 : vector<2x128xf32>
    %cst_27 = arith.constant 1.000000e+00 : f32
    %75 = vector.broadcast %cst_27 : f32 to vector<2x128xf32>
    %76 = arith.addf %75, %74 : vector<2x128xf32>
    %77 = arith.divf %75, %76 : vector<2x128xf32>
    %78 = arith.mulf %71, %65 : vector<2x128xf32>
    %79 = arith.addf %62, %78 : vector<2x128xf32>
    %80 = math.tanh %79 : vector<2x128xf32>
    %cst_28 = arith.constant 1.000000e+00 : f32
    %81 = vector.broadcast %cst_28 : f32 to vector<2x128xf32>
    %82 = arith.subf %81, %77 : vector<2x128xf32>
    %83 = arith.mulf %82, %80 : vector<2x128xf32>
    %84 = arith.mulf %77, %45 : vector<2x128xf32>
    %85 = arith.addf %83, %84 : vector<2x128xf32>
    %86 = arith.truncf %85 : vector<2x128xf32> to vector<2x128xbf16>
    %87 = arith.index_cast %c1_i32 : i32 to index
    %c0_29 = arith.constant 0 : index
    %c0_30 = arith.constant 0 : index
    %88 = vector.load %arg17[%87, %c0_29, %c0_30] : memref<8x2x128xbf16, #tpu.memory_space<vmem>>, vector<1x2x128xbf16>
    %89 = vector.shape_cast %88 : vector<1x2x128xbf16> to vector<2x128xbf16>
    %90 = vector.shape_cast %86 : vector<2x128xbf16> to vector<1x2x128xbf16>
    tpu.vector_store %arg17[%87, %c0_29, %c0_30], %90 {strides = array<i32>} : memref<8x2x128xbf16, #tpu.memory_space<vmem>>, vector<1x2x128xbf16>,
    %c2_i32 = arith.constant 2 : i32
    %91 = arith.truncf %85 : vector<2x128xf32> to vector<2x128xbf16>
    %c0_31 = arith.constant 0 : index
    %c0_32 = arith.constant 0 : index
    %92 = vector.load %arg3[%c0_31, %c0_32] : memref<128x384xbf16, #tpu.memory_space<vmem>>, vector<128x384xbf16>
    %cst_33 = arith.constant dense<0.000000e+00> : vector<2x384xf32>
    %93 = tpu.matmul %91, %92, %cst_33 {dimension_numbers = #tpu.dot_dimension_numbers<[1], [0], [0], [1], [0, 0, 1, 1], [], []>} : vector<2x128xbf16>, vector<128x384xbf16>, vector<2x384xf32> -> vector<2x384xf32>
    %94 = vector.broadcast %9 : vector<1x384xf32> to vector<2x384xf32>
    %95 = arith.addf %93, %94 : vector<2x384xf32>
    %96 = arith.index_cast %c2_i32 : i32 to index
    %c0_34 = arith.constant 0 : index
    %c0_35 = arith.constant 0 : index
    %97 = vector.load %arg16[%96, %c0_34, %c0_35] : memref<8x2x384xbf16, #tpu.memory_space<vmem>>, vector<1x2x384xbf16>
    %98 = vector.shape_cast %97 : vector<1x2x384xbf16> to vector<2x384xbf16>
    %99 = arith.extf %98 : vector<2x384xbf16> to vector<2x384xf32>
    %100 = vector.extract_strided_slice %99 {offsets = [0, 0], sizes = [2, 128], strides = [1, 1]} : vector<2x384xf32> to vector<2x128xf32>
    %101 = vector.extract_strided_slice %99 {offsets = [0, 128], sizes = [2, 128], strides = [1, 1]} : vector<2x384xf32> to vector<2x128xf32>
    %102 = vector.extract_strided_slice %99 {offsets = [0, 256], sizes = [2, 128], strides = [1, 1]} : vector<2x384xf32> to vector<2x128xf32>
    %103 = vector.extract_strided_slice %95 {offsets = [0, 0], sizes = [2, 128], strides = [1, 1]} : vector<2x384xf32> to vector<2x128xf32>
    %104 = vector.extract_strided_slice %95 {offsets = [0, 128], sizes = [2, 128], strides = [1, 1]} : vector<2x384xf32> to vector<2x128xf32>
    %105 = vector.extract_strided_slice %95 {offsets = [0, 256], sizes = [2, 128], strides = [1, 1]} : vector<2x384xf32> to vector<2x128xf32>
    %106 = arith.addf %100, %103 : vector<2x128xf32>
    %107 = arith.negf %106 : vector<2x128xf32>
    %108 = math.exp %107 : vector<2x128xf32>
    %cst_36 = arith.constant 1.000000e+00 : f32
    %109 = vector.broadcast %cst_36 : f32 to vector<2x128xf32>
    %110 = arith.addf %109, %108 : vector<2x128xf32>
    %111 = arith.divf %109, %110 : vector<2x128xf32>
    %112 = arith.addf %101, %104 : vector<2x128xf32>
    %113 = arith.negf %112 : vector<2x128xf32>
    %114 = math.exp %113 : vector<2x128xf32>
    %cst_37 = arith.constant 1.000000e+00 : f32
    %115 = vector.broadcast %cst_37 : f32 to vector<2x128xf32>
    %116 = arith.addf %115, %114 : vector<2x128xf32>
    %117 = arith.divf %115, %116 : vector<2x128xf32>
    %118 = arith.mulf %111, %105 : vector<2x128xf32>
    %119 = arith.addf %102, %118 : vector<2x128xf32>
    %120 = math.tanh %119 : vector<2x128xf32>
    %cst_38 = arith.constant 1.000000e+00 : f32
    %121 = vector.broadcast %cst_38 : f32 to vector<2x128xf32>
    %122 = arith.subf %121, %117 : vector<2x128xf32>
    %123 = arith.mulf %122, %120 : vector<2x128xf32>
    %124 = arith.mulf %117, %85 : vector<2x128xf32>
    %125 = arith.addf %123, %124 : vector<2x128xf32>
    %126 = arith.truncf %125 : vector<2x128xf32> to vector<2x128xbf16>
    %127 = arith.index_cast %c2_i32 : i32 to index
    %c0_39 = arith.constant 0 : index
    %c0_40 = arith.constant 0 : index
    %128 = vector.load %arg17[%127, %c0_39, %c0_40] : memref<8x2x128xbf16, #tpu.memory_space<vmem>>, vector<1x2x128xbf16>
    %129 = vector.shape_cast %128 : vector<1x2x128xbf16> to vector<2x128xbf16>
    %130 = vector.shape_cast %126 : vector<2x128xbf16> to vector<1x2x128xbf16>
    tpu.vector_store %arg17[%127, %c0_39, %c0_40], %130 {strides = array<i32>} : memref<8x2x128xbf16, #tpu.memory_space<vmem>>, vector<1x2x128xbf16>,
    %c3_i32 = arith.constant 3 : i32
    %131 = arith.truncf %125 : vector<2x128xf32> to vector<2x128xbf16>
    %c0_41 = arith.constant 0 : index
    %c0_42 = arith.constant 0 : index
    %132 = vector.load %arg3[%c0_41, %c0_42] : memref<128x384xbf16, #tpu.memory_space<vmem>>, vector<128x384xbf16>
    %cst_43 = arith.constant dense<0.000000e+00> : vector<2x384xf32>
    %133 = tpu.matmul %131, %132, %cst_43 {dimension_numbers = #tpu.dot_dimension_numbers<[1], [0], [0], [1], [0, 0, 1, 1], [], []>} : vector<2x128xbf16>, vector<128x384xbf16>, vector<2x384xf32> -> vector<2x384xf32>
    %134 = vector.broadcast %9 : vector<1x384xf32> to vector<2x384xf32>
    %135 = arith.addf %133, %134 : vector<2x384xf32>
    %136 = arith.index_cast %c3_i32 : i32 to index
    %c0_44 = arith.constant 0 : index
    %c0_45 = arith.constant 0 : index
    %137 = vector.load %arg16[%136, %c0_44, %c0_45] : memref<8x2x384xbf16, #tpu.memory_space<vmem>>, vector<1x2x384xbf16>
    %138 = vector.shape_cast %137 : vector<1x2x384xbf16> to vector<2x384xbf16>
    %139 = arith.extf %138 : vector<2x384xbf16> to vector<2x384xf32>
    %140 = vector.extract_strided_slice %139 {offsets = [0, 0], sizes = [2, 128], strides = [1, 1]} : vector<2x384xf32> to vector<2x128xf32>
    %141 = vector.extract_strided_slice %139 {offsets = [0, 128], sizes = [2, 128], strides = [1, 1]} : vector<2x384xf32> to vector<2x128xf32>
    %142 = vector.extract_strided_slice %139 {offsets = [0, 256], sizes = [2, 128], strides = [1, 1]} : vector<2x384xf32> to vector<2x128xf32>
    %143 = vector.extract_strided_slice %135 {offsets = [0, 0], sizes = [2, 128], strides = [1, 1]} : vector<2x384xf32> to vector<2x128xf32>
    %144 = vector.extract_strided_slice %135 {offsets = [0, 128], sizes = [2, 128], strides = [1, 1]} : vector<2x384xf32> to vector<2x128xf32>
    %145 = vector.extract_strided_slice %135 {offsets = [0, 256], sizes = [2, 128], strides = [1, 1]} : vector<2x384xf32> to vector<2x128xf32>
    %146 = arith.addf %140, %143 : vector<2x128xf32>
    %147 = arith.negf %146 : vector<2x128xf32>
    %148 = math.exp %147 : vector<2x128xf32>
    %cst_46 = arith.constant 1.000000e+00 : f32
    %149 = vector.broadcast %cst_46 : f32 to vector<2x128xf32>
    %150 = arith.addf %149, %148 : vector<2x128xf32>
    %151 = arith.divf %149, %150 : vector<2x128xf32>
    %152 = arith.addf %141, %144 : vector<2x128xf32>
    %153 = arith.negf %152 : vector<2x128xf32>
    %154 = math.exp %153 : vector<2x128xf32>
    %cst_47 = arith.constant 1.000000e+00 : f32
    %155 = vector.broadcast %cst_47 : f32 to vector<2x128xf32>
    %156 = arith.addf %155, %154 : vector<2x128xf32>
    %157 = arith.divf %155, %156 : vector<2x128xf32>
    %158 = arith.mulf %151, %145 : vector<2x128xf32>
    %159 = arith.addf %142, %158 : vector<2x128xf32>
    %160 = math.tanh %159 : vector<2x128xf32>
    %cst_48 = arith.constant 1.000000e+00 : f32
    %161 = vector.broadcast %cst_48 : f32 to vector<2x128xf32>
    %162 = arith.subf %161, %157 : vector<2x128xf32>
    %163 = arith.mulf %162, %160 : vector<2x128xf32>
    %164 = arith.mulf %157, %125 : vector<2x128xf32>
    %165 = arith.addf %163, %164 : vector<2x128xf32>
    %166 = arith.truncf %165 : vector<2x128xf32> to vector<2x128xbf16>
    %167 = arith.index_cast %c3_i32 : i32 to index
    %c0_49 = arith.constant 0 : index
    %c0_50 = arith.constant 0 : index
    %168 = vector.load %arg17[%167, %c0_49, %c0_50] : memref<8x2x128xbf16, #tpu.memory_space<vmem>>, vector<1x2x128xbf16>
    %169 = vector.shape_cast %168 : vector<1x2x128xbf16> to vector<2x128xbf16>
    %170 = vector.shape_cast %166 : vector<2x128xbf16> to vector<1x2x128xbf16>
    tpu.vector_store %arg17[%167, %c0_49, %c0_50], %170 {strides = array<i32>} : memref<8x2x128xbf16, #tpu.memory_space<vmem>>, vector<1x2x128xbf16>,
    %c4_i32 = arith.constant 4 : i32
    %171 = arith.truncf %165 : vector<2x128xf32> to vector<2x128xbf16>
    %c0_51 = arith.constant 0 : index
    %c0_52 = arith.constant 0 : index
    %172 = vector.load %arg3[%c0_51, %c0_52] : memref<128x384xbf16, #tpu.memory_space<vmem>>, vector<128x384xbf16>
    %cst_53 = arith.constant dense<0.000000e+00> : vector<2x384xf32>
    %173 = tpu.matmul %171, %172, %cst_53 {dimension_numbers = #tpu.dot_dimension_numbers<[1], [0], [0], [1], [0, 0, 1, 1], [], []>} : vector<2x128xbf16>, vector<128x384xbf16>, vector<2x384xf32> -> vector<2x384xf32>
    %174 = vector.broadcast %9 : vector<1x384xf32> to vector<2x384xf32>
    %175 = arith.addf %173, %174 : vector<2x384xf32>
    %176 = arith.index_cast %c4_i32 : i32 to index
    %c0_54 = arith.constant 0 : index
    %c0_55 = arith.constant 0 : index
    %177 = vector.load %arg16[%176, %c0_54, %c0_55] : memref<8x2x384xbf16, #tpu.memory_space<vmem>>, vector<1x2x384xbf16>
    %178 = vector.shape_cast %177 : vector<1x2x384xbf16> to vector<2x384xbf16>
    %179 = arith.extf %178 : vector<2x384xbf16> to vector<2x384xf32>
    %180 = vector.extract_strided_slice %179 {offsets = [0, 0], sizes = [2, 128], strides = [1, 1]} : vector<2x384xf32> to vector<2x128xf32>
    %181 = vector.extract_strided_slice %179 {offsets = [0, 128], sizes = [2, 128], strides = [1, 1]} : vector<2x384xf32> to vector<2x128xf32>
    %182 = vector.extract_strided_slice %179 {offsets = [0, 256], sizes = [2, 128], strides = [1, 1]} : vector<2x384xf32> to vector<2x128xf32>
    %183 = vector.extract_strided_slice %175 {offsets = [0, 0], sizes = [2, 128], strides = [1, 1]} : vector<2x384xf32> to vector<2x128xf32>
    %184 = vector.extract_strided_slice %175 {offsets = [0, 128], sizes = [2, 128], strides = [1, 1]} : vector<2x384xf32> to vector<2x128xf32>
    %185 = vector.extract_strided_slice %175 {offsets = [0, 256], sizes = [2, 128], strides = [1, 1]} : vector<2x384xf32> to vector<2x128xf32>
    %186 = arith.addf %180, %183 : vector<2x128xf32>
    %187 = arith.negf %186 : vector<2x128xf32>
    %188 = math.exp %187 : vector<2x128xf32>
    %cst_56 = arith.constant 1.000000e+00 : f32
    %189 = vector.broadcast %cst_56 : f32 to vector<2x128xf32>
    %190 = arith.addf %189, %188 : vector<2x128xf32>
    %191 = arith.divf %189, %190 : vector<2x128xf32>
    %192 = arith.addf %181, %184 : vector<2x128xf32>
    %193 = arith.negf %192 : vector<2x128xf32>
    %194 = math.exp %193 : vector<2x128xf32>
    %cst_57 = arith.constant 1.000000e+00 : f32
    %195 = vector.broadcast %cst_57 : f32 to vector<2x128xf32>
    %196 = arith.addf %195, %194 : vector<2x128xf32>
    %197 = arith.divf %195, %196 : vector<2x128xf32>
    %198 = arith.mulf %191, %185 : vector<2x128xf32>
    %199 = arith.addf %182, %198 : vector<2x128xf32>
    %200 = math.tanh %199 : vector<2x128xf32>
    %cst_58 = arith.constant 1.000000e+00 : f32
    %201 = vector.broadcast %cst_58 : f32 to vector<2x128xf32>
    %202 = arith.subf %201, %197 : vector<2x128xf32>
    %203 = arith.mulf %202, %200 : vector<2x128xf32>
    %204 = arith.mulf %197, %165 : vector<2x128xf32>
    %205 = arith.addf %203, %204 : vector<2x128xf32>
    %206 = arith.truncf %205 : vector<2x128xf32> to vector<2x128xbf16>
    %207 = arith.index_cast %c4_i32 : i32 to index
    %c0_59 = arith.constant 0 : index
    %c0_60 = arith.constant 0 : index
    %208 = vector.load %arg17[%207, %c0_59, %c0_60] : memref<8x2x128xbf16, #tpu.memory_space<vmem>>, vector<1x2x128xbf16>
    %209 = vector.shape_cast %208 : vector<1x2x128xbf16> to vector<2x128xbf16>
    %210 = vector.shape_cast %206 : vector<2x128xbf16> to vector<1x2x128xbf16>
    tpu.vector_store %arg17[%207, %c0_59, %c0_60], %210 {strides = array<i32>} : memref<8x2x128xbf16, #tpu.memory_space<vmem>>, vector<1x2x128xbf16>,
    %c5_i32 = arith.constant 5 : i32
    %211 = arith.truncf %205 : vector<2x128xf32> to vector<2x128xbf16>
    %c0_61 = arith.constant 0 : index
    %c0_62 = arith.constant 0 : index
    %212 = vector.load %arg3[%c0_61, %c0_62] : memref<128x384xbf16, #tpu.memory_space<vmem>>, vector<128x384xbf16>
    %cst_63 = arith.constant dense<0.000000e+00> : vector<2x384xf32>
    %213 = tpu.matmul %211, %212, %cst_63 {dimension_numbers = #tpu.dot_dimension_numbers<[1], [0], [0], [1], [0, 0, 1, 1], [], []>} : vector<2x128xbf16>, vector<128x384xbf16>, vector<2x384xf32> -> vector<2x384xf32>
    %214 = vector.broadcast %9 : vector<1x384xf32> to vector<2x384xf32>
    %215 = arith.addf %213, %214 : vector<2x384xf32>
    %216 = arith.index_cast %c5_i32 : i32 to index
    %c0_64 = arith.constant 0 : index
    %c0_65 = arith.constant 0 : index
    %217 = vector.load %arg16[%216, %c0_64, %c0_65] : memref<8x2x384xbf16, #tpu.memory_space<vmem>>, vector<1x2x384xbf16>
    %218 = vector.shape_cast %217 : vector<1x2x384xbf16> to vector<2x384xbf16>
    %219 = arith.extf %218 : vector<2x384xbf16> to vector<2x384xf32>
    %220 = vector.extract_strided_slice %219 {offsets = [0, 0], sizes = [2, 128], strides = [1, 1]} : vector<2x384xf32> to vector<2x128xf32>
    %221 = vector.extract_strided_slice %219 {offsets = [0, 128], sizes = [2, 128], strides = [1, 1]} : vector<2x384xf32> to vector<2x128xf32>
    %222 = vector.extract_strided_slice %219 {offsets = [0, 256], sizes = [2, 128], strides = [1, 1]} : vector<2x384xf32> to vector<2x128xf32>
    %223 = vector.extract_strided_slice %215 {offsets = [0, 0], sizes = [2, 128], strides = [1, 1]} : vector<2x384xf32> to vector<2x128xf32>
    %224 = vector.extract_strided_slice %215 {offsets = [0, 128], sizes = [2, 128], strides = [1, 1]} : vector<2x384xf32> to vector<2x128xf32>
    %225 = vector.extract_strided_slice %215 {offsets = [0, 256], sizes = [2, 128], strides = [1, 1]} : vector<2x384xf32> to vector<2x128xf32>
    %226 = arith.addf %220, %223 : vector<2x128xf32>
    %227 = arith.negf %226 : vector<2x128xf32>
    %228 = math.exp %227 : vector<2x128xf32>
    %cst_66 = arith.constant 1.000000e+00 : f32
    %229 = vector.broadcast %cst_66 : f32 to vector<2x128xf32>
    %230 = arith.addf %229, %228 : vector<2x128xf32>
    %231 = arith.divf %229, %230 : vector<2x128xf32>
    %232 = arith.addf %221, %224 : vector<2x128xf32>
    %233 = arith.negf %232 : vector<2x128xf32>
    %234 = math.exp %233 : vector<2x128xf32>
    %cst_67 = arith.constant 1.000000e+00 : f32
    %235 = vector.broadcast %cst_67 : f32 to vector<2x128xf32>
    %236 = arith.addf %235, %234 : vector<2x128xf32>
    %237 = arith.divf %235, %236 : vector<2x128xf32>
    %238 = arith.mulf %231, %225 : vector<2x128xf32>
    %239 = arith.addf %222, %238 : vector<2x128xf32>
    %240 = math.tanh %239 : vector<2x128xf32>
    %cst_68 = arith.constant 1.000000e+00 : f32
    %241 = vector.broadcast %cst_68 : f32 to vector<2x128xf32>
    %242 = arith.subf %241, %237 : vector<2x128xf32>
    %243 = arith.mulf %242, %240 : vector<2x128xf32>
    %244 = arith.mulf %237, %205 : vector<2x128xf32>
    %245 = arith.addf %243, %244 : vector<2x128xf32>
    %246 = arith.truncf %245 : vector<2x128xf32> to vector<2x128xbf16>
    %247 = arith.index_cast %c5_i32 : i32 to index
    %c0_69 = arith.constant 0 : index
    %c0_70 = arith.constant 0 : index
    %248 = vector.load %arg17[%247, %c0_69, %c0_70] : memref<8x2x128xbf16, #tpu.memory_space<vmem>>, vector<1x2x128xbf16>
    %249 = vector.shape_cast %248 : vector<1x2x128xbf16> to vector<2x128xbf16>
    %250 = vector.shape_cast %246 : vector<2x128xbf16> to vector<1x2x128xbf16>
    tpu.vector_store %arg17[%247, %c0_69, %c0_70], %250 {strides = array<i32>} : memref<8x2x128xbf16, #tpu.memory_space<vmem>>, vector<1x2x128xbf16>,
    %c6_i32 = arith.constant 6 : i32
    %251 = arith.truncf %245 : vector<2x128xf32> to vector<2x128xbf16>
    %c0_71 = arith.constant 0 : index
    %c0_72 = arith.constant 0 : index
    %252 = vector.load %arg3[%c0_71, %c0_72] : memref<128x384xbf16, #tpu.memory_space<vmem>>, vector<128x384xbf16>
    %cst_73 = arith.constant dense<0.000000e+00> : vector<2x384xf32>
    %253 = tpu.matmul %251, %252, %cst_73 {dimension_numbers = #tpu.dot_dimension_numbers<[1], [0], [0], [1], [0, 0, 1, 1], [], []>} : vector<2x128xbf16>, vector<128x384xbf16>, vector<2x384xf32> -> vector<2x384xf32>
    %254 = vector.broadcast %9 : vector<1x384xf32> to vector<2x384xf32>
    %255 = arith.addf %253, %254 : vector<2x384xf32>
    %256 = arith.index_cast %c6_i32 : i32 to index
    %c0_74 = arith.constant 0 : index
    %c0_75 = arith.constant 0 : index
    %257 = vector.load %arg16[%256, %c0_74, %c0_75] : memref<8x2x384xbf16, #tpu.memory_space<vmem>>, vector<1x2x384xbf16>
    %258 = vector.shape_cast %257 : vector<1x2x384xbf16> to vector<2x384xbf16>
    %259 = arith.extf %258 : vector<2x384xbf16> to vector<2x384xf32>
    %260 = vector.extract_strided_slice %259 {offsets = [0, 0], sizes = [2, 128], strides = [1, 1]} : vector<2x384xf32> to vector<2x128xf32>
    %261 = vector.extract_strided_slice %259 {offsets = [0, 128], sizes = [2, 128], strides = [1, 1]} : vector<2x384xf32> to vector<2x128xf32>
    %262 = vector.extract_strided_slice %259 {offsets = [0, 256], sizes = [2, 128], strides = [1, 1]} : vector<2x384xf32> to vector<2x128xf32>
    %263 = vector.extract_strided_slice %255 {offsets = [0, 0], sizes = [2, 128], strides = [1, 1]} : vector<2x384xf32> to vector<2x128xf32>
    %264 = vector.extract_strided_slice %255 {offsets = [0, 128], sizes = [2, 128], strides = [1, 1]} : vector<2x384xf32> to vector<2x128xf32>
    %265 = vector.extract_strided_slice %255 {offsets = [0, 256], sizes = [2, 128], strides = [1, 1]} : vector<2x384xf32> to vector<2x128xf32>
    %266 = arith.addf %260, %263 : vector<2x128xf32>
    %267 = arith.negf %266 : vector<2x128xf32>
    %268 = math.exp %267 : vector<2x128xf32>
    %cst_76 = arith.constant 1.000000e+00 : f32
    %269 = vector.broadcast %cst_76 : f32 to vector<2x128xf32>
    %270 = arith.addf %269, %268 : vector<2x128xf32>
    %271 = arith.divf %269, %270 : vector<2x128xf32>
    %272 = arith.addf %261, %264 : vector<2x128xf32>
    %273 = arith.negf %272 : vector<2x128xf32>
    %274 = math.exp %273 : vector<2x128xf32>
    %cst_77 = arith.constant 1.000000e+00 : f32
    %275 = vector.broadcast %cst_77 : f32 to vector<2x128xf32>
    %276 = arith.addf %275, %274 : vector<2x128xf32>
    %277 = arith.divf %275, %276 : vector<2x128xf32>
    %278 = arith.mulf %271, %265 : vector<2x128xf32>
    %279 = arith.addf %262, %278 : vector<2x128xf32>
    %280 = math.tanh %279 : vector<2x128xf32>
    %cst_78 = arith.constant 1.000000e+00 : f32
    %281 = vector.broadcast %cst_78 : f32 to vector<2x128xf32>
    %282 = arith.subf %281, %277 : vector<2x128xf32>
    %283 = arith.mulf %282, %280 : vector<2x128xf32>
    %284 = arith.mulf %277, %245 : vector<2x128xf32>
    %285 = arith.addf %283, %284 : vector<2x128xf32>
    %286 = arith.truncf %285 : vector<2x128xf32> to vector<2x128xbf16>
    %287 = arith.index_cast %c6_i32 : i32 to index
    %c0_79 = arith.constant 0 : index
    %c0_80 = arith.constant 0 : index
    %288 = vector.load %arg17[%287, %c0_79, %c0_80] : memref<8x2x128xbf16, #tpu.memory_space<vmem>>, vector<1x2x128xbf16>
    %289 = vector.shape_cast %288 : vector<1x2x128xbf16> to vector<2x128xbf16>
    %290 = vector.shape_cast %286 : vector<2x128xbf16> to vector<1x2x128xbf16>
    tpu.vector_store %arg17[%287, %c0_79, %c0_80], %290 {strides = array<i32>} : memref<8x2x128xbf16, #tpu.memory_space<vmem>>, vector<1x2x128xbf16>,
    %c7_i32 = arith.constant 7 : i32
    %291 = arith.truncf %285 : vector<2x128xf32> to vector<2x128xbf16>
    %c0_81 = arith.constant 0 : index
    %c0_82 = arith.constant 0 : index
    %292 = vector.load %arg3[%c0_81, %c0_82] : memref<128x384xbf16, #tpu.memory_space<vmem>>, vector<128x384xbf16>
    %cst_83 = arith.constant dense<0.000000e+00> : vector<2x384xf32>
    %293 = tpu.matmul %291, %292, %cst_83 {dimension_numbers = #tpu.dot_dimension_numbers<[1], [0], [0], [1], [0, 0, 1, 1], [], []>} : vector<2x128xbf16>, vector<128x384xbf16>, vector<2x384xf32> -> vector<2x384xf32>
    %294 = vector.broadcast %9 : vector<1x384xf32> to vector<2x384xf32>
    %295 = arith.addf %293, %294 : vector<2x384xf32>
    %296 = arith.index_cast %c7_i32 : i32 to index
    %c0_84 = arith.constant 0 : index
    %c0_85 = arith.constant 0 : index
    %297 = vector.load %arg16[%296, %c0_84, %c0_85] : memref<8x2x384xbf16, #tpu.memory_space<vmem>>, vector<1x2x384xbf16>
    %298 = vector.shape_cast %297 : vector<1x2x384xbf16> to vector<2x384xbf16>
    %299 = arith.extf %298 : vector<2x384xbf16> to vector<2x384xf32>
    %300 = vector.extract_strided_slice %299 {offsets = [0, 0], sizes = [2, 128], strides = [1, 1]} : vector<2x384xf32> to vector<2x128xf32>
    %301 = vector.extract_strided_slice %299 {offsets = [0, 128], sizes = [2, 128], strides = [1, 1]} : vector<2x384xf32> to vector<2x128xf32>
    %302 = vector.extract_strided_slice %299 {offsets = [0, 256], sizes = [2, 128], strides = [1, 1]} : vector<2x384xf32> to vector<2x128xf32>
    %303 = vector.extract_strided_slice %295 {offsets = [0, 0], sizes = [2, 128], strides = [1, 1]} : vector<2x384xf32> to vector<2x128xf32>
    %304 = vector.extract_strided_slice %295 {offsets = [0, 128], sizes = [2, 128], strides = [1, 1]} : vector<2x384xf32> to vector<2x128xf32>
    %305 = vector.extract_strided_slice %295 {offsets = [0, 256], sizes = [2, 128], strides = [1, 1]} : vector<2x384xf32> to vector<2x128xf32>
    %306 = arith.addf %300, %303 : vector<2x128xf32>
    %307 = arith.negf %306 : vector<2x128xf32>
    %308 = math.exp %307 : vector<2x128xf32>
    %cst_86 = arith.constant 1.000000e+00 : f32
    %309 = vector.broadcast %cst_86 : f32 to vector<2x128xf32>
    %310 = arith.addf %309, %308 : vector<2x128xf32>
    %311 = arith.divf %309, %310 : vector<2x128xf32>
    %312 = arith.addf %301, %304 : vector<2x128xf32>
    %313 = arith.negf %312 : vector<2x128xf32>
    %314 = math.exp %313 : vector<2x128xf32>
    %cst_87 = arith.constant 1.000000e+00 : f32
    %315 = vector.broadcast %cst_87 : f32 to vector<2x128xf32>
    %316 = arith.addf %315, %314 : vector<2x128xf32>
    %317 = arith.divf %315, %316 : vector<2x128xf32>
    %318 = arith.mulf %311, %305 : vector<2x128xf32>
    %319 = arith.addf %302, %318 : vector<2x128xf32>
    %320 = math.tanh %319 : vector<2x128xf32>
    %cst_88 = arith.constant 1.000000e+00 : f32
    %321 = vector.broadcast %cst_88 : f32 to vector<2x128xf32>
    %322 = arith.subf %321, %317 : vector<2x128xf32>
    %323 = arith.mulf %322, %320 : vector<2x128xf32>
    %324 = arith.mulf %317, %285 : vector<2x128xf32>
    %325 = arith.addf %323, %324 : vector<2x128xf32>
    %326 = arith.truncf %325 : vector<2x128xf32> to vector<2x128xbf16>
    %327 = arith.index_cast %c7_i32 : i32 to index
    %c0_89 = arith.constant 0 : index
    %c0_90 = arith.constant 0 : index
    %328 = vector.load %arg17[%327, %c0_89, %c0_90] : memref<8x2x128xbf16, #tpu.memory_space<vmem>>, vector<1x2x128xbf16>
    %329 = vector.shape_cast %328 : vector<1x2x128xbf16> to vector<2x128xbf16>
    %330 = vector.shape_cast %326 : vector<2x128xbf16> to vector<1x2x128xbf16>
    tpu.vector_store %arg17[%327, %c0_89, %c0_90], %330 {strides = array<i32>} : memref<8x2x128xbf16, #tpu.memory_space<vmem>>, vector<1x2x128xbf16>,
    %c8_i32 = arith.constant 8 : i32
    %c0_91 = arith.constant 0 : index
    %c0_92 = arith.constant 0 : index
    %331 = vector.load %arg6[%c0_91, %c0_92] : memref<128x128xbf16, #tpu.memory_space<vmem>>, vector<128x128xbf16>
    %c0_93 = arith.constant 0 : index
    %c0_94 = arith.constant 0 : index
    %332 = vector.load %arg7[%c0_93, %c0_94] : memref<128x384xbf16, #tpu.memory_space<vmem>>, vector<128x384xbf16>
    %cst_95 = arith.constant dense<0.000000e+00> : vector<128x384xf32>
    %333 = tpu.matmul %331, %332, %cst_95 {dimension_numbers = #tpu.dot_dimension_numbers<[1], [0], [0], [1], [0, 0, 1, 1], [], []>} : vector<128x128xbf16>, vector<128x384xbf16>, vector<128x384xf32> -> vector<128x384xf32>
    %334 = arith.truncf %333 : vector<128x384xf32> to vector<128x384xbf16>
    %c0_96 = arith.constant 0 : index
    %c0_97 = arith.constant 0 : index
    %335 = vector.load %arg10[%c0_96, %c0_97] : memref<1x384xf32, #tpu.memory_space<vmem>>, vector<1x384xf32>
    %c0_98 = arith.constant 0 : index
    %c0_99 = arith.constant 0 : index
    %336 = vector.load %arg11[%c0_98, %c0_99] : memref<1x384xf32, #tpu.memory_space<vmem>>, vector<1x384xf32>
    %c0_100 = arith.constant 0 : index
    %c0_101 = arith.constant 0 : index
    %c0_102 = arith.constant 0 : index
    %337 = vector.load %arg17[%c0_100, %c0_101, %c0_102] : memref<8x2x128xbf16, #tpu.memory_space<vmem>>, vector<8x2x128xbf16>
    %338 = arith.extf %337 : vector<8x2x128xbf16> to vector<8x2x128xf32>
    %c0_103 = arith.constant 0 : index
    %c0_104 = arith.constant 0 : index
    %339 = vector.load %arg18[%c0_103, %c0_104] : memref<128x384xbf16, #tpu.memory_space<vmem>>, vector<128x384xbf16>
    tpu.vector_store %arg18[%c0_103, %c0_104], %334 {strides = array<i32>} : memref<128x384xbf16, #tpu.memory_space<vmem>>, vector<128x384xbf16>,
    %c0_105 = arith.constant 0 : index
    %c0_106 = arith.constant 0 : index
    %340 = vector.load %arg13[%c0_105, %c0_106] : memref<1x128xf32, #tpu.memory_space<vmem>>, vector<1x128xf32>
    %c0_107 = arith.constant 0 : index
    %c0_108 = arith.constant 0 : index
    %341 = vector.load %arg5[%c0_107, %c0_108] : memref<2x1xi32, #tpu.memory_space<vmem>>, vector<2x1xi32>
    %c0_i32_109 = arith.constant 0 : i32
    %342 = tpu.iota {dimensions = array<i32: 1>} : vector<2x128xi32>
    %343 = vector.broadcast %341 : vector<2x1xi32> to vector<2x128xi32>
    %344 = arith.cmpi eq, %342, %343 : vector<2x128xi32>
    %345 = arith.extui %344 : vector<2x128xi1> to vector<2x128xi32>
    %346 = arith.sitofp %345 : vector<2x128xi32> to vector<2x128xf32>
    %347 = arith.truncf %346 : vector<2x128xf32> to vector<2x128xbf16>
    %c0_110 = arith.constant 0 : index
    %c0_111 = arith.constant 0 : index
    %348 = vector.load %arg18[%c0_110, %c0_111] : memref<128x384xbf16, #tpu.memory_space<vmem>>, vector<128x384xbf16>
    %cst_112 = arith.constant dense<0.000000e+00> : vector<2x384xf32>
    %349 = tpu.matmul %347, %348, %cst_112 {dimension_numbers = #tpu.dot_dimension_numbers<[1], [0], [0], [1], [0, 0, 1, 1], [], []>} : vector<2x128xbf16>, vector<128x384xbf16>, vector<2x384xf32> -> vector<2x384xf32>
    %350 = vector.shape_cast %325 : vector<2x128xf32> to vector<1x2x128xf32>
    %351 = vector.broadcast %350 : vector<1x2x128xf32> to vector<8x2x128xf32>
    %352 = arith.mulf %338, %351 : vector<8x2x128xf32>
    %cst_113 = arith.constant dense<0.000000e+00> : vector<8x2xf32>
    %353 = vector.multi_reduction <add>, %352, %cst_113 [2] : vector<8x2x128xf32> to vector<8x2xf32>
    %354 = vector.shape_cast %353 : vector<8x2xf32> to vector<8x2x1xf32>
    %cst_114 = arith.constant dense<0xFF800000> : vector<2x1xf32>
    %355 = vector.multi_reduction <maximumf>, %354, %cst_114 [0] : vector<8x2x1xf32> to vector<2x1xf32>
    %356 = vector.shape_cast %355 : vector<2x1xf32> to vector<1x2x1xf32>
    %357 = vector.broadcast %356 : vector<1x2x1xf32> to vector<8x2x1xf32>
    %358 = arith.subf %354, %357 : vector<8x2x1xf32>
    %359 = math.exp %358 : vector<8x2x1xf32>
    %cst_115 = arith.constant dense<0.000000e+00> : vector<2x1xf32>
    %360 = vector.multi_reduction <add>, %359, %cst_115 [0] : vector<8x2x1xf32> to vector<2x1xf32>
    %361 = vector.shape_cast %360 : vector<2x1xf32> to vector<1x2x1xf32>
    %362 = tpu.reciprocal %361 {approx = true} : vector<1x2x1xf32> -> vector<1x2x1xf32>
    %363 = vector.broadcast %362 : vector<1x2x1xf32> to vector<8x2x1xf32>
    %364 = arith.mulf %359, %363 : vector<8x2x1xf32>
    %365 = vector.broadcast %364 : vector<8x2x1xf32> to vector<8x2x128xf32>
    %366 = arith.mulf %365, %338 : vector<8x2x128xf32>
    %cst_116 = arith.constant dense<0.000000e+00> : vector<2x128xf32>
    %367 = vector.multi_reduction <add>, %366, %cst_116 [0] : vector<8x2x128xf32> to vector<2x128xf32>
    %368 = arith.truncf %367 : vector<2x128xf32> to vector<2x128xbf16>
    %c0_117 = arith.constant 0 : index
    %c0_118 = arith.constant 0 : index
    %369 = vector.load %arg8[%c0_117, %c0_118] : memref<128x384xbf16, #tpu.memory_space<vmem>>, vector<128x384xbf16>
    %cst_119 = arith.constant dense<0.000000e+00> : vector<2x384xf32>
    %370 = tpu.matmul %368, %369, %cst_119 {dimension_numbers = #tpu.dot_dimension_numbers<[1], [0], [0], [1], [0, 0, 1, 1], [], []>} : vector<2x128xbf16>, vector<128x384xbf16>, vector<2x384xf32> -> vector<2x384xf32>
    %371 = arith.addf %349, %370 : vector<2x384xf32>
    %372 = vector.broadcast %335 : vector<1x384xf32> to vector<2x384xf32>
    %373 = arith.addf %371, %372 : vector<2x384xf32>
    %374 = arith.truncf %325 : vector<2x128xf32> to vector<2x128xbf16>
    %c0_120 = arith.constant 0 : index
    %c0_121 = arith.constant 0 : index
    %375 = vector.load %arg9[%c0_120, %c0_121] : memref<128x384xbf16, #tpu.memory_space<vmem>>, vector<128x384xbf16>
    %cst_122 = arith.constant dense<0.000000e+00> : vector<2x384xf32>
    %376 = tpu.matmul %374, %375, %cst_122 {dimension_numbers = #tpu.dot_dimension_numbers<[1], [0], [0], [1], [0, 0, 1, 1], [], []>} : vector<2x128xbf16>, vector<128x384xbf16>, vector<2x384xf32> -> vector<2x384xf32>
    %377 = vector.broadcast %336 : vector<1x384xf32> to vector<2x384xf32>
    %378 = arith.addf %376, %377 : vector<2x384xf32>
    %379 = vector.extract_strided_slice %373 {offsets = [0, 0], sizes = [2, 128], strides = [1, 1]} : vector<2x384xf32> to vector<2x128xf32>
    %380 = vector.extract_strided_slice %373 {offsets = [0, 128], sizes = [2, 128], strides = [1, 1]} : vector<2x384xf32> to vector<2x128xf32>
    %381 = vector.extract_strided_slice %373 {offsets = [0, 256], sizes = [2, 128], strides = [1, 1]} : vector<2x384xf32> to vector<2x128xf32>
    %382 = vector.extract_strided_slice %378 {offsets = [0, 0], sizes = [2, 128], strides = [1, 1]} : vector<2x384xf32> to vector<2x128xf32>
    %383 = vector.extract_strided_slice %378 {offsets = [0, 128], sizes = [2, 128], strides = [1, 1]} : vector<2x384xf32> to vector<2x128xf32>
    %384 = vector.extract_strided_slice %378 {offsets = [0, 256], sizes = [2, 128], strides = [1, 1]} : vector<2x384xf32> to vector<2x128xf32>
    %385 = arith.addf %379, %382 : vector<2x128xf32>
    %386 = arith.negf %385 : vector<2x128xf32>
    %387 = math.exp %386 : vector<2x128xf32>
    %cst_123 = arith.constant 1.000000e+00 : f32
    %388 = vector.broadcast %cst_123 : f32 to vector<2x128xf32>
    %389 = arith.addf %388, %387 : vector<2x128xf32>
    %390 = arith.divf %388, %389 : vector<2x128xf32>
    %391 = arith.addf %380, %383 : vector<2x128xf32>
    %392 = arith.negf %391 : vector<2x128xf32>
    %393 = math.exp %392 : vector<2x128xf32>
    %cst_124 = arith.constant 1.000000e+00 : f32
    %394 = vector.broadcast %cst_124 : f32 to vector<2x128xf32>
    %395 = arith.addf %394, %393 : vector<2x128xf32>
    %396 = arith.divf %394, %395 : vector<2x128xf32>
    %397 = arith.mulf %390, %384 : vector<2x128xf32>
    %398 = arith.addf %381, %397 : vector<2x128xf32>
    %399 = math.tanh %398 : vector<2x128xf32>
    %cst_125 = arith.constant 1.000000e+00 : f32
    %400 = vector.broadcast %cst_125 : f32 to vector<2x128xf32>
    %401 = arith.subf %400, %396 : vector<2x128xf32>
    %402 = arith.mulf %401, %399 : vector<2x128xf32>
    %403 = arith.mulf %396, %325 : vector<2x128xf32>
    %404 = arith.addf %402, %403 : vector<2x128xf32>
    %405 = arith.truncf %404 : vector<2x128xf32> to vector<2x128xbf16>
    %c0_126 = arith.constant 0 : index
    %c0_127 = arith.constant 0 : index
    %406 = vector.load %arg12[%c0_126, %c0_127] : memref<128x128xbf16, #tpu.memory_space<vmem>>, vector<128x128xbf16>
    %cst_128 = arith.constant dense<0.000000e+00> : vector<2x128xf32>
    %407 = tpu.matmul %405, %406, %cst_128 {dimension_numbers = #tpu.dot_dimension_numbers<[1], [0], [0], [1], [0, 0, 1, 1], [], []>} : vector<2x128xbf16>, vector<128x128xbf16>, vector<2x128xf32> -> vector<2x128xf32>
    %408 = vector.broadcast %340 : vector<1x128xf32> to vector<2x128xf32>
    %409 = arith.addf %407, %408 : vector<2x128xf32>
    %cst_129 = arith.constant dense<0xFF800000> : vector<2xf32>
    %410 = vector.multi_reduction <maximumf>, %409, %cst_129 [1] : vector<2x128xf32> to vector<2xf32>
    %411 = vector.shape_cast %410 : vector<2xf32> to vector<2x1xf32>
    %412 = vector.broadcast %411 : vector<2x1xf32> to vector<2x128xf32>
    %413 = arith.subf %409, %412 : vector<2x128xf32>
    %414 = math.exp %413 : vector<2x128xf32>
    %cst_130 = arith.constant dense<0.000000e+00> : vector<2xf32>
    %415 = vector.multi_reduction <add>, %414, %cst_130 [1] : vector<2x128xf32> to vector<2xf32>
    %416 = vector.shape_cast %415 : vector<2xf32> to vector<2x1xf32>
    %417 = math.log %416 : vector<2x1xf32>
    %418 = arith.addf %411, %417 : vector<2x1xf32>
    %419 = vector.broadcast %418 : vector<2x1xf32> to vector<2x128xf32>
    %420 = arith.subf %409, %419 : vector<2x128xf32>
    %421 = tpu.iota {dimensions = array<i32: 1>} : vector<2x128xi32>
    %422 = vector.broadcast %411 : vector<2x1xf32> to vector<2x128xf32>
    %423 = arith.cmpf oeq, %409, %422 : vector<2x128xf32>
    %c128_i32 = arith.constant 128 : i32
    %424 = vector.broadcast %c128_i32 : i32 to vector<2x128xi32>
    %425 = arith.select %423, %421, %424 : vector<2x128xi1>, vector<2x128xi32>
    %cst_131 = arith.constant dense<2147483647> : vector<2xi32>
    %426 = vector.multi_reduction <minsi>, %425, %cst_131 [1] : vector<2x128xi32> to vector<2xi32>
    %427 = vector.shape_cast %426 : vector<2xi32> to vector<2x1xi32>
    %428 = arith.index_cast %c0_i32_109 : i32 to index
    %c0_132 = arith.constant 0 : index
    %c0_133 = arith.constant 0 : index
    %429 = vector.load %arg14[%428, %c0_132, %c0_133] : memref<6x2x128xf32, #tpu.memory_space<vmem>>, vector<1x2x128xf32>
    %430 = vector.shape_cast %429 : vector<1x2x128xf32> to vector<2x128xf32>
    %431 = vector.shape_cast %420 : vector<2x128xf32> to vector<1x2x128xf32>
    tpu.vector_store %arg14[%428, %c0_132, %c0_133], %431 {strides = array<i32>} : memref<6x2x128xf32, #tpu.memory_space<vmem>>, vector<1x2x128xf32>,
    %432 = arith.index_cast %c0_i32_109 : i32 to index
    %c0_134 = arith.constant 0 : index
    %c0_135 = arith.constant 0 : index
    %433 = vector.load %arg15[%432, %c0_134, %c0_135] : memref<6x2x1xi32, #tpu.memory_space<vmem>>, vector<1x2x1xi32>
    %434 = vector.shape_cast %433 : vector<1x2x1xi32> to vector<2x1xi32>
    %435 = vector.shape_cast %427 : vector<2x1xi32> to vector<1x2x1xi32>
    tpu.vector_store %arg15[%432, %c0_134, %c0_135], %435 {strides = array<i32>} : memref<6x2x1xi32, #tpu.memory_space<vmem>>, vector<1x2x1xi32>,
    %c1_i32_136 = arith.constant 1 : i32
    %436 = tpu.iota {dimensions = array<i32: 1>} : vector<2x128xi32>
    %437 = vector.broadcast %427 : vector<2x1xi32> to vector<2x128xi32>
    %438 = arith.cmpi eq, %436, %437 : vector<2x128xi32>
    %439 = arith.extui %438 : vector<2x128xi1> to vector<2x128xi32>
    %440 = arith.sitofp %439 : vector<2x128xi32> to vector<2x128xf32>
    %441 = arith.truncf %440 : vector<2x128xf32> to vector<2x128xbf16>
    %c0_137 = arith.constant 0 : index
    %c0_138 = arith.constant 0 : index
    %442 = vector.load %arg18[%c0_137, %c0_138] : memref<128x384xbf16, #tpu.memory_space<vmem>>, vector<128x384xbf16>
    %cst_139 = arith.constant dense<0.000000e+00> : vector<2x384xf32>
    %443 = tpu.matmul %441, %442, %cst_139 {dimension_numbers = #tpu.dot_dimension_numbers<[1], [0], [0], [1], [0, 0, 1, 1], [], []>} : vector<2x128xbf16>, vector<128x384xbf16>, vector<2x384xf32> -> vector<2x384xf32>
    %444 = vector.shape_cast %404 : vector<2x128xf32> to vector<1x2x128xf32>
    %445 = vector.broadcast %444 : vector<1x2x128xf32> to vector<8x2x128xf32>
    %446 = arith.mulf %338, %445 : vector<8x2x128xf32>
    %cst_140 = arith.constant dense<0.000000e+00> : vector<8x2xf32>
    %447 = vector.multi_reduction <add>, %446, %cst_140 [2] : vector<8x2x128xf32> to vector<8x2xf32>
    %448 = vector.shape_cast %447 : vector<8x2xf32> to vector<8x2x1xf32>
    %cst_141 = arith.constant dense<0xFF800000> : vector<2x1xf32>
    %449 = vector.multi_reduction <maximumf>, %448, %cst_141 [0] : vector<8x2x1xf32> to vector<2x1xf32>
    %450 = vector.shape_cast %449 : vector<2x1xf32> to vector<1x2x1xf32>
    %451 = vector.broadcast %450 : vector<1x2x1xf32> to vector<8x2x1xf32>
    %452 = arith.subf %448, %451 : vector<8x2x1xf32>
    %453 = math.exp %452 : vector<8x2x1xf32>
    %cst_142 = arith.constant dense<0.000000e+00> : vector<2x1xf32>
    %454 = vector.multi_reduction <add>, %453, %cst_142 [0] : vector<8x2x1xf32> to vector<2x1xf32>
    %455 = vector.shape_cast %454 : vector<2x1xf32> to vector<1x2x1xf32>
    %456 = tpu.reciprocal %455 {approx = true} : vector<1x2x1xf32> -> vector<1x2x1xf32>
    %457 = vector.broadcast %456 : vector<1x2x1xf32> to vector<8x2x1xf32>
    %458 = arith.mulf %453, %457 : vector<8x2x1xf32>
    %459 = vector.broadcast %458 : vector<8x2x1xf32> to vector<8x2x128xf32>
    %460 = arith.mulf %459, %338 : vector<8x2x128xf32>
    %cst_143 = arith.constant dense<0.000000e+00> : vector<2x128xf32>
    %461 = vector.multi_reduction <add>, %460, %cst_143 [0] : vector<8x2x128xf32> to vector<2x128xf32>
    %462 = arith.truncf %461 : vector<2x128xf32> to vector<2x128xbf16>
    %c0_144 = arith.constant 0 : index
    %c0_145 = arith.constant 0 : index
    %463 = vector.load %arg8[%c0_144, %c0_145] : memref<128x384xbf16, #tpu.memory_space<vmem>>, vector<128x384xbf16>
    %cst_146 = arith.constant dense<0.000000e+00> : vector<2x384xf32>
    %464 = tpu.matmul %462, %463, %cst_146 {dimension_numbers = #tpu.dot_dimension_numbers<[1], [0], [0], [1], [0, 0, 1, 1], [], []>} : vector<2x128xbf16>, vector<128x384xbf16>, vector<2x384xf32> -> vector<2x384xf32>
    %465 = arith.addf %443, %464 : vector<2x384xf32>
    %466 = vector.broadcast %335 : vector<1x384xf32> to vector<2x384xf32>
    %467 = arith.addf %465, %466 : vector<2x384xf32>
    %468 = arith.truncf %404 : vector<2x128xf32> to vector<2x128xbf16>
    %c0_147 = arith.constant 0 : index
    %c0_148 = arith.constant 0 : index
    %469 = vector.load %arg9[%c0_147, %c0_148] : memref<128x384xbf16, #tpu.memory_space<vmem>>, vector<128x384xbf16>
    %cst_149 = arith.constant dense<0.000000e+00> : vector<2x384xf32>
    %470 = tpu.matmul %468, %469, %cst_149 {dimension_numbers = #tpu.dot_dimension_numbers<[1], [0], [0], [1], [0, 0, 1, 1], [], []>} : vector<2x128xbf16>, vector<128x384xbf16>, vector<2x384xf32> -> vector<2x384xf32>
    %471 = vector.broadcast %336 : vector<1x384xf32> to vector<2x384xf32>
    %472 = arith.addf %470, %471 : vector<2x384xf32>
    %473 = vector.extract_strided_slice %467 {offsets = [0, 0], sizes = [2, 128], strides = [1, 1]} : vector<2x384xf32> to vector<2x128xf32>
    %474 = vector.extract_strided_slice %467 {offsets = [0, 128], sizes = [2, 128], strides = [1, 1]} : vector<2x384xf32> to vector<2x128xf32>
    %475 = vector.extract_strided_slice %467 {offsets = [0, 256], sizes = [2, 128], strides = [1, 1]} : vector<2x384xf32> to vector<2x128xf32>
    %476 = vector.extract_strided_slice %472 {offsets = [0, 0], sizes = [2, 128], strides = [1, 1]} : vector<2x384xf32> to vector<2x128xf32>
    %477 = vector.extract_strided_slice %472 {offsets = [0, 128], sizes = [2, 128], strides = [1, 1]} : vector<2x384xf32> to vector<2x128xf32>
    %478 = vector.extract_strided_slice %472 {offsets = [0, 256], sizes = [2, 128], strides = [1, 1]} : vector<2x384xf32> to vector<2x128xf32>
    %479 = arith.addf %473, %476 : vector<2x128xf32>
    %480 = arith.negf %479 : vector<2x128xf32>
    %481 = math.exp %480 : vector<2x128xf32>
    %cst_150 = arith.constant 1.000000e+00 : f32
    %482 = vector.broadcast %cst_150 : f32 to vector<2x128xf32>
    %483 = arith.addf %482, %481 : vector<2x128xf32>
    %484 = arith.divf %482, %483 : vector<2x128xf32>
    %485 = arith.addf %474, %477 : vector<2x128xf32>
    %486 = arith.negf %485 : vector<2x128xf32>
    %487 = math.exp %486 : vector<2x128xf32>
    %cst_151 = arith.constant 1.000000e+00 : f32
    %488 = vector.broadcast %cst_151 : f32 to vector<2x128xf32>
    %489 = arith.addf %488, %487 : vector<2x128xf32>
    %490 = arith.divf %488, %489 : vector<2x128xf32>
    %491 = arith.mulf %484, %478 : vector<2x128xf32>
    %492 = arith.addf %475, %491 : vector<2x128xf32>
    %493 = math.tanh %492 : vector<2x128xf32>
    %cst_152 = arith.constant 1.000000e+00 : f32
    %494 = vector.broadcast %cst_152 : f32 to vector<2x128xf32>
    %495 = arith.subf %494, %490 : vector<2x128xf32>
    %496 = arith.mulf %495, %493 : vector<2x128xf32>
    %497 = arith.mulf %490, %404 : vector<2x128xf32>
    %498 = arith.addf %496, %497 : vector<2x128xf32>
    %499 = arith.truncf %498 : vector<2x128xf32> to vector<2x128xbf16>
    %c0_153 = arith.constant 0 : index
    %c0_154 = arith.constant 0 : index
    %500 = vector.load %arg12[%c0_153, %c0_154] : memref<128x128xbf16, #tpu.memory_space<vmem>>, vector<128x128xbf16>
    %cst_155 = arith.constant dense<0.000000e+00> : vector<2x128xf32>
    %501 = tpu.matmul %499, %500, %cst_155 {dimension_numbers = #tpu.dot_dimension_numbers<[1], [0], [0], [1], [0, 0, 1, 1], [], []>} : vector<2x128xbf16>, vector<128x128xbf16>, vector<2x128xf32> -> vector<2x128xf32>
    %502 = vector.broadcast %340 : vector<1x128xf32> to vector<2x128xf32>
    %503 = arith.addf %501, %502 : vector<2x128xf32>
    %cst_156 = arith.constant dense<0xFF800000> : vector<2xf32>
    %504 = vector.multi_reduction <maximumf>, %503, %cst_156 [1] : vector<2x128xf32> to vector<2xf32>
    %505 = vector.shape_cast %504 : vector<2xf32> to vector<2x1xf32>
    %506 = vector.broadcast %505 : vector<2x1xf32> to vector<2x128xf32>
    %507 = arith.subf %503, %506 : vector<2x128xf32>
    %508 = math.exp %507 : vector<2x128xf32>
    %cst_157 = arith.constant dense<0.000000e+00> : vector<2xf32>
    %509 = vector.multi_reduction <add>, %508, %cst_157 [1] : vector<2x128xf32> to vector<2xf32>
    %510 = vector.shape_cast %509 : vector<2xf32> to vector<2x1xf32>
    %511 = math.log %510 : vector<2x1xf32>
    %512 = arith.addf %505, %511 : vector<2x1xf32>
    %513 = vector.broadcast %512 : vector<2x1xf32> to vector<2x128xf32>
    %514 = arith.subf %503, %513 : vector<2x128xf32>
    %515 = tpu.iota {dimensions = array<i32: 1>} : vector<2x128xi32>
    %516 = vector.broadcast %505 : vector<2x1xf32> to vector<2x128xf32>
    %517 = arith.cmpf oeq, %503, %516 : vector<2x128xf32>
    %c128_i32_158 = arith.constant 128 : i32
    %518 = vector.broadcast %c128_i32_158 : i32 to vector<2x128xi32>
    %519 = arith.select %517, %515, %518 : vector<2x128xi1>, vector<2x128xi32>
    %cst_159 = arith.constant dense<2147483647> : vector<2xi32>
    %520 = vector.multi_reduction <minsi>, %519, %cst_159 [1] : vector<2x128xi32> to vector<2xi32>
    %521 = vector.shape_cast %520 : vector<2xi32> to vector<2x1xi32>
    %522 = arith.index_cast %c1_i32_136 : i32 to index
    %c0_160 = arith.constant 0 : index
    %c0_161 = arith.constant 0 : index
    %523 = vector.load %arg14[%522, %c0_160, %c0_161] : memref<6x2x128xf32, #tpu.memory_space<vmem>>, vector<1x2x128xf32>
    %524 = vector.shape_cast %523 : vector<1x2x128xf32> to vector<2x128xf32>
    %525 = vector.shape_cast %514 : vector<2x128xf32> to vector<1x2x128xf32>
    tpu.vector_store %arg14[%522, %c0_160, %c0_161], %525 {strides = array<i32>} : memref<6x2x128xf32, #tpu.memory_space<vmem>>, vector<1x2x128xf32>,
    %526 = arith.index_cast %c1_i32_136 : i32 to index
    %c0_162 = arith.constant 0 : index
    %c0_163 = arith.constant 0 : index
    %527 = vector.load %arg15[%526, %c0_162, %c0_163] : memref<6x2x1xi32, #tpu.memory_space<vmem>>, vector<1x2x1xi32>
    %528 = vector.shape_cast %527 : vector<1x2x1xi32> to vector<2x1xi32>
    %529 = vector.shape_cast %521 : vector<2x1xi32> to vector<1x2x1xi32>
    tpu.vector_store %arg15[%526, %c0_162, %c0_163], %529 {strides = array<i32>} : memref<6x2x1xi32, #tpu.memory_space<vmem>>, vector<1x2x1xi32>,
    %c2_i32_164 = arith.constant 2 : i32
    %530 = tpu.iota {dimensions = array<i32: 1>} : vector<2x128xi32>
    %531 = vector.broadcast %521 : vector<2x1xi32> to vector<2x128xi32>
    %532 = arith.cmpi eq, %530, %531 : vector<2x128xi32>
    %533 = arith.extui %532 : vector<2x128xi1> to vector<2x128xi32>
    %534 = arith.sitofp %533 : vector<2x128xi32> to vector<2x128xf32>
    %535 = arith.truncf %534 : vector<2x128xf32> to vector<2x128xbf16>
    %c0_165 = arith.constant 0 : index
    %c0_166 = arith.constant 0 : index
    %536 = vector.load %arg18[%c0_165, %c0_166] : memref<128x384xbf16, #tpu.memory_space<vmem>>, vector<128x384xbf16>
    %cst_167 = arith.constant dense<0.000000e+00> : vector<2x384xf32>
    %537 = tpu.matmul %535, %536, %cst_167 {dimension_numbers = #tpu.dot_dimension_numbers<[1], [0], [0], [1], [0, 0, 1, 1], [], []>} : vector<2x128xbf16>, vector<128x384xbf16>, vector<2x384xf32> -> vector<2x384xf32>
    %538 = vector.shape_cast %498 : vector<2x128xf32> to vector<1x2x128xf32>
    %539 = vector.broadcast %538 : vector<1x2x128xf32> to vector<8x2x128xf32>
    %540 = arith.mulf %338, %539 : vector<8x2x128xf32>
    %cst_168 = arith.constant dense<0.000000e+00> : vector<8x2xf32>
    %541 = vector.multi_reduction <add>, %540, %cst_168 [2] : vector<8x2x128xf32> to vector<8x2xf32>
    %542 = vector.shape_cast %541 : vector<8x2xf32> to vector<8x2x1xf32>
    %cst_169 = arith.constant dense<0xFF800000> : vector<2x1xf32>
    %543 = vector.multi_reduction <maximumf>, %542, %cst_169 [0] : vector<8x2x1xf32> to vector<2x1xf32>
    %544 = vector.shape_cast %543 : vector<2x1xf32> to vector<1x2x1xf32>
    %545 = vector.broadcast %544 : vector<1x2x1xf32> to vector<8x2x1xf32>
    %546 = arith.subf %542, %545 : vector<8x2x1xf32>
    %547 = math.exp %546 : vector<8x2x1xf32>
    %cst_170 = arith.constant dense<0.000000e+00> : vector<2x1xf32>
    %548 = vector.multi_reduction <add>, %547, %cst_170 [0] : vector<8x2x1xf32> to vector<2x1xf32>
    %549 = vector.shape_cast %548 : vector<2x1xf32> to vector<1x2x1xf32>
    %550 = tpu.reciprocal %549 {approx = true} : vector<1x2x1xf32> -> vector<1x2x1xf32>
    %551 = vector.broadcast %550 : vector<1x2x1xf32> to vector<8x2x1xf32>
    %552 = arith.mulf %547, %551 : vector<8x2x1xf32>
    %553 = vector.broadcast %552 : vector<8x2x1xf32> to vector<8x2x128xf32>
    %554 = arith.mulf %553, %338 : vector<8x2x128xf32>
    %cst_171 = arith.constant dense<0.000000e+00> : vector<2x128xf32>
    %555 = vector.multi_reduction <add>, %554, %cst_171 [0] : vector<8x2x128xf32> to vector<2x128xf32>
    %556 = arith.truncf %555 : vector<2x128xf32> to vector<2x128xbf16>
    %c0_172 = arith.constant 0 : index
    %c0_173 = arith.constant 0 : index
    %557 = vector.load %arg8[%c0_172, %c0_173] : memref<128x384xbf16, #tpu.memory_space<vmem>>, vector<128x384xbf16>
    %cst_174 = arith.constant dense<0.000000e+00> : vector<2x384xf32>
    %558 = tpu.matmul %556, %557, %cst_174 {dimension_numbers = #tpu.dot_dimension_numbers<[1], [0], [0], [1], [0, 0, 1, 1], [], []>} : vector<2x128xbf16>, vector<128x384xbf16>, vector<2x384xf32> -> vector<2x384xf32>
    %559 = arith.addf %537, %558 : vector<2x384xf32>
    %560 = vector.broadcast %335 : vector<1x384xf32> to vector<2x384xf32>
    %561 = arith.addf %559, %560 : vector<2x384xf32>
    %562 = arith.truncf %498 : vector<2x128xf32> to vector<2x128xbf16>
    %c0_175 = arith.constant 0 : index
    %c0_176 = arith.constant 0 : index
    %563 = vector.load %arg9[%c0_175, %c0_176] : memref<128x384xbf16, #tpu.memory_space<vmem>>, vector<128x384xbf16>
    %cst_177 = arith.constant dense<0.000000e+00> : vector<2x384xf32>
    %564 = tpu.matmul %562, %563, %cst_177 {dimension_numbers = #tpu.dot_dimension_numbers<[1], [0], [0], [1], [0, 0, 1, 1], [], []>} : vector<2x128xbf16>, vector<128x384xbf16>, vector<2x384xf32> -> vector<2x384xf32>
    %565 = vector.broadcast %336 : vector<1x384xf32> to vector<2x384xf32>
    %566 = arith.addf %564, %565 : vector<2x384xf32>
    %567 = vector.extract_strided_slice %561 {offsets = [0, 0], sizes = [2, 128], strides = [1, 1]} : vector<2x384xf32> to vector<2x128xf32>
    %568 = vector.extract_strided_slice %561 {offsets = [0, 128], sizes = [2, 128], strides = [1, 1]} : vector<2x384xf32> to vector<2x128xf32>
    %569 = vector.extract_strided_slice %561 {offsets = [0, 256], sizes = [2, 128], strides = [1, 1]} : vector<2x384xf32> to vector<2x128xf32>
    %570 = vector.extract_strided_slice %566 {offsets = [0, 0], sizes = [2, 128], strides = [1, 1]} : vector<2x384xf32> to vector<2x128xf32>
    %571 = vector.extract_strided_slice %566 {offsets = [0, 128], sizes = [2, 128], strides = [1, 1]} : vector<2x384xf32> to vector<2x128xf32>
    %572 = vector.extract_strided_slice %566 {offsets = [0, 256], sizes = [2, 128], strides = [1, 1]} : vector<2x384xf32> to vector<2x128xf32>
    %573 = arith.addf %567, %570 : vector<2x128xf32>
    %574 = arith.negf %573 : vector<2x128xf32>
    %575 = math.exp %574 : vector<2x128xf32>
    %cst_178 = arith.constant 1.000000e+00 : f32
    %576 = vector.broadcast %cst_178 : f32 to vector<2x128xf32>
    %577 = arith.addf %576, %575 : vector<2x128xf32>
    %578 = arith.divf %576, %577 : vector<2x128xf32>
    %579 = arith.addf %568, %571 : vector<2x128xf32>
    %580 = arith.negf %579 : vector<2x128xf32>
    %581 = math.exp %580 : vector<2x128xf32>
    %cst_179 = arith.constant 1.000000e+00 : f32
    %582 = vector.broadcast %cst_179 : f32 to vector<2x128xf32>
    %583 = arith.addf %582, %581 : vector<2x128xf32>
    %584 = arith.divf %582, %583 : vector<2x128xf32>
    %585 = arith.mulf %578, %572 : vector<2x128xf32>
    %586 = arith.addf %569, %585 : vector<2x128xf32>
    %587 = math.tanh %586 : vector<2x128xf32>
    %cst_180 = arith.constant 1.000000e+00 : f32
    %588 = vector.broadcast %cst_180 : f32 to vector<2x128xf32>
    %589 = arith.subf %588, %584 : vector<2x128xf32>
    %590 = arith.mulf %589, %587 : vector<2x128xf32>
    %591 = arith.mulf %584, %498 : vector<2x128xf32>
    %592 = arith.addf %590, %591 : vector<2x128xf32>
    %593 = arith.truncf %592 : vector<2x128xf32> to vector<2x128xbf16>
    %c0_181 = arith.constant 0 : index
    %c0_182 = arith.constant 0 : index
    %594 = vector.load %arg12[%c0_181, %c0_182] : memref<128x128xbf16, #tpu.memory_space<vmem>>, vector<128x128xbf16>
    %cst_183 = arith.constant dense<0.000000e+00> : vector<2x128xf32>
    %595 = tpu.matmul %593, %594, %cst_183 {dimension_numbers = #tpu.dot_dimension_numbers<[1], [0], [0], [1], [0, 0, 1, 1], [], []>} : vector<2x128xbf16>, vector<128x128xbf16>, vector<2x128xf32> -> vector<2x128xf32>
    %596 = vector.broadcast %340 : vector<1x128xf32> to vector<2x128xf32>
    %597 = arith.addf %595, %596 : vector<2x128xf32>
    %cst_184 = arith.constant dense<0xFF800000> : vector<2xf32>
    %598 = vector.multi_reduction <maximumf>, %597, %cst_184 [1] : vector<2x128xf32> to vector<2xf32>
    %599 = vector.shape_cast %598 : vector<2xf32> to vector<2x1xf32>
    %600 = vector.broadcast %599 : vector<2x1xf32> to vector<2x128xf32>
    %601 = arith.subf %597, %600 : vector<2x128xf32>
    %602 = math.exp %601 : vector<2x128xf32>
    %cst_185 = arith.constant dense<0.000000e+00> : vector<2xf32>
    %603 = vector.multi_reduction <add>, %602, %cst_185 [1] : vector<2x128xf32> to vector<2xf32>
    %604 = vector.shape_cast %603 : vector<2xf32> to vector<2x1xf32>
    %605 = math.log %604 : vector<2x1xf32>
    %606 = arith.addf %599, %605 : vector<2x1xf32>
    %607 = vector.broadcast %606 : vector<2x1xf32> to vector<2x128xf32>
    %608 = arith.subf %597, %607 : vector<2x128xf32>
    %609 = tpu.iota {dimensions = array<i32: 1>} : vector<2x128xi32>
    %610 = vector.broadcast %599 : vector<2x1xf32> to vector<2x128xf32>
    %611 = arith.cmpf oeq, %597, %610 : vector<2x128xf32>
    %c128_i32_186 = arith.constant 128 : i32
    %612 = vector.broadcast %c128_i32_186 : i32 to vector<2x128xi32>
    %613 = arith.select %611, %609, %612 : vector<2x128xi1>, vector<2x128xi32>
    %cst_187 = arith.constant dense<2147483647> : vector<2xi32>
    %614 = vector.multi_reduction <minsi>, %613, %cst_187 [1] : vector<2x128xi32> to vector<2xi32>
    %615 = vector.shape_cast %614 : vector<2xi32> to vector<2x1xi32>
    %616 = arith.index_cast %c2_i32_164 : i32 to index
    %c0_188 = arith.constant 0 : index
    %c0_189 = arith.constant 0 : index
    %617 = vector.load %arg14[%616, %c0_188, %c0_189] : memref<6x2x128xf32, #tpu.memory_space<vmem>>, vector<1x2x128xf32>
    %618 = vector.shape_cast %617 : vector<1x2x128xf32> to vector<2x128xf32>
    %619 = vector.shape_cast %608 : vector<2x128xf32> to vector<1x2x128xf32>
    tpu.vector_store %arg14[%616, %c0_188, %c0_189], %619 {strides = array<i32>} : memref<6x2x128xf32, #tpu.memory_space<vmem>>, vector<1x2x128xf32>,
    %620 = arith.index_cast %c2_i32_164 : i32 to index
    %c0_190 = arith.constant 0 : index
    %c0_191 = arith.constant 0 : index
    %621 = vector.load %arg15[%620, %c0_190, %c0_191] : memref<6x2x1xi32, #tpu.memory_space<vmem>>, vector<1x2x1xi32>
    %622 = vector.shape_cast %621 : vector<1x2x1xi32> to vector<2x1xi32>
    %623 = vector.shape_cast %615 : vector<2x1xi32> to vector<1x2x1xi32>
    tpu.vector_store %arg15[%620, %c0_190, %c0_191], %623 {strides = array<i32>} : memref<6x2x1xi32, #tpu.memory_space<vmem>>, vector<1x2x1xi32>,
    %c3_i32_192 = arith.constant 3 : i32
    %624 = tpu.iota {dimensions = array<i32: 1>} : vector<2x128xi32>
    %625 = vector.broadcast %615 : vector<2x1xi32> to vector<2x128xi32>
    %626 = arith.cmpi eq, %624, %625 : vector<2x128xi32>
    %627 = arith.extui %626 : vector<2x128xi1> to vector<2x128xi32>
    %628 = arith.sitofp %627 : vector<2x128xi32> to vector<2x128xf32>
    %629 = arith.truncf %628 : vector<2x128xf32> to vector<2x128xbf16>
    %c0_193 = arith.constant 0 : index
    %c0_194 = arith.constant 0 : index
    %630 = vector.load %arg18[%c0_193, %c0_194] : memref<128x384xbf16, #tpu.memory_space<vmem>>, vector<128x384xbf16>
    %cst_195 = arith.constant dense<0.000000e+00> : vector<2x384xf32>
    %631 = tpu.matmul %629, %630, %cst_195 {dimension_numbers = #tpu.dot_dimension_numbers<[1], [0], [0], [1], [0, 0, 1, 1], [], []>} : vector<2x128xbf16>, vector<128x384xbf16>, vector<2x384xf32> -> vector<2x384xf32>
    %632 = vector.shape_cast %592 : vector<2x128xf32> to vector<1x2x128xf32>
    %633 = vector.broadcast %632 : vector<1x2x128xf32> to vector<8x2x128xf32>
    %634 = arith.mulf %338, %633 : vector<8x2x128xf32>
    %cst_196 = arith.constant dense<0.000000e+00> : vector<8x2xf32>
    %635 = vector.multi_reduction <add>, %634, %cst_196 [2] : vector<8x2x128xf32> to vector<8x2xf32>
    %636 = vector.shape_cast %635 : vector<8x2xf32> to vector<8x2x1xf32>
    %cst_197 = arith.constant dense<0xFF800000> : vector<2x1xf32>
    %637 = vector.multi_reduction <maximumf>, %636, %cst_197 [0] : vector<8x2x1xf32> to vector<2x1xf32>
    %638 = vector.shape_cast %637 : vector<2x1xf32> to vector<1x2x1xf32>
    %639 = vector.broadcast %638 : vector<1x2x1xf32> to vector<8x2x1xf32>
    %640 = arith.subf %636, %639 : vector<8x2x1xf32>
    %641 = math.exp %640 : vector<8x2x1xf32>
    %cst_198 = arith.constant dense<0.000000e+00> : vector<2x1xf32>
    %642 = vector.multi_reduction <add>, %641, %cst_198 [0] : vector<8x2x1xf32> to vector<2x1xf32>
    %643 = vector.shape_cast %642 : vector<2x1xf32> to vector<1x2x1xf32>
    %644 = tpu.reciprocal %643 {approx = true} : vector<1x2x1xf32> -> vector<1x2x1xf32>
    %645 = vector.broadcast %644 : vector<1x2x1xf32> to vector<8x2x1xf32>
    %646 = arith.mulf %641, %645 : vector<8x2x1xf32>
    %647 = vector.broadcast %646 : vector<8x2x1xf32> to vector<8x2x128xf32>
    %648 = arith.mulf %647, %338 : vector<8x2x128xf32>
    %cst_199 = arith.constant dense<0.000000e+00> : vector<2x128xf32>
    %649 = vector.multi_reduction <add>, %648, %cst_199 [0] : vector<8x2x128xf32> to vector<2x128xf32>
    %650 = arith.truncf %649 : vector<2x128xf32> to vector<2x128xbf16>
    %c0_200 = arith.constant 0 : index
    %c0_201 = arith.constant 0 : index
    %651 = vector.load %arg8[%c0_200, %c0_201] : memref<128x384xbf16, #tpu.memory_space<vmem>>, vector<128x384xbf16>
    %cst_202 = arith.constant dense<0.000000e+00> : vector<2x384xf32>
    %652 = tpu.matmul %650, %651, %cst_202 {dimension_numbers = #tpu.dot_dimension_numbers<[1], [0], [0], [1], [0, 0, 1, 1], [], []>} : vector<2x128xbf16>, vector<128x384xbf16>, vector<2x384xf32> -> vector<2x384xf32>
    %653 = arith.addf %631, %652 : vector<2x384xf32>
    %654 = vector.broadcast %335 : vector<1x384xf32> to vector<2x384xf32>
    %655 = arith.addf %653, %654 : vector<2x384xf32>
    %656 = arith.truncf %592 : vector<2x128xf32> to vector<2x128xbf16>
    %c0_203 = arith.constant 0 : index
    %c0_204 = arith.constant 0 : index
    %657 = vector.load %arg9[%c0_203, %c0_204] : memref<128x384xbf16, #tpu.memory_space<vmem>>, vector<128x384xbf16>
    %cst_205 = arith.constant dense<0.000000e+00> : vector<2x384xf32>
    %658 = tpu.matmul %656, %657, %cst_205 {dimension_numbers = #tpu.dot_dimension_numbers<[1], [0], [0], [1], [0, 0, 1, 1], [], []>} : vector<2x128xbf16>, vector<128x384xbf16>, vector<2x384xf32> -> vector<2x384xf32>
    %659 = vector.broadcast %336 : vector<1x384xf32> to vector<2x384xf32>
    %660 = arith.addf %658, %659 : vector<2x384xf32>
    %661 = vector.extract_strided_slice %655 {offsets = [0, 0], sizes = [2, 128], strides = [1, 1]} : vector<2x384xf32> to vector<2x128xf32>
    %662 = vector.extract_strided_slice %655 {offsets = [0, 128], sizes = [2, 128], strides = [1, 1]} : vector<2x384xf32> to vector<2x128xf32>
    %663 = vector.extract_strided_slice %655 {offsets = [0, 256], sizes = [2, 128], strides = [1, 1]} : vector<2x384xf32> to vector<2x128xf32>
    %664 = vector.extract_strided_slice %660 {offsets = [0, 0], sizes = [2, 128], strides = [1, 1]} : vector<2x384xf32> to vector<2x128xf32>
    %665 = vector.extract_strided_slice %660 {offsets = [0, 128], sizes = [2, 128], strides = [1, 1]} : vector<2x384xf32> to vector<2x128xf32>
    %666 = vector.extract_strided_slice %660 {offsets = [0, 256], sizes = [2, 128], strides = [1, 1]} : vector<2x384xf32> to vector<2x128xf32>
    %667 = arith.addf %661, %664 : vector<2x128xf32>
    %668 = arith.negf %667 : vector<2x128xf32>
    %669 = math.exp %668 : vector<2x128xf32>
    %cst_206 = arith.constant 1.000000e+00 : f32
    %670 = vector.broadcast %cst_206 : f32 to vector<2x128xf32>
    %671 = arith.addf %670, %669 : vector<2x128xf32>
    %672 = arith.divf %670, %671 : vector<2x128xf32>
    %673 = arith.addf %662, %665 : vector<2x128xf32>
    %674 = arith.negf %673 : vector<2x128xf32>
    %675 = math.exp %674 : vector<2x128xf32>
    %cst_207 = arith.constant 1.000000e+00 : f32
    %676 = vector.broadcast %cst_207 : f32 to vector<2x128xf32>
    %677 = arith.addf %676, %675 : vector<2x128xf32>
    %678 = arith.divf %676, %677 : vector<2x128xf32>
    %679 = arith.mulf %672, %666 : vector<2x128xf32>
    %680 = arith.addf %663, %679 : vector<2x128xf32>
    %681 = math.tanh %680 : vector<2x128xf32>
    %cst_208 = arith.constant 1.000000e+00 : f32
    %682 = vector.broadcast %cst_208 : f32 to vector<2x128xf32>
    %683 = arith.subf %682, %678 : vector<2x128xf32>
    %684 = arith.mulf %683, %681 : vector<2x128xf32>
    %685 = arith.mulf %678, %592 : vector<2x128xf32>
    %686 = arith.addf %684, %685 : vector<2x128xf32>
    %687 = arith.truncf %686 : vector<2x128xf32> to vector<2x128xbf16>
    %c0_209 = arith.constant 0 : index
    %c0_210 = arith.constant 0 : index
    %688 = vector.load %arg12[%c0_209, %c0_210] : memref<128x128xbf16, #tpu.memory_space<vmem>>, vector<128x128xbf16>
    %cst_211 = arith.constant dense<0.000000e+00> : vector<2x128xf32>
    %689 = tpu.matmul %687, %688, %cst_211 {dimension_numbers = #tpu.dot_dimension_numbers<[1], [0], [0], [1], [0, 0, 1, 1], [], []>} : vector<2x128xbf16>, vector<128x128xbf16>, vector<2x128xf32> -> vector<2x128xf32>
    %690 = vector.broadcast %340 : vector<1x128xf32> to vector<2x128xf32>
    %691 = arith.addf %689, %690 : vector<2x128xf32>
    %cst_212 = arith.constant dense<0xFF800000> : vector<2xf32>
    %692 = vector.multi_reduction <maximumf>, %691, %cst_212 [1] : vector<2x128xf32> to vector<2xf32>
    %693 = vector.shape_cast %692 : vector<2xf32> to vector<2x1xf32>
    %694 = vector.broadcast %693 : vector<2x1xf32> to vector<2x128xf32>
    %695 = arith.subf %691, %694 : vector<2x128xf32>
    %696 = math.exp %695 : vector<2x128xf32>
    %cst_213 = arith.constant dense<0.000000e+00> : vector<2xf32>
    %697 = vector.multi_reduction <add>, %696, %cst_213 [1] : vector<2x128xf32> to vector<2xf32>
    %698 = vector.shape_cast %697 : vector<2xf32> to vector<2x1xf32>
    %699 = math.log %698 : vector<2x1xf32>
    %700 = arith.addf %693, %699 : vector<2x1xf32>
    %701 = vector.broadcast %700 : vector<2x1xf32> to vector<2x128xf32>
    %702 = arith.subf %691, %701 : vector<2x128xf32>
    %703 = tpu.iota {dimensions = array<i32: 1>} : vector<2x128xi32>
    %704 = vector.broadcast %693 : vector<2x1xf32> to vector<2x128xf32>
    %705 = arith.cmpf oeq, %691, %704 : vector<2x128xf32>
    %c128_i32_214 = arith.constant 128 : i32
    %706 = vector.broadcast %c128_i32_214 : i32 to vector<2x128xi32>
    %707 = arith.select %705, %703, %706 : vector<2x128xi1>, vector<2x128xi32>
    %cst_215 = arith.constant dense<2147483647> : vector<2xi32>
    %708 = vector.multi_reduction <minsi>, %707, %cst_215 [1] : vector<2x128xi32> to vector<2xi32>
    %709 = vector.shape_cast %708 : vector<2xi32> to vector<2x1xi32>
    %710 = arith.index_cast %c3_i32_192 : i32 to index
    %c0_216 = arith.constant 0 : index
    %c0_217 = arith.constant 0 : index
    %711 = vector.load %arg14[%710, %c0_216, %c0_217] : memref<6x2x128xf32, #tpu.memory_space<vmem>>, vector<1x2x128xf32>
    %712 = vector.shape_cast %711 : vector<1x2x128xf32> to vector<2x128xf32>
    %713 = vector.shape_cast %702 : vector<2x128xf32> to vector<1x2x128xf32>
    tpu.vector_store %arg14[%710, %c0_216, %c0_217], %713 {strides = array<i32>} : memref<6x2x128xf32, #tpu.memory_space<vmem>>, vector<1x2x128xf32>,
    %714 = arith.index_cast %c3_i32_192 : i32 to index
    %c0_218 = arith.constant 0 : index
    %c0_219 = arith.constant 0 : index
    %715 = vector.load %arg15[%714, %c0_218, %c0_219] : memref<6x2x1xi32, #tpu.memory_space<vmem>>, vector<1x2x1xi32>
    %716 = vector.shape_cast %715 : vector<1x2x1xi32> to vector<2x1xi32>
    %717 = vector.shape_cast %709 : vector<2x1xi32> to vector<1x2x1xi32>
    tpu.vector_store %arg15[%714, %c0_218, %c0_219], %717 {strides = array<i32>} : memref<6x2x1xi32, #tpu.memory_space<vmem>>, vector<1x2x1xi32>,
    %c4_i32_220 = arith.constant 4 : i32
    %718 = tpu.iota {dimensions = array<i32: 1>} : vector<2x128xi32>
    %719 = vector.broadcast %709 : vector<2x1xi32> to vector<2x128xi32>
    %720 = arith.cmpi eq, %718, %719 : vector<2x128xi32>
    %721 = arith.extui %720 : vector<2x128xi1> to vector<2x128xi32>
    %722 = arith.sitofp %721 : vector<2x128xi32> to vector<2x128xf32>
    %723 = arith.truncf %722 : vector<2x128xf32> to vector<2x128xbf16>
    %c0_221 = arith.constant 0 : index
    %c0_222 = arith.constant 0 : index
    %724 = vector.load %arg18[%c0_221, %c0_222] : memref<128x384xbf16, #tpu.memory_space<vmem>>, vector<128x384xbf16>
    %cst_223 = arith.constant dense<0.000000e+00> : vector<2x384xf32>
    %725 = tpu.matmul %723, %724, %cst_223 {dimension_numbers = #tpu.dot_dimension_numbers<[1], [0], [0], [1], [0, 0, 1, 1], [], []>} : vector<2x128xbf16>, vector<128x384xbf16>, vector<2x384xf32> -> vector<2x384xf32>
    %726 = vector.shape_cast %686 : vector<2x128xf32> to vector<1x2x128xf32>
    %727 = vector.broadcast %726 : vector<1x2x128xf32> to vector<8x2x128xf32>
    %728 = arith.mulf %338, %727 : vector<8x2x128xf32>
    %cst_224 = arith.constant dense<0.000000e+00> : vector<8x2xf32>
    %729 = vector.multi_reduction <add>, %728, %cst_224 [2] : vector<8x2x128xf32> to vector<8x2xf32>
    %730 = vector.shape_cast %729 : vector<8x2xf32> to vector<8x2x1xf32>
    %cst_225 = arith.constant dense<0xFF800000> : vector<2x1xf32>
    %731 = vector.multi_reduction <maximumf>, %730, %cst_225 [0] : vector<8x2x1xf32> to vector<2x1xf32>
    %732 = vector.shape_cast %731 : vector<2x1xf32> to vector<1x2x1xf32>
    %733 = vector.broadcast %732 : vector<1x2x1xf32> to vector<8x2x1xf32>
    %734 = arith.subf %730, %733 : vector<8x2x1xf32>
    %735 = math.exp %734 : vector<8x2x1xf32>
    %cst_226 = arith.constant dense<0.000000e+00> : vector<2x1xf32>
    %736 = vector.multi_reduction <add>, %735, %cst_226 [0] : vector<8x2x1xf32> to vector<2x1xf32>
    %737 = vector.shape_cast %736 : vector<2x1xf32> to vector<1x2x1xf32>
    %738 = tpu.reciprocal %737 {approx = true} : vector<1x2x1xf32> -> vector<1x2x1xf32>
    %739 = vector.broadcast %738 : vector<1x2x1xf32> to vector<8x2x1xf32>
    %740 = arith.mulf %735, %739 : vector<8x2x1xf32>
    %741 = vector.broadcast %740 : vector<8x2x1xf32> to vector<8x2x128xf32>
    %742 = arith.mulf %741, %338 : vector<8x2x128xf32>
    %cst_227 = arith.constant dense<0.000000e+00> : vector<2x128xf32>
    %743 = vector.multi_reduction <add>, %742, %cst_227 [0] : vector<8x2x128xf32> to vector<2x128xf32>
    %744 = arith.truncf %743 : vector<2x128xf32> to vector<2x128xbf16>
    %c0_228 = arith.constant 0 : index
    %c0_229 = arith.constant 0 : index
    %745 = vector.load %arg8[%c0_228, %c0_229] : memref<128x384xbf16, #tpu.memory_space<vmem>>, vector<128x384xbf16>
    %cst_230 = arith.constant dense<0.000000e+00> : vector<2x384xf32>
    %746 = tpu.matmul %744, %745, %cst_230 {dimension_numbers = #tpu.dot_dimension_numbers<[1], [0], [0], [1], [0, 0, 1, 1], [], []>} : vector<2x128xbf16>, vector<128x384xbf16>, vector<2x384xf32> -> vector<2x384xf32>
    %747 = arith.addf %725, %746 : vector<2x384xf32>
    %748 = vector.broadcast %335 : vector<1x384xf32> to vector<2x384xf32>
    %749 = arith.addf %747, %748 : vector<2x384xf32>
    %750 = arith.truncf %686 : vector<2x128xf32> to vector<2x128xbf16>
    %c0_231 = arith.constant 0 : index
    %c0_232 = arith.constant 0 : index
    %751 = vector.load %arg9[%c0_231, %c0_232] : memref<128x384xbf16, #tpu.memory_space<vmem>>, vector<128x384xbf16>
    %cst_233 = arith.constant dense<0.000000e+00> : vector<2x384xf32>
    %752 = tpu.matmul %750, %751, %cst_233 {dimension_numbers = #tpu.dot_dimension_numbers<[1], [0], [0], [1], [0, 0, 1, 1], [], []>} : vector<2x128xbf16>, vector<128x384xbf16>, vector<2x384xf32> -> vector<2x384xf32>
    %753 = vector.broadcast %336 : vector<1x384xf32> to vector<2x384xf32>
    %754 = arith.addf %752, %753 : vector<2x384xf32>
    %755 = vector.extract_strided_slice %749 {offsets = [0, 0], sizes = [2, 128], strides = [1, 1]} : vector<2x384xf32> to vector<2x128xf32>
    %756 = vector.extract_strided_slice %749 {offsets = [0, 128], sizes = [2, 128], strides = [1, 1]} : vector<2x384xf32> to vector<2x128xf32>
    %757 = vector.extract_strided_slice %749 {offsets = [0, 256], sizes = [2, 128], strides = [1, 1]} : vector<2x384xf32> to vector<2x128xf32>
    %758 = vector.extract_strided_slice %754 {offsets = [0, 0], sizes = [2, 128], strides = [1, 1]} : vector<2x384xf32> to vector<2x128xf32>
    %759 = vector.extract_strided_slice %754 {offsets = [0, 128], sizes = [2, 128], strides = [1, 1]} : vector<2x384xf32> to vector<2x128xf32>
    %760 = vector.extract_strided_slice %754 {offsets = [0, 256], sizes = [2, 128], strides = [1, 1]} : vector<2x384xf32> to vector<2x128xf32>
    %761 = arith.addf %755, %758 : vector<2x128xf32>
    %762 = arith.negf %761 : vector<2x128xf32>
    %763 = math.exp %762 : vector<2x128xf32>
    %cst_234 = arith.constant 1.000000e+00 : f32
    %764 = vector.broadcast %cst_234 : f32 to vector<2x128xf32>
    %765 = arith.addf %764, %763 : vector<2x128xf32>
    %766 = arith.divf %764, %765 : vector<2x128xf32>
    %767 = arith.addf %756, %759 : vector<2x128xf32>
    %768 = arith.negf %767 : vector<2x128xf32>
    %769 = math.exp %768 : vector<2x128xf32>
    %cst_235 = arith.constant 1.000000e+00 : f32
    %770 = vector.broadcast %cst_235 : f32 to vector<2x128xf32>
    %771 = arith.addf %770, %769 : vector<2x128xf32>
    %772 = arith.divf %770, %771 : vector<2x128xf32>
    %773 = arith.mulf %766, %760 : vector<2x128xf32>
    %774 = arith.addf %757, %773 : vector<2x128xf32>
    %775 = math.tanh %774 : vector<2x128xf32>
    %cst_236 = arith.constant 1.000000e+00 : f32
    %776 = vector.broadcast %cst_236 : f32 to vector<2x128xf32>
    %777 = arith.subf %776, %772 : vector<2x128xf32>
    %778 = arith.mulf %777, %775 : vector<2x128xf32>
    %779 = arith.mulf %772, %686 : vector<2x128xf32>
    %780 = arith.addf %778, %779 : vector<2x128xf32>
    %781 = arith.truncf %780 : vector<2x128xf32> to vector<2x128xbf16>
    %c0_237 = arith.constant 0 : index
    %c0_238 = arith.constant 0 : index
    %782 = vector.load %arg12[%c0_237, %c0_238] : memref<128x128xbf16, #tpu.memory_space<vmem>>, vector<128x128xbf16>
    %cst_239 = arith.constant dense<0.000000e+00> : vector<2x128xf32>
    %783 = tpu.matmul %781, %782, %cst_239 {dimension_numbers = #tpu.dot_dimension_numbers<[1], [0], [0], [1], [0, 0, 1, 1], [], []>} : vector<2x128xbf16>, vector<128x128xbf16>, vector<2x128xf32> -> vector<2x128xf32>
    %784 = vector.broadcast %340 : vector<1x128xf32> to vector<2x128xf32>
    %785 = arith.addf %783, %784 : vector<2x128xf32>
    %cst_240 = arith.constant dense<0xFF800000> : vector<2xf32>
    %786 = vector.multi_reduction <maximumf>, %785, %cst_240 [1] : vector<2x128xf32> to vector<2xf32>
    %787 = vector.shape_cast %786 : vector<2xf32> to vector<2x1xf32>
    %788 = vector.broadcast %787 : vector<2x1xf32> to vector<2x128xf32>
    %789 = arith.subf %785, %788 : vector<2x128xf32>
    %790 = math.exp %789 : vector<2x128xf32>
    %cst_241 = arith.constant dense<0.000000e+00> : vector<2xf32>
    %791 = vector.multi_reduction <add>, %790, %cst_241 [1] : vector<2x128xf32> to vector<2xf32>
    %792 = vector.shape_cast %791 : vector<2xf32> to vector<2x1xf32>
    %793 = math.log %792 : vector<2x1xf32>
    %794 = arith.addf %787, %793 : vector<2x1xf32>
    %795 = vector.broadcast %794 : vector<2x1xf32> to vector<2x128xf32>
    %796 = arith.subf %785, %795 : vector<2x128xf32>
    %797 = tpu.iota {dimensions = array<i32: 1>} : vector<2x128xi32>
    %798 = vector.broadcast %787 : vector<2x1xf32> to vector<2x128xf32>
    %799 = arith.cmpf oeq, %785, %798 : vector<2x128xf32>
    %c128_i32_242 = arith.constant 128 : i32
    %800 = vector.broadcast %c128_i32_242 : i32 to vector<2x128xi32>
    %801 = arith.select %799, %797, %800 : vector<2x128xi1>, vector<2x128xi32>
    %cst_243 = arith.constant dense<2147483647> : vector<2xi32>
    %802 = vector.multi_reduction <minsi>, %801, %cst_243 [1] : vector<2x128xi32> to vector<2xi32>
    %803 = vector.shape_cast %802 : vector<2xi32> to vector<2x1xi32>
    %804 = arith.index_cast %c4_i32_220 : i32 to index
    %c0_244 = arith.constant 0 : index
    %c0_245 = arith.constant 0 : index
    %805 = vector.load %arg14[%804, %c0_244, %c0_245] : memref<6x2x128xf32, #tpu.memory_space<vmem>>, vector<1x2x128xf32>
    %806 = vector.shape_cast %805 : vector<1x2x128xf32> to vector<2x128xf32>
    %807 = vector.shape_cast %796 : vector<2x128xf32> to vector<1x2x128xf32>
    tpu.vector_store %arg14[%804, %c0_244, %c0_245], %807 {strides = array<i32>} : memref<6x2x128xf32, #tpu.memory_space<vmem>>, vector<1x2x128xf32>,
    %808 = arith.index_cast %c4_i32_220 : i32 to index
    %c0_246 = arith.constant 0 : index
    %c0_247 = arith.constant 0 : index
    %809 = vector.load %arg15[%808, %c0_246, %c0_247] : memref<6x2x1xi32, #tpu.memory_space<vmem>>, vector<1x2x1xi32>
    %810 = vector.shape_cast %809 : vector<1x2x1xi32> to vector<2x1xi32>
    %811 = vector.shape_cast %803 : vector<2x1xi32> to vector<1x2x1xi32>
    tpu.vector_store %arg15[%808, %c0_246, %c0_247], %811 {strides = array<i32>} : memref<6x2x1xi32, #tpu.memory_space<vmem>>, vector<1x2x1xi32>,
    %c5_i32_248 = arith.constant 5 : i32
    %812 = tpu.iota {dimensions = array<i32: 1>} : vector<2x128xi32>
    %813 = vector.broadcast %803 : vector<2x1xi32> to vector<2x128xi32>
    %814 = arith.cmpi eq, %812, %813 : vector<2x128xi32>
    %815 = arith.extui %814 : vector<2x128xi1> to vector<2x128xi32>
    %816 = arith.sitofp %815 : vector<2x128xi32> to vector<2x128xf32>
    %817 = arith.truncf %816 : vector<2x128xf32> to vector<2x128xbf16>
    %c0_249 = arith.constant 0 : index
    %c0_250 = arith.constant 0 : index
    %818 = vector.load %arg18[%c0_249, %c0_250] : memref<128x384xbf16, #tpu.memory_space<vmem>>, vector<128x384xbf16>
    %cst_251 = arith.constant dense<0.000000e+00> : vector<2x384xf32>
    %819 = tpu.matmul %817, %818, %cst_251 {dimension_numbers = #tpu.dot_dimension_numbers<[1], [0], [0], [1], [0, 0, 1, 1], [], []>} : vector<2x128xbf16>, vector<128x384xbf16>, vector<2x384xf32> -> vector<2x384xf32>
    %820 = vector.shape_cast %780 : vector<2x128xf32> to vector<1x2x128xf32>
    %821 = vector.broadcast %820 : vector<1x2x128xf32> to vector<8x2x128xf32>
    %822 = arith.mulf %338, %821 : vector<8x2x128xf32>
    %cst_252 = arith.constant dense<0.000000e+00> : vector<8x2xf32>
    %823 = vector.multi_reduction <add>, %822, %cst_252 [2] : vector<8x2x128xf32> to vector<8x2xf32>
    %824 = vector.shape_cast %823 : vector<8x2xf32> to vector<8x2x1xf32>
    %cst_253 = arith.constant dense<0xFF800000> : vector<2x1xf32>
    %825 = vector.multi_reduction <maximumf>, %824, %cst_253 [0] : vector<8x2x1xf32> to vector<2x1xf32>
    %826 = vector.shape_cast %825 : vector<2x1xf32> to vector<1x2x1xf32>
    %827 = vector.broadcast %826 : vector<1x2x1xf32> to vector<8x2x1xf32>
    %828 = arith.subf %824, %827 : vector<8x2x1xf32>
    %829 = math.exp %828 : vector<8x2x1xf32>
    %cst_254 = arith.constant dense<0.000000e+00> : vector<2x1xf32>
    %830 = vector.multi_reduction <add>, %829, %cst_254 [0] : vector<8x2x1xf32> to vector<2x1xf32>
    %831 = vector.shape_cast %830 : vector<2x1xf32> to vector<1x2x1xf32>
    %832 = tpu.reciprocal %831 {approx = true} : vector<1x2x1xf32> -> vector<1x2x1xf32>
    %833 = vector.broadcast %832 : vector<1x2x1xf32> to vector<8x2x1xf32>
    %834 = arith.mulf %829, %833 : vector<8x2x1xf32>
    %835 = vector.broadcast %834 : vector<8x2x1xf32> to vector<8x2x128xf32>
    %836 = arith.mulf %835, %338 : vector<8x2x128xf32>
    %cst_255 = arith.constant dense<0.000000e+00> : vector<2x128xf32>
    %837 = vector.multi_reduction <add>, %836, %cst_255 [0] : vector<8x2x128xf32> to vector<2x128xf32>
    %838 = arith.truncf %837 : vector<2x128xf32> to vector<2x128xbf16>
    %c0_256 = arith.constant 0 : index
    %c0_257 = arith.constant 0 : index
    %839 = vector.load %arg8[%c0_256, %c0_257] : memref<128x384xbf16, #tpu.memory_space<vmem>>, vector<128x384xbf16>
    %cst_258 = arith.constant dense<0.000000e+00> : vector<2x384xf32>
    %840 = tpu.matmul %838, %839, %cst_258 {dimension_numbers = #tpu.dot_dimension_numbers<[1], [0], [0], [1], [0, 0, 1, 1], [], []>} : vector<2x128xbf16>, vector<128x384xbf16>, vector<2x384xf32> -> vector<2x384xf32>
    %841 = arith.addf %819, %840 : vector<2x384xf32>
    %842 = vector.broadcast %335 : vector<1x384xf32> to vector<2x384xf32>
    %843 = arith.addf %841, %842 : vector<2x384xf32>
    %844 = arith.truncf %780 : vector<2x128xf32> to vector<2x128xbf16>
    %c0_259 = arith.constant 0 : index
    %c0_260 = arith.constant 0 : index
    %845 = vector.load %arg9[%c0_259, %c0_260] : memref<128x384xbf16, #tpu.memory_space<vmem>>, vector<128x384xbf16>
    %cst_261 = arith.constant dense<0.000000e+00> : vector<2x384xf32>
    %846 = tpu.matmul %844, %845, %cst_261 {dimension_numbers = #tpu.dot_dimension_numbers<[1], [0], [0], [1], [0, 0, 1, 1], [], []>} : vector<2x128xbf16>, vector<128x384xbf16>, vector<2x384xf32> -> vector<2x384xf32>
    %847 = vector.broadcast %336 : vector<1x384xf32> to vector<2x384xf32>
    %848 = arith.addf %846, %847 : vector<2x384xf32>
    %849 = vector.extract_strided_slice %843 {offsets = [0, 0], sizes = [2, 128], strides = [1, 1]} : vector<2x384xf32> to vector<2x128xf32>
    %850 = vector.extract_strided_slice %843 {offsets = [0, 128], sizes = [2, 128], strides = [1, 1]} : vector<2x384xf32> to vector<2x128xf32>
    %851 = vector.extract_strided_slice %843 {offsets = [0, 256], sizes = [2, 128], strides = [1, 1]} : vector<2x384xf32> to vector<2x128xf32>
    %852 = vector.extract_strided_slice %848 {offsets = [0, 0], sizes = [2, 128], strides = [1, 1]} : vector<2x384xf32> to vector<2x128xf32>
    %853 = vector.extract_strided_slice %848 {offsets = [0, 128], sizes = [2, 128], strides = [1, 1]} : vector<2x384xf32> to vector<2x128xf32>
    %854 = vector.extract_strided_slice %848 {offsets = [0, 256], sizes = [2, 128], strides = [1, 1]} : vector<2x384xf32> to vector<2x128xf32>
    %855 = arith.addf %849, %852 : vector<2x128xf32>
    %856 = arith.negf %855 : vector<2x128xf32>
    %857 = math.exp %856 : vector<2x128xf32>
    %cst_262 = arith.constant 1.000000e+00 : f32
    %858 = vector.broadcast %cst_262 : f32 to vector<2x128xf32>
    %859 = arith.addf %858, %857 : vector<2x128xf32>
    %860 = arith.divf %858, %859 : vector<2x128xf32>
    %861 = arith.addf %850, %853 : vector<2x128xf32>
    %862 = arith.negf %861 : vector<2x128xf32>
    %863 = math.exp %862 : vector<2x128xf32>
    %cst_263 = arith.constant 1.000000e+00 : f32
    %864 = vector.broadcast %cst_263 : f32 to vector<2x128xf32>
    %865 = arith.addf %864, %863 : vector<2x128xf32>
    %866 = arith.divf %864, %865 : vector<2x128xf32>
    %867 = arith.mulf %860, %854 : vector<2x128xf32>
    %868 = arith.addf %851, %867 : vector<2x128xf32>
    %869 = math.tanh %868 : vector<2x128xf32>
    %cst_264 = arith.constant 1.000000e+00 : f32
    %870 = vector.broadcast %cst_264 : f32 to vector<2x128xf32>
    %871 = arith.subf %870, %866 : vector<2x128xf32>
    %872 = arith.mulf %871, %869 : vector<2x128xf32>
    %873 = arith.mulf %866, %780 : vector<2x128xf32>
    %874 = arith.addf %872, %873 : vector<2x128xf32>
    %875 = arith.truncf %874 : vector<2x128xf32> to vector<2x128xbf16>
    %c0_265 = arith.constant 0 : index
    %c0_266 = arith.constant 0 : index
    %876 = vector.load %arg12[%c0_265, %c0_266] : memref<128x128xbf16, #tpu.memory_space<vmem>>, vector<128x128xbf16>
    %cst_267 = arith.constant dense<0.000000e+00> : vector<2x128xf32>
    %877 = tpu.matmul %875, %876, %cst_267 {dimension_numbers = #tpu.dot_dimension_numbers<[1], [0], [0], [1], [0, 0, 1, 1], [], []>} : vector<2x128xbf16>, vector<128x128xbf16>, vector<2x128xf32> -> vector<2x128xf32>
    %878 = vector.broadcast %340 : vector<1x128xf32> to vector<2x128xf32>
    %879 = arith.addf %877, %878 : vector<2x128xf32>
    %cst_268 = arith.constant dense<0xFF800000> : vector<2xf32>
    %880 = vector.multi_reduction <maximumf>, %879, %cst_268 [1] : vector<2x128xf32> to vector<2xf32>
    %881 = vector.shape_cast %880 : vector<2xf32> to vector<2x1xf32>
    %882 = vector.broadcast %881 : vector<2x1xf32> to vector<2x128xf32>
    %883 = arith.subf %879, %882 : vector<2x128xf32>
    %884 = math.exp %883 : vector<2x128xf32>
    %cst_269 = arith.constant dense<0.000000e+00> : vector<2xf32>
    %885 = vector.multi_reduction <add>, %884, %cst_269 [1] : vector<2x128xf32> to vector<2xf32>
    %886 = vector.shape_cast %885 : vector<2xf32> to vector<2x1xf32>
    %887 = math.log %886 : vector<2x1xf32>
    %888 = arith.addf %881, %887 : vector<2x1xf32>
    %889 = vector.broadcast %888 : vector<2x1xf32> to vector<2x128xf32>
    %890 = arith.subf %879, %889 : vector<2x128xf32>
    %891 = tpu.iota {dimensions = array<i32: 1>} : vector<2x128xi32>
    %892 = vector.broadcast %881 : vector<2x1xf32> to vector<2x128xf32>
    %893 = arith.cmpf oeq, %879, %892 : vector<2x128xf32>
    %c128_i32_270 = arith.constant 128 : i32
    %894 = vector.broadcast %c128_i32_270 : i32 to vector<2x128xi32>
    %895 = arith.select %893, %891, %894 : vector<2x128xi1>, vector<2x128xi32>
    %cst_271 = arith.constant dense<2147483647> : vector<2xi32>
    %896 = vector.multi_reduction <minsi>, %895, %cst_271 [1] : vector<2x128xi32> to vector<2xi32>
    %897 = vector.shape_cast %896 : vector<2xi32> to vector<2x1xi32>
    %898 = arith.index_cast %c5_i32_248 : i32 to index
    %c0_272 = arith.constant 0 : index
    %c0_273 = arith.constant 0 : index
    %899 = vector.load %arg14[%898, %c0_272, %c0_273] : memref<6x2x128xf32, #tpu.memory_space<vmem>>, vector<1x2x128xf32>
    %900 = vector.shape_cast %899 : vector<1x2x128xf32> to vector<2x128xf32>
    %901 = vector.shape_cast %890 : vector<2x128xf32> to vector<1x2x128xf32>
    tpu.vector_store %arg14[%898, %c0_272, %c0_273], %901 {strides = array<i32>} : memref<6x2x128xf32, #tpu.memory_space<vmem>>, vector<1x2x128xf32>,
    %902 = arith.index_cast %c5_i32_248 : i32 to index
    %c0_274 = arith.constant 0 : index
    %c0_275 = arith.constant 0 : index
    %903 = vector.load %arg15[%902, %c0_274, %c0_275] : memref<6x2x1xi32, #tpu.memory_space<vmem>>, vector<1x2x1xi32>
    %904 = vector.shape_cast %903 : vector<1x2x1xi32> to vector<2x1xi32>
    %905 = vector.shape_cast %897 : vector<2x1xi32> to vector<1x2x1xi32>
    tpu.vector_store %arg15[%902, %c0_274, %c0_275], %905 {strides = array<i32>} : memref<6x2x1xi32, #tpu.memory_space<vmem>>, vector<1x2x1xi32>,
    %c6_i32_276 = arith.constant 6 : i32
    return
  }
}

</mosaic_0001>

<llo_original>
// kernel: tpu_custom_call.1
$region0: #{tpu_custom_call.1}
  #allocation0 [shape = 'u32[]', space=smem, size = 0x4, offset = 0x4, fixed_abs, tag = 'smem constant byte address 0x4 - core index']
  #allocation1 [shape = 'u32[144,128]{1,0:T(1,128)}', space=vmem, size = 0x12000, scoped, tag = 'internal scratch']
  #allocation2 [shape = 'bf16[8,2,384]{2,1,0:T(2,128)(2,1)}', space=vmem, size = 0x3000, scoped, tag = 'scratch operand']
  #allocation3 [shape = 'bf16[8,2,128]{2,1,0:T(2,128)(2,1)}', space=vmem, size = 0x1000, scoped, tag = 'scratch operand']
  #allocation4 [shape = 'bf16[128,384]{1,0:T(8,128)(2,1)}', space=vmem, size = 0x18000, scoped, tag = 'scratch operand']
  %s0 = inlined_call_operand.hbm [shape: bf16[16,32], index: 0, kind: input, shape index: {}]
  %s1 = inlined_call_operand.hbm [shape: bf16[32,384], index: 1, kind: input, shape index: {}]
  %s2 = inlined_call_operand.vmem [shape: f32[1,384], index: 2, kind: input, shape index: {}]
  %s3 = inlined_call_operand.hbm [shape: bf16[128,384], index: 3, kind: input, shape index: {}]
  %s4 = inlined_call_operand.vmem [shape: f32[1,384], index: 4, kind: input, shape index: {}]
  %s5 = inlined_call_operand.vmem [shape: s32[2,1], index: 5, kind: input, shape index: {}]
  %s6 = inlined_call_operand.hbm [shape: bf16[128,128], index: 6, kind: input, shape index: {}]
  %s7 = inlined_call_operand.hbm [shape: bf16[128,384], index: 7, kind: input, shape index: {}]
  %s8 = inlined_call_operand.hbm [shape: bf16[128,384], index: 8, kind: input, shape index: {}]
  %s9 = inlined_call_operand.hbm [shape: bf16[128,384], index: 9, kind: input, shape index: {}]
  %s10 = inlined_call_operand.vmem [shape: f32[1,384], index: 10, kind: input, shape index: {}]
  %s11 = inlined_call_operand.vmem [shape: f32[1,384], index: 11, kind: input, shape index: {}]
  %s12 = inlined_call_operand.hbm [shape: bf16[128,128], index: 12, kind: input, shape index: {}]
  %s13 = inlined_call_operand.vmem [shape: f32[1,128], index: 13, kind: input, shape index: {}]
  %s14 = inlined_call_operand.hbm [shape: f32[6,2,128], index: 14, kind: output, shape index: {0}]
  %s15 = inlined_call_operand.vmem [shape: s32[6,2,1], index: 15, kind: output, shape index: {1}]
  %16 = xla_tuple %s14, %s15
  %s17 = sld [smem:[#allocation0]]
  $region106: #{tpu_custom_call.1} parent=0
    _
  %s19 = ssub.s32 1, %s17
  %s20 = scalar_select 0, %s19, %s17
  $region1: #{tpu_custom_call.1} parent=0
    #allocation5 [shape = 'u8[4096]{0}', space=vmem, size = 0x1000, scoped, tag = 'input window, operand 0, single buffered']
    #allocation6 [shape = 's32[1]{0}', space=sflag, size = 0x4, scoped, tag = 'scoped memory for tpu_custom_call.1']
    #allocation7 [shape = 's32[1]{0}', space=sflag, size = 0x4, scoped, tag = 'scoped memory for tpu_custom_call.1']
    #allocation8 [shape = 'u8[24576]{0}', space=vmem, size = 0x6000, scoped, tag = 'input window, operand 1, single buffered']
    #allocation9 [shape = 's32[1]{0}', space=sflag, size = 0x4, scoped, tag = 'scoped memory for tpu_custom_call.1']
    #allocation10 [shape = 'u8[98304]{0}', space=vmem, size = 0x18000, scoped, tag = 'input window, operand 3, single buffered']
    #allocation11 [shape = 'u8[32768]{0}', space=vmem, size = 0x8000, scoped, tag = 'input window, operand 6, single buffered']
    #allocation12 [shape = 's32[1]{0}', space=sflag, size = 0x4, scoped, tag = 'scoped memory for tpu_custom_call.1']
    #allocation13 [shape = 'u8[98304]{0}', space=vmem, size = 0x18000, scoped, tag = 'input window, operand 7, single buffered']
    #allocation14 [shape = 'u8[98304]{0}', space=vmem, size = 0x18000, scoped, tag = 'input window, operand 8, single buffered']
    #allocation15 [shape = 's32[1]{0}', space=sflag, size = 0x4, scoped, tag = 'scoped memory for tpu_custom_call.1']
    #allocation16 [shape = 'u8[98304]{0}', space=vmem, size = 0x18000, scoped, tag = 'input window, operand 9, single buffered']
    #allocation17 [shape = 'u8[32768]{0}', space=vmem, size = 0x8000, scoped, tag = 'input window, operand 12, single buffered']
    #allocation18 [shape = 's32[1]{0}', space=sflag, size = 0x4, scoped, tag = 'scoped memory for tpu_custom_call.1']
    #allocation19 [shape = 'u8[6144]{0}', space=vmem, size = 0x1800, scoped, tag = 'output window, operand 0, single buffered']
    %21 = vsyncpa [#allocation6], 0
    %22 = vsyncpa [#allocation9], 0
    %23 = vsyncpa [#allocation12], 0
    %24 = vsyncpa [#allocation15], 0
    %25 = vsyncpa [#allocation18], 0
    %26 = vsyncpa [#allocation7], 0
    // Predicated region
    $region2: #{tpu_custom_call.1} parent=1 // pred_check
      _
    $region3: #{tpu_custom_call.1} parent=1 // pred_check_branch
      %28 = sbr.rel (0) target = $region5
    $region4: #{tpu_custom_call.1} parent=1 // pred_region
      %s30 = ssub.s32 128, 128
      %31 = vsyncadd [#allocation6], %s30
      %s32 = sshll.u32 [#allocation5], 4
      %s33 = int_to_ptr.vmem [resolvable:$true] %s32
      %38 = dma.hbm_to_vmem [thread:$0]  %s0, 128, %s33, [#allocation6], 64, 64, 4
    $region5: #{tpu_custom_call.1} parent=1 // pred_fallthru
      _
    // Predicated region
    $region6: #{tpu_custom_call.1} parent=1 // pred_check
      _
    $region7: #{tpu_custom_call.1} parent=1 // pred_check_branch
      %40 = sbr.rel (0) target = $region9
    $region8: #{tpu_custom_call.1} parent=1 // pred_region
      %s42 = ssub.s32 768, 768
      %43 = vsyncadd [#allocation9], %s42
      %s44 = sshll.u32 [#allocation8], 4
      %s45 = int_to_ptr.vmem [resolvable:$true] %s44
      %50 = dma.hbm_to_vmem [thread:$0]  %s1, 768, %s45, [#allocation9], 192, 192, 12
    $region9: #{tpu_custom_call.1} parent=1 // pred_fallthru
      _
    // Predicated region
    $region10: #{tpu_custom_call.1} parent=1 // pred_check
      _
    $region11: #{tpu_custom_call.1} parent=1 // pred_check_branch
      %52 = sbr.rel (0) target = $region13
    $region12: #{tpu_custom_call.1} parent=1 // pred_region
      _
    $region13: #{tpu_custom_call.1} parent=1 // pred_fallthru
      _
    // Predicated region
    $region14: #{tpu_custom_call.1} parent=1 // pred_check
      _
    $region15: #{tpu_custom_call.1} parent=1 // pred_check_branch
      %54 = sbr.rel (0) target = $region17
    $region16: #{tpu_custom_call.1} parent=1 // pred_region
      %s56 = ssub.s32 3072, 3072
      %57 = vsyncadd [#allocation9], %s56
      %s58 = sshll.u32 [#allocation10], 4
      %s59 = int_to_ptr.vmem [resolvable:$true] %s58
      %64 = dma.hbm_to_vmem [thread:$0]  %s3, 3072, %s59, [#allocation9], 192, 192, 12
    $region17: #{tpu_custom_call.1} parent=1 // pred_fallthru
      _
    // Predicated region
    $region18: #{tpu_custom_call.1} parent=1 // pred_check
      _
    $region19: #{tpu_custom_call.1} parent=1 // pred_check_branch
      %66 = sbr.rel (0) target = $region21
    $region20: #{tpu_custom_call.1} parent=1 // pred_region
      _
    $region21: #{tpu_custom_call.1} parent=1 // pred_fallthru
      _
    // Predicated region
    $region22: #{tpu_custom_call.1} parent=1 // pred_check
      _
    $region23: #{tpu_custom_call.1} parent=1 // pred_check_branch
      %68 = sbr.rel (0) target = $region25
    $region24: #{tpu_custom_call.1} parent=1 // pred_region
      _
    $region25: #{tpu_custom_call.1} parent=1 // pred_fallthru
      _
    // Predicated region
    $region26: #{tpu_custom_call.1} parent=1 // pred_check
      _
    $region27: #{tpu_custom_call.1} parent=1 // pred_check_branch
      %70 = sbr.rel (0) target = $region29
    $region28: #{tpu_custom_call.1} parent=1 // pred_region
      %s72 = ssub.s32 1024, 1024
      %73 = vsyncadd [#allocation12], %s72
      %s74 = sshll.u32 [#allocation11], 4
      %s75 = int_to_ptr.vmem [resolvable:$true] %s74
      %80 = dma.hbm_to_vmem [thread:$0]  %s6, 1024, %s75, [#allocation12], 64, 64, 4
    $region29: #{tpu_custom_call.1} parent=1 // pred_fallthru
      _
    // Predicated region
    $region30: #{tpu_custom_call.1} parent=1 // pred_check
      _
    $region31: #{tpu_custom_call.1} parent=1 // pred_check_branch
      %82 = sbr.rel (0) target = $region33
    $region32: #{tpu_custom_call.1} parent=1 // pred_region
      %s84 = ssub.s32 3072, 3072
      %85 = vsyncadd [#allocation12], %s84
      %s86 = sshll.u32 [#allocation13], 4
      %s87 = int_to_ptr.vmem [resolvable:$true] %s86
      %92 = dma.hbm_to_vmem [thread:$0]  %s7, 3072, %s87, [#allocation12], 192, 192, 12
    $region33: #{tpu_custom_call.1} parent=1 // pred_fallthru
      _
    // Predicated region
    $region34: #{tpu_custom_call.1} parent=1 // pred_check
      _
    $region35: #{tpu_custom_call.1} parent=1 // pred_check_branch
      %94 = sbr.rel (0) target = $region37
    $region36: #{tpu_custom_call.1} parent=1 // pred_region
      %s96 = ssub.s32 3072, 3072
      %97 = vsyncadd [#allocation15], %s96
      %s98 = sshll.u32 [#allocation14], 4
      %s99 = int_to_ptr.vmem [resolvable:$true] %s98
      %104 = dma.hbm_to_vmem [thread:$0]  %s8, 3072, %s99, [#allocation15], 192, 192, 12
    $region37: #{tpu_custom_call.1} parent=1 // pred_fallthru
      _
    // Predicated region
    $region38: #{tpu_custom_call.1} parent=1 // pred_check
      _
    $region39: #{tpu_custom_call.1} parent=1 // pred_check_branch
      %106 = sbr.rel (0) target = $region41
    $region40: #{tpu_custom_call.1} parent=1 // pred_region
      %s108 = ssub.s32 3072, 3072
      %109 = vsyncadd [#allocation15], %s108
      %s110 = sshll.u32 [#allocation16], 4
      %s111 = int_to_ptr.vmem [resolvable:$true] %s110
      %116 = dma.hbm_to_vmem [thread:$0]  %s9, 3072, %s111, [#allocation15], 192, 192, 12
    $region41: #{tpu_custom_call.1} parent=1 // pred_fallthru
      _
    // Predicated region
    $region42: #{tpu_custom_call.1} parent=1 // pred_check
      _
    $region43: #{tpu_custom_call.1} parent=1 // pred_check_branch
      %118 = sbr.rel (0) target = $region45
    $region44: #{tpu_custom_call.1} parent=1 // pred_region
      _
    $region45: #{tpu_custom_call.1} parent=1 // pred_fallthru
      _
    // Predicated region
    $region46: #{tpu_custom_call.1} parent=1 // pred_check
      _
    $region47: #{tpu_custom_call.1} parent=1 // pred_check_branch
      %120 = sbr.rel (0) target = $region49
    $region48: #{tpu_custom_call.1} parent=1 // pred_region
      _
    $region49: #{tpu_custom_call.1} parent=1 // pred_fallthru
      _
    // Predicated region
    $region50: #{tpu_custom_call.1} parent=1 // pred_check
      _
    $region51: #{tpu_custom_call.1} parent=1 // pred_check_branch
      %122 = sbr.rel (0) target = $region53
    $region52: #{tpu_custom_call.1} parent=1 // pred_region
      %s124 = ssub.s32 1024, 1024
      %125 = vsyncadd [#allocation18], %s124
      %s126 = sshll.u32 [#allocation17], 4
      %s127 = int_to_ptr.vmem [resolvable:$true] %s126
      %132 = dma.hbm_to_vmem [thread:$0]  %s12, 1024, %s127, [#allocation18], 64, 64, 4
    $region53: #{tpu_custom_call.1} parent=1 // pred_fallthru
      _
    // Predicated region
    $region54: #{tpu_custom_call.1} parent=1 // pred_check
      _
    $region55: #{tpu_custom_call.1} parent=1 // pred_check_branch
      %134 = sbr.rel (0) target = $region57
    $region56: #{tpu_custom_call.1} parent=1 // pred_region
      _
    $region57: #{tpu_custom_call.1} parent=1 // pred_fallthru
      _
    // Predicated region
    $region58: #{tpu_custom_call.1} parent=1 // pred_check
      _
    $region59: #{tpu_custom_call.1} parent=1 // pred_check_branch
      %136 = sbr.rel (0) target = $region61
    $region60: #{tpu_custom_call.1} parent=1 // pred_region
      %137 = dma.done [#allocation6], 128
    $region61: #{tpu_custom_call.1} parent=1 // pred_fallthru
      _
    // Predicated region
    $region62: #{tpu_custom_call.1} parent=1 // pred_check
      _
    $region63: #{tpu_custom_call.1} parent=1 // pred_check_branch
      %139 = sbr.rel (0) target = $region65
    $region64: #{tpu_custom_call.1} parent=1 // pred_region
      %140 = dma.done [#allocation9], 768
    $region65: #{tpu_custom_call.1} parent=1 // pred_fallthru
      _
    // Predicated region
    $region66: #{tpu_custom_call.1} parent=1 // pred_check
      _
    $region67: #{tpu_custom_call.1} parent=1 // pred_check_branch
      %142 = sbr.rel (0) target = $region69
    $region68: #{tpu_custom_call.1} parent=1 // pred_region
      %143 = dma.done [#allocation9], 3072
    $region69: #{tpu_custom_call.1} parent=1 // pred_fallthru
      _
    // Predicated region
    $region70: #{tpu_custom_call.1} parent=1 // pred_check
      _
    $region71: #{tpu_custom_call.1} parent=1 // pred_check_branch
      %145 = sbr.rel (0) target = $region73
    $region72: #{tpu_custom_call.1} parent=1 // pred_region
      %146 = dma.done [#allocation12], 1024
    $region73: #{tpu_custom_call.1} parent=1 // pred_fallthru
      _
    // Predicated region
    $region74: #{tpu_custom_call.1} parent=1 // pred_check
      _
    $region75: #{tpu_custom_call.1} parent=1 // pred_check_branch
      %148 = sbr.rel (0) target = $region77
    $region76: #{tpu_custom_call.1} parent=1 // pred_region
      %149 = dma.done [#allocation12], 3072
    $region77: #{tpu_custom_call.1} parent=1 // pred_fallthru
      _
    // Predicated region
    $region78: #{tpu_custom_call.1} parent=1 // pred_check
      _
    $region79: #{tpu_custom_call.1} parent=1 // pred_check_branch
      %151 = sbr.rel (0) target = $region81
    $region80: #{tpu_custom_call.1} parent=1 // pred_region
      %152 = dma.done [#allocation15], 3072
    $region81: #{tpu_custom_call.1} parent=1 // pred_fallthru
      _
    // Predicated region
    $region82: #{tpu_custom_call.1} parent=1 // pred_check
      _
    $region83: #{tpu_custom_call.1} parent=1 // pred_check_branch
      %154 = sbr.rel (0) target = $region85
    $region84: #{tpu_custom_call.1} parent=1 // pred_region
      %155 = dma.done [#allocation15], 3072
    $region85: #{tpu_custom_call.1} parent=1 // pred_fallthru
      _
    // Predicated region
    $region86: #{tpu_custom_call.1} parent=1 // pred_check
      _
    $region87: #{tpu_custom_call.1} parent=1 // pred_check_branch
      %157 = sbr.rel (0) target = $region89
    $region88: #{tpu_custom_call.1} parent=1 // pred_region
      %158 = dma.done [#allocation18], 1024
    $region89: #{tpu_custom_call.1} parent=1 // pred_fallthru
      _
    %v160 = vld [vmem:[#allocation5] sm:$0xf]
    %v161 = vld [vmem:[#allocation5 + $0x4] sm:$0xf]
    %v162 = vld [vmem:[#allocation8] sm:$0xff]
    %v163 = vld [vmem:[#allocation8 + $0x8] sm:$0xf]
    %v164 = vld [vmem:[#allocation8 + $0xc] sm:$0xff]
    %v165 = vld [vmem:[#allocation8 + $0x14] sm:$0xf]
    %v166 = vld [vmem:[#allocation8 + $0x18] sm:$0xff]
    %v167 = vld [vmem:[#allocation8 + $0x20] sm:$0xf]
    %v168 = vld [vmem:[#allocation8 + $0x24] sm:$0xff]
    %v169 = vld [vmem:[#allocation8 + $0x2c] sm:$0xf]
    %v170 = vld [vmem:[%s2] sm:$0x7]
    %v172 = vlaneseq
    %v173 = vshrl.u32 %v172, 7
    %v174 = vsub.s32 0, %v173
    %v175 = vrot.slane %v170, %v174
    %v176 = vlaneseq
    %v177 = vshrl.u32 %v176, 7
    %v178 = vsub.s32 1, %v177
    %v179 = vrot.slane %v170, %v178
    %v180 = vlaneseq
    %v181 = vshrl.u32 %v180, 7
    %v182 = vsub.s32 2, %v181
    %v183 = vrot.slane %v170, %v182
    %v189 = vunpack.c.l.b16 %v160
    %v190 = vunpack.c.l.b16 %v161
    %v191 = vpack.c.b16 %v190, %v189
    %v200 = vunpack.c.l.b16 %v162
    %v201 = vunpack.c.h.b16 %v162
    %v202 = vunpack.c.l.b16 %v163
    %v203 = vunpack.c.l.b16 %v164
    %v204 = vunpack.c.h.b16 %v164
    %v205 = vunpack.c.l.b16 %v165
    %v206 = vunpack.c.l.b16 %v166
    %v207 = vunpack.c.h.b16 %v166
    %v208 = vunpack.c.l.b16 %v167
    %v209 = vunpack.c.l.b16 %v168
    %v210 = vunpack.c.h.b16 %v168
    %v211 = vunpack.c.l.b16 %v169
    %v212 = vpack.c.b16 %v203, %v200
    %v213 = vpack.c.b16 %v204, %v201
    %v214 = vpack.c.b16 %v205, %v202
    %v215 = vpack.c.b16 %v209, %v206
    %v216 = vpack.c.b16 %v210, %v207
    %v217 = vpack.c.b16 %v211, %v208
    %vm224 = vcmask 261120
    %v226 = vsel %vm224, %v191, 0
    %228 = vmatprep.subr.bf16.mxu0 0
    %229 = vmatpush1.bf16.msra.mxu0 0
    %230 = vmatprep.subr.bf16.mxu0 0
    %231 = vmatpush1.bf16.msra.mxu0 0
    %232 = vmatprep.subr.bf16.mxu0 0
    %233 = vmatpush1.bf16.msra.mxu0 0
    %234 = vmatprep.subr.bf16.mxu0 0
    %235 = vmatpush1.bf16.msra.mxu0 0
    %236 = vmatprep.subr.bf16.mxu0 0
    %237 = vmatpush1.bf16.msra.mxu0 0
    %238 = vmatprep.subr.bf16.mxu0 0
    %239 = vmatpush1.bf16.msra.mxu0 0
    %240 = vmatprep.subr.bf16.mxu0 %v216
    %241 = vmatpush1.bf16.msra.mxu0 %v215
    %242 = vmatprep.subr.bf16.mxu0 %v213
    %243 = vmatpush1.bf16.msra.mxu0 %v212
    %244 = vmatprep.subr.bf16.mxu0 0
    %245 = vmatpush2.bf16.msra.mxu0 0
    %246 = vmatprep.subr.bf16.mxu0 0
    %247 = vmatpush2.bf16.msra.mxu0 0
    %248 = vmatprep.subr.bf16.mxu0 0
    %249 = vmatpush2.bf16.msra.mxu0 0
    %250 = vmatprep.subr.bf16.mxu0 0
    %251 = vmatpush2.bf16.msra.mxu0 0
    %252 = vmatprep.subr.bf16.mxu0 0
    %253 = vmatpush2.bf16.msra.mxu0 0
    %254 = vmatprep.subr.bf16.mxu0 0
    %255 = vmatpush2.bf16.msra.mxu0 0
    %256 = vmatprep.subr.bf16.mxu0 0
    %257 = vmatpush2.bf16.msra.mxu0 0
    %258 = vmatprep.subr.bf16.mxu0 0
    %259 = vmatpush2.bf16.msra.mxu0 0
    %260 = vmatprep.mubr.bf16.mxu0 0
    %261 = vmatmul.mubr.bf16.gmra.mxu0 %v226
    %v262 = vpop.f32.mrf.mxu0
    %v263 = vadd.f32 %v175, %v262
    %v264 = vpop.f32.mrf.mxu0
    %v265 = vadd.f32 %v179, %v264
    %v266 = vpop.f32.mrf.mxu0
    %v267 = vadd.f32 %v175, %v266
    %v268 = vpop.f32.mrf.mxu0
    %v269 = vadd.f32 %v179, %v268
    %270 = vdwg.mxu0
    %271 = vmatprep.subr.bf16.mxu0 0
    %272 = vmatpush1.bf16.msra.mxu0 0
    %273 = vmatprep.subr.bf16.mxu0 0
    %274 = vmatpush1.bf16.msra.mxu0 0
    %275 = vmatprep.subr.bf16.mxu0 0
    %276 = vmatpush1.bf16.msra.mxu0 0
    %277 = vmatprep.subr.bf16.mxu0 0
    %278 = vmatpush1.bf16.msra.mxu0 0
    %279 = vmatprep.subr.bf16.mxu0 0
    %280 = vmatpush1.bf16.msra.mxu0 0
    %281 = vmatprep.subr.bf16.mxu0 0
    %282 = vmatpush1.bf16.msra.mxu0 0
    %283 = vmatprep.subr.bf16.mxu0 0
    %284 = vmatpush1.bf16.msra.mxu0 %v217
    %285 = vmatprep.subr.bf16.mxu0 0
    %286 = vmatpush1.bf16.msra.mxu0 %v214
    %287 = vmatprep.subr.bf16.mxu0 0
    %288 = vmatpush2.bf16.msra.mxu0 0
    %289 = vmatprep.subr.bf16.mxu0 0
    %290 = vmatpush2.bf16.msra.mxu0 0
    %291 = vmatprep.subr.bf16.mxu0 0
    %292 = vmatpush2.bf16.msra.mxu0 0
    %293 = vmatprep.subr.bf16.mxu0 0
    %294 = vmatpush2.bf16.msra.mxu0 0
    %295 = vmatprep.subr.bf16.mxu0 0
    %296 = vmatpush2.bf16.msra.mxu0 0
    %297 = vmatprep.subr.bf16.mxu0 0
    %298 = vmatpush2.bf16.msra.mxu0 0
    %299 = vmatprep.subr.bf16.mxu0 0
    %300 = vmatpush2.bf16.msra.mxu0 0
    %301 = vmatprep.subr.bf16.mxu0 0
    %302 = vmatpush2.bf16.msra.mxu0 0
    %303 = vmatprep.mubr.bf16.mxu0 0
    %304 = vmatmul.mubr.bf16.gmra.mxu0 %v226
    %v305 = vpop.f32.mrf.mxu0
    %v306 = vadd.f32 %v183, %v305
    %v307 = vpop.f32.mrf.mxu0
    %v308 = vpop.f32.mrf.mxu0
    %v309 = vadd.f32 %v183, %v308
    %v310 = vpop.f32.mrf.mxu0
    %311 = vdwg.mxu0
    %v318 = vcombine.low %v263, %v265
    %v319 = vcombine.high %v263, %v265
    %v320 = vcombine.high %v306, %v306
    %v322 = vunpack.c.l.s4 1983009808
    %v323 = vunpack.c.0.s8 %v322
    %v324 = vlaneseq
    %v325 = vshrl.u32 %v324, 7
    %v326 = vsub.s32 %v323, %v325
    %v327 = vrot.slane %v318, %v326
    %v329 = vunpack.c.l.s4 1983009808
    %v330 = vunpack.c.0.s8 %v329
    %v331 = vlaneseq
    %v332 = vshrl.u32 %v331, 7
    %v333 = vsub.s32 %v330, %v332
    %v334 = vrot.slane %v319, %v333
    %v336 = vunpack.c.l.s4 1983009808
    %v337 = vunpack.c.0.s8 %v336
    %v338 = vlaneseq
    %v339 = vshrl.u32 %v338, 7
    %v340 = vsub.s32 %v337, %v339
    %v341 = vrot.slane %v306, %v340
    %v343 = vunpack.c.l.s4 1983009808
    %v344 = vunpack.c.0.s8 %v343
    %v345 = vlaneseq
    %v346 = vshrl.u32 %v345, 7
    %v347 = vsub.s32 %v344, %v346
    %v348 = vrot.slane %v320, %v347
    %v349 = vcombine.low %v327, %v341
    %v350 = vcombine.high %v327, %v341
    %v351 = vcombine.low %v334, %v348
    %v352 = vcombine.high %v334, %v348
    %v353 = vcombine.low %v267, %v269
    %v354 = vcombine.high %v267, %v269
    %v355 = vcombine.high %v309, %v309
    %v357 = vunpack.c.l.s4 1983009808
    %v358 = vunpack.c.0.s8 %v357
    %v359 = vlaneseq
    %v360 = vshrl.u32 %v359, 7
    %v361 = vsub.s32 %v358, %v360
    %v362 = vrot.slane %v353, %v361
    %v364 = vunpack.c.l.s4 1983009808
    %v365 = vunpack.c.0.s8 %v364
    %v366 = vlaneseq
    %v367 = vshrl.u32 %v366, 7
    %v368 = vsub.s32 %v365, %v367
    %v369 = vrot.slane %v354, %v368
    %v371 = vunpack.c.l.s4 1983009808
    %v372 = vunpack.c.0.s8 %v371
    %v373 = vlaneseq
    %v374 = vshrl.u32 %v373, 7
    %v375 = vsub.s32 %v372, %v374
    %v376 = vrot.slane %v309, %v375
    %v378 = vunpack.c.l.s4 1983009808
    %v379 = vunpack.c.0.s8 %v378
    %v380 = vlaneseq
    %v381 = vshrl.u32 %v380, 7
    %v382 = vsub.s32 %v379, %v381
    %v383 = vrot.slane %v355, %v382
    %v384 = vcombine.low %v362, %v376
    %v385 = vcombine.high %v362, %v376
    %v386 = vcombine.low %v369, %v383
    %v387 = vcombine.high %v369, %v383
    %v388 = vcombine.high %v349, %v349
    %v390 = vunpack.c.l.s4 1983009808
    %v391 = vunpack.c.0.s8 %v390
    %v392 = vlaneseq
    %v393 = vshrl.u32 %v392, 7
    %v394 = vsub.s32 %v391, %v393
    %v395 = vrot.slane %v349, %v394
    %v397 = vunpack.c.l.s4 1983009808
    %v398 = vunpack.c.0.s8 %v397
    %v399 = vlaneseq
    %v400 = vshrl.u32 %v399, 7
    %v401 = vsub.s32 %v398, %v400
    %v402 = vrot.slane %v388, %v401
    %v403 = vcombine.high %v395, %v395
    %v404 = vcombine.high %v350, %v350
    %v406 = vunpack.c.l.s4 1983009808
    %v407 = vunpack.c.0.s8 %v406
    %v408 = vlaneseq
    %v409 = vshrl.u32 %v408, 7
    %v410 = vsub.s32 %v407, %v409
    %v411 = vrot.slane %v350, %v410
    %v413 = vunpack.c.l.s4 1983009808
    %v414 = vunpack.c.0.s8 %v413
    %v415 = vlaneseq
    %v416 = vshrl.u32 %v415, 7
    %v417 = vsub.s32 %v414, %v416
    %v418 = vrot.slane %v404, %v417
    %v419 = vcombine.high %v411, %v411
    %v420 = vcombine.high %v351, %v351
    %v422 = vunpack.c.l.s4 1983009808
    %v423 = vunpack.c.0.s8 %v422
    %v424 = vlaneseq
    %v425 = vshrl.u32 %v424, 7
    %v426 = vsub.s32 %v423, %v425
    %v427 = vrot.slane %v351, %v426
    %v429 = vunpack.c.l.s4 1983009808
    %v430 = vunpack.c.0.s8 %v429
    %v431 = vlaneseq
    %v432 = vshrl.u32 %v431, 7
    %v433 = vsub.s32 %v430, %v432
    %v434 = vrot.slane %v420, %v433
    %v435 = vcombine.high %v427, %v427
    %v436 = vcombine.high %v352, %v352
    %v438 = vunpack.c.l.s4 1983009808
    %v439 = vunpack.c.0.s8 %v438
    %v440 = vlaneseq
    %v441 = vshrl.u32 %v440, 7
    %v442 = vsub.s32 %v439, %v441
    %v443 = vrot.slane %v352, %v442
    %v445 = vunpack.c.l.s4 1983009808
    %v446 = vunpack.c.0.s8 %v445
    %v447 = vlaneseq
    %v448 = vshrl.u32 %v447, 7
    %v449 = vsub.s32 %v446, %v448
    %v450 = vrot.slane %v436, %v449
    %v451 = vcombine.high %v443, %v443
    %v452 = vcombine.high %v384, %v384
    %v454 = vunpack.c.l.s4 1983009808
    %v455 = vunpack.c.0.s8 %v454
    %v456 = vlaneseq
    %v457 = vshrl.u32 %v456, 7
    %v458 = vsub.s32 %v455, %v457
    %v459 = vrot.slane %v384, %v458
    %v461 = vunpack.c.l.s4 1983009808
    %v462 = vunpack.c.0.s8 %v461
    %v463 = vlaneseq
    %v464 = vshrl.u32 %v463, 7
    %v465 = vsub.s32 %v462, %v464
    %v466 = vrot.slane %v452, %v465
    %v467 = vcombine.high %v459, %v459
    %v468 = vcombine.high %v385, %v385
    %v470 = vunpack.c.l.s4 1983009808
    %v471 = vunpack.c.0.s8 %v470
    %v472 = vlaneseq
    %v473 = vshrl.u32 %v472, 7
    %v474 = vsub.s32 %v471, %v473
    %v475 = vrot.slane %v385, %v474
    %v477 = vunpack.c.l.s4 1983009808
    %v478 = vunpack.c.0.s8 %v477
    %v479 = vlaneseq
    %v480 = vshrl.u32 %v479, 7
    %v481 = vsub.s32 %v478, %v480
    %v482 = vrot.slane %v468, %v481
    %v483 = vcombine.high %v475, %v475
    %v484 = vcombine.high %v386, %v386
    %v486 = vunpack.c.l.s4 1983009808
    %v487 = vunpack.c.0.s8 %v486
    %v488 = vlaneseq
    %v489 = vshrl.u32 %v488, 7
    %v490 = vsub.s32 %v487, %v489
    %v491 = vrot.slane %v386, %v490
    %v493 = vunpack.c.l.s4 1983009808
    %v494 = vunpack.c.0.s8 %v493
    %v495 = vlaneseq
    %v496 = vshrl.u32 %v495, 7
    %v497 = vsub.s32 %v494, %v496
    %v498 = vrot.slane %v484, %v497
    %v499 = vcombine.high %v491, %v491
    %v500 = vcombine.high %v387, %v387
    %v502 = vunpack.c.l.s4 1983009808
    %v503 = vunpack.c.0.s8 %v502
    %v504 = vlaneseq
    %v505 = vshrl.u32 %v504, 7
    %v506 = vsub.s32 %v503, %v505
    %v507 = vrot.slane %v387, %v506
    %v509 = vunpack.c.l.s4 1983009808
    %v510 = vunpack.c.0.s8 %v509
    %v511 = vlaneseq
    %v512 = vshrl.u32 %v511, 7
    %v513 = vsub.s32 %v510, %v512
    %v514 = vrot.slane %v500, %v513
    %v515 = vcombine.high %v507, %v507
    %v540 = vpack.c.bf16 %v395, %v395
    %v541 = vpack.c.bf16 %v403, %v403
    %v542 = vpack.c.bf16 %v402, %v402
    %v543 = vpack.c.bf16 %v411, %v411
    %v544 = vpack.c.bf16 %v419, %v419
    %v545 = vpack.c.bf16 %v418, %v418
    %v546 = vpack.c.bf16 %v427, %v427
    %v547 = vpack.c.bf16 %v435, %v435
    %v548 = vpack.c.bf16 %v434, %v434
    %v549 = vpack.c.bf16 %v443, %v443
    %v550 = vpack.c.bf16 %v451, %v451
    %v551 = vpack.c.bf16 %v450, %v450
    %v552 = vpack.c.bf16 %v459, %v459
    %v553 = vpack.c.bf16 %v467, %v467
    %v554 = vpack.c.bf16 %v466, %v466
    %v555 = vpack.c.bf16 %v475, %v475
    %v556 = vpack.c.bf16 %v483, %v483
    %v557 = vpack.c.bf16 %v482, %v482
    %v558 = vpack.c.bf16 %v491, %v491
    %v559 = vpack.c.bf16 %v499, %v499
    %v560 = vpack.c.bf16 %v498, %v498
    %v561 = vpack.c.bf16 %v507, %v507
    %v562 = vpack.c.bf16 %v515, %v515
    %v563 = vpack.c.bf16 %v514, %v514
    %v588 = vcombine.low %v540, %v541
    %v590 = vunpack.c.l.s4 1966171168
    %v591 = vunpack.c.0.s8 %v590
    %v592 = vlaneseq
    %v593 = vshrl.u32 %v592, 7
    %v594 = vsub.s32 %v591, %v593
    %v595 = vrot.slane %v588, %v594
    %v597 = vunpack.c.l.s4 1966171168
    %v598 = vunpack.c.0.s8 %v597
    %v599 = vlaneseq
    %v600 = vshrl.u32 %v599, 7
    %v601 = vsub.s32 %v598, %v600
    %v602 = vrot.slane %v542, %v601
    %v603 = vcombine.low %v595, %v602
    %v605 = vunpack.c.l.s4 1966171168
    %v606 = vunpack.c.0.s8 %v605
    %v607 = vlaneseq
    %v608 = vshrl.u32 %v607, 7
    %v609 = vsub.s32 %v606, %v608
    %v610 = vrot.slane %v603, %v609
    %v611 = vcombine.low %v543, %v544
    %v613 = vunpack.c.l.s4 1966171168
    %v614 = vunpack.c.0.s8 %v613
    %v615 = vlaneseq
    %v616 = vshrl.u32 %v615, 7
    %v617 = vsub.s32 %v614, %v616
    %v618 = vrot.slane %v611, %v617
    %v620 = vunpack.c.l.s4 1966171168
    %v621 = vunpack.c.0.s8 %v620
    %v622 = vlaneseq
    %v623 = vshrl.u32 %v622, 7
    %v624 = vsub.s32 %v621, %v623
    %v625 = vrot.slane %v545, %v624
    %v626 = vcombine.low %v618, %v625
    %v628 = vunpack.c.l.s4 1966171168
    %v629 = vunpack.c.0.s8 %v628
    %v630 = vlaneseq
    %v631 = vshrl.u32 %v630, 7
    %v632 = vsub.s32 %v629, %v631
    %v633 = vrot.slane %v626, %v632
    %v634 = vcombine.low %v546, %v547
    %v636 = vunpack.c.l.s4 1966171168
    %v637 = vunpack.c.0.s8 %v636
    %v638 = vlaneseq
    %v639 = vshrl.u32 %v638, 7
    %v640 = vsub.s32 %v637, %v639
    %v641 = vrot.slane %v634, %v640
    %v643 = vunpack.c.l.s4 1966171168
    %v644 = vunpack.c.0.s8 %v643
    %v645 = vlaneseq
    %v646 = vshrl.u32 %v645, 7
    %v647 = vsub.s32 %v644, %v646
    %v648 = vrot.slane %v548, %v647
    %v649 = vcombine.low %v641, %v648
    %v651 = vunpack.c.l.s4 1966171168
    %v652 = vunpack.c.0.s8 %v651
    %v653 = vlaneseq
    %v654 = vshrl.u32 %v653, 7
    %v655 = vsub.s32 %v652, %v654
    %v656 = vrot.slane %v649, %v655
    %v657 = vcombine.low %v549, %v550
    %v659 = vunpack.c.l.s4 1966171168
    %v660 = vunpack.c.0.s8 %v659
    %v661 = vlaneseq
    %v662 = vshrl.u32 %v661, 7
    %v663 = vsub.s32 %v660, %v662
    %v664 = vrot.slane %v657, %v663
    %v666 = vunpack.c.l.s4 1966171168
    %v667 = vunpack.c.0.s8 %v666
    %v668 = vlaneseq
    %v669 = vshrl.u32 %v668, 7
    %v670 = vsub.s32 %v667, %v669
    %v671 = vrot.slane %v551, %v670
    %v672 = vcombine.low %v664, %v671
    %v674 = vunpack.c.l.s4 1966171168
    %v675 = vunpack.c.0.s8 %v674
    %v676 = vlaneseq
    %v677 = vshrl.u32 %v676, 7
    %v678 = vsub.s32 %v675, %v677
    %v679 = vrot.slane %v672, %v678
    %v680 = vcombine.low %v552, %v553
    %v682 = vunpack.c.l.s4 1966171168
    %v683 = vunpack.c.0.s8 %v682
    %v684 = vlaneseq
    %v685 = vshrl.u32 %v684, 7
    %v686 = vsub.s32 %v683, %v685
    %v687 = vrot.slane %v680, %v686
    %v689 = vunpack.c.l.s4 1966171168
    %v690 = vunpack.c.0.s8 %v689
    %v691 = vlaneseq
    %v692 = vshrl.u32 %v691, 7
    %v693 = vsub.s32 %v690, %v692
    %v694 = vrot.slane %v554, %v693
    %v695 = vcombine.low %v687, %v694
    %v697 = vunpack.c.l.s4 1966171168
    %v698 = vunpack.c.0.s8 %v697
    %v699 = vlaneseq
    %v700 = vshrl.u32 %v699, 7
    %v701 = vsub.s32 %v698, %v700
    %v702 = vrot.slane %v695, %v701
    %v703 = vcombine.low %v555, %v556
    %v705 = vunpack.c.l.s4 1966171168
    %v706 = vunpack.c.0.s8 %v705
    %v707 = vlaneseq
    %v708 = vshrl.u32 %v707, 7
    %v709 = vsub.s32 %v706, %v708
    %v710 = vrot.slane %v703, %v709
    %v712 = vunpack.c.l.s4 1966171168
    %v713 = vunpack.c.0.s8 %v712
    %v714 = vlaneseq
    %v715 = vshrl.u32 %v714, 7
    %v716 = vsub.s32 %v713, %v715
    %v717 = vrot.slane %v557, %v716
    %v718 = vcombine.low %v710, %v717
    %v720 = vunpack.c.l.s4 1966171168
    %v721 = vunpack.c.0.s8 %v720
    %v722 = vlaneseq
    %v723 = vshrl.u32 %v722, 7
    %v724 = vsub.s32 %v721, %v723
    %v725 = vrot.slane %v718, %v724
    %v726 = vcombine.low %v558, %v559
    %v728 = vunpack.c.l.s4 1966171168
    %v729 = vunpack.c.0.s8 %v728
    %v730 = vlaneseq
    %v731 = vshrl.u32 %v730, 7
    %v732 = vsub.s32 %v729, %v731
    %v733 = vrot.slane %v726, %v732
    %v735 = vunpack.c.l.s4 1966171168
    %v736 = vunpack.c.0.s8 %v735
    %v737 = vlaneseq
    %v738 = vshrl.u32 %v737, 7
    %v739 = vsub.s32 %v736, %v738
    %v740 = vrot.slane %v560, %v739
    %v741 = vcombine.low %v733, %v740
    %v743 = vunpack.c.l.s4 1966171168
    %v744 = vunpack.c.0.s8 %v743
    %v745 = vlaneseq
    %v746 = vshrl.u32 %v745, 7
    %v747 = vsub.s32 %v744, %v746
    %v748 = vrot.slane %v741, %v747
    %v749 = vcombine.low %v561, %v562
    %v751 = vunpack.c.l.s4 1966171168
    %v752 = vunpack.c.0.s8 %v751
    %v753 = vlaneseq
    %v754 = vshrl.u32 %v753, 7
    %v755 = vsub.s32 %v752, %v754
    %v756 = vrot.slane %v749, %v755
    %v758 = vunpack.c.l.s4 1966171168
    %v759 = vunpack.c.0.s8 %v758
    %v760 = vlaneseq
    %v761 = vshrl.u32 %v760, 7
    %v762 = vsub.s32 %v759, %v761
    %v763 = vrot.slane %v563, %v762
    %v764 = vcombine.low %v756, %v763
    %v766 = vunpack.c.l.s4 1966171168
    %v767 = vunpack.c.0.s8 %v766
    %v768 = vlaneseq
    %v769 = vshrl.u32 %v768, 7
    %v770 = vsub.s32 %v767, %v769
    %v771 = vrot.slane %v764, %v770
    %780 = vst [vmem:[#allocation2] sm:$0x7] %v610
    %781 = vst [vmem:[#allocation2 + $0x3] sm:$0x7] %v633
    %782 = vst [vmem:[#allocation2 + $0x6] sm:$0x7] %v656
    %783 = vst [vmem:[#allocation2 + $0x9] sm:$0x7] %v679
    %784 = vst [vmem:[#allocation2 + $0xc] sm:$0x7] %v702
    %785 = vst [vmem:[#allocation2 + $0xf] sm:$0x7] %v725
    %786 = vst [vmem:[#allocation2 + $0x12] sm:$0x7] %v748
    %787 = vst [vmem:[#allocation2 + $0x15] sm:$0x7] %v771
    %v788 = vld [vmem:[%s4] sm:$0x7]
    %v789 = vld [vmem:[#allocation10] sm:$0xff]
    %v790 = vld [vmem:[#allocation10 + $0x8] sm:$0xf]
    %v791 = vld [vmem:[#allocation10 + $0xc] sm:$0xff]
    %v792 = vld [vmem:[#allocation10 + $0x14] sm:$0xf]
    %v793 = vld [vmem:[#allocation10 + $0x18] sm:$0xff]
    %v794 = vld [vmem:[#allocation10 + $0x20] sm:$0xf]
    %v795 = vld [vmem:[#allocation10 + $0x24] sm:$0xff]
    %v796 = vld [vmem:[#allocation10 + $0x2c] sm:$0xf]
    %v797 = vld [vmem:[#allocation10 + $0x30] sm:$0xff]
    %v798 = vld [vmem:[#allocation10 + $0x38] sm:$0xf]
    %v799 = vld [vmem:[#allocation10 + $0x3c] sm:$0xff]
    %v800 = vld [vmem:[#allocation10 + $0x44] sm:$0xf]
    %v801 = vld [vmem:[#allocation10 + $0x48] sm:$0xff]
    %v802 = vld [vmem:[#allocation10 + $0x50] sm:$0xf]
    %v803 = vld [vmem:[#allocation10 + $0x54] sm:$0xff]
    %v804 = vld [vmem:[#allocation10 + $0x5c] sm:$0xf]
    %v805 = vld [vmem:[#allocation10 + $0x60] sm:$0xff]
    %v806 = vld [vmem:[#allocation10 + $0x68] sm:$0xf]
    %v807 = vld [vmem:[#allocation10 + $0x6c] sm:$0xff]
    %v808 = vld [vmem:[#allocation10 + $0x74] sm:$0xf]
    %v809 = vld [vmem:[#allocation10 + $0x78] sm:$0xff]
    %v810 = vld [vmem:[#allocation10 + $0x80] sm:$0xf]
    %v811 = vld [vmem:[#allocation10 + $0x84] sm:$0xff]
    %v812 = vld [vmem:[#allocation10 + $0x8c] sm:$0xf]
    %v813 = vld [vmem:[#allocation10 + $0x90] sm:$0xff]
    %v814 = vld [vmem:[#allocation10 + $0x98] sm:$0xf]
    %v815 = vld [vmem:[#allocation10 + $0x9c] sm:$0xff]
    %v816 = vld [vmem:[#allocation10 + $0xa4] sm:$0xf]
    %v817 = vld [vmem:[#allocation10 + $0xa8] sm:$0xff]
    %v818 = vld [vmem:[#allocation10 + $0xb0] sm:$0xf]
    %v819 = vld [vmem:[#allocation10 + $0xb4] sm:$0xff]
    %v820 = vld [vmem:[#allocation10 + $0xbc] sm:$0xf]
    %v822 = vlaneseq
    %v823 = vshrl.u32 %v822, 7
    %v824 = vsub.s32 0, %v823
    %v825 = vrot.slane %v788, %v824
    %v826 = vlaneseq
    %v827 = vshrl.u32 %v826, 7
    %v828 = vsub.s32 1, %v827
    %v829 = vrot.slane %v788, %v828
    %v830 = vlaneseq
    %v831 = vshrl.u32 %v830, 7
    %v832 = vsub.s32 2, %v831
    %v833 = vrot.slane %v788, %v832
    %v869 = vunpack.c.l.b16 %v789
    %v870 = vunpack.c.h.b16 %v789
    %v871 = vunpack.c.l.b16 %v790
    %v872 = vunpack.c.l.b16 %v791
    %v873 = vunpack.c.h.b16 %v791
    %v874 = vunpack.c.l.b16 %v792
    %v875 = vunpack.c.l.b16 %v793
    %v876 = vunpack.c.h.b16 %v793
    %v877 = vunpack.c.l.b16 %v794
    %v878 = vunpack.c.l.b16 %v795
    %v879 = vunpack.c.h.b16 %v795
    %v880 = vunpack.c.l.b16 %v796
    %v881 = vunpack.c.l.b16 %v797
    %v882 = vunpack.c.h.b16 %v797
    %v883 = vunpack.c.l.b16 %v798
    %v884 = vunpack.c.l.b16 %v799
    %v885 = vunpack.c.h.b16 %v799
    %v886 = vunpack.c.l.b16 %v800
    %v887 = vunpack.c.l.b16 %v801
    %v888 = vunpack.c.h.b16 %v801
    %v889 = vunpack.c.l.b16 %v802
    %v890 = vunpack.c.l.b16 %v803
    %v891 = vunpack.c.h.b16 %v803
    %v892 = vunpack.c.l.b16 %v804
    %v893 = vunpack.c.l.b16 %v805
    %v894 = vunpack.c.h.b16 %v805
    %v895 = vunpack.c.l.b16 %v806
    %v896 = vunpack.c.l.b16 %v807
    %v897 = vunpack.c.h.b16 %v807
    %v898 = vunpack.c.l.b16 %v808
    %v899 = vunpack.c.l.b16 %v809
    %v900 = vunpack.c.h.b16 %v809
    %v901 = vunpack.c.l.b16 %v810
    %v902 = vunpack.c.l.b16 %v811
    %v903 = vunpack.c.h.b16 %v811
    %v904 = vunpack.c.l.b16 %v812
    %v905 = vunpack.c.l.b16 %v813
    %v906 = vunpack.c.h.b16 %v813
    %v907 = vunpack.c.l.b16 %v814
    %v908 = vunpack.c.l.b16 %v815
    %v909 = vunpack.c.h.b16 %v815
    %v910 = vunpack.c.l.b16 %v816
    %v911 = vunpack.c.l.b16 %v817
    %v912 = vunpack.c.h.b16 %v817
    %v913 = vunpack.c.l.b16 %v818
    %v914 = vunpack.c.l.b16 %v819
    %v915 = vunpack.c.h.b16 %v819
    %v916 = vunpack.c.l.b16 %v820
    %v917 = vpack.c.b16 %v872, %v869
    %v918 = vpack.c.b16 %v873, %v870
    %v919 = vpack.c.b16 %v874, %v871
    %v920 = vpack.c.b16 %v878, %v875
    %v921 = vpack.c.b16 %v879, %v876
    %v922 = vpack.c.b16 %v880, %v877
    %v923 = vpack.c.b16 %v884, %v881
    %v924 = vpack.c.b16 %v885, %v882
    %v925 = vpack.c.b16 %v886, %v883
    %v926 = vpack.c.b16 %v890, %v887
    %v927 = vpack.c.b16 %v891, %v888
    %v928 = vpack.c.b16 %v892, %v889
    %v929 = vpack.c.b16 %v896, %v893
    %v930 = vpack.c.b16 %v897, %v894
    %v931 = vpack.c.b16 %v898, %v895
    %v932 = vpack.c.b16 %v902, %v899
    %v933 = vpack.c.b16 %v903, %v900
    %v934 = vpack.c.b16 %v904, %v901
    %v935 = vpack.c.b16 %v908, %v905
    %v936 = vpack.c.b16 %v909, %v906
    %v937 = vpack.c.b16 %v910, %v907
    %v938 = vpack.c.b16 %v914, %v911
    %v939 = vpack.c.b16 %v915, %v912
    %v940 = vpack.c.b16 %v916, %v913
    %965 = vmatprep.subr.bf16.mxu0 %v939
    %966 = vmatpush1.bf16.msra.mxu0 %v938
    %967 = vmatprep.subr.bf16.mxu0 %v936
    %968 = vmatpush1.bf16.msra.mxu0 %v935
    %969 = vmatprep.subr.bf16.mxu0 %v933
    %970 = vmatpush1.bf16.msra.mxu0 %v932
    %971 = vmatprep.subr.bf16.mxu0 %v930
    %972 = vmatpush1.bf16.msra.mxu0 %v929
    %973 = vmatprep.subr.bf16.mxu0 %v927
    %974 = vmatpush1.bf16.msra.mxu0 %v926
    %975 = vmatprep.subr.bf16.mxu0 %v924
    %976 = vmatpush1.bf16.msra.mxu0 %v923
    %977 = vmatprep.subr.bf16.mxu0 %v921
    %978 = vmatpush1.bf16.msra.mxu0 %v920
    %979 = vmatprep.subr.bf16.mxu0 %v918
    %980 = vmatpush1.bf16.msra.mxu0 %v917
    %981 = vmatprep.subr.bf16.mxu0 0
    %982 = vmatpush2.bf16.msra.mxu0 0
    %983 = vmatprep.subr.bf16.mxu0 0
    %984 = vmatpush2.bf16.msra.mxu0 0
    %985 = vmatprep.subr.bf16.mxu0 0
    %986 = vmatpush2.bf16.msra.mxu0 0
    %987 = vmatprep.subr.bf16.mxu0 0
    %988 = vmatpush2.bf16.msra.mxu0 0
    %989 = vmatprep.subr.bf16.mxu0 0
    %990 = vmatpush2.bf16.msra.mxu0 0
    %991 = vmatprep.subr.bf16.mxu0 0
    %992 = vmatpush2.bf16.msra.mxu0 0
    %993 = vmatprep.subr.bf16.mxu0 0
    %994 = vmatpush2.bf16.msra.mxu0 0
    %995 = vmatprep.subr.bf16.mxu0 0
    %996 = vmatpush2.bf16.msra.mxu0 0
    %997 = vmatprep.mubr.bf16.mxu0 0
    %998 = vmatmul.mubr.bf16.gmra.mxu0 0
    %v999 = vpop.f32.mrf.mxu0
    %v1000 = vadd.f32 %v825, %v999
    %v1001 = vpop.f32.mrf.mxu0
    %v1002 = vadd.f32 %v829, %v1001
    %v1003 = vpop.f32.mrf.mxu0
    %v1004 = vpop.f32.mrf.mxu0
    %1005 = vdwg.mxu0
    %1006 = vmatprep.subr.bf16.mxu0 0
    %1007 = vmatpush1.bf16.msra.mxu0 %v940
    %1008 = vmatprep.subr.bf16.mxu0 0
    %1009 = vmatpush1.bf16.msra.mxu0 %v937
    %1010 = vmatprep.subr.bf16.mxu0 0
    %1011 = vmatpush1.bf16.msra.mxu0 %v934
    %1012 = vmatprep.subr.bf16.mxu0 0
    %1013 = vmatpush1.bf16.msra.mxu0 %v931
    %1014 = vmatprep.subr.bf16.mxu0 0
    %1015 = vmatpush1.bf16.msra.mxu0 %v928
    %1016 = vmatprep.subr.bf16.mxu0 0
    %1017 = vmatpush1.bf16.msra.mxu0 %v925
    %1018 = vmatprep.subr.bf16.mxu0 0
    %1019 = vmatpush1.bf16.msra.mxu0 %v922
    %1020 = vmatprep.subr.bf16.mxu0 0
    %1021 = vmatpush1.bf16.msra.mxu0 %v919
    %1022 = vmatprep.subr.bf16.mxu0 0
    %1023 = vmatpush2.bf16.msra.mxu0 0
    %1024 = vmatprep.subr.bf16.mxu0 0
    %1025 = vmatpush2.bf16.msra.mxu0 0
    %1026 = vmatprep.subr.bf16.mxu0 0
    %1027 = vmatpush2.bf16.msra.mxu0 0
    %1028 = vmatprep.subr.bf16.mxu0 0
    %1029 = vmatpush2.bf16.msra.mxu0 0
    %1030 = vmatprep.subr.bf16.mxu0 0
    %1031 = vmatpush2.bf16.msra.mxu0 0
    %1032 = vmatprep.subr.bf16.mxu0 0
    %1033 = vmatpush2.bf16.msra.mxu0 0
    %1034 = vmatprep.subr.bf16.mxu0 0
    %1035 = vmatpush2.bf16.msra.mxu0 0
    %1036 = vmatprep.subr.bf16.mxu0 0
    %1037 = vmatpush2.bf16.msra.mxu0 0
    %1038 = vmatprep.mubr.bf16.mxu0 0
    %1039 = vmatmul.mubr.bf16.gmra.mxu0 0
    %v1040 = vpop.f32.mrf.mxu0
    %v1041 = vadd.f32 %v833, %v1040
    %v1042 = vpop.f32.mrf.mxu0
    %v1043 = vpop.f32.mrf.mxu0
    %v1044 = vpop.f32.mrf.mxu0
    %1045 = vdwg.mxu0
    %v1046 = vld [vmem:[#allocation2] sm:$0x7]
    %v1047 = vunpack.c.l.bf16 %v1046
    %v1048 = vadd.f32 %v1047, %v1000
    %v1049 = vxor.u32 %v1048, 2147483648
    %v1050 = vmul.f32 %v1049, 1.442695
    %v1051 = vpow.pop %v1050
    %v1052 = vadd.f32 %v1051, 1.0
    %v1053 = vrcp.pop %v1052
    %v1054 = vmul.f32 1.0, %v1053
    %v1056 = vrot.slane %v1047, 2
    %v1058 = vadd.f32 %v1056, %v1002
    %v1059 = vxor.u32 %v1058, 2147483648
    %v1060 = vmul.f32 %v1059, 1.442695
    %v1061 = vpow.pop %v1060
    %v1062 = vadd.f32 %v1061, 1.0
    %v1063 = vrcp.pop %v1062
    %v1064 = vmul.f32 1.0, %v1063
    %v1065 = vmul.f32 %v1054, %v1041
    %v1066 = vrot.slane %v1047, 4
    %v1068 = vadd.f32 %v1066, %v1065
    %v1069 = vtanh.pop %v1068
    %v1070 = vsub.f32 1.0, %v1064
    %v1071 = vmul.f32 %v1070, %v1069
    %v1072 = vmul.f32 %v1064, 0.0
    %v1073 = vadd.f32 %v1071, %v1072
    %v1074 = vpack.c.bf16 %v1073, %v1073
    %1075 = vst [vmem:[#allocation3] sm:$0x1] %v1074
    %v1076 = vld [vmem:[#allocation10] sm:$0xff]
    %v1077 = vld [vmem:[#allocation10 + $0x8] sm:$0xf]
    %v1078 = vld [vmem:[#allocation10 + $0xc] sm:$0xff]
    %v1079 = vld [vmem:[#allocation10 + $0x14] sm:$0xf]
    %v1080 = vld [vmem:[#allocation10 + $0x18] sm:$0xff]
    %v1081 = vld [vmem:[#allocation10 + $0x20] sm:$0xf]
    %v1082 = vld [vmem:[#allocation10 + $0x24] sm:$0xff]
    %v1083 = vld [vmem:[#allocation10 + $0x2c] sm:$0xf]
    %v1084 = vld [vmem:[#allocation10 + $0x30] sm:$0xff]
    %v1085 = vld [vmem:[#allocation10 + $0x38] sm:$0xf]
    %v1086 = vld [vmem:[#allocation10 + $0x3c] sm:$0xff]
    %v1087 = vld [vmem:[#allocation10 + $0x44] sm:$0xf]
    %v1088 = vld [vmem:[#allocation10 + $0x48] sm:$0xff]
    %v1089 = vld [vmem:[#allocation10 + $0x50] sm:$0xf]
    %v1090 = vld [vmem:[#allocation10 + $0x54] sm:$0xff]
    %v1091 = vld [vmem:[#allocation10 + $0x5c] sm:$0xf]
    %v1092 = vld [vmem:[#allocation10 + $0x60] sm:$0xff]
    %v1093 = vld [vmem:[#allocation10 + $0x68] sm:$0xf]
    %v1094 = vld [vmem:[#allocation10 + $0x6c] sm:$0xff]
    %v1095 = vld [vmem:[#allocation10 + $0x74] sm:$0xf]
    %v1096 = vld [vmem:[#allocation10 + $0x78] sm:$0xff]
    %v1097 = vld [vmem:[#allocation10 + $0x80] sm:$0xf]
    %v1098 = vld [vmem:[#allocation10 + $0x84] sm:$0xff]
    %v1099 = vld [vmem:[#allocation10 + $0x8c] sm:$0xf]
    %v1100 = vld [vmem:[#allocation10 + $0x90] sm:$0xff]
    %v1101 = vld [vmem:[#allocation10 + $0x98] sm:$0xf]
    %v1102 = vld [vmem:[#allocation10 + $0x9c] sm:$0xff]
    %v1103 = vld [vmem:[#allocation10 + $0xa4] sm:$0xf]
    %v1104 = vld [vmem:[#allocation10 + $0xa8] sm:$0xff]
    %v1105 = vld [vmem:[#allocation10 + $0xb0] sm:$0xf]
    %v1106 = vld [vmem:[#allocation10 + $0xb4] sm:$0xff]
    %v1107 = vld [vmem:[#allocation10 + $0xbc] sm:$0xf]
    %v1140 = vunpack.c.l.b16 %v1076
    %v1141 = vunpack.c.h.b16 %v1076
    %v1142 = vunpack.c.l.b16 %v1077
    %v1143 = vunpack.c.l.b16 %v1078
    %v1144 = vunpack.c.h.b16 %v1078
    %v1145 = vunpack.c.l.b16 %v1079
    %v1146 = vunpack.c.l.b16 %v1080
    %v1147 = vunpack.c.h.b16 %v1080
    %v1148 = vunpack.c.l.b16 %v1081
    %v1149 = vunpack.c.l.b16 %v1082
    %v1150 = vunpack.c.h.b16 %v1082
    %v1151 = vunpack.c.l.b16 %v1083
    %v1152 = vunpack.c.l.b16 %v1084
    %v1153 = vunpack.c.h.b16 %v1084
    %v1154 = vunpack.c.l.b16 %v1085
    %v1155 = vunpack.c.l.b16 %v1086
    %v1156 = vunpack.c.h.b16 %v1086
    %v1157 = vunpack.c.l.b16 %v1087
    %v1158 = vunpack.c.l.b16 %v1088
    %v1159 = vunpack.c.h.b16 %v1088
    %v1160 = vunpack.c.l.b16 %v1089
    %v1161 = vunpack.c.l.b16 %v1090
    %v1162 = vunpack.c.h.b16 %v1090
    %v1163 = vunpack.c.l.b16 %v1091
    %v1164 = vunpack.c.l.b16 %v1092
    %v1165 = vunpack.c.h.b16 %v1092
    %v1166 = vunpack.c.l.b16 %v1093
    %v1167 = vunpack.c.l.b16 %v1094
    %v1168 = vunpack.c.h.b16 %v1094
    %v1169 = vunpack.c.l.b16 %v1095
    %v1170 = vunpack.c.l.b16 %v1096
    %v1171 = vunpack.c.h.b16 %v1096
    %v1172 = vunpack.c.l.b16 %v1097
    %v1173 = vunpack.c.l.b16 %v1098
    %v1174 = vunpack.c.h.b16 %v1098
    %v1175 = vunpack.c.l.b16 %v1099
    %v1176 = vunpack.c.l.b16 %v1100
    %v1177 = vunpack.c.h.b16 %v1100
    %v1178 = vunpack.c.l.b16 %v1101
    %v1179 = vunpack.c.l.b16 %v1102
    %v1180 = vunpack.c.h.b16 %v1102
    %v1181 = vunpack.c.l.b16 %v1103
    %v1182 = vunpack.c.l.b16 %v1104
    %v1183 = vunpack.c.h.b16 %v1104
    %v1184 = vunpack.c.l.b16 %v1105
    %v1185 = vunpack.c.l.b16 %v1106
    %v1186 = vunpack.c.h.b16 %v1106
    %v1187 = vunpack.c.l.b16 %v1107
    %v1188 = vpack.c.b16 %v1143, %v1140
    %v1189 = vpack.c.b16 %v1144, %v1141
    %v1190 = vpack.c.b16 %v1145, %v1142
    %v1191 = vpack.c.b16 %v1149, %v1146
    %v1192 = vpack.c.b16 %v1150, %v1147
    %v1193 = vpack.c.b16 %v1151, %v1148
    %v1194 = vpack.c.b16 %v1155, %v1152
    %v1195 = vpack.c.b16 %v1156, %v1153
    %v1196 = vpack.c.b16 %v1157, %v1154
    %v1197 = vpack.c.b16 %v1161, %v1158
    %v1198 = vpack.c.b16 %v1162, %v1159
    %v1199 = vpack.c.b16 %v1163, %v1160
    %v1200 = vpack.c.b16 %v1167, %v1164
    %v1201 = vpack.c.b16 %v1168, %v1165
    %v1202 = vpack.c.b16 %v1169, %v1166
    %v1203 = vpack.c.b16 %v1173, %v1170
    %v1204 = vpack.c.b16 %v1174, %v1171
    %v1205 = vpack.c.b16 %v1175, %v1172
    %v1206 = vpack.c.b16 %v1179, %v1176
    %v1207 = vpack.c.b16 %v1180, %v1177
    %v1208 = vpack.c.b16 %v1181, %v1178
    %v1209 = vpack.c.b16 %v1185, %v1182
    %v1210 = vpack.c.b16 %v1186, %v1183
    %v1211 = vpack.c.b16 %v1187, %v1184
    %1236 = vmatprep.subr.bf16.mxu0 %v1210
    %1237 = vmatpush1.bf16.msra.mxu0 %v1209
    %1238 = vmatprep.subr.bf16.mxu0 %v1207
    %1239 = vmatpush1.bf16.msra.mxu0 %v1206
    %1240 = vmatprep.subr.bf16.mxu0 %v1204
    %1241 = vmatpush1.bf16.msra.mxu0 %v1203
    %1242 = vmatprep.subr.bf16.mxu0 %v1201
    %1243 = vmatpush1.bf16.msra.mxu0 %v1200
    %1244 = vmatprep.subr.bf16.mxu0 %v1198
    %1245 = vmatpush1.bf16.msra.mxu0 %v1197
    %1246 = vmatprep.subr.bf16.mxu0 %v1195
    %1247 = vmatpush1.bf16.msra.mxu0 %v1194
    %1248 = vmatprep.subr.bf16.mxu0 %v1192
    %1249 = vmatpush1.bf16.msra.mxu0 %v1191
    %1250 = vmatprep.subr.bf16.mxu0 %v1189
    %1251 = vmatpush1.bf16.msra.mxu0 %v1188
    %1252 = vmatprep.subr.bf16.mxu0 0
    %1253 = vmatpush2.bf16.msra.mxu0 0
    %1254 = vmatprep.subr.bf16.mxu0 0
    %1255 = vmatpush2.bf16.msra.mxu0 0
    %1256 = vmatprep.subr.bf16.mxu0 0
    %1257 = vmatpush2.bf16.msra.mxu0 0
    %1258 = vmatprep.subr.bf16.mxu0 0
    %1259 = vmatpush2.bf16.msra.mxu0 0
    %1260 = vmatprep.subr.bf16.mxu0 0
    %1261 = vmatpush2.bf16.msra.mxu0 0
    %1262 = vmatprep.subr.bf16.mxu0 0
    %1263 = vmatpush2.bf16.msra.mxu0 0
    %1264 = vmatprep.subr.bf16.mxu0 0
    %1265 = vmatpush2.bf16.msra.mxu0 0
    %1266 = vmatprep.subr.bf16.mxu0 0
    %1267 = vmatpush2.bf16.msra.mxu0 0
    %1268 = vmatprep.mubr.bf16.mxu0 0
    %1269 = vmatmul.mubr.bf16.gmra.mxu0 %v1074
    %v1270 = vpop.f32.mrf.mxu0
    %v1271 = vadd.f32 %v825, %v1270
    %v1272 = vpop.f32.mrf.mxu0
    %v1273 = vadd.f32 %v829, %v1272
    %v1274 = vpop.f32.mrf.mxu0
    %v1275 = vpop.f32.mrf.mxu0
    %1276 = vdwg.mxu0
    %1277 = vmatprep.subr.bf16.mxu0 0
    %1278 = vmatpush1.bf16.msra.mxu0 %v1211
    %1279 = vmatprep.subr.bf16.mxu0 0
    %1280 = vmatpush1.bf16.msra.mxu0 %v1208
    %1281 = vmatprep.subr.bf16.mxu0 0
    %1282 = vmatpush1.bf16.msra.mxu0 %v1205
    %1283 = vmatprep.subr.bf16.mxu0 0
    %1284 = vmatpush1.bf16.msra.mxu0 %v1202
    %1285 = vmatprep.subr.bf16.mxu0 0
    %1286 = vmatpush1.bf16.msra.mxu0 %v1199
    %1287 = vmatprep.subr.bf16.mxu0 0
    %1288 = vmatpush1.bf16.msra.mxu0 %v1196
    %1289 = vmatprep.subr.bf16.mxu0 0
    %1290 = vmatpush1.bf16.msra.mxu0 %v1193
    %1291 = vmatprep.subr.bf16.mxu0 0
    %1292 = vmatpush1.bf16.msra.mxu0 %v1190
    %1293 = vmatprep.subr.bf16.mxu0 0
    %1294 = vmatpush2.bf16.msra.mxu0 0
    %1295 = vmatprep.subr.bf16.mxu0 0
    %1296 = vmatpush2.bf16.msra.mxu0 0
    %1297 = vmatprep.subr.bf16.mxu0 0
    %1298 = vmatpush2.bf16.msra.mxu0 0
    %1299 = vmatprep.subr.bf16.mxu0 0
    %1300 = vmatpush2.bf16.msra.mxu0 0
    %1301 = vmatprep.subr.bf16.mxu0 0
    %1302 = vmatpush2.bf16.msra.mxu0 0
    %1303 = vmatprep.subr.bf16.mxu0 0
    %1304 = vmatpush2.bf16.msra.mxu0 0
    %1305 = vmatprep.subr.bf16.mxu0 0
    %1306 = vmatpush2.bf16.msra.mxu0 0
    %1307 = vmatprep.subr.bf16.mxu0 0
    %1308 = vmatpush2.bf16.msra.mxu0 0
    %1309 = vmatprep.mubr.bf16.mxu0 0
    %1310 = vmatmul.mubr.bf16.gmra.mxu0 %v1074
    %v1311 = vpop.f32.mrf.mxu0
    %v1312 = vadd.f32 %v833, %v1311
    %v1313 = vpop.f32.mrf.mxu0
    %v1314 = vpop.f32.mrf.mxu0
    %v1315 = vpop.f32.mrf.mxu0
    %1316 = vdwg.mxu0
    %s1317 = scalar_lea.vmem [#allocation2], 3
    %v1318 = vld [vmem:[%s1317] sm:$0x7]
    %v1319 = vunpack.c.l.bf16 %v1318
    %v1320 = vadd.f32 %v1319, %v1271
    %v1321 = vxor.u32 %v1320, 2147483648
    %v1322 = vmul.f32 %v1321, 1.442695
    %v1323 = vpow.pop %v1322
    %v1324 = vadd.f32 %v1323, 1.0
    %v1325 = vrcp.pop %v1324
    %v1326 = vmul.f32 1.0, %v1325
    %v1328 = vrot.slane %v1319, 2
    %v1330 = vadd.f32 %v1328, %v1273
    %v1331 = vxor.u32 %v1330, 2147483648
    %v1332 = vmul.f32 %v1331, 1.442695
    %v1333 = vpow.pop %v1332
    %v1334 = vadd.f32 %v1333, 1.0
    %v1335 = vrcp.pop %v1334
    %v1336 = vmul.f32 1.0, %v1335
    %v1337 = vmul.f32 %v1326, %v1312
    %v1338 = vrot.slane %v1319, 4
    %v1340 = vadd.f32 %v1338, %v1337
    %v1341 = vtanh.pop %v1340
    %v1342 = vsub.f32 1.0, %v1336
    %v1343 = vmul.f32 %v1342, %v1341
    %v1344 = vmul.f32 %v1336, %v1073
    %v1345 = vadd.f32 %v1343, %v1344
    %v1346 = vpack.c.bf16 %v1345, %v1345
    %s1347 = scalar_lea.vmem [#allocation3], 1
    %1348 = vst [vmem:[%s1347] sm:$0x1] %v1346
    %v1349 = vld [vmem:[#allocation10] sm:$0xff]
    %v1350 = vld [vmem:[#allocation10 + $0x8] sm:$0xf]
    %v1351 = vld [vmem:[#allocation10 + $0xc] sm:$0xff]
    %v1352 = vld [vmem:[#allocation10 + $0x14] sm:$0xf]
    %v1353 = vld [vmem:[#allocation10 + $0x18] sm:$0xff]
    %v1354 = vld [vmem:[#allocation10 + $0x20] sm:$0xf]
    %v1355 = vld [vmem:[#allocation10 + $0x24] sm:$0xff]
    %v1356 = vld [vmem:[#allocation10 + $0x2c] sm:$0xf]
    %v1357 = vld [vmem:[#allocation10 + $0x30] sm:$0xff]
    %v1358 = vld [vmem:[#allocation10 + $0x38] sm:$0xf]
    %v1359 = vld [vmem:[#allocation10 + $0x3c] sm:$0xff]
    %v1360 = vld [vmem:[#allocation10 + $0x44] sm:$0xf]
    %v1361 = vld [vmem:[#allocation10 + $0x48] sm:$0xff]
    %v1362 = vld [vmem:[#allocation10 + $0x50] sm:$0xf]
    %v1363 = vld [vmem:[#allocation10 + $0x54] sm:$0xff]
    %v1364 = vld [vmem:[#allocation10 + $0x5c] sm:$0xf]
    %v1365 = vld [vmem:[#allocation10 + $0x60] sm:$0xff]
    %v1366 = vld [vmem:[#allocation10 + $0x68] sm:$0xf]
    %v1367 = vld [vmem:[#allocation10 + $0x6c] sm:$0xff]
    %v1368 = vld [vmem:[#allocation10 + $0x74] sm:$0xf]
    %v1369 = vld [vmem:[#allocation10 + $0x78] sm:$0xff]
    %v1370 = vld [vmem:[#allocation10 + $0x80] sm:$0xf]
    %v1371 = vld [vmem:[#allocation10 + $0x84] sm:$0xff]
    %v1372 = vld [vmem:[#allocation10 + $0x8c] sm:$0xf]
    %v1373 = vld [vmem:[#allocation10 + $0x90] sm:$0xff]
    %v1374 = vld [vmem:[#allocation10 + $0x98] sm:$0xf]
    %v1375 = vld [vmem:[#allocation10 + $0x9c] sm:$0xff]
    %v1376 = vld [vmem:[#allocation10 + $0xa4] sm:$0xf]
    %v1377 = vld [vmem:[#allocation10 + $0xa8] sm:$0xff]
    %v1378 = vld [vmem:[#allocation10 + $0xb0] sm:$0xf]
    %v1379 = vld [vmem:[#allocation10 + $0xb4] sm:$0xff]
    %v1380 = vld [vmem:[#allocation10 + $0xbc] sm:$0xf]
    %v1413 = vunpack.c.l.b16 %v1349
    %v1414 = vunpack.c.h.b16 %v1349
    %v1415 = vunpack.c.l.b16 %v1350
    %v1416 = vunpack.c.l.b16 %v1351
    %v1417 = vunpack.c.h.b16 %v1351
    %v1418 = vunpack.c.l.b16 %v1352
    %v1419 = vunpack.c.l.b16 %v1353
    %v1420 = vunpack.c.h.b16 %v1353
    %v1421 = vunpack.c.l.b16 %v1354
    %v1422 = vunpack.c.l.b16 %v1355
    %v1423 = vunpack.c.h.b16 %v1355
    %v1424 = vunpack.c.l.b16 %v1356
    %v1425 = vunpack.c.l.b16 %v1357
    %v1426 = vunpack.c.h.b16 %v1357
    %v1427 = vunpack.c.l.b16 %v1358
    %v1428 = vunpack.c.l.b16 %v1359
    %v1429 = vunpack.c.h.b16 %v1359
    %v1430 = vunpack.c.l.b16 %v1360
    %v1431 = vunpack.c.l.b16 %v1361
    %v1432 = vunpack.c.h.b16 %v1361
    %v1433 = vunpack.c.l.b16 %v1362
    %v1434 = vunpack.c.l.b16 %v1363
    %v1435 = vunpack.c.h.b16 %v1363
    %v1436 = vunpack.c.l.b16 %v1364
    %v1437 = vunpack.c.l.b16 %v1365
    %v1438 = vunpack.c.h.b16 %v1365
    %v1439 = vunpack.c.l.b16 %v1366
    %v1440 = vunpack.c.l.b16 %v1367
    %v1441 = vunpack.c.h.b16 %v1367
    %v1442 = vunpack.c.l.b16 %v1368
    %v1443 = vunpack.c.l.b16 %v1369
    %v1444 = vunpack.c.h.b16 %v1369
    %v1445 = vunpack.c.l.b16 %v1370
    %v1446 = vunpack.c.l.b16 %v1371
    %v1447 = vunpack.c.h.b16 %v1371
    %v1448 = vunpack.c.l.b16 %v1372
    %v1449 = vunpack.c.l.b16 %v1373
    %v1450 = vunpack.c.h.b16 %v1373
    %v1451 = vunpack.c.l.b16 %v1374
    %v1452 = vunpack.c.l.b16 %v1375
    %v1453 = vunpack.c.h.b16 %v1375
    %v1454 = vunpack.c.l.b16 %v1376
    %v1455 = vunpack.c.l.b16 %v1377
    %v1456 = vunpack.c.h.b16 %v1377
    %v1457 = vunpack.c.l.b16 %v1378
    %v1458 = vunpack.c.l.b16 %v1379
    %v1459 = vunpack.c.h.b16 %v1379
    %v1460 = vunpack.c.l.b16 %v1380
    %v1461 = vpack.c.b16 %v1416, %v1413
    %v1462 = vpack.c.b16 %v1417, %v1414
    %v1463 = vpack.c.b16 %v1418, %v1415
    %v1464 = vpack.c.b16 %v1422, %v1419
    %v1465 = vpack.c.b16 %v1423, %v1420
    %v1466 = vpack.c.b16 %v1424, %v1421
    %v1467 = vpack.c.b16 %v1428, %v1425
    %v1468 = vpack.c.b16 %v1429, %v1426
    %v1469 = vpack.c.b16 %v1430, %v1427
    %v1470 = vpack.c.b16 %v1434, %v1431
    %v1471 = vpack.c.b16 %v1435, %v1432
    %v1472 = vpack.c.b16 %v1436, %v1433
    %v1473 = vpack.c.b16 %v1440, %v1437
    %v1474 = vpack.c.b16 %v1441, %v1438
    %v1475 = vpack.c.b16 %v1442, %v1439
    %v1476 = vpack.c.b16 %v1446, %v1443
    %v1477 = vpack.c.b16 %v1447, %v1444
    %v1478 = vpack.c.b16 %v1448, %v1445
    %v1479 = vpack.c.b16 %v1452, %v1449
    %v1480 = vpack.c.b16 %v1453, %v1450
    %v1481 = vpack.c.b16 %v1454, %v1451
    %v1482 = vpack.c.b16 %v1458, %v1455
    %v1483 = vpack.c.b16 %v1459, %v1456
    %v1484 = vpack.c.b16 %v1460, %v1457
    %1509 = vmatprep.subr.bf16.mxu0 %v1483
    %1510 = vmatpush1.bf16.msra.mxu0 %v1482
    %1511 = vmatprep.subr.bf16.mxu0 %v1480
    %1512 = vmatpush1.bf16.msra.mxu0 %v1479
    %1513 = vmatprep.subr.bf16.mxu0 %v1477
    %1514 = vmatpush1.bf16.msra.mxu0 %v1476
    %1515 = vmatprep.subr.bf16.mxu0 %v1474
    %1516 = vmatpush1.bf16.msra.mxu0 %v1473
    %1517 = vmatprep.subr.bf16.mxu0 %v1471
    %1518 = vmatpush1.bf16.msra.mxu0 %v1470
    %1519 = vmatprep.subr.bf16.mxu0 %v1468
    %1520 = vmatpush1.bf16.msra.mxu0 %v1467
    %1521 = vmatprep.subr.bf16.mxu0 %v1465
    %1522 = vmatpush1.bf16.msra.mxu0 %v1464
    %1523 = vmatprep.subr.bf16.mxu0 %v1462
    %1524 = vmatpush1.bf16.msra.mxu0 %v1461
    %1525 = vmatprep.subr.bf16.mxu0 0
    %1526 = vmatpush2.bf16.msra.mxu0 0
    %1527 = vmatprep.subr.bf16.mxu0 0
    %1528 = vmatpush2.bf16.msra.mxu0 0
    %1529 = vmatprep.subr.bf16.mxu0 0
    %1530 = vmatpush2.bf16.msra.mxu0 0
    %1531 = vmatprep.subr.bf16.mxu0 0
    %1532 = vmatpush2.bf16.msra.mxu0 0
    %1533 = vmatprep.subr.bf16.mxu0 0
    %1534 = vmatpush2.bf16.msra.mxu0 0
    %1535 = vmatprep.subr.bf16.mxu0 0
    %1536 = vmatpush2.bf16.msra.mxu0 0
    %1537 = vmatprep.subr.bf16.mxu0 0
    %1538 = vmatpush2.bf16.msra.mxu0 0
    %1539 = vmatprep.subr.bf16.mxu0 0
    %1540 = vmatpush2.bf16.msra.mxu0 0
    %1541 = vmatprep.mubr.bf16.mxu0 0
    %1542 = vmatmul.mubr.bf16.gmra.mxu0 %v1346
    %v1543 = vpop.f32.mrf.mxu0
    %v1544 = vadd.f32 %v825, %v1543
    %v1545 = vpop.f32.mrf.mxu0
    %v1546 = vadd.f32 %v829, %v1545
    %v1547 = vpop.f32.mrf.mxu0
    %v1548 = vpop.f32.mrf.mxu0
    %1549 = vdwg.mxu0
    %1550 = vmatprep.subr.bf16.mxu0 0
    %1551 = vmatpush1.bf16.msra.mxu0 %v1484
    %1552 = vmatprep.subr.bf16.mxu0 0
    %1553 = vmatpush1.bf16.msra.mxu0 %v1481
    %1554 = vmatprep.subr.bf16.mxu0 0
    %1555 = vmatpush1.bf16.msra.mxu0 %v1478
    %1556 = vmatprep.subr.bf16.mxu0 0
    %1557 = vmatpush1.bf16.msra.mxu0 %v1475
    %1558 = vmatprep.subr.bf16.mxu0 0
    %1559 = vmatpush1.bf16.msra.mxu0 %v1472
    %1560 = vmatprep.subr.bf16.mxu0 0
    %1561 = vmatpush1.bf16.msra.mxu0 %v1469
    %1562 = vmatprep.subr.bf16.mxu0 0
    %1563 = vmatpush1.bf16.msra.mxu0 %v1466
    %1564 = vmatprep.subr.bf16.mxu0 0
    %1565 = vmatpush1.bf16.msra.mxu0 %v1463
    %1566 = vmatprep.subr.bf16.mxu0 0
    %1567 = vmatpush2.bf16.msra.mxu0 0
    %1568 = vmatprep.subr.bf16.mxu0 0
    %1569 = vmatpush2.bf16.msra.mxu0 0
    %1570 = vmatprep.subr.bf16.mxu0 0
    %1571 = vmatpush2.bf16.msra.mxu0 0
    %1572 = vmatprep.subr.bf16.mxu0 0
    %1573 = vmatpush2.bf16.msra.mxu0 0
    %1574 = vmatprep.subr.bf16.mxu0 0
    %1575 = vmatpush2.bf16.msra.mxu0 0
    %1576 = vmatprep.subr.bf16.mxu0 0
    %1577 = vmatpush2.bf16.msra.mxu0 0
    %1578 = vmatprep.subr.bf16.mxu0 0
    %1579 = vmatpush2.bf16.msra.mxu0 0
    %1580 = vmatprep.subr.bf16.mxu0 0
    %1581 = vmatpush2.bf16.msra.mxu0 0
    %1582 = vmatprep.mubr.bf16.mxu0 0
    %1583 = vmatmul.mubr.bf16.gmra.mxu0 %v1346
    %v1584 = vpop.f32.mrf.mxu0
    %v1585 = vadd.f32 %v833, %v1584
    %v1586 = vpop.f32.mrf.mxu0
    %v1587 = vpop.f32.mrf.mxu0
    %v1588 = vpop.f32.mrf.mxu0
    %1589 = vdwg.mxu0
    %s1590 = scalar_lea.vmem [#allocation2], 6
    %v1591 = vld [vmem:[%s1590] sm:$0x7]
    %v1592 = vunpack.c.l.bf16 %v1591
    %v1593 = vadd.f32 %v1592, %v1544
    %v1594 = vxor.u32 %v1593, 2147483648
    %v1595 = vmul.f32 %v1594, 1.442695
    %v1596 = vpow.pop %v1595
    %v1597 = vadd.f32 %v1596, 1.0
    %v1598 = vrcp.pop %v1597
    %v1599 = vmul.f32 1.0, %v1598
    %v1601 = vrot.slane %v1592, 2
    %v1603 = vadd.f32 %v1601, %v1546
    %v1604 = vxor.u32 %v1603, 2147483648
    %v1605 = vmul.f32 %v1604, 1.442695
    %v1606 = vpow.pop %v1605
    %v1607 = vadd.f32 %v1606, 1.0
    %v1608 = vrcp.pop %v1607
    %v1609 = vmul.f32 1.0, %v1608
    %v1610 = vmul.f32 %v1599, %v1585
    %v1611 = vrot.slane %v1592, 4
    %v1613 = vadd.f32 %v1611, %v1610
    %v1614 = vtanh.pop %v1613
    %v1615 = vsub.f32 1.0, %v1609
    %v1616 = vmul.f32 %v1615, %v1614
    %v1617 = vmul.f32 %v1609, %v1345
    %v1618 = vadd.f32 %v1616, %v1617
    %v1619 = vpack.c.bf16 %v1618, %v1618
    %s1620 = scalar_lea.vmem [#allocation3], 2
    %1621 = vst [vmem:[%s1620] sm:$0x1] %v1619
    %v1622 = vld [vmem:[#allocation10] sm:$0xff]
    %v1623 = vld [vmem:[#allocation10 + $0x8] sm:$0xf]
    %v1624 = vld [vmem:[#allocation10 + $0xc] sm:$0xff]
    %v1625 = vld [vmem:[#allocation10 + $0x14] sm:$0xf]
    %v1626 = vld [vmem:[#allocation10 + $0x18] sm:$0xff]
    %v1627 = vld [vmem:[#allocation10 + $0x20] sm:$0xf]
    %v1628 = vld [vmem:[#allocation10 + $0x24] sm:$0xff]
    %v1629 = vld [vmem:[#allocation10 + $0x2c] sm:$0xf]
    %v1630 = vld [vmem:[#allocation10 + $0x30] sm:$0xff]
    %v1631 = vld [vmem:[#allocation10 + $0x38] sm:$0xf]
    %v1632 = vld [vmem:[#allocation10 + $0x3c] sm:$0xff]
    %v1633 = vld [vmem:[#allocation10 + $0x44] sm:$0xf]
    %v1634 = vld [vmem:[#allocation10 + $0x48] sm:$0xff]
    %v1635 = vld [vmem:[#allocation10 + $0x50] sm:$0xf]
    %v1636 = vld [vmem:[#allocation10 + $0x54] sm:$0xff]
    %v1637 = vld [vmem:[#allocation10 + $0x5c] sm:$0xf]
    %v1638 = vld [vmem:[#allocation10 + $0x60] sm:$0xff]
    %v1639 = vld [vmem:[#allocation10 + $0x68] sm:$0xf]
    %v1640 = vld [vmem:[#allocation10 + $0x6c] sm:$0xff]
    %v1641 = vld [vmem:[#allocation10 + $0x74] sm:$0xf]
    %v1642 = vld [vmem:[#allocation10 + $0x78] sm:$0xff]
    %v1643 = vld [vmem:[#allocation10 + $0x80] sm:$0xf]
    %v1644 = vld [vmem:[#allocation10 + $0x84] sm:$0xff]
    %v1645 = vld [vmem:[#allocation10 + $0x8c] sm:$0xf]
    %v1646 = vld [vmem:[#allocation10 + $0x90] sm:$0xff]
    %v1647 = vld [vmem:[#allocation10 + $0x98] sm:$0xf]
    %v1648 = vld [vmem:[#allocation10 + $0x9c] sm:$0xff]
    %v1649 = vld [vmem:[#allocation10 + $0xa4] sm:$0xf]
    %v1650 = vld [vmem:[#allocation10 + $0xa8] sm:$0xff]
    %v1651 = vld [vmem:[#allocation10 + $0xb0] sm:$0xf]
    %v1652 = vld [vmem:[#allocation10 + $0xb4] sm:$0xff]
    %v1653 = vld [vmem:[#allocation10 + $0xbc] sm:$0xf]
    %v1686 = vunpack.c.l.b16 %v1622
    %v1687 = vunpack.c.h.b16 %v1622
    %v1688 = vunpack.c.l.b16 %v1623
    %v1689 = vunpack.c.l.b16 %v1624
    %v1690 = vunpack.c.h.b16 %v1624
    %v1691 = vunpack.c.l.b16 %v1625
    %v1692 = vunpack.c.l.b16 %v1626
    %v1693 = vunpack.c.h.b16 %v1626
    %v1694 = vunpack.c.l.b16 %v1627
    %v1695 = vunpack.c.l.b16 %v1628
    %v1696 = vunpack.c.h.b16 %v1628
    %v1697 = vunpack.c.l.b16 %v1629
    %v1698 = vunpack.c.l.b16 %v1630
    %v1699 = vunpack.c.h.b16 %v1630
    %v1700 = vunpack.c.l.b16 %v1631
    %v1701 = vunpack.c.l.b16 %v1632
    %v1702 = vunpack.c.h.b16 %v1632
    %v1703 = vunpack.c.l.b16 %v1633
    %v1704 = vunpack.c.l.b16 %v1634
    %v1705 = vunpack.c.h.b16 %v1634
    %v1706 = vunpack.c.l.b16 %v1635
    %v1707 = vunpack.c.l.b16 %v1636
    %v1708 = vunpack.c.h.b16 %v1636
    %v1709 = vunpack.c.l.b16 %v1637
    %v1710 = vunpack.c.l.b16 %v1638
    %v1711 = vunpack.c.h.b16 %v1638
    %v1712 = vunpack.c.l.b16 %v1639
    %v1713 = vunpack.c.l.b16 %v1640
    %v1714 = vunpack.c.h.b16 %v1640
    %v1715 = vunpack.c.l.b16 %v1641
    %v1716 = vunpack.c.l.b16 %v1642
    %v1717 = vunpack.c.h.b16 %v1642
    %v1718 = vunpack.c.l.b16 %v1643
    %v1719 = vunpack.c.l.b16 %v1644
    %v1720 = vunpack.c.h.b16 %v1644
    %v1721 = vunpack.c.l.b16 %v1645
    %v1722 = vunpack.c.l.b16 %v1646
    %v1723 = vunpack.c.h.b16 %v1646
    %v1724 = vunpack.c.l.b16 %v1647
    %v1725 = vunpack.c.l.b16 %v1648
    %v1726 = vunpack.c.h.b16 %v1648
    %v1727 = vunpack.c.l.b16 %v1649
    %v1728 = vunpack.c.l.b16 %v1650
    %v1729 = vunpack.c.h.b16 %v1650
    %v1730 = vunpack.c.l.b16 %v1651
    %v1731 = vunpack.c.l.b16 %v1652
    %v1732 = vunpack.c.h.b16 %v1652
    %v1733 = vunpack.c.l.b16 %v1653
    %v1734 = vpack.c.b16 %v1689, %v1686
    %v1735 = vpack.c.b16 %v1690, %v1687
    %v1736 = vpack.c.b16 %v1691, %v1688
    %v1737 = vpack.c.b16 %v1695, %v1692
    %v1738 = vpack.c.b16 %v1696, %v1693
    %v1739 = vpack.c.b16 %v1697, %v1694
    %v1740 = vpack.c.b16 %v1701, %v1698
    %v1741 = vpack.c.b16 %v1702, %v1699
    %v1742 = vpack.c.b16 %v1703, %v1700
    %v1743 = vpack.c.b16 %v1707, %v1704
    %v1744 = vpack.c.b16 %v1708, %v1705
    %v1745 = vpack.c.b16 %v1709, %v1706
    %v1746 = vpack.c.b16 %v1713, %v1710
    %v1747 = vpack.c.b16 %v1714, %v1711
    %v1748 = vpack.c.b16 %v1715, %v1712
    %v1749 = vpack.c.b16 %v1719, %v1716
    %v1750 = vpack.c.b16 %v1720, %v1717
    %v1751 = vpack.c.b16 %v1721, %v1718
    %v1752 = vpack.c.b16 %v1725, %v1722
    %v1753 = vpack.c.b16 %v1726, %v1723
    %v1754 = vpack.c.b16 %v1727, %v1724
    %v1755 = vpack.c.b16 %v1731, %v1728
    %v1756 = vpack.c.b16 %v1732, %v1729
    %v1757 = vpack.c.b16 %v1733, %v1730
    %1782 = vmatprep.subr.bf16.mxu0 %v1756
    %1783 = vmatpush1.bf16.msra.mxu0 %v1755
    %1784 = vmatprep.subr.bf16.mxu0 %v1753
    %1785 = vmatpush1.bf16.msra.mxu0 %v1752
    %1786 = vmatprep.subr.bf16.mxu0 %v1750
    %1787 = vmatpush1.bf16.msra.mxu0 %v1749
    %1788 = vmatprep.subr.bf16.mxu0 %v1747
    %1789 = vmatpush1.bf16.msra.mxu0 %v1746
    %1790 = vmatprep.subr.bf16.mxu0 %v1744
    %1791 = vmatpush1.bf16.msra.mxu0 %v1743
    %1792 = vmatprep.subr.bf16.mxu0 %v1741
    %1793 = vmatpush1.bf16.msra.mxu0 %v1740
    %1794 = vmatprep.subr.bf16.mxu0 %v1738
    %1795 = vmatpush1.bf16.msra.mxu0 %v1737
    %1796 = vmatprep.subr.bf16.mxu0 %v1735
    %1797 = vmatpush1.bf16.msra.mxu0 %v1734
    %1798 = vmatprep.subr.bf16.mxu0 0
    %1799 = vmatpush2.bf16.msra.mxu0 0
    %1800 = vmatprep.subr.bf16.mxu0 0
    %1801 = vmatpush2.bf16.msra.mxu0 0
    %1802 = vmatprep.subr.bf16.mxu0 0
    %1803 = vmatpush2.bf16.msra.mxu0 0
    %1804 = vmatprep.subr.bf16.mxu0 0
    %1805 = vmatpush2.bf16.msra.mxu0 0
    %1806 = vmatprep.subr.bf16.mxu0 0
    %1807 = vmatpush2.bf16.msra.mxu0 0
    %1808 = vmatprep.subr.bf16.mxu0 0
    %1809 = vmatpush2.bf16.msra.mxu0 0
    %1810 = vmatprep.subr.bf16.mxu0 0
    %1811 = vmatpush2.bf16.msra.mxu0 0
    %1812 = vmatprep.subr.bf16.mxu0 0
    %1813 = vmatpush2.bf16.msra.mxu0 0
    %1814 = vmatprep.mubr.bf16.mxu0 0
    %1815 = vmatmul.mubr.bf16.gmra.mxu0 %v1619
    %v1816 = vpop.f32.mrf.mxu0
    %v1817 = vadd.f32 %v825, %v1816
    %v1818 = vpop.f32.mrf.mxu0
    %v1819 = vadd.f32 %v829, %v1818
    %v1820 = vpop.f32.mrf.mxu0
    %v1821 = vpop.f32.mrf.mxu0
    %1822 = vdwg.mxu0
    %1823 = vmatprep.subr.bf16.mxu0 0
    %1824 = vmatpush1.bf16.msra.mxu0 %v1757
    %1825 = vmatprep.subr.bf16.mxu0 0
    %1826 = vmatpush1.bf16.msra.mxu0 %v1754
    %1827 = vmatprep.subr.bf16.mxu0 0
    %1828 = vmatpush1.bf16.msra.mxu0 %v1751
    %1829 = vmatprep.subr.bf16.mxu0 0
    %1830 = vmatpush1.bf16.msra.mxu0 %v1748
    %1831 = vmatprep.subr.bf16.mxu0 0
    %1832 = vmatpush1.bf16.msra.mxu0 %v1745
    %1833 = vmatprep.subr.bf16.mxu0 0
    %1834 = vmatpush1.bf16.msra.mxu0 %v1742
    %1835 = vmatprep.subr.bf16.mxu0 0
    %1836 = vmatpush1.bf16.msra.mxu0 %v1739
    %1837 = vmatprep.subr.bf16.mxu0 0
    %1838 = vmatpush1.bf16.msra.mxu0 %v1736
    %1839 = vmatprep.subr.bf16.mxu0 0
    %1840 = vmatpush2.bf16.msra.mxu0 0
    %1841 = vmatprep.subr.bf16.mxu0 0
    %1842 = vmatpush2.bf16.msra.mxu0 0
    %1843 = vmatprep.subr.bf16.mxu0 0
    %1844 = vmatpush2.bf16.msra.mxu0 0
    %1845 = vmatprep.subr.bf16.mxu0 0
    %1846 = vmatpush2.bf16.msra.mxu0 0
    %1847 = vmatprep.subr.bf16.mxu0 0
    %1848 = vmatpush2.bf16.msra.mxu0 0
    %1849 = vmatprep.subr.bf16.mxu0 0
    %1850 = vmatpush2.bf16.msra.mxu0 0
    %1851 = vmatprep.subr.bf16.mxu0 0
    %1852 = vmatpush2.bf16.msra.mxu0 0
    %1853 = vmatprep.subr.bf16.mxu0 0
    %1854 = vmatpush2.bf16.msra.mxu0 0
    %1855 = vmatprep.mubr.bf16.mxu0 0
    %1856 = vmatmul.mubr.bf16.gmra.mxu0 %v1619
    %v1857 = vpop.f32.mrf.mxu0
    %v1858 = vadd.f32 %v833, %v1857
    %v1859 = vpop.f32.mrf.mxu0
    %v1860 = vpop.f32.mrf.mxu0
    %v1861 = vpop.f32.mrf.mxu0
    %1862 = vdwg.mxu0
    %s1863 = scalar_lea.vmem [#allocation2], 9
    %v1864 = vld [vmem:[%s1863] sm:$0x7]
    %v1865 = vunpack.c.l.bf16 %v1864
    %v1866 = vadd.f32 %v1865, %v1817
    %v1867 = vxor.u32 %v1866, 2147483648
    %v1868 = vmul.f32 %v1867, 1.442695
    %v1869 = vpow.pop %v1868
    %v1870 = vadd.f32 %v1869, 1.0
    %v1871 = vrcp.pop %v1870
    %v1872 = vmul.f32 1.0, %v1871
    %v1874 = vrot.slane %v1865, 2
    %v1876 = vadd.f32 %v1874, %v1819
    %v1877 = vxor.u32 %v1876, 2147483648
    %v1878 = vmul.f32 %v1877, 1.442695
    %v1879 = vpow.pop %v1878
    %v1880 = vadd.f32 %v1879, 1.0
    %v1881 = vrcp.pop %v1880
    %v1882 = vmul.f32 1.0, %v1881
    %v1883 = vmul.f32 %v1872, %v1858
    %v1884 = vrot.slane %v1865, 4
    %v1886 = vadd.f32 %v1884, %v1883
    %v1887 = vtanh.pop %v1886
    %v1888 = vsub.f32 1.0, %v1882
    %v1889 = vmul.f32 %v1888, %v1887
    %v1890 = vmul.f32 %v1882, %v1618
    %v1891 = vadd.f32 %v1889, %v1890
    %v1892 = vpack.c.bf16 %v1891, %v1891
    %s1893 = scalar_lea.vmem [#allocation3], 3
    %1894 = vst [vmem:[%s1893] sm:$0x1] %v1892
    %v1895 = vld [vmem:[#allocation10] sm:$0xff]
    %v1896 = vld [vmem:[#allocation10 + $0x8] sm:$0xf]
    %v1897 = vld [vmem:[#allocation10 + $0xc] sm:$0xff]
    %v1898 = vld [vmem:[#allocation10 + $0x14] sm:$0xf]
    %v1899 = vld [vmem:[#allocation10 + $0x18] sm:$0xff]
    %v1900 = vld [vmem:[#allocation10 + $0x20] sm:$0xf]
    %v1901 = vld [vmem:[#allocation10 + $0x24] sm:$0xff]
    %v1902 = vld [vmem:[#allocation10 + $0x2c] sm:$0xf]
    %v1903 = vld [vmem:[#allocation10 + $0x30] sm:$0xff]
    %v1904 = vld [vmem:[#allocation10 + $0x38] sm:$0xf]
    %v1905 = vld [vmem:[#allocation10 + $0x3c] sm:$0xff]
    %v1906 = vld [vmem:[#allocation10 + $0x44] sm:$0xf]
    %v1907 = vld [vmem:[#allocation10 + $0x48] sm:$0xff]
    %v1908 = vld [vmem:[#allocation10 + $0x50] sm:$0xf]
    %v1909 = vld [vmem:[#allocation10 + $0x54] sm:$0xff]
    %v1910 = vld [vmem:[#allocation10 + $0x5c] sm:$0xf]
    %v1911 = vld [vmem:[#allocation10 + $0x60] sm:$0xff]
    %v1912 = vld [vmem:[#allocation10 + $0x68] sm:$0xf]
    %v1913 = vld [vmem:[#allocation10 + $0x6c] sm:$0xff]
    %v1914 = vld [vmem:[#allocation10 + $0x74] sm:$0xf]
    %v1915 = vld [vmem:[#allocation10 + $0x78] sm:$0xff]
    %v1916 = vld [vmem:[#allocation10 + $0x80] sm:$0xf]
    %v1917 = vld [vmem:[#allocation10 + $0x84] sm:$0xff]
    %v1918 = vld [vmem:[#allocation10 + $0x8c] sm:$0xf]
    %v1919 = vld [vmem:[#allocation10 + $0x90] sm:$0xff]
    %v1920 = vld [vmem:[#allocation10 + $0x98] sm:$0xf]
    %v1921 = vld [vmem:[#allocation10 + $0x9c] sm:$0xff]
    %v1922 = vld [vmem:[#allocation10 + $0xa4] sm:$0xf]
    %v1923 = vld [vmem:[#allocation10 + $0xa8] sm:$0xff]
    %v1924 = vld [vmem:[#allocation10 + $0xb0] sm:$0xf]
    %v1925 = vld [vmem:[#allocation10 + $0xb4] sm:$0xff]
    %v1926 = vld [vmem:[#allocation10 + $0xbc] sm:$0xf]
    %v1959 = vunpack.c.l.b16 %v1895
    %v1960 = vunpack.c.h.b16 %v1895
    %v1961 = vunpack.c.l.b16 %v1896
    %v1962 = vunpack.c.l.b16 %v1897
    %v1963 = vunpack.c.h.b16 %v1897
    %v1964 = vunpack.c.l.b16 %v1898
    %v1965 = vunpack.c.l.b16 %v1899
    %v1966 = vunpack.c.h.b16 %v1899
    %v1967 = vunpack.c.l.b16 %v1900
    %v1968 = vunpack.c.l.b16 %v1901
    %v1969 = vunpack.c.h.b16 %v1901
    %v1970 = vunpack.c.l.b16 %v1902
    %v1971 = vunpack.c.l.b16 %v1903
    %v1972 = vunpack.c.h.b16 %v1903
    %v1973 = vunpack.c.l.b16 %v1904
    %v1974 = vunpack.c.l.b16 %v1905
    %v1975 = vunpack.c.h.b16 %v1905
    %v1976 = vunpack.c.l.b16 %v1906
    %v1977 = vunpack.c.l.b16 %v1907
    %v1978 = vunpack.c.h.b16 %v1907
    %v1979 = vunpack.c.l.b16 %v1908
    %v1980 = vunpack.c.l.b16 %v1909
    %v1981 = vunpack.c.h.b16 %v1909
    %v1982 = vunpack.c.l.b16 %v1910
    %v1983 = vunpack.c.l.b16 %v1911
    %v1984 = vunpack.c.h.b16 %v1911
    %v1985 = vunpack.c.l.b16 %v1912
    %v1986 = vunpack.c.l.b16 %v1913
    %v1987 = vunpack.c.h.b16 %v1913
    %v1988 = vunpack.c.l.b16 %v1914
    %v1989 = vunpack.c.l.b16 %v1915
    %v1990 = vunpack.c.h.b16 %v1915
    %v1991 = vunpack.c.l.b16 %v1916
    %v1992 = vunpack.c.l.b16 %v1917
    %v1993 = vunpack.c.h.b16 %v1917
    %v1994 = vunpack.c.l.b16 %v1918
    %v1995 = vunpack.c.l.b16 %v1919
    %v1996 = vunpack.c.h.b16 %v1919
    %v1997 = vunpack.c.l.b16 %v1920
    %v1998 = vunpack.c.l.b16 %v1921
    %v1999 = vunpack.c.h.b16 %v1921
    %v2000 = vunpack.c.l.b16 %v1922
    %v2001 = vunpack.c.l.b16 %v1923
    %v2002 = vunpack.c.h.b16 %v1923
    %v2003 = vunpack.c.l.b16 %v1924
    %v2004 = vunpack.c.l.b16 %v1925
    %v2005 = vunpack.c.h.b16 %v1925
    %v2006 = vunpack.c.l.b16 %v1926
    %v2007 = vpack.c.b16 %v1962, %v1959
    %v2008 = vpack.c.b16 %v1963, %v1960
    %v2009 = vpack.c.b16 %v1964, %v1961
    %v2010 = vpack.c.b16 %v1968, %v1965
    %v2011 = vpack.c.b16 %v1969, %v1966
    %v2012 = vpack.c.b16 %v1970, %v1967
    %v2013 = vpack.c.b16 %v1974, %v1971
    %v2014 = vpack.c.b16 %v1975, %v1972
    %v2015 = vpack.c.b16 %v1976, %v1973
    %v2016 = vpack.c.b16 %v1980, %v1977
    %v2017 = vpack.c.b16 %v1981, %v1978
    %v2018 = vpack.c.b16 %v1982, %v1979
    %v2019 = vpack.c.b16 %v1986, %v1983
    %v2020 = vpack.c.b16 %v1987, %v1984
    %v2021 = vpack.c.b16 %v1988, %v1985
    %v2022 = vpack.c.b16 %v1992, %v1989
    %v2023 = vpack.c.b16 %v1993, %v1990
    %v2024 = vpack.c.b16 %v1994, %v1991
    %v2025 = vpack.c.b16 %v1998, %v1995
    %v2026 = vpack.c.b16 %v1999, %v1996
    %v2027 = vpack.c.b16 %v2000, %v1997
    %v2028 = vpack.c.b16 %v2004, %v2001
    %v2029 = vpack.c.b16 %v2005, %v2002
    %v2030 = vpack.c.b16 %v2006, %v2003
    %2055 = vmatprep.subr.bf16.mxu0 %v2029
    %2056 = vmatpush1.bf16.msra.mxu0 %v2028
    %2057 = vmatprep.subr.bf16.mxu0 %v2026
    %2058 = vmatpush1.bf16.msra.mxu0 %v2025
    %2059 = vmatprep.subr.bf16.mxu0 %v2023
    %2060 = vmatpush1.bf16.msra.mxu0 %v2022
    %2061 = vmatprep.subr.bf16.mxu0 %v2020
    %2062 = vmatpush1.bf16.msra.mxu0 %v2019
    %2063 = vmatprep.subr.bf16.mxu0 %v2017
    %2064 = vmatpush1.bf16.msra.mxu0 %v2016
    %2065 = vmatprep.subr.bf16.mxu0 %v2014
    %2066 = vmatpush1.bf16.msra.mxu0 %v2013
    %2067 = vmatprep.subr.bf16.mxu0 %v2011
    %2068 = vmatpush1.bf16.msra.mxu0 %v2010
    %2069 = vmatprep.subr.bf16.mxu0 %v2008
    %2070 = vmatpush1.bf16.msra.mxu0 %v2007
    %2071 = vmatprep.subr.bf16.mxu0 0
    %2072 = vmatpush2.bf16.msra.mxu0 0
    %2073 = vmatprep.subr.bf16.mxu0 0
    %2074 = vmatpush2.bf16.msra.mxu0 0
    %2075 = vmatprep.subr.bf16.mxu0 0
    %2076 = vmatpush2.bf16.msra.mxu0 0
    %2077 = vmatprep.subr.bf16.mxu0 0
    %2078 = vmatpush2.bf16.msra.mxu0 0
    %2079 = vmatprep.subr.bf16.mxu0 0
    %2080 = vmatpush2.bf16.msra.mxu0 0
    %2081 = vmatprep.subr.bf16.mxu0 0
    %2082 = vmatpush2.bf16.msra.mxu0 0
    %2083 = vmatprep.subr.bf16.mxu0 0
    %2084 = vmatpush2.bf16.msra.mxu0 0
    %2085 = vmatprep.subr.bf16.mxu0 0
    %2086 = vmatpush2.bf16.msra.mxu0 0
    %2087 = vmatprep.mubr.bf16.mxu0 0
    %2088 = vmatmul.mubr.bf16.gmra.mxu0 %v1892
    %v2089 = vpop.f32.mrf.mxu0
    %v2090 = vadd.f32 %v825, %v2089
    %v2091 = vpop.f32.mrf.mxu0
    %v2092 = vadd.f32 %v829, %v2091
    %v2093 = vpop.f32.mrf.mxu0
    %v2094 = vpop.f32.mrf.mxu0
    %2095 = vdwg.mxu0
    %2096 = vmatprep.subr.bf16.mxu0 0
    %2097 = vmatpush1.bf16.msra.mxu0 %v2030
    %2098 = vmatprep.subr.bf16.mxu0 0
    %2099 = vmatpush1.bf16.msra.mxu0 %v2027
    %2100 = vmatprep.subr.bf16.mxu0 0
    %2101 = vmatpush1.bf16.msra.mxu0 %v2024
    %2102 = vmatprep.subr.bf16.mxu0 0
    %2103 = vmatpush1.bf16.msra.mxu0 %v2021
    %2104 = vmatprep.subr.bf16.mxu0 0
    %2105 = vmatpush1.bf16.msra.mxu0 %v2018
    %2106 = vmatprep.subr.bf16.mxu0 0
    %2107 = vmatpush1.bf16.msra.mxu0 %v2015
    %2108 = vmatprep.subr.bf16.mxu0 0
    %2109 = vmatpush1.bf16.msra.mxu0 %v2012
    %2110 = vmatprep.subr.bf16.mxu0 0
    %2111 = vmatpush1.bf16.msra.mxu0 %v2009
    %2112 = vmatprep.subr.bf16.mxu0 0
    %2113 = vmatpush2.bf16.msra.mxu0 0
    %2114 = vmatprep.subr.bf16.mxu0 0
    %2115 = vmatpush2.bf16.msra.mxu0 0
    %2116 = vmatprep.subr.bf16.mxu0 0
    %2117 = vmatpush2.bf16.msra.mxu0 0
    %2118 = vmatprep.subr.bf16.mxu0 0
    %2119 = vmatpush2.bf16.msra.mxu0 0
    %2120 = vmatprep.subr.bf16.mxu0 0
    %2121 = vmatpush2.bf16.msra.mxu0 0
    %2122 = vmatprep.subr.bf16.mxu0 0
    %2123 = vmatpush2.bf16.msra.mxu0 0
    %2124 = vmatprep.subr.bf16.mxu0 0
    %2125 = vmatpush2.bf16.msra.mxu0 0
    %2126 = vmatprep.subr.bf16.mxu0 0
    %2127 = vmatpush2.bf16.msra.mxu0 0
    %2128 = vmatprep.mubr.bf16.mxu0 0
    %2129 = vmatmul.mubr.bf16.gmra.mxu0 %v1892
    %v2130 = vpop.f32.mrf.mxu0
    %v2131 = vadd.f32 %v833, %v2130
    %v2132 = vpop.f32.mrf.mxu0
    %v2133 = vpop.f32.mrf.mxu0
    %v2134 = vpop.f32.mrf.mxu0
    %2135 = vdwg.mxu0
    %s2136 = scalar_lea.vmem [#allocation2], 12
    %v2137 = vld [vmem:[%s2136] sm:$0x7]
    %v2138 = vunpack.c.l.bf16 %v2137
    %v2139 = vadd.f32 %v2138, %v2090
    %v2140 = vxor.u32 %v2139, 2147483648
    %v2141 = vmul.f32 %v2140, 1.442695
    %v2142 = vpow.pop %v2141
    %v2143 = vadd.f32 %v2142, 1.0
    %v2144 = vrcp.pop %v2143
    %v2145 = vmul.f32 1.0, %v2144
    %v2147 = vrot.slane %v2138, 2
    %v2149 = vadd.f32 %v2147, %v2092
    %v2150 = vxor.u32 %v2149, 2147483648
    %v2151 = vmul.f32 %v2150, 1.442695
    %v2152 = vpow.pop %v2151
    %v2153 = vadd.f32 %v2152, 1.0
    %v2154 = vrcp.pop %v2153
    %v2155 = vmul.f32 1.0, %v2154
    %v2156 = vmul.f32 %v2145, %v2131
    %v2157 = vrot.slane %v2138, 4
    %v2159 = vadd.f32 %v2157, %v2156
    %v2160 = vtanh.pop %v2159
    %v2161 = vsub.f32 1.0, %v2155
    %v2162 = vmul.f32 %v2161, %v2160
    %v2163 = vmul.f32 %v2155, %v1891
    %v2164 = vadd.f32 %v2162, %v2163
    %v2165 = vpack.c.bf16 %v2164, %v2164
    %s2166 = scalar_lea.vmem [#allocation3], 4
    %2167 = vst [vmem:[%s2166] sm:$0x1] %v2165
    %v2168 = vld [vmem:[#allocation10] sm:$0xff]
    %v2169 = vld [vmem:[#allocation10 + $0x8] sm:$0xf]
    %v2170 = vld [vmem:[#allocation10 + $0xc] sm:$0xff]
    %v2171 = vld [vmem:[#allocation10 + $0x14] sm:$0xf]
    %v2172 = vld [vmem:[#allocation10 + $0x18] sm:$0xff]
    %v2173 = vld [vmem:[#allocation10 + $0x20] sm:$0xf]
    %v2174 = vld [vmem:[#allocation10 + $0x24] sm:$0xff]
    %v2175 = vld [vmem:[#allocation10 + $0x2c] sm:$0xf]
    %v2176 = vld [vmem:[#allocation10 + $0x30] sm:$0xff]
    %v2177 = vld [vmem:[#allocation10 + $0x38] sm:$0xf]
    %v2178 = vld [vmem:[#allocation10 + $0x3c] sm:$0xff]
    %v2179 = vld [vmem:[#allocation10 + $0x44] sm:$0xf]
    %v2180 = vld [vmem:[#allocation10 + $0x48] sm:$0xff]
    %v2181 = vld [vmem:[#allocation10 + $0x50] sm:$0xf]
    %v2182 = vld [vmem:[#allocation10 + $0x54] sm:$0xff]
    %v2183 = vld [vmem:[#allocation10 + $0x5c] sm:$0xf]
    %v2184 = vld [vmem:[#allocation10 + $0x60] sm:$0xff]
    %v2185 = vld [vmem:[#allocation10 + $0x68] sm:$0xf]
    %v2186 = vld [vmem:[#allocation10 + $0x6c] sm:$0xff]
    %v2187 = vld [vmem:[#allocation10 + $0x74] sm:$0xf]
    %v2188 = vld [vmem:[#allocation10 + $0x78] sm:$0xff]
    %v2189 = vld [vmem:[#allocation10 + $0x80] sm:$0xf]
    %v2190 = vld [vmem:[#allocation10 + $0x84] sm:$0xff]
    %v2191 = vld [vmem:[#allocation10 + $0x8c] sm:$0xf]
    %v2192 = vld [vmem:[#allocation10 + $0x90] sm:$0xff]
    %v2193 = vld [vmem:[#allocation10 + $0x98] sm:$0xf]
    %v2194 = vld [vmem:[#allocation10 + $0x9c] sm:$0xff]
    %v2195 = vld [vmem:[#allocation10 + $0xa4] sm:$0xf]
    %v2196 = vld [vmem:[#allocation10 + $0xa8] sm:$0xff]
    %v2197 = vld [vmem:[#allocation10 + $0xb0] sm:$0xf]
    %v2198 = vld [vmem:[#allocation10 + $0xb4] sm:$0xff]
    %v2199 = vld [vmem:[#allocation10 + $0xbc] sm:$0xf]
    %v2232 = vunpack.c.l.b16 %v2168
    %v2233 = vunpack.c.h.b16 %v2168
    %v2234 = vunpack.c.l.b16 %v2169
    %v2235 = vunpack.c.l.b16 %v2170
    %v2236 = vunpack.c.h.b16 %v2170
    %v2237 = vunpack.c.l.b16 %v2171
    %v2238 = vunpack.c.l.b16 %v2172
    %v2239 = vunpack.c.h.b16 %v2172
    %v2240 = vunpack.c.l.b16 %v2173
    %v2241 = vunpack.c.l.b16 %v2174
    %v2242 = vunpack.c.h.b16 %v2174
    %v2243 = vunpack.c.l.b16 %v2175
    %v2244 = vunpack.c.l.b16 %v2176
    %v2245 = vunpack.c.h.b16 %v2176
    %v2246 = vunpack.c.l.b16 %v2177
    %v2247 = vunpack.c.l.b16 %v2178
    %v2248 = vunpack.c.h.b16 %v2178
    %v2249 = vunpack.c.l.b16 %v2179
    %v2250 = vunpack.c.l.b16 %v2180
    %v2251 = vunpack.c.h.b16 %v2180
    %v2252 = vunpack.c.l.b16 %v2181
    %v2253 = vunpack.c.l.b16 %v2182
    %v2254 = vunpack.c.h.b16 %v2182
    %v2255 = vunpack.c.l.b16 %v2183
    %v2256 = vunpack.c.l.b16 %v2184
    %v2257 = vunpack.c.h.b16 %v2184
    %v2258 = vunpack.c.l.b16 %v2185
    %v2259 = vunpack.c.l.b16 %v2186
    %v2260 = vunpack.c.h.b16 %v2186
    %v2261 = vunpack.c.l.b16 %v2187
    %v2262 = vunpack.c.l.b16 %v2188
    %v2263 = vunpack.c.h.b16 %v2188
    %v2264 = vunpack.c.l.b16 %v2189
    %v2265 = vunpack.c.l.b16 %v2190
    %v2266 = vunpack.c.h.b16 %v2190
    %v2267 = vunpack.c.l.b16 %v2191
    %v2268 = vunpack.c.l.b16 %v2192
    %v2269 = vunpack.c.h.b16 %v2192
    %v2270 = vunpack.c.l.b16 %v2193
    %v2271 = vunpack.c.l.b16 %v2194
    %v2272 = vunpack.c.h.b16 %v2194
    %v2273 = vunpack.c.l.b16 %v2195
    %v2274 = vunpack.c.l.b16 %v2196
    %v2275 = vunpack.c.h.b16 %v2196
    %v2276 = vunpack.c.l.b16 %v2197
    %v2277 = vunpack.c.l.b16 %v2198
    %v2278 = vunpack.c.h.b16 %v2198
    %v2279 = vunpack.c.l.b16 %v2199
    %v2280 = vpack.c.b16 %v2235, %v2232
    %v2281 = vpack.c.b16 %v2236, %v2233
    %v2282 = vpack.c.b16 %v2237, %v2234
    %v2283 = vpack.c.b16 %v2241, %v2238
    %v2284 = vpack.c.b16 %v2242, %v2239
    %v2285 = vpack.c.b16 %v2243, %v2240
    %v2286 = vpack.c.b16 %v2247, %v2244
    %v2287 = vpack.c.b16 %v2248, %v2245
    %v2288 = vpack.c.b16 %v2249, %v2246
    %v2289 = vpack.c.b16 %v2253, %v2250
    %v2290 = vpack.c.b16 %v2254, %v2251
    %v2291 = vpack.c.b16 %v2255, %v2252
    %v2292 = vpack.c.b16 %v2259, %v2256
    %v2293 = vpack.c.b16 %v2260, %v2257
    %v2294 = vpack.c.b16 %v2261, %v2258
    %v2295 = vpack.c.b16 %v2265, %v2262
    %v2296 = vpack.c.b16 %v2266, %v2263
    %v2297 = vpack.c.b16 %v2267, %v2264
    %v2298 = vpack.c.b16 %v2271, %v2268
    %v2299 = vpack.c.b16 %v2272, %v2269
    %v2300 = vpack.c.b16 %v2273, %v2270
    %v2301 = vpack.c.b16 %v2277, %v2274
    %v2302 = vpack.c.b16 %v2278, %v2275
    %v2303 = vpack.c.b16 %v2279, %v2276
    %2328 = vmatprep.subr.bf16.mxu0 %v2302
    %2329 = vmatpush1.bf16.msra.mxu0 %v2301
    %2330 = vmatprep.subr.bf16.mxu0 %v2299
    %2331 = vmatpush1.bf16.msra.mxu0 %v2298
    %2332 = vmatprep.subr.bf16.mxu0 %v2296
    %2333 = vmatpush1.bf16.msra.mxu0 %v2295
    %2334 = vmatprep.subr.bf16.mxu0 %v2293
    %2335 = vmatpush1.bf16.msra.mxu0 %v2292
    %2336 = vmatprep.subr.bf16.mxu0 %v2290
    %2337 = vmatpush1.bf16.msra.mxu0 %v2289
    %2338 = vmatprep.subr.bf16.mxu0 %v2287
    %2339 = vmatpush1.bf16.msra.mxu0 %v2286
    %2340 = vmatprep.subr.bf16.mxu0 %v2284
    %2341 = vmatpush1.bf16.msra.mxu0 %v2283
    %2342 = vmatprep.subr.bf16.mxu0 %v2281
    %2343 = vmatpush1.bf16.msra.mxu0 %v2280
    %2344 = vmatprep.subr.bf16.mxu0 0
    %2345 = vmatpush2.bf16.msra.mxu0 0
    %2346 = vmatprep.subr.bf16.mxu0 0
    %2347 = vmatpush2.bf16.msra.mxu0 0
    %2348 = vmatprep.subr.bf16.mxu0 0
    %2349 = vmatpush2.bf16.msra.mxu0 0
    %2350 = vmatprep.subr.bf16.mxu0 0
    %2351 = vmatpush2.bf16.msra.mxu0 0
    %2352 = vmatprep.subr.bf16.mxu0 0
    %2353 = vmatpush2.bf16.msra.mxu0 0
    %2354 = vmatprep.subr.bf16.mxu0 0
    %2355 = vmatpush2.bf16.msra.mxu0 0
    %2356 = vmatprep.subr.bf16.mxu0 0
    %2357 = vmatpush2.bf16.msra.mxu0 0
    %2358 = vmatprep.subr.bf16.mxu0 0
    %2359 = vmatpush2.bf16.msra.mxu0 0
    %2360 = vmatprep.mubr.bf16.mxu0 0
    %2361 = vmatmul.mubr.bf16.gmra.mxu0 %v2165
    %v2362 = vpop.f32.mrf.mxu0
    %v2363 = vadd.f32 %v825, %v2362
    %v2364 = vpop.f32.mrf.mxu0
    %v2365 = vadd.f32 %v829, %v2364
    %v2366 = vpop.f32.mrf.mxu0
    %v2367 = vpop.f32.mrf.mxu0
    %2368 = vdwg.mxu0
    %2369 = vmatprep.subr.bf16.mxu0 0
    %2370 = vmatpush1.bf16.msra.mxu0 %v2303
    %2371 = vmatprep.subr.bf16.mxu0 0
    %2372 = vmatpush1.bf16.msra.mxu0 %v2300
    %2373 = vmatprep.subr.bf16.mxu0 0
    %2374 = vmatpush1.bf16.msra.mxu0 %v2297
    %2375 = vmatprep.subr.bf16.mxu0 0
    %2376 = vmatpush1.bf16.msra.mxu0 %v2294
    %2377 = vmatprep.subr.bf16.mxu0 0
    %2378 = vmatpush1.bf16.msra.mxu0 %v2291
    %2379 = vmatprep.subr.bf16.mxu0 0
    %2380 = vmatpush1.bf16.msra.mxu0 %v2288
    %2381 = vmatprep.subr.bf16.mxu0 0
    %2382 = vmatpush1.bf16.msra.mxu0 %v2285
    %2383 = vmatprep.subr.bf16.mxu0 0
    %2384 = vmatpush1.bf16.msra.mxu0 %v2282
    %2385 = vmatprep.subr.bf16.mxu0 0
    %2386 = vmatpush2.bf16.msra.mxu0 0
    %2387 = vmatprep.subr.bf16.mxu0 0
    %2388 = vmatpush2.bf16.msra.mxu0 0
    %2389 = vmatprep.subr.bf16.mxu0 0
    %2390 = vmatpush2.bf16.msra.mxu0 0
    %2391 = vmatprep.subr.bf16.mxu0 0
    %2392 = vmatpush2.bf16.msra.mxu0 0
    %2393 = vmatprep.subr.bf16.mxu0 0
    %2394 = vmatpush2.bf16.msra.mxu0 0
    %2395 = vmatprep.subr.bf16.mxu0 0
    %2396 = vmatpush2.bf16.msra.mxu0 0
    %2397 = vmatprep.subr.bf16.mxu0 0
    %2398 = vmatpush2.bf16.msra.mxu0 0
    %2399 = vmatprep.subr.bf16.mxu0 0
    %2400 = vmatpush2.bf16.msra.mxu0 0
    %2401 = vmatprep.mubr.bf16.mxu0 0
    %2402 = vmatmul.mubr.bf16.gmra.mxu0 %v2165
    %v2403 = vpop.f32.mrf.mxu0
    %v2404 = vadd.f32 %v833, %v2403
    %v2405 = vpop.f32.mrf.mxu0
    %v2406 = vpop.f32.mrf.mxu0
    %v2407 = vpop.f32.mrf.mxu0
    %2408 = vdwg.mxu0
    %s2409 = scalar_lea.vmem [#allocation2], 15
    %v2410 = vld [vmem:[%s2409] sm:$0x7]
    %v2411 = vunpack.c.l.bf16 %v2410
    %v2412 = vadd.f32 %v2411, %v2363
    %v2413 = vxor.u32 %v2412, 2147483648
    %v2414 = vmul.f32 %v2413, 1.442695
    %v2415 = vpow.pop %v2414
    %v2416 = vadd.f32 %v2415, 1.0
    %v2417 = vrcp.pop %v2416
    %v2418 = vmul.f32 1.0, %v2417
    %v2420 = vrot.slane %v2411, 2
    %v2422 = vadd.f32 %v2420, %v2365
    %v2423 = vxor.u32 %v2422, 2147483648
    %v2424 = vmul.f32 %v2423, 1.442695
    %v2425 = vpow.pop %v2424
    %v2426 = vadd.f32 %v2425, 1.0
    %v2427 = vrcp.pop %v2426
    %v2428 = vmul.f32 1.0, %v2427
    %v2429 = vmul.f32 %v2418, %v2404
    %v2430 = vrot.slane %v2411, 4
    %v2432 = vadd.f32 %v2430, %v2429
    %v2433 = vtanh.pop %v2432
    %v2434 = vsub.f32 1.0, %v2428
    %v2435 = vmul.f32 %v2434, %v2433
    %v2436 = vmul.f32 %v2428, %v2164
    %v2437 = vadd.f32 %v2435, %v2436
    %v2438 = vpack.c.bf16 %v2437, %v2437
    %s2439 = scalar_lea.vmem [#allocation3], 5
    %2440 = vst [vmem:[%s2439] sm:$0x1] %v2438
    %v2441 = vld [vmem:[#allocation10] sm:$0xff]
    %v2442 = vld [vmem:[#allocation10 + $0x8] sm:$0xf]
    %v2443 = vld [vmem:[#allocation10 + $0xc] sm:$0xff]
    %v2444 = vld [vmem:[#allocation10 + $0x14] sm:$0xf]
    %v2445 = vld [vmem:[#allocation10 + $0x18] sm:$0xff]
    %v2446 = vld [vmem:[#allocation10 + $0x20] sm:$0xf]
    %v2447 = vld [vmem:[#allocation10 + $0x24] sm:$0xff]
    %v2448 = vld [vmem:[#allocation10 + $0x2c] sm:$0xf]
    %v2449 = vld [vmem:[#allocation10 + $0x30] sm:$0xff]
    %v2450 = vld [vmem:[#allocation10 + $0x38] sm:$0xf]
    %v2451 = vld [vmem:[#allocation10 + $0x3c] sm:$0xff]
    %v2452 = vld [vmem:[#allocation10 + $0x44] sm:$0xf]
    %v2453 = vld [vmem:[#allocation10 + $0x48] sm:$0xff]
    %v2454 = vld [vmem:[#allocation10 + $0x50] sm:$0xf]
    %v2455 = vld [vmem:[#allocation10 + $0x54] sm:$0xff]
    %v2456 = vld [vmem:[#allocation10 + $0x5c] sm:$0xf]
    %v2457 = vld [vmem:[#allocation10 + $0x60] sm:$0xff]
    %v2458 = vld [vmem:[#allocation10 + $0x68] sm:$0xf]
    %v2459 = vld [vmem:[#allocation10 + $0x6c] sm:$0xff]
    %v2460 = vld [vmem:[#allocation10 + $0x74] sm:$0xf]
    %v2461 = vld [vmem:[#allocation10 + $0x78] sm:$0xff]
    %v2462 = vld [vmem:[#allocation10 + $0x80] sm:$0xf]
    %v2463 = vld [vmem:[#allocation10 + $0x84] sm:$0xff]
    %v2464 = vld [vmem:[#allocation10 + $0x8c] sm:$0xf]
    %v2465 = vld [vmem:[#allocation10 + $0x90] sm:$0xff]
    %v2466 = vld [vmem:[#allocation10 + $0x98] sm:$0xf]
    %v2467 = vld [vmem:[#allocation10 + $0x9c] sm:$0xff]
    %v2468 = vld [vmem:[#allocation10 + $0xa4] sm:$0xf]
    %v2469 = vld [vmem:[#allocation10 + $0xa8] sm:$0xff]
    %v2470 = vld [vmem:[#allocation10 + $0xb0] sm:$0xf]
    %v2471 = vld [vmem:[#allocation10 + $0xb4] sm:$0xff]
    %v2472 = vld [vmem:[#allocation10 + $0xbc] sm:$0xf]
    %v2505 = vunpack.c.l.b16 %v2441
    %v2506 = vunpack.c.h.b16 %v2441
    %v2507 = vunpack.c.l.b16 %v2442
    %v2508 = vunpack.c.l.b16 %v2443
    %v2509 = vunpack.c.h.b16 %v2443
    %v2510 = vunpack.c.l.b16 %v2444
    %v2511 = vunpack.c.l.b16 %v2445
    %v2512 = vunpack.c.h.b16 %v2445
    %v2513 = vunpack.c.l.b16 %v2446
    %v2514 = vunpack.c.l.b16 %v2447
    %v2515 = vunpack.c.h.b16 %v2447
    %v2516 = vunpack.c.l.b16 %v2448
    %v2517 = vunpack.c.l.b16 %v2449
    %v2518 = vunpack.c.h.b16 %v2449
    %v2519 = vunpack.c.l.b16 %v2450
    %v2520 = vunpack.c.l.b16 %v2451
    %v2521 = vunpack.c.h.b16 %v2451
    %v2522 = vunpack.c.l.b16 %v2452
    %v2523 = vunpack.c.l.b16 %v2453
    %v2524 = vunpack.c.h.b16 %v2453
    %v2525 = vunpack.c.l.b16 %v2454
    %v2526 = vunpack.c.l.b16 %v2455
    %v2527 = vunpack.c.h.b16 %v2455
    %v2528 = vunpack.c.l.b16 %v2456
    %v2529 = vunpack.c.l.b16 %v2457
    %v2530 = vunpack.c.h.b16 %v2457
    %v2531 = vunpack.c.l.b16 %v2458
    %v2532 = vunpack.c.l.b16 %v2459
    %v2533 = vunpack.c.h.b16 %v2459
    %v2534 = vunpack.c.l.b16 %v2460
    %v2535 = vunpack.c.l.b16 %v2461
    %v2536 = vunpack.c.h.b16 %v2461
    %v2537 = vunpack.c.l.b16 %v2462
    %v2538 = vunpack.c.l.b16 %v2463
    %v2539 = vunpack.c.h.b16 %v2463
    %v2540 = vunpack.c.l.b16 %v2464
    %v2541 = vunpack.c.l.b16 %v2465
    %v2542 = vunpack.c.h.b16 %v2465
    %v2543 = vunpack.c.l.b16 %v2466
    %v2544 = vunpack.c.l.b16 %v2467
    %v2545 = vunpack.c.h.b16 %v2467
    %v2546 = vunpack.c.l.b16 %v2468
    %v2547 = vunpack.c.l.b16 %v2469
    %v2548 = vunpack.c.h.b16 %v2469
    %v2549 = vunpack.c.l.b16 %v2470
    %v2550 = vunpack.c.l.b16 %v2471
    %v2551 = vunpack.c.h.b16 %v2471
    %v2552 = vunpack.c.l.b16 %v2472
    %v2553 = vpack.c.b16 %v2508, %v2505
    %v2554 = vpack.c.b16 %v2509, %v2506
    %v2555 = vpack.c.b16 %v2510, %v2507
    %v2556 = vpack.c.b16 %v2514, %v2511
    %v2557 = vpack.c.b16 %v2515, %v2512
    %v2558 = vpack.c.b16 %v2516, %v2513
    %v2559 = vpack.c.b16 %v2520, %v2517
    %v2560 = vpack.c.b16 %v2521, %v2518
    %v2561 = vpack.c.b16 %v2522, %v2519
    %v2562 = vpack.c.b16 %v2526, %v2523
    %v2563 = vpack.c.b16 %v2527, %v2524
    %v2564 = vpack.c.b16 %v2528, %v2525
    %v2565 = vpack.c.b16 %v2532, %v2529
    %v2566 = vpack.c.b16 %v2533, %v2530
    %v2567 = vpack.c.b16 %v2534, %v2531
    %v2568 = vpack.c.b16 %v2538, %v2535
    %v2569 = vpack.c.b16 %v2539, %v2536
    %v2570 = vpack.c.b16 %v2540, %v2537
    %v2571 = vpack.c.b16 %v2544, %v2541
    %v2572 = vpack.c.b16 %v2545, %v2542
    %v2573 = vpack.c.b16 %v2546, %v2543
    %v2574 = vpack.c.b16 %v2550, %v2547
    %v2575 = vpack.c.b16 %v2551, %v2548
    %v2576 = vpack.c.b16 %v2552, %v2549
    %2601 = vmatprep.subr.bf16.mxu0 %v2575
    %2602 = vmatpush1.bf16.msra.mxu0 %v2574
    %2603 = vmatprep.subr.bf16.mxu0 %v2572
    %2604 = vmatpush1.bf16.msra.mxu0 %v2571
    %2605 = vmatprep.subr.bf16.mxu0 %v2569
    %2606 = vmatpush1.bf16.msra.mxu0 %v2568
    %2607 = vmatprep.subr.bf16.mxu0 %v2566
    %2608 = vmatpush1.bf16.msra.mxu0 %v2565
    %2609 = vmatprep.subr.bf16.mxu0 %v2563
    %2610 = vmatpush1.bf16.msra.mxu0 %v2562
    %2611 = vmatprep.subr.bf16.mxu0 %v2560
    %2612 = vmatpush1.bf16.msra.mxu0 %v2559
    %2613 = vmatprep.subr.bf16.mxu0 %v2557
    %2614 = vmatpush1.bf16.msra.mxu0 %v2556
    %2615 = vmatprep.subr.bf16.mxu0 %v2554
    %2616 = vmatpush1.bf16.msra.mxu0 %v2553
    %2617 = vmatprep.subr.bf16.mxu0 0
    %2618 = vmatpush2.bf16.msra.mxu0 0
    %2619 = vmatprep.subr.bf16.mxu0 0
    %2620 = vmatpush2.bf16.msra.mxu0 0
    %2621 = vmatprep.subr.bf16.mxu0 0
    %2622 = vmatpush2.bf16.msra.mxu0 0
    %2623 = vmatprep.subr.bf16.mxu0 0
    %2624 = vmatpush2.bf16.msra.mxu0 0
    %2625 = vmatprep.subr.bf16.mxu0 0
    %2626 = vmatpush2.bf16.msra.mxu0 0
    %2627 = vmatprep.subr.bf16.mxu0 0
    %2628 = vmatpush2.bf16.msra.mxu0 0
    %2629 = vmatprep.subr.bf16.mxu0 0
    %2630 = vmatpush2.bf16.msra.mxu0 0
    %2631 = vmatprep.subr.bf16.mxu0 0
    %2632 = vmatpush2.bf16.msra.mxu0 0
    %2633 = vmatprep.mubr.bf16.mxu0 0
    %2634 = vmatmul.mubr.bf16.gmra.mxu0 %v2438
    %v2635 = vpop.f32.mrf.mxu0
    %v2636 = vadd.f32 %v825, %v2635
    %v2637 = vpop.f32.mrf.mxu0
    %v2638 = vadd.f32 %v829, %v2637
    %v2639 = vpop.f32.mrf.mxu0
    %v2640 = vpop.f32.mrf.mxu0
    %2641 = vdwg.mxu0
    %2642 = vmatprep.subr.bf16.mxu0 0
    %2643 = vmatpush1.bf16.msra.mxu0 %v2576
    %2644 = vmatprep.subr.bf16.mxu0 0
    %2645 = vmatpush1.bf16.msra.mxu0 %v2573
    %2646 = vmatprep.subr.bf16.mxu0 0
    %2647 = vmatpush1.bf16.msra.mxu0 %v2570
    %2648 = vmatprep.subr.bf16.mxu0 0
    %2649 = vmatpush1.bf16.msra.mxu0 %v2567
    %2650 = vmatprep.subr.bf16.mxu0 0
    %2651 = vmatpush1.bf16.msra.mxu0 %v2564
    %2652 = vmatprep.subr.bf16.mxu0 0
    %2653 = vmatpush1.bf16.msra.mxu0 %v2561
    %2654 = vmatprep.subr.bf16.mxu0 0
    %2655 = vmatpush1.bf16.msra.mxu0 %v2558
    %2656 = vmatprep.subr.bf16.mxu0 0
    %2657 = vmatpush1.bf16.msra.mxu0 %v2555
    %2658 = vmatprep.subr.bf16.mxu0 0
    %2659 = vmatpush2.bf16.msra.mxu0 0
    %2660 = vmatprep.subr.bf16.mxu0 0
    %2661 = vmatpush2.bf16.msra.mxu0 0
    %2662 = vmatprep.subr.bf16.mxu0 0
    %2663 = vmatpush2.bf16.msra.mxu0 0
    %2664 = vmatprep.subr.bf16.mxu0 0
    %2665 = vmatpush2.bf16.msra.mxu0 0
    %2666 = vmatprep.subr.bf16.mxu0 0
    %2667 = vmatpush2.bf16.msra.mxu0 0
    %2668 = vmatprep.subr.bf16.mxu0 0
    %2669 = vmatpush2.bf16.msra.mxu0 0
    %2670 = vmatprep.subr.bf16.mxu0 0
    %2671 = vmatpush2.bf16.msra.mxu0 0
    %2672 = vmatprep.subr.bf16.mxu0 0
    %2673 = vmatpush2.bf16.msra.mxu0 0
    %2674 = vmatprep.mubr.bf16.mxu0 0
    %2675 = vmatmul.mubr.bf16.gmra.mxu0 %v2438
    %v2676 = vpop.f32.mrf.mxu0
    %v2677 = vadd.f32 %v833, %v2676
    %v2678 = vpop.f32.mrf.mxu0
    %v2679 = vpop.f32.mrf.mxu0
    %v2680 = vpop.f32.mrf.mxu0
    %2681 = vdwg.mxu0
    %s2682 = scalar_lea.vmem [#allocation2], 18
    %v2683 = vld [vmem:[%s2682] sm:$0x7]
    %v2684 = vunpack.c.l.bf16 %v2683
    %v2685 = vadd.f32 %v2684, %v2636
    %v2686 = vxor.u32 %v2685, 2147483648
    %v2687 = vmul.f32 %v2686, 1.442695
    %v2688 = vpow.pop %v2687
    %v2689 = vadd.f32 %v2688, 1.0
    %v2690 = vrcp.pop %v2689
    %v2691 = vmul.f32 1.0, %v2690
    %v2693 = vrot.slane %v2684, 2
    %v2695 = vadd.f32 %v2693, %v2638
    %v2696 = vxor.u32 %v2695, 2147483648
    %v2697 = vmul.f32 %v2696, 1.442695
    %v2698 = vpow.pop %v2697
    %v2699 = vadd.f32 %v2698, 1.0
    %v2700 = vrcp.pop %v2699
    %v2701 = vmul.f32 1.0, %v2700
    %v2702 = vmul.f32 %v2691, %v2677
    %v2703 = vrot.slane %v2684, 4
    %v2705 = vadd.f32 %v2703, %v2702
    %v2706 = vtanh.pop %v2705
    %v2707 = vsub.f32 1.0, %v2701
    %v2708 = vmul.f32 %v2707, %v2706
    %v2709 = vmul.f32 %v2701, %v2437
    %v2710 = vadd.f32 %v2708, %v2709
    %v2711 = vpack.c.bf16 %v2710, %v2710
    %s2712 = scalar_lea.vmem [#allocation3], 6
    %2713 = vst [vmem:[%s2712] sm:$0x1] %v2711
    %v2714 = vld [vmem:[#allocation10] sm:$0xff]
    %v2715 = vld [vmem:[#allocation10 + $0x8] sm:$0xf]
    %v2716 = vld [vmem:[#allocation10 + $0xc] sm:$0xff]
    %v2717 = vld [vmem:[#allocation10 + $0x14] sm:$0xf]
    %v2718 = vld [vmem:[#allocation10 + $0x18] sm:$0xff]
    %v2719 = vld [vmem:[#allocation10 + $0x20] sm:$0xf]
    %v2720 = vld [vmem:[#allocation10 + $0x24] sm:$0xff]
    %v2721 = vld [vmem:[#allocation10 + $0x2c] sm:$0xf]
    %v2722 = vld [vmem:[#allocation10 + $0x30] sm:$0xff]
    %v2723 = vld [vmem:[#allocation10 + $0x38] sm:$0xf]
    %v2724 = vld [vmem:[#allocation10 + $0x3c] sm:$0xff]
    %v2725 = vld [vmem:[#allocation10 + $0x44] sm:$0xf]
    %v2726 = vld [vmem:[#allocation10 + $0x48] sm:$0xff]
    %v2727 = vld [vmem:[#allocation10 + $0x50] sm:$0xf]
    %v2728 = vld [vmem:[#allocation10 + $0x54] sm:$0xff]
    %v2729 = vld [vmem:[#allocation10 + $0x5c] sm:$0xf]
    %v2730 = vld [vmem:[#allocation10 + $0x60] sm:$0xff]
    %v2731 = vld [vmem:[#allocation10 + $0x68] sm:$0xf]
    %v2732 = vld [vmem:[#allocation10 + $0x6c] sm:$0xff]
    %v2733 = vld [vmem:[#allocation10 + $0x74] sm:$0xf]
    %v2734 = vld [vmem:[#allocation10 + $0x78] sm:$0xff]
    %v2735 = vld [vmem:[#allocation10 + $0x80] sm:$0xf]
    %v2736 = vld [vmem:[#allocation10 + $0x84] sm:$0xff]
    %v2737 = vld [vmem:[#allocation10 + $0x8c] sm:$0xf]
    %v2738 = vld [vmem:[#allocation10 + $0x90] sm:$0xff]
    %v2739 = vld [vmem:[#allocation10 + $0x98] sm:$0xf]
    %v2740 = vld [vmem:[#allocation10 + $0x9c] sm:$0xff]
    %v2741 = vld [vmem:[#allocation10 + $0xa4] sm:$0xf]
    %v2742 = vld [vmem:[#allocation10 + $0xa8] sm:$0xff]
    %v2743 = vld [vmem:[#allocation10 + $0xb0] sm:$0xf]
    %v2744 = vld [vmem:[#allocation10 + $0xb4] sm:$0xff]
    %v2745 = vld [vmem:[#allocation10 + $0xbc] sm:$0xf]
    %v2778 = vunpack.c.l.b16 %v2714
    %v2779 = vunpack.c.h.b16 %v2714
    %v2780 = vunpack.c.l.b16 %v2715
    %v2781 = vunpack.c.l.b16 %v2716
    %v2782 = vunpack.c.h.b16 %v2716
    %v2783 = vunpack.c.l.b16 %v2717
    %v2784 = vunpack.c.l.b16 %v2718
    %v2785 = vunpack.c.h.b16 %v2718
    %v2786 = vunpack.c.l.b16 %v2719
    %v2787 = vunpack.c.l.b16 %v2720
    %v2788 = vunpack.c.h.b16 %v2720
    %v2789 = vunpack.c.l.b16 %v2721
    %v2790 = vunpack.c.l.b16 %v2722
    %v2791 = vunpack.c.h.b16 %v2722
    %v2792 = vunpack.c.l.b16 %v2723
    %v2793 = vunpack.c.l.b16 %v2724
    %v2794 = vunpack.c.h.b16 %v2724
    %v2795 = vunpack.c.l.b16 %v2725
    %v2796 = vunpack.c.l.b16 %v2726
    %v2797 = vunpack.c.h.b16 %v2726
    %v2798 = vunpack.c.l.b16 %v2727
    %v2799 = vunpack.c.l.b16 %v2728
    %v2800 = vunpack.c.h.b16 %v2728
    %v2801 = vunpack.c.l.b16 %v2729
    %v2802 = vunpack.c.l.b16 %v2730
    %v2803 = vunpack.c.h.b16 %v2730
    %v2804 = vunpack.c.l.b16 %v2731
    %v2805 = vunpack.c.l.b16 %v2732
    %v2806 = vunpack.c.h.b16 %v2732
    %v2807 = vunpack.c.l.b16 %v2733
    %v2808 = vunpack.c.l.b16 %v2734
    %v2809 = vunpack.c.h.b16 %v2734
    %v2810 = vunpack.c.l.b16 %v2735
    %v2811 = vunpack.c.l.b16 %v2736
    %v2812 = vunpack.c.h.b16 %v2736
    %v2813 = vunpack.c.l.b16 %v2737
    %v2814 = vunpack.c.l.b16 %v2738
    %v2815 = vunpack.c.h.b16 %v2738
    %v2816 = vunpack.c.l.b16 %v2739
    %v2817 = vunpack.c.l.b16 %v2740
    %v2818 = vunpack.c.h.b16 %v2740
    %v2819 = vunpack.c.l.b16 %v2741
    %v2820 = vunpack.c.l.b16 %v2742
    %v2821 = vunpack.c.h.b16 %v2742
    %v2822 = vunpack.c.l.b16 %v2743
    %v2823 = vunpack.c.l.b16 %v2744
    %v2824 = vunpack.c.h.b16 %v2744
    %v2825 = vunpack.c.l.b16 %v2745
    %v2826 = vpack.c.b16 %v2781, %v2778
    %v2827 = vpack.c.b16 %v2782, %v2779
    %v2828 = vpack.c.b16 %v2783, %v2780
    %v2829 = vpack.c.b16 %v2787, %v2784
    %v2830 = vpack.c.b16 %v2788, %v2785
    %v2831 = vpack.c.b16 %v2789, %v2786
    %v2832 = vpack.c.b16 %v2793, %v2790
    %v2833 = vpack.c.b16 %v2794, %v2791
    %v2834 = vpack.c.b16 %v2795, %v2792
    %v2835 = vpack.c.b16 %v2799, %v2796
    %v2836 = vpack.c.b16 %v2800, %v2797
    %v2837 = vpack.c.b16 %v2801, %v2798
    %v2838 = vpack.c.b16 %v2805, %v2802
    %v2839 = vpack.c.b16 %v2806, %v2803
    %v2840 = vpack.c.b16 %v2807, %v2804
    %v2841 = vpack.c.b16 %v2811, %v2808
    %v2842 = vpack.c.b16 %v2812, %v2809
    %v2843 = vpack.c.b16 %v2813, %v2810
    %v2844 = vpack.c.b16 %v2817, %v2814
    %v2845 = vpack.c.b16 %v2818, %v2815
    %v2846 = vpack.c.b16 %v2819, %v2816
    %v2847 = vpack.c.b16 %v2823, %v2820
    %v2848 = vpack.c.b16 %v2824, %v2821
    %v2849 = vpack.c.b16 %v2825, %v2822
    %2874 = vmatprep.subr.bf16.mxu0 %v2848
    %2875 = vmatpush1.bf16.msra.mxu0 %v2847
    %2876 = vmatprep.subr.bf16.mxu0 %v2845
    %2877 = vmatpush1.bf16.msra.mxu0 %v2844
    %2878 = vmatprep.subr.bf16.mxu0 %v2842
    %2879 = vmatpush1.bf16.msra.mxu0 %v2841
    %2880 = vmatprep.subr.bf16.mxu0 %v2839
    %2881 = vmatpush1.bf16.msra.mxu0 %v2838
    %2882 = vmatprep.subr.bf16.mxu0 %v2836
    %2883 = vmatpush1.bf16.msra.mxu0 %v2835
    %2884 = vmatprep.subr.bf16.mxu0 %v2833
    %2885 = vmatpush1.bf16.msra.mxu0 %v2832
    %2886 = vmatprep.subr.bf16.mxu0 %v2830
    %2887 = vmatpush1.bf16.msra.mxu0 %v2829
    %2888 = vmatprep.subr.bf16.mxu0 %v2827
    %2889 = vmatpush1.bf16.msra.mxu0 %v2826
    %2890 = vmatprep.subr.bf16.mxu0 0
    %2891 = vmatpush2.bf16.msra.mxu0 0
    %2892 = vmatprep.subr.bf16.mxu0 0
    %2893 = vmatpush2.bf16.msra.mxu0 0
    %2894 = vmatprep.subr.bf16.mxu0 0
    %2895 = vmatpush2.bf16.msra.mxu0 0
    %2896 = vmatprep.subr.bf16.mxu0 0
    %2897 = vmatpush2.bf16.msra.mxu0 0
    %2898 = vmatprep.subr.bf16.mxu0 0
    %2899 = vmatpush2.bf16.msra.mxu0 0
    %2900 = vmatprep.subr.bf16.mxu0 0
    %2901 = vmatpush2.bf16.msra.mxu0 0
    %2902 = vmatprep.subr.bf16.mxu0 0
    %2903 = vmatpush2.bf16.msra.mxu0 0
    %2904 = vmatprep.subr.bf16.mxu0 0
    %2905 = vmatpush2.bf16.msra.mxu0 0
    %2906 = vmatprep.mubr.bf16.mxu0 0
    %2907 = vmatmul.mubr.bf16.gmra.mxu0 %v2711
    %v2908 = vpop.f32.mrf.mxu0
    %v2909 = vadd.f32 %v825, %v2908
    %v2910 = vpop.f32.mrf.mxu0
    %v2911 = vadd.f32 %v829, %v2910
    %v2912 = vpop.f32.mrf.mxu0
    %v2913 = vpop.f32.mrf.mxu0
    %2914 = vdwg.mxu0
    %2915 = vmatprep.subr.bf16.mxu0 0
    %2916 = vmatpush1.bf16.msra.mxu0 %v2849
    %2917 = vmatprep.subr.bf16.mxu0 0
    %2918 = vmatpush1.bf16.msra.mxu0 %v2846
    %2919 = vmatprep.subr.bf16.mxu0 0
    %2920 = vmatpush1.bf16.msra.mxu0 %v2843
    %2921 = vmatprep.subr.bf16.mxu0 0
    %2922 = vmatpush1.bf16.msra.mxu0 %v2840
    %2923 = vmatprep.subr.bf16.mxu0 0
    %2924 = vmatpush1.bf16.msra.mxu0 %v2837
    %2925 = vmatprep.subr.bf16.mxu0 0
    %2926 = vmatpush1.bf16.msra.mxu0 %v2834
    %2927 = vmatprep.subr.bf16.mxu0 0
    %2928 = vmatpush1.bf16.msra.mxu0 %v2831
    %2929 = vmatprep.subr.bf16.mxu0 0
    %2930 = vmatpush1.bf16.msra.mxu0 %v2828
    %2931 = vmatprep.subr.bf16.mxu0 0
    %2932 = vmatpush2.bf16.msra.mxu0 0
    %2933 = vmatprep.subr.bf16.mxu0 0
    %2934 = vmatpush2.bf16.msra.mxu0 0
    %2935 = vmatprep.subr.bf16.mxu0 0
    %2936 = vmatpush2.bf16.msra.mxu0 0
    %2937 = vmatprep.subr.bf16.mxu0 0
    %2938 = vmatpush2.bf16.msra.mxu0 0
    %2939 = vmatprep.subr.bf16.mxu0 0
    %2940 = vmatpush2.bf16.msra.mxu0 0
    %2941 = vmatprep.subr.bf16.mxu0 0
    %2942 = vmatpush2.bf16.msra.mxu0 0
    %2943 = vmatprep.subr.bf16.mxu0 0
    %2944 = vmatpush2.bf16.msra.mxu0 0
    %2945 = vmatprep.subr.bf16.mxu0 0
    %2946 = vmatpush2.bf16.msra.mxu0 0
    %2947 = vmatprep.mubr.bf16.mxu0 0
    %2948 = vmatmul.mubr.bf16.gmra.mxu0 %v2711
    %v2949 = vpop.f32.mrf.mxu0
    %v2950 = vadd.f32 %v833, %v2949
    %v2951 = vpop.f32.mrf.mxu0
    %v2952 = vpop.f32.mrf.mxu0
    %v2953 = vpop.f32.mrf.mxu0
    %2954 = vdwg.mxu0
    %s2955 = scalar_lea.vmem [#allocation2], 21
    %v2956 = vld [vmem:[%s2955] sm:$0x7]
    %v2957 = vunpack.c.l.bf16 %v2956
    %v2958 = vadd.f32 %v2957, %v2909
    %v2959 = vxor.u32 %v2958, 2147483648
    %v2960 = vmul.f32 %v2959, 1.442695
    %v2961 = vpow.pop %v2960
    %v2962 = vadd.f32 %v2961, 1.0
    %v2963 = vrcp.pop %v2962
    %v2964 = vmul.f32 1.0, %v2963
    %v2966 = vrot.slane %v2957, 2
    %v2968 = vadd.f32 %v2966, %v2911
    %v2969 = vxor.u32 %v2968, 2147483648
    %v2970 = vmul.f32 %v2969, 1.442695
    %v2971 = vpow.pop %v2970
    %v2972 = vadd.f32 %v2971, 1.0
    %v2973 = vrcp.pop %v2972
    %v2974 = vmul.f32 1.0, %v2973
    %v2975 = vmul.f32 %v2964, %v2950
    %v2976 = vrot.slane %v2957, 4
    %v2978 = vadd.f32 %v2976, %v2975
    %v2979 = vtanh.pop %v2978
    %v2980 = vsub.f32 1.0, %v2974
    %v2981 = vmul.f32 %v2980, %v2979
    %v2982 = vmul.f32 %v2974, %v2710
    %v2983 = vadd.f32 %v2981, %v2982
    %v2984 = vpack.c.bf16 %v2983, %v2983
    %s2985 = scalar_lea.vmem [#allocation3], 7
    %2986 = vst [vmem:[%s2985] sm:$0x1] %v2984
    %v2987 = vld [vmem:[#allocation11] sm:$0xf]
    %v2988 = vld [vmem:[#allocation11 + $0x4] sm:$0xf]
    %v2989 = vld [vmem:[#allocation11 + $0x8] sm:$0xf]
    %v2990 = vld [vmem:[#allocation11 + $0xc] sm:$0xf]
    %v2991 = vld [vmem:[#allocation11 + $0x10] sm:$0xf]
    %v2992 = vld [vmem:[#allocation11 + $0x14] sm:$0xf]
    %v2993 = vld [vmem:[#allocation11 + $0x18] sm:$0xf]
    %v2994 = vld [vmem:[#allocation11 + $0x1c] sm:$0xf]
    %v2995 = vld [vmem:[#allocation11 + $0x20] sm:$0xf]
    %v2996 = vld [vmem:[#allocation11 + $0x24] sm:$0xf]
    %v2997 = vld [vmem:[#allocation11 + $0x28] sm:$0xf]
    %v2998 = vld [vmem:[#allocation11 + $0x2c] sm:$0xf]
    %v2999 = vld [vmem:[#allocation11 + $0x30] sm:$0xf]
    %v3000 = vld [vmem:[#allocation11 + $0x34] sm:$0xf]
    %v3001 = vld [vmem:[#allocation11 + $0x38] sm:$0xf]
    %v3002 = vld [vmem:[#allocation11 + $0x3c] sm:$0xf]
    %v3003 = vld [vmem:[#allocation13] sm:$0xff]
    %v3004 = vld [vmem:[#allocation13 + $0x8] sm:$0xf]
    %v3005 = vld [vmem:[#allocation13 + $0xc] sm:$0xff]
    %v3006 = vld [vmem:[#allocation13 + $0x14] sm:$0xf]
    %v3007 = vld [vmem:[#allocation13 + $0x18] sm:$0xff]
    %v3008 = vld [vmem:[#allocation13 + $0x20] sm:$0xf]
    %v3009 = vld [vmem:[#allocation13 + $0x24] sm:$0xff]
    %v3010 = vld [vmem:[#allocation13 + $0x2c] sm:$0xf]
    %v3011 = vld [vmem:[#allocation13 + $0x30] sm:$0xff]
    %v3012 = vld [vmem:[#allocation13 + $0x38] sm:$0xf]
    %v3013 = vld [vmem:[#allocation13 + $0x3c] sm:$0xff]
    %v3014 = vld [vmem:[#allocation13 + $0x44] sm:$0xf]
    %v3015 = vld [vmem:[#allocation13 + $0x48] sm:$0xff]
    %v3016 = vld [vmem:[#allocation13 + $0x50] sm:$0xf]
    %v3017 = vld [vmem:[#allocation13 + $0x54] sm:$0xff]
    %v3018 = vld [vmem:[#allocation13 + $0x5c] sm:$0xf]
    %v3019 = vld [vmem:[#allocation13 + $0x60] sm:$0xff]
    %v3020 = vld [vmem:[#allocation13 + $0x68] sm:$0xf]
    %v3021 = vld [vmem:[#allocation13 + $0x6c] sm:$0xff]
    %v3022 = vld [vmem:[#allocation13 + $0x74] sm:$0xf]
    %v3023 = vld [vmem:[#allocation13 + $0x78] sm:$0xff]
    %v3024 = vld [vmem:[#allocation13 + $0x80] sm:$0xf]
    %v3025 = vld [vmem:[#allocation13 + $0x84] sm:$0xff]
    %v3026 = vld [vmem:[#allocation13 + $0x8c] sm:$0xf]
    %v3027 = vld [vmem:[#allocation13 + $0x90] sm:$0xff]
    %v3028 = vld [vmem:[#allocation13 + $0x98] sm:$0xf]
    %v3029 = vld [vmem:[#allocation13 + $0x9c] sm:$0xff]
    %v3030 = vld [vmem:[#allocation13 + $0xa4] sm:$0xf]
    %v3031 = vld [vmem:[#allocation13 + $0xa8] sm:$0xff]
    %v3032 = vld [vmem:[#allocation13 + $0xb0] sm:$0xf]
    %v3033 = vld [vmem:[#allocation13 + $0xb4] sm:$0xff]
    %v3034 = vld [vmem:[#allocation13 + $0xbc] sm:$0xf]
    %v3051 = vunpack.c.l.b16 %v2987
    %v3052 = vunpack.c.l.b16 %v2988
    %v3053 = vunpack.c.l.b16 %v2989
    %v3054 = vunpack.c.l.b16 %v2990
    %v3055 = vunpack.c.l.b16 %v2991
    %v3056 = vunpack.c.l.b16 %v2992
    %v3057 = vunpack.c.l.b16 %v2993
    %v3058 = vunpack.c.l.b16 %v2994
    %v3059 = vunpack.c.l.b16 %v2995
    %v3060 = vunpack.c.l.b16 %v2996
    %v3061 = vunpack.c.l.b16 %v2997
    %v3062 = vunpack.c.l.b16 %v2998
    %v3063 = vunpack.c.l.b16 %v2999
    %v3064 = vunpack.c.l.b16 %v3000
    %v3065 = vunpack.c.l.b16 %v3001
    %v3066 = vunpack.c.l.b16 %v3002
    %v3067 = vpack.c.b16 %v3052, %v3051
    %v3068 = vpack.c.b16 %v3054, %v3053
    %v3069 = vpack.c.b16 %v3056, %v3055
    %v3070 = vpack.c.b16 %v3058, %v3057
    %v3071 = vpack.c.b16 %v3060, %v3059
    %v3072 = vpack.c.b16 %v3062, %v3061
    %v3073 = vpack.c.b16 %v3064, %v3063
    %v3074 = vpack.c.b16 %v3066, %v3065
    %v3115 = vunpack.c.l.b16 %v3003
    %v3116 = vunpack.c.h.b16 %v3003
    %v3117 = vunpack.c.l.b16 %v3004
    %v3118 = vunpack.c.l.b16 %v3005
    %v3119 = vunpack.c.h.b16 %v3005
    %v3120 = vunpack.c.l.b16 %v3006
    %v3121 = vunpack.c.l.b16 %v3007
    %v3122 = vunpack.c.h.b16 %v3007
    %v3123 = vunpack.c.l.b16 %v3008
    %v3124 = vunpack.c.l.b16 %v3009
    %v3125 = vunpack.c.h.b16 %v3009
    %v3126 = vunpack.c.l.b16 %v3010
    %v3127 = vunpack.c.l.b16 %v3011
    %v3128 = vunpack.c.h.b16 %v3011
    %v3129 = vunpack.c.l.b16 %v3012
    %v3130 = vunpack.c.l.b16 %v3013
    %v3131 = vunpack.c.h.b16 %v3013
    %v3132 = vunpack.c.l.b16 %v3014
    %v3133 = vunpack.c.l.b16 %v3015
    %v3134 = vunpack.c.h.b16 %v3015
    %v3135 = vunpack.c.l.b16 %v3016
    %v3136 = vunpack.c.l.b16 %v3017
    %v3137 = vunpack.c.h.b16 %v3017
    %v3138 = vunpack.c.l.b16 %v3018
    %v3139 = vunpack.c.l.b16 %v3019
    %v3140 = vunpack.c.h.b16 %v3019
    %v3141 = vunpack.c.l.b16 %v3020
    %v3142 = vunpack.c.l.b16 %v3021
    %v3143 = vunpack.c.h.b16 %v3021
    %v3144 = vunpack.c.l.b16 %v3022
    %v3145 = vunpack.c.l.b16 %v3023
    %v3146 = vunpack.c.h.b16 %v3023
    %v3147 = vunpack.c.l.b16 %v3024
    %v3148 = vunpack.c.l.b16 %v3025
    %v3149 = vunpack.c.h.b16 %v3025
    %v3150 = vunpack.c.l.b16 %v3026
    %v3151 = vunpack.c.l.b16 %v3027
    %v3152 = vunpack.c.h.b16 %v3027
    %v3153 = vunpack.c.l.b16 %v3028
    %v3154 = vunpack.c.l.b16 %v3029
    %v3155 = vunpack.c.h.b16 %v3029
    %v3156 = vunpack.c.l.b16 %v3030
    %v3157 = vunpack.c.l.b16 %v3031
    %v3158 = vunpack.c.h.b16 %v3031
    %v3159 = vunpack.c.l.b16 %v3032
    %v3160 = vunpack.c.l.b16 %v3033
    %v3161 = vunpack.c.h.b16 %v3033
    %v3162 = vunpack.c.l.b16 %v3034
    %v3163 = vpack.c.b16 %v3118, %v3115
    %v3164 = vpack.c.b16 %v3119, %v3116
    %v3165 = vpack.c.b16 %v3120, %v3117
    %v3166 = vpack.c.b16 %v3124, %v3121
    %v3167 = vpack.c.b16 %v3125, %v3122
    %v3168 = vpack.c.b16 %v3126, %v3123
    %v3169 = vpack.c.b16 %v3130, %v3127
    %v3170 = vpack.c.b16 %v3131, %v3128
    %v3171 = vpack.c.b16 %v3132, %v3129
    %v3172 = vpack.c.b16 %v3136, %v3133
    %v3173 = vpack.c.b16 %v3137, %v3134
    %v3174 = vpack.c.b16 %v3138, %v3135
    %v3175 = vpack.c.b16 %v3142, %v3139
    %v3176 = vpack.c.b16 %v3143, %v3140
    %v3177 = vpack.c.b16 %v3144, %v3141
    %v3178 = vpack.c.b16 %v3148, %v3145
    %v3179 = vpack.c.b16 %v3149, %v3146
    %v3180 = vpack.c.b16 %v3150, %v3147
    %v3181 = vpack.c.b16 %v3154, %v3151
    %v3182 = vpack.c.b16 %v3155, %v3152
    %v3183 = vpack.c.b16 %v3156, %v3153
    %v3184 = vpack.c.b16 %v3160, %v3157
    %v3185 = vpack.c.b16 %v3161, %v3158
    %v3186 = vpack.c.b16 %v3162, %v3159
    %3211 = vmatprep.subr.bf16.mxu0 %v3185
    %3212 = vmatpush1.bf16.msra.mxu0 %v3184
    %3213 = vmatprep.subr.bf16.mxu0 %v3182
    %3214 = vmatpush1.bf16.msra.mxu0 %v3181
    %3215 = vmatprep.subr.bf16.mxu0 %v3179
    %3216 = vmatpush1.bf16.msra.mxu0 %v3178
    %3217 = vmatprep.subr.bf16.mxu0 %v3176
    %3218 = vmatpush1.bf16.msra.mxu0 %v3175
    %3219 = vmatprep.subr.bf16.mxu0 %v3173
    %3220 = vmatpush1.bf16.msra.mxu0 %v3172
    %3221 = vmatprep.subr.bf16.mxu0 %v3170
    %3222 = vmatpush1.bf16.msra.mxu0 %v3169
    %3223 = vmatprep.subr.bf16.mxu0 %v3167
    %3224 = vmatpush1.bf16.msra.mxu0 %v3166
    %3225 = vmatprep.subr.bf16.mxu0 %v3164
    %3226 = vmatpush1.bf16.msra.mxu0 %v3163
    %3227 = vmatprep.subr.bf16.mxu0 0
    %3228 = vmatpush2.bf16.msra.mxu0 0
    %3229 = vmatprep.subr.bf16.mxu0 0
    %3230 = vmatpush2.bf16.msra.mxu0 0
    %3231 = vmatprep.subr.bf16.mxu0 0
    %3232 = vmatpush2.bf16.msra.mxu0 0
    %3233 = vmatprep.subr.bf16.mxu0 0
    %3234 = vmatpush2.bf16.msra.mxu0 0
    %3235 = vmatprep.subr.bf16.mxu0 0
    %3236 = vmatpush2.bf16.msra.mxu0 0
    %3237 = vmatprep.subr.bf16.mxu0 0
    %3238 = vmatpush2.bf16.msra.mxu0 0
    %3239 = vmatprep.subr.bf16.mxu0 0
    %3240 = vmatpush2.bf16.msra.mxu0 0
    %3241 = vmatprep.subr.bf16.mxu0 0
    %3242 = vmatpush2.bf16.msra.mxu0 0
    %3243 = vmatprep.mubr.bf16.mxu0 0
    %3244 = vmatmul.mubr.bf16.gmra.mxu0 %v3067
    %v3245 = vpop.f32.mrf.mxu0
    %v3246 = vadd.f32 0.0, %v3245
    %v3247 = vpop.f32.mrf.mxu0
    %v3248 = vadd.f32 0.0, %v3247
    %v3249 = vpop.f32.mrf.mxu0
    %v3250 = vadd.f32 0.0, %v3249
    %v3251 = vpop.f32.mrf.mxu0
    %v3252 = vadd.f32 0.0, %v3251
    %3253 = vmatprep.mubr.bf16.mxu0 0
    %3254 = vmatmul.mubr.bf16.gmra.mxu0 %v3068
    %v3255 = vpop.f32.mrf.mxu0
    %v3256 = vadd.f32 0.0, %v3255
    %v3257 = vpop.f32.mrf.mxu0
    %v3258 = vadd.f32 0.0, %v3257
    %v3259 = vpop.f32.mrf.mxu0
    %v3260 = vadd.f32 0.0, %v3259
    %v3261 = vpop.f32.mrf.mxu0
    %v3262 = vadd.f32 0.0, %v3261
    %3263 = vmatprep.mubr.bf16.mxu0 0
    %3264 = vmatmul.mubr.bf16.gmra.mxu0 %v3069
    %v3265 = vpop.f32.mrf.mxu0
    %v3266 = vadd.f32 0.0, %v3265
    %v3267 = vpop.f32.mrf.mxu0
    %v3268 = vadd.f32 0.0, %v3267
    %v3269 = vpop.f32.mrf.mxu0
    %v3270 = vadd.f32 0.0, %v3269
    %v3271 = vpop.f32.mrf.mxu0
    %v3272 = vadd.f32 0.0, %v3271
    %3273 = vmatprep.mubr.bf16.mxu0 0
    %3274 = vmatmul.mubr.bf16.gmra.mxu0 %v3070
    %v3275 = vpop.f32.mrf.mxu0
    %v3276 = vadd.f32 0.0, %v3275
    %v3277 = vpop.f32.mrf.mxu0
    %v3278 = vadd.f32 0.0, %v3277
    %v3279 = vpop.f32.mrf.mxu0
    %v3280 = vadd.f32 0.0, %v3279
    %v3281 = vpop.f32.mrf.mxu0
    %v3282 = vadd.f32 0.0, %v3281
    %3283 = vmatprep.mubr.bf16.mxu0 0
    %3284 = vmatmul.mubr.bf16.gmra.mxu0 %v3071
    %v3285 = vpop.f32.mrf.mxu0
    %v3286 = vadd.f32 0.0, %v3285
    %v3287 = vpop.f32.mrf.mxu0
    %v3288 = vadd.f32 0.0, %v3287
    %v3289 = vpop.f32.mrf.mxu0
    %v3290 = vadd.f32 0.0, %v3289
    %v3291 = vpop.f32.mrf.mxu0
    %v3292 = vadd.f32 0.0, %v3291
    %3293 = vmatprep.mubr.bf16.mxu0 0
    %3294 = vmatmul.mubr.bf16.gmra.mxu0 %v3072
    %v3295 = vpop.f32.mrf.mxu0
    %v3296 = vadd.f32 0.0, %v3295
    %v3297 = vpop.f32.mrf.mxu0
    %v3298 = vadd.f32 0.0, %v3297
    %v3299 = vpop.f32.mrf.mxu0
    %v3300 = vadd.f32 0.0, %v3299
    %v3301 = vpop.f32.mrf.mxu0
    %v3302 = vadd.f32 0.0, %v3301
    %3303 = vmatprep.mubr.bf16.mxu0 0
    %3304 = vmatmul.mubr.bf16.gmra.mxu0 %v3073
    %v3305 = vpop.f32.mrf.mxu0
    %v3306 = vadd.f32 0.0, %v3305
    %v3307 = vpop.f32.mrf.mxu0
    %v3308 = vadd.f32 0.0, %v3307
    %v3309 = vpop.f32.mrf.mxu0
    %v3310 = vadd.f32 0.0, %v3309
    %v3311 = vpop.f32.mrf.mxu0
    %v3312 = vadd.f32 0.0, %v3311
    %3313 = vmatprep.mubr.bf16.mxu0 0
    %3314 = vmatmul.mubr.bf16.gmra.mxu0 %v3074
    %v3315 = vpop.f32.mrf.mxu0
    %v3316 = vadd.f32 0.0, %v3315
    %v3317 = vpop.f32.mrf.mxu0
    %v3318 = vadd.f32 0.0, %v3317
    %v3319 = vpop.f32.mrf.mxu0
    %v3320 = vadd.f32 0.0, %v3319
    %v3321 = vpop.f32.mrf.mxu0
    %v3322 = vadd.f32 0.0, %v3321
    %3323 = vdwg.mxu0
    %3324 = vmatprep.subr.bf16.mxu0 0
    %3325 = vmatpush1.bf16.msra.mxu0 %v3186
    %3326 = vmatprep.subr.bf16.mxu0 0
    %3327 = vmatpush1.bf16.msra.mxu0 %v3183
    %3328 = vmatprep.subr.bf16.mxu0 0
    %3329 = vmatpush1.bf16.msra.mxu0 %v3180
    %3330 = vmatprep.subr.bf16.mxu0 0
    %3331 = vmatpush1.bf16.msra.mxu0 %v3177
    %3332 = vmatprep.subr.bf16.mxu0 0
    %3333 = vmatpush1.bf16.msra.mxu0 %v3174
    %3334 = vmatprep.subr.bf16.mxu0 0
    %3335 = vmatpush1.bf16.msra.mxu0 %v3171
    %3336 = vmatprep.subr.bf16.mxu0 0
    %3337 = vmatpush1.bf16.msra.mxu0 %v3168
    %3338 = vmatprep.subr.bf16.mxu0 0
    %3339 = vmatpush1.bf16.msra.mxu0 %v3165
    %3340 = vmatprep.subr.bf16.mxu0 0
    %3341 = vmatpush2.bf16.msra.mxu0 0
    %3342 = vmatprep.subr.bf16.mxu0 0
    %3343 = vmatpush2.bf16.msra.mxu0 0
    %3344 = vmatprep.subr.bf16.mxu0 0
    %3345 = vmatpush2.bf16.msra.mxu0 0
    %3346 = vmatprep.subr.bf16.mxu0 0
    %3347 = vmatpush2.bf16.msra.mxu0 0
    %3348 = vmatprep.subr.bf16.mxu0 0
    %3349 = vmatpush2.bf16.msra.mxu0 0
    %3350 = vmatprep.subr.bf16.mxu0 0
    %3351 = vmatpush2.bf16.msra.mxu0 0
    %3352 = vmatprep.subr.bf16.mxu0 0
    %3353 = vmatpush2.bf16.msra.mxu0 0
    %3354 = vmatprep.subr.bf16.mxu0 0
    %3355 = vmatpush2.bf16.msra.mxu0 0
    %3356 = vmatprep.mubr.bf16.mxu0 0
    %3357 = vmatmul.mubr.bf16.gmra.mxu0 %v3067
    %v3358 = vpop.f32.mrf.mxu0
    %v3359 = vadd.f32 0.0, %v3358
    %v3360 = vpop.f32.mrf.mxu0
    %v3361 = vpop.f32.mrf.mxu0
    %v3362 = vadd.f32 0.0, %v3361
    %v3363 = vpop.f32.mrf.mxu0
    %3364 = vmatprep.mubr.bf16.mxu0 0
    %3365 = vmatmul.mubr.bf16.gmra.mxu0 %v3068
    %v3366 = vpop.f32.mrf.mxu0
    %v3367 = vadd.f32 0.0, %v3366
    %v3368 = vpop.f32.mrf.mxu0
    %v3369 = vpop.f32.mrf.mxu0
    %v3370 = vadd.f32 0.0, %v3369
    %v3371 = vpop.f32.mrf.mxu0
    %3372 = vmatprep.mubr.bf16.mxu0 0
    %3373 = vmatmul.mubr.bf16.gmra.mxu0 %v3069
    %v3374 = vpop.f32.mrf.mxu0
    %v3375 = vadd.f32 0.0, %v3374
    %v3376 = vpop.f32.mrf.mxu0
    %v3377 = vpop.f32.mrf.mxu0
    %v3378 = vadd.f32 0.0, %v3377
    %v3379 = vpop.f32.mrf.mxu0
    %3380 = vmatprep.mubr.bf16.mxu0 0
    %3381 = vmatmul.mubr.bf16.gmra.mxu0 %v3070
    %v3382 = vpop.f32.mrf.mxu0
    %v3383 = vadd.f32 0.0, %v3382
    %v3384 = vpop.f32.mrf.mxu0
    %v3385 = vpop.f32.mrf.mxu0
    %v3386 = vadd.f32 0.0, %v3385
    %v3387 = vpop.f32.mrf.mxu0
    %3388 = vmatprep.mubr.bf16.mxu0 0
    %3389 = vmatmul.mubr.bf16.gmra.mxu0 %v3071
    %v3390 = vpop.f32.mrf.mxu0
    %v3391 = vadd.f32 0.0, %v3390
    %v3392 = vpop.f32.mrf.mxu0
    %v3393 = vpop.f32.mrf.mxu0
    %v3394 = vadd.f32 0.0, %v3393
    %v3395 = vpop.f32.mrf.mxu0
    %3396 = vmatprep.mubr.bf16.mxu0 0
    %3397 = vmatmul.mubr.bf16.gmra.mxu0 %v3072
    %v3398 = vpop.f32.mrf.mxu0
    %v3399 = vadd.f32 0.0, %v3398
    %v3400 = vpop.f32.mrf.mxu0
    %v3401 = vpop.f32.mrf.mxu0
    %v3402 = vadd.f32 0.0, %v3401
    %v3403 = vpop.f32.mrf.mxu0
    %3404 = vmatprep.mubr.bf16.mxu0 0
    %3405 = vmatmul.mubr.bf16.gmra.mxu0 %v3073
    %v3406 = vpop.f32.mrf.mxu0
    %v3407 = vadd.f32 0.0, %v3406
    %v3408 = vpop.f32.mrf.mxu0
    %v3409 = vpop.f32.mrf.mxu0
    %v3410 = vadd.f32 0.0, %v3409
    %v3411 = vpop.f32.mrf.mxu0
    %3412 = vmatprep.mubr.bf16.mxu0 0
    %3413 = vmatmul.mubr.bf16.gmra.mxu0 %v3074
    %v3414 = vpop.f32.mrf.mxu0
    %v3415 = vadd.f32 0.0, %v3414
    %v3416 = vpop.f32.mrf.mxu0
    %v3417 = vpop.f32.mrf.mxu0
    %v3418 = vadd.f32 0.0, %v3417
    %v3419 = vpop.f32.mrf.mxu0
    %3420 = vdwg.mxu0
    %v3421 = vpack.c.bf16 %v3250, %v3246
    %v3422 = vpack.c.bf16 %v3252, %v3248
    %v3423 = vpack.c.bf16 %v3362, %v3359
    %v3424 = vpack.c.bf16 %v3260, %v3256
    %v3425 = vpack.c.bf16 %v3262, %v3258
    %v3426 = vpack.c.bf16 %v3370, %v3367
    %v3427 = vpack.c.bf16 %v3270, %v3266
    %v3428 = vpack.c.bf16 %v3272, %v3268
    %v3429 = vpack.c.bf16 %v3378, %v3375
    %v3430 = vpack.c.bf16 %v3280, %v3276
    %v3431 = vpack.c.bf16 %v3282, %v3278
    %v3432 = vpack.c.bf16 %v3386, %v3383
    %v3433 = vpack.c.bf16 %v3290, %v3286
    %v3434 = vpack.c.bf16 %v3292, %v3288
    %v3435 = vpack.c.bf16 %v3394, %v3391
    %v3436 = vpack.c.bf16 %v3300, %v3296
    %v3437 = vpack.c.bf16 %v3302, %v3298
    %v3438 = vpack.c.bf16 %v3402, %v3399
    %v3439 = vpack.c.bf16 %v3310, %v3306
    %v3440 = vpack.c.bf16 %v3312, %v3308
    %v3441 = vpack.c.bf16 %v3410, %v3407
    %v3442 = vpack.c.bf16 %v3320, %v3316
    %v3443 = vpack.c.bf16 %v3322, %v3318
    %v3444 = vpack.c.bf16 %v3418, %v3415
    %v3445 = vld [vmem:[%s10] sm:$0x7]
    %v3446 = vld [vmem:[%s11] sm:$0x7]
    %v3447 = vld [vmem:[#allocation3] sm:$0x1]
    %v3448 = vld [vmem:[#allocation3 + $0x1] sm:$0x1]
    %v3449 = vld [vmem:[#allocation3 + $0x2] sm:$0x1]
    %v3450 = vld [vmem:[#allocation3 + $0x3] sm:$0x1]
    %v3451 = vld [vmem:[#allocation3 + $0x4] sm:$0x1]
    %v3452 = vld [vmem:[#allocation3 + $0x5] sm:$0x1]
    %v3453 = vld [vmem:[#allocation3 + $0x6] sm:$0x1]
    %v3454 = vld [vmem:[#allocation3 + $0x7] sm:$0x1]
    %v3455 = vunpack.c.l.bf16 %v3447
    %v3456 = vunpack.c.l.bf16 %v3448
    %v3457 = vunpack.c.l.bf16 %v3449
    %v3458 = vunpack.c.l.bf16 %v3450
    %v3459 = vunpack.c.l.bf16 %v3451
    %v3460 = vunpack.c.l.bf16 %v3452
    %v3461 = vunpack.c.l.bf16 %v3453
    %v3462 = vunpack.c.l.bf16 %v3454
    %v3487 = vunpack.c.l.b16 %v3421
    %v3488 = vunpack.c.l.b16 %v3422
    %v3489 = vunpack.c.l.b16 %v3423
    %v3490 = vunpack.c.h.b16 %v3421
    %v3491 = vunpack.c.h.b16 %v3422
    %v3492 = vunpack.c.h.b16 %v3423
    %v3493 = vunpack.c.l.b16 %v3424
    %v3494 = vunpack.c.l.b16 %v3425
    %v3495 = vunpack.c.l.b16 %v3426
    %v3496 = vunpack.c.h.b16 %v3424
    %v3497 = vunpack.c.h.b16 %v3425
    %v3498 = vunpack.c.h.b16 %v3426
    %v3499 = vunpack.c.l.b16 %v3427
    %v3500 = vunpack.c.l.b16 %v3428
    %v3501 = vunpack.c.l.b16 %v3429
    %v3502 = vunpack.c.h.b16 %v3427
    %v3503 = vunpack.c.h.b16 %v3428
    %v3504 = vunpack.c.h.b16 %v3429
    %v3505 = vunpack.c.l.b16 %v3430
    %v3506 = vunpack.c.l.b16 %v3431
    %v3507 = vunpack.c.l.b16 %v3432
    %v3508 = vunpack.c.h.b16 %v3430
    %v3509 = vunpack.c.h.b16 %v3431
    %v3510 = vunpack.c.h.b16 %v3432
    %v3511 = vunpack.c.l.b16 %v3433
    %v3512 = vunpack.c.l.b16 %v3434
    %v3513 = vunpack.c.l.b16 %v3435
    %v3514 = vunpack.c.h.b16 %v3433
    %v3515 = vunpack.c.h.b16 %v3434
    %v3516 = vunpack.c.h.b16 %v3435
    %v3517 = vunpack.c.l.b16 %v3436
    %v3518 = vunpack.c.l.b16 %v3437
    %v3519 = vunpack.c.l.b16 %v3438
    %v3520 = vunpack.c.h.b16 %v3436
    %v3521 = vunpack.c.h.b16 %v3437
    %v3522 = vunpack.c.h.b16 %v3438
    %v3523 = vunpack.c.l.b16 %v3439
    %v3524 = vunpack.c.l.b16 %v3440
    %v3525 = vunpack.c.l.b16 %v3441
    %v3526 = vunpack.c.h.b16 %v3439
    %v3527 = vunpack.c.h.b16 %v3440
    %v3528 = vunpack.c.h.b16 %v3441
    %v3529 = vunpack.c.l.b16 %v3442
    %v3530 = vunpack.c.l.b16 %v3443
    %v3531 = vunpack.c.l.b16 %v3444
    %v3532 = vunpack.c.h.b16 %v3442
    %v3533 = vunpack.c.h.b16 %v3443
    %v3534 = vunpack.c.h.b16 %v3444
    %v3535 = vpack.c.b16 %v3488, %v3487
    %v3536 = vpack.c.b16 %v3489, %v3489
    %v3537 = vpack.c.b16 %v3491, %v3490
    %v3538 = vpack.c.b16 %v3492, %v3492
    %v3539 = vpack.c.b16 %v3494, %v3493
    %v3540 = vpack.c.b16 %v3495, %v3495
    %v3541 = vpack.c.b16 %v3497, %v3496
    %v3542 = vpack.c.b16 %v3498, %v3498
    %v3543 = vpack.c.b16 %v3500, %v3499
    %v3544 = vpack.c.b16 %v3501, %v3501
    %v3545 = vpack.c.b16 %v3503, %v3502
    %v3546 = vpack.c.b16 %v3504, %v3504
    %v3547 = vpack.c.b16 %v3506, %v3505
    %v3548 = vpack.c.b16 %v3507, %v3507
    %v3549 = vpack.c.b16 %v3509, %v3508
    %v3550 = vpack.c.b16 %v3510, %v3510
    %v3551 = vpack.c.b16 %v3512, %v3511
    %v3552 = vpack.c.b16 %v3513, %v3513
    %v3553 = vpack.c.b16 %v3515, %v3514
    %v3554 = vpack.c.b16 %v3516, %v3516
    %v3555 = vpack.c.b16 %v3518, %v3517
    %v3556 = vpack.c.b16 %v3519, %v3519
    %v3557 = vpack.c.b16 %v3521, %v3520
    %v3558 = vpack.c.b16 %v3522, %v3522
    %v3559 = vpack.c.b16 %v3524, %v3523
    %v3560 = vpack.c.b16 %v3525, %v3525
    %v3561 = vpack.c.b16 %v3527, %v3526
    %v3562 = vpack.c.b16 %v3528, %v3528
    %v3563 = vpack.c.b16 %v3530, %v3529
    %v3564 = vpack.c.b16 %v3531, %v3531
    %v3565 = vpack.c.b16 %v3533, %v3532
    %v3566 = vpack.c.b16 %v3534, %v3534
    %3599 = vst [vmem:[#allocation4] sm:$0xff] %v3535
    %3600 = vst [vmem:[#allocation4 + $0x8] sm:$0xf] %v3536
    %3601 = vst [vmem:[#allocation4 + $0xc] sm:$0xff] %v3537
    %3602 = vst [vmem:[#allocation4 + $0x14] sm:$0xf] %v3538
    %3603 = vst [vmem:[#allocation4 + $0x18] sm:$0xff] %v3539
    %3604 = vst [vmem:[#allocation4 + $0x20] sm:$0xf] %v3540
    %3605 = vst [vmem:[#allocation4 + $0x24] sm:$0xff] %v3541
    %3606 = vst [vmem:[#allocation4 + $0x2c] sm:$0xf] %v3542
    %3607 = vst [vmem:[#allocation4 + $0x30] sm:$0xff] %v3543
    %3608 = vst [vmem:[#allocation4 + $0x38] sm:$0xf] %v3544
    %3609 = vst [vmem:[#allocation4 + $0x3c] sm:$0xff] %v3545
    %3610 = vst [vmem:[#allocation4 + $0x44] sm:$0xf] %v3546
    %3611 = vst [vmem:[#allocation4 + $0x48] sm:$0xff] %v3547
    %3612 = vst [vmem:[#allocation4 + $0x50] sm:$0xf] %v3548
    %3613 = vst [vmem:[#allocation4 + $0x54] sm:$0xff] %v3549
    %3614 = vst [vmem:[#allocation4 + $0x5c] sm:$0xf] %v3550
    %3615 = vst [vmem:[#allocation4 + $0x60] sm:$0xff] %v3551
    %3616 = vst [vmem:[#allocation4 + $0x68] sm:$0xf] %v3552
    %3617 = vst [vmem:[#allocation4 + $0x6c] sm:$0xff] %v3553
    %3618 = vst [vmem:[#allocation4 + $0x74] sm:$0xf] %v3554
    %3619 = vst [vmem:[#allocation4 + $0x78] sm:$0xff] %v3555
    %3620 = vst [vmem:[#allocation4 + $0x80] sm:$0xf] %v3556
    %3621 = vst [vmem:[#allocation4 + $0x84] sm:$0xff] %v3557
    %3622 = vst [vmem:[#allocation4 + $0x8c] sm:$0xf] %v3558
    %3623 = vst [vmem:[#allocation4 + $0x90] sm:$0xff] %v3559
    %3624 = vst [vmem:[#allocation4 + $0x98] sm:$0xf] %v3560
    %3625 = vst [vmem:[#allocation4 + $0x9c] sm:$0xff] %v3561
    %3626 = vst [vmem:[#allocation4 + $0xa4] sm:$0xf] %v3562
    %3627 = vst [vmem:[#allocation4 + $0xa8] sm:$0xff] %v3563
    %3628 = vst [vmem:[#allocation4 + $0xb0] sm:$0xf] %v3564
    %3629 = vst [vmem:[#allocation4 + $0xb4] sm:$0xff] %v3565
    %3630 = vst [vmem:[#allocation4 + $0xbc] sm:$0xf] %v3566
    %v3631 = vld [vmem:[%s13] sm:$0x1]
    %v3632 = vld [vmem:[%s5] sm:$0x3]
    %v3633 = vlaneseq
    %v3634 = vand.u32 %v3633, 127
    %3635 = vset.pattern.permute.xlu0 0
    %3636 = vperm.xlu0 %3635, %v3632
    %v3637 = vpop.permute.xlu0 %3636
    %vm3638 = vcmp.eq.s32.totalorder %v3634, %v3637
    %v3639 = vsel %vm3638, 1, 0
    %v3640 = vcvt.s32.f32 %v3639
    %v3641 = vpack.c.bf16 %v3640, %v3640
    %v3642 = vld [vmem:[#allocation4] sm:$0xff]
    %v3643 = vld [vmem:[#allocation4 + $0x8] sm:$0xf]
    %v3644 = vld [vmem:[#allocation4 + $0xc] sm:$0xff]
    %v3645 = vld [vmem:[#allocation4 + $0x14] sm:$0xf]
    %v3646 = vld [vmem:[#allocation4 + $0x18] sm:$0xff]
    %v3647 = vld [vmem:[#allocation4 + $0x20] sm:$0xf]
    %v3648 = vld [vmem:[#allocation4 + $0x24] sm:$0xff]
    %v3649 = vld [vmem:[#allocation4 + $0x2c] sm:$0xf]
    %v3650 = vld [vmem:[#allocation4 + $0x30] sm:$0xff]
    %v3651 = vld [vmem:[#allocation4 + $0x38] sm:$0xf]
    %v3652 = vld [vmem:[#allocation4 + $0x3c] sm:$0xff]
    %v3653 = vld [vmem:[#allocation4 + $0x44] sm:$0xf]
    %v3654 = vld [vmem:[#allocation4 + $0x48] sm:$0xff]
    %v3655 = vld [vmem:[#allocation4 + $0x50] sm:$0xf]
    %v3656 = vld [vmem:[#allocation4 + $0x54] sm:$0xff]
    %v3657 = vld [vmem:[#allocation4 + $0x5c] sm:$0xf]
    %v3658 = vld [vmem:[#allocation4 + $0x60] sm:$0xff]
    %v3659 = vld [vmem:[#allocation4 + $0x68] sm:$0xf]
    %v3660 = vld [vmem:[#allocation4 + $0x6c] sm:$0xff]
    %v3661 = vld [vmem:[#allocation4 + $0x74] sm:$0xf]
    %v3662 = vld [vmem:[#allocation4 + $0x78] sm:$0xff]
    %v3663 = vld [vmem:[#allocation4 + $0x80] sm:$0xf]
    %v3664 = vld [vmem:[#allocation4 + $0x84] sm:$0xff]
    %v3665 = vld [vmem:[#allocation4 + $0x8c] sm:$0xf]
    %v3666 = vld [vmem:[#allocation4 + $0x90] sm:$0xff]
    %v3667 = vld [vmem:[#allocation4 + $0x98] sm:$0xf]
    %v3668 = vld [vmem:[#allocation4 + $0x9c] sm:$0xff]
    %v3669 = vld [vmem:[#allocation4 + $0xa4] sm:$0xf]
    %v3670 = vld [vmem:[#allocation4 + $0xa8] sm:$0xff]
    %v3671 = vld [vmem:[#allocation4 + $0xb0] sm:$0xf]
    %v3672 = vld [vmem:[#allocation4 + $0xb4] sm:$0xff]
    %v3673 = vld [vmem:[#allocation4 + $0xbc] sm:$0xf]
    %v3674 = vmul.f32 %v3455, %v2983
    %v3675 = vmul.f32 %v3456, %v2983
    %v3676 = vmul.f32 %v3457, %v2983
    %v3677 = vmul.f32 %v3458, %v2983
    %v3678 = vmul.f32 %v3459, %v2983
    %v3679 = vmul.f32 %v3460, %v2983
    %v3680 = vmul.f32 %v3461, %v2983
    %v3681 = vmul.f32 %v3462, %v2983
    %vm3682 = vcmask 1041408
    %v3683 = vsel %vm3682, %v3674, 0.0
    %3684 = vadd.xlane.f32.xlu0 %v3683
    %v3685 = vpop.xlane.xlu0 %3684
    %v3686 = vsel %vm3682, %v3675, 0.0
    %3687 = vadd.xlane.f32.xlu0 %v3686
    %v3688 = vpop.xlane.xlu0 %3687
    %v3689 = vsel %vm3682, %v3676, 0.0
    %3690 = vadd.xlane.f32.xlu0 %v3689
    %v3691 = vpop.xlane.xlu0 %3690
    %v3692 = vsel %vm3682, %v3677, 0.0
    %3693 = vadd.xlane.f32.xlu0 %v3692
    %v3694 = vpop.xlane.xlu0 %3693
    %v3695 = vsel %vm3682, %v3678, 0.0
    %3696 = vadd.xlane.f32.xlu0 %v3695
    %v3697 = vpop.xlane.xlu0 %3696
    %v3698 = vsel %vm3682, %v3679, 0.0
    %3699 = vadd.xlane.f32.xlu0 %v3698
    %v3700 = vpop.xlane.xlu0 %3699
    %v3701 = vsel %vm3682, %v3680, 0.0
    %3702 = vadd.xlane.f32.xlu0 %v3701
    %v3703 = vpop.xlane.xlu0 %3702
    %v3704 = vsel %vm3682, %v3681, 0.0
    %3705 = vadd.xlane.f32.xlu0 %v3704
    %v3706 = vpop.xlane.xlu0 %3705
    %v3707 = vsel %vm3682, %v3685, -inf
    %v3708 = vsel %vm3682, %v3688, -inf
    %v3709 = vsel %vm3682, %v3691, -inf
    %v3710 = vsel %vm3682, %v3694, -inf
    %v3711 = vsel %vm3682, %v3697, -inf
    %v3712 = vmax.f32 %v3707, %v3711
    %v3713 = vsel %vm3682, %v3700, -inf
    %v3714 = vmax.f32 %v3708, %v3713
    %v3715 = vsel %vm3682, %v3703, -inf
    %v3716 = vmax.f32 %v3709, %v3715
    %v3717 = vsel %vm3682, %v3706, -inf
    %v3718 = vmax.f32 %v3710, %v3717
    %v3719 = vmax.f32 %v3712, %v3714
    %v3720 = vmax.f32 %v3716, %v3718
    %v3721 = vmax.f32 %v3719, %v3720
    %v3722 = vsub.f32 %v3685, %v3721
    %v3723 = vsub.f32 %v3688, %v3721
    %v3724 = vsub.f32 %v3691, %v3721
    %v3725 = vsub.f32 %v3694, %v3721
    %v3726 = vsub.f32 %v3697, %v3721
    %v3727 = vsub.f32 %v3700, %v3721
    %v3728 = vsub.f32 %v3703, %v3721
    %v3729 = vsub.f32 %v3706, %v3721
    %v3730 = vmul.f32 %v3722, 1.442695
    %v3731 = vpow.pop %v3730
    %v3732 = vmul.f32 %v3723, 1.442695
    %v3733 = vpow.pop %v3732
    %v3734 = vmul.f32 %v3724, 1.442695
    %v3735 = vpow.pop %v3734
    %v3736 = vmul.f32 %v3725, 1.442695
    %v3737 = vpow.pop %v3736
    %v3738 = vmul.f32 %v3726, 1.442695
    %v3739 = vpow.pop %v3738
    %v3740 = vmul.f32 %v3727, 1.442695
    %v3741 = vpow.pop %v3740
    %v3742 = vmul.f32 %v3728, 1.442695
    %v3743 = vpow.pop %v3742
    %v3744 = vmul.f32 %v3729, 1.442695
    %v3745 = vpow.pop %v3744
    %v3746 = vsel %vm3682, %v3731, 0.0
    %v3747 = vsel %vm3682, %v3733, 0.0
    %v3748 = vadd.f32 %v3746, %v3747
    %v3749 = vsel %vm3682, %v3735, 0.0
    %v3750 = vadd.f32 %v3748, %v3749
    %v3751 = vsel %vm3682, %v3737, 0.0
    %v3752 = vadd.f32 %v3750, %v3751
    %v3753 = vsel %vm3682, %v3739, 0.0
    %v3754 = vadd.f32 %v3752, %v3753
    %v3755 = vsel %vm3682, %v3741, 0.0
    %v3756 = vadd.f32 %v3754, %v3755
    %v3757 = vsel %vm3682, %v3743, 0.0
    %v3758 = vadd.f32 %v3756, %v3757
    %v3759 = vsel %vm3682, %v3745, 0.0
    %v3760 = vadd.f32 %v3758, %v3759
    %v3761 = vrcp.pop %v3760
    %v3762 = vmul.f32 %v3731, %v3761
    %v3763 = vmul.f32 %v3733, %v3761
    %v3764 = vmul.f32 %v3735, %v3761
    %v3765 = vmul.f32 %v3737, %v3761
    %v3766 = vmul.f32 %v3739, %v3761
    %v3767 = vmul.f32 %v3741, %v3761
    %v3768 = vmul.f32 %v3743, %v3761
    %v3769 = vmul.f32 %v3745, %v3761
    %v3770 = vmul.f32 %v3762, %v3455
    %v3771 = vmul.f32 %v3763, %v3456
    %v3772 = vmul.f32 %v3764, %v3457
    %v3773 = vmul.f32 %v3765, %v3458
    %v3774 = vmul.f32 %v3766, %v3459
    %v3775 = vmul.f32 %v3767, %v3460
    %v3776 = vmul.f32 %v3768, %v3461
    %v3777 = vmul.f32 %v3769, %v3462
    %v3778 = vsel %vm3682, %v3770, 0.0
    %v3779 = vsel %vm3682, %v3771, 0.0
    %v3780 = vadd.f32 %v3778, %v3779
    %v3781 = vsel %vm3682, %v3772, 0.0
    %v3782 = vadd.f32 %v3780, %v3781
    %v3783 = vsel %vm3682, %v3773, 0.0
    %v3784 = vadd.f32 %v3782, %v3783
    %v3785 = vsel %vm3682, %v3774, 0.0
    %v3786 = vadd.f32 %v3784, %v3785
    %v3787 = vsel %vm3682, %v3775, 0.0
    %v3788 = vadd.f32 %v3786, %v3787
    %v3789 = vsel %vm3682, %v3776, 0.0
    %v3790 = vadd.f32 %v3788, %v3789
    %v3791 = vsel %vm3682, %v3777, 0.0
    %v3792 = vadd.f32 %v3790, %v3791
    %v3793 = vpack.c.bf16 %v3792, %v3792
    %v3794 = vld [vmem:[#allocation14] sm:$0xff]
    %v3795 = vld [vmem:[#allocation14 + $0x8] sm:$0xf]
    %v3796 = vld [vmem:[#allocation14 + $0xc] sm:$0xff]
    %v3797 = vld [vmem:[#allocation14 + $0x14] sm:$0xf]
    %v3798 = vld [vmem:[#allocation14 + $0x18] sm:$0xff]
    %v3799 = vld [vmem:[#allocation14 + $0x20] sm:$0xf]
    %v3800 = vld [vmem:[#allocation14 + $0x24] sm:$0xff]
    %v3801 = vld [vmem:[#allocation14 + $0x2c] sm:$0xf]
    %v3802 = vld [vmem:[#allocation14 + $0x30] sm:$0xff]
    %v3803 = vld [vmem:[#allocation14 + $0x38] sm:$0xf]
    %v3804 = vld [vmem:[#allocation14 + $0x3c] sm:$0xff]
    %v3805 = vld [vmem:[#allocation14 + $0x44] sm:$0xf]
    %v3806 = vld [vmem:[#allocation14 + $0x48] sm:$0xff]
    %v3807 = vld [vmem:[#allocation14 + $0x50] sm:$0xf]
    %v3808 = vld [vmem:[#allocation14 + $0x54] sm:$0xff]
    %v3809 = vld [vmem:[#allocation14 + $0x5c] sm:$0xf]
    %v3810 = vld [vmem:[#allocation14 + $0x60] sm:$0xff]
    %v3811 = vld [vmem:[#allocation14 + $0x68] sm:$0xf]
    %v3812 = vld [vmem:[#allocation14 + $0x6c] sm:$0xff]
    %v3813 = vld [vmem:[#allocation14 + $0x74] sm:$0xf]
    %v3814 = vld [vmem:[#allocation14 + $0x78] sm:$0xff]
    %v3815 = vld [vmem:[#allocation14 + $0x80] sm:$0xf]
    %v3816 = vld [vmem:[#allocation14 + $0x84] sm:$0xff]
    %v3817 = vld [vmem:[#allocation14 + $0x8c] sm:$0xf]
    %v3818 = vld [vmem:[#allocation14 + $0x90] sm:$0xff]
    %v3819 = vld [vmem:[#allocation14 + $0x98] sm:$0xf]
    %v3820 = vld [vmem:[#allocation14 + $0x9c] sm:$0xff]
    %v3821 = vld [vmem:[#allocation14 + $0xa4] sm:$0xf]
    %v3822 = vld [vmem:[#allocation14 + $0xa8] sm:$0xff]
    %v3823 = vld [vmem:[#allocation14 + $0xb0] sm:$0xf]
    %v3824 = vld [vmem:[#allocation14 + $0xb4] sm:$0xff]
    %v3825 = vld [vmem:[#allocation14 + $0xbc] sm:$0xf]
    %v3858 = vunpack.c.l.b16 %v3794
    %v3859 = vunpack.c.h.b16 %v3794
    %v3860 = vunpack.c.l.b16 %v3795
    %v3861 = vunpack.c.l.b16 %v3796
    %v3862 = vunpack.c.h.b16 %v3796
    %v3863 = vunpack.c.l.b16 %v3797
    %v3864 = vunpack.c.l.b16 %v3798
    %v3865 = vunpack.c.h.b16 %v3798
    %v3866 = vunpack.c.l.b16 %v3799
    %v3867 = vunpack.c.l.b16 %v3800
    %v3868 = vunpack.c.h.b16 %v3800
    %v3869 = vunpack.c.l.b16 %v3801
    %v3870 = vunpack.c.l.b16 %v3802
    %v3871 = vunpack.c.h.b16 %v3802
    %v3872 = vunpack.c.l.b16 %v3803
    %v3873 = vunpack.c.l.b16 %v3804
    %v3874 = vunpack.c.h.b16 %v3804
    %v3875 = vunpack.c.l.b16 %v3805
    %v3876 = vunpack.c.l.b16 %v3806
    %v3877 = vunpack.c.h.b16 %v3806
    %v3878 = vunpack.c.l.b16 %v3807
    %v3879 = vunpack.c.l.b16 %v3808
    %v3880 = vunpack.c.h.b16 %v3808
    %v3881 = vunpack.c.l.b16 %v3809
    %v3882 = vunpack.c.l.b16 %v3810
    %v3883 = vunpack.c.h.b16 %v3810
    %v3884 = vunpack.c.l.b16 %v3811
    %v3885 = vunpack.c.l.b16 %v3812
    %v3886 = vunpack.c.h.b16 %v3812
    %v3887 = vunpack.c.l.b16 %v3813
    %v3888 = vunpack.c.l.b16 %v3814
    %v3889 = vunpack.c.h.b16 %v3814
    %v3890 = vunpack.c.l.b16 %v3815
    %v3891 = vunpack.c.l.b16 %v3816
    %v3892 = vunpack.c.h.b16 %v3816
    %v3893 = vunpack.c.l.b16 %v3817
    %v3894 = vunpack.c.l.b16 %v3818
    %v3895 = vunpack.c.h.b16 %v3818
    %v3896 = vunpack.c.l.b16 %v3819
    %v3897 = vunpack.c.l.b16 %v3820
    %v3898 = vunpack.c.h.b16 %v3820
    %v3899 = vunpack.c.l.b16 %v3821
    %v3900 = vunpack.c.l.b16 %v3822
    %v3901 = vunpack.c.h.b16 %v3822
    %v3902 = vunpack.c.l.b16 %v3823
    %v3903 = vunpack.c.l.b16 %v3824
    %v3904 = vunpack.c.h.b16 %v3824
    %v3905 = vunpack.c.l.b16 %v3825
    %v3906 = vpack.c.b16 %v3861, %v3858
    %v3907 = vpack.c.b16 %v3862, %v3859
    %v3908 = vpack.c.b16 %v3863, %v3860
    %v3909 = vpack.c.b16 %v3867, %v3864
    %v3910 = vpack.c.b16 %v3868, %v3865
    %v3911 = vpack.c.b16 %v3869, %v3866
    %v3912 = vpack.c.b16 %v3873, %v3870
    %v3913 = vpack.c.b16 %v3874, %v3871
    %v3914 = vpack.c.b16 %v3875, %v3872
    %v3915 = vpack.c.b16 %v3879, %v3876
    %v3916 = vpack.c.b16 %v3880, %v3877
    %v3917 = vpack.c.b16 %v3881, %v3878
    %v3918 = vpack.c.b16 %v3885, %v3882
    %v3919 = vpack.c.b16 %v3886, %v3883
    %v3920 = vpack.c.b16 %v3887, %v3884
    %v3921 = vpack.c.b16 %v3891, %v3888
    %v3922 = vpack.c.b16 %v3892, %v3889
    %v3923 = vpack.c.b16 %v3893, %v3890
    %v3924 = vpack.c.b16 %v3897, %v3894
    %v3925 = vpack.c.b16 %v3898, %v3895
    %v3926 = vpack.c.b16 %v3899, %v3896
    %v3927 = vpack.c.b16 %v3903, %v3900
    %v3928 = vpack.c.b16 %v3904, %v3901
    %v3929 = vpack.c.b16 %v3905, %v3902
    %3954 = vmatprep.subr.bf16.mxu0 %v3928
    %3955 = vmatpush1.bf16.msra.mxu0 %v3927
    %3956 = vmatprep.subr.bf16.mxu0 %v3925
    %3957 = vmatpush1.bf16.msra.mxu0 %v3924
    %3958 = vmatprep.subr.bf16.mxu0 %v3922
    %3959 = vmatpush1.bf16.msra.mxu0 %v3921
    %3960 = vmatprep.subr.bf16.mxu0 %v3919
    %3961 = vmatpush1.bf16.msra.mxu0 %v3918
    %3962 = vmatprep.subr.bf16.mxu0 %v3916
    %3963 = vmatpush1.bf16.msra.mxu0 %v3915
    %3964 = vmatprep.subr.bf16.mxu0 %v3913
    %3965 = vmatpush1.bf16.msra.mxu0 %v3912
    %3966 = vmatprep.subr.bf16.mxu0 %v3910
    %3967 = vmatpush1.bf16.msra.mxu0 %v3909
    %3968 = vmatprep.subr.bf16.mxu0 %v3907
    %3969 = vmatpush1.bf16.msra.mxu0 %v3906
    %3970 = vmatprep.subr.bf16.mxu0 0
    %3971 = vmatpush2.bf16.msra.mxu0 0
    %3972 = vmatprep.subr.bf16.mxu0 0
    %3973 = vmatpush2.bf16.msra.mxu0 0
    %3974 = vmatprep.subr.bf16.mxu0 0
    %3975 = vmatpush2.bf16.msra.mxu0 0
    %3976 = vmatprep.subr.bf16.mxu0 0
    %3977 = vmatpush2.bf16.msra.mxu0 0
    %3978 = vmatprep.subr.bf16.mxu0 0
    %3979 = vmatpush2.bf16.msra.mxu0 0
    %3980 = vmatprep.subr.bf16.mxu0 0
    %3981 = vmatpush2.bf16.msra.mxu0 0
    %3982 = vmatprep.subr.bf16.mxu0 0
    %3983 = vmatpush2.bf16.msra.mxu0 0
    %3984 = vmatprep.subr.bf16.mxu0 0
    %3985 = vmatpush2.bf16.msra.mxu0 0
    %3986 = vmatprep.mubr.bf16.mxu0 0
    %3987 = vmatmul.mubr.bf16.gmra.mxu0 %v3793
    %v3988 = vpop.f32.mrf.mxu0
    %v3989 = vadd.f32 0.0, %v3988
    %v3990 = vpop.f32.mrf.mxu0
    %v3991 = vadd.f32 0.0, %v3990
    %v3992 = vpop.f32.mrf.mxu0
    %v3993 = vpop.f32.mrf.mxu0
    %3994 = vdwg.mxu0
    %3995 = vmatprep.subr.bf16.mxu0 0
    %3996 = vmatpush1.bf16.msra.mxu0 %v3929
    %3997 = vmatprep.subr.bf16.mxu0 0
    %3998 = vmatpush1.bf16.msra.mxu0 %v3926
    %3999 = vmatprep.subr.bf16.mxu0 0
    %4000 = vmatpush1.bf16.msra.mxu0 %v3923
    %4001 = vmatprep.subr.bf16.mxu0 0
    %4002 = vmatpush1.bf16.msra.mxu0 %v3920
    %4003 = vmatprep.subr.bf16.mxu0 0
    %4004 = vmatpush1.bf16.msra.mxu0 %v3917
    %4005 = vmatprep.subr.bf16.mxu0 0
    %4006 = vmatpush1.bf16.msra.mxu0 %v3914
    %4007 = vmatprep.subr.bf16.mxu0 0
    %4008 = vmatpush1.bf16.msra.mxu0 %v3911
    %4009 = vmatprep.subr.bf16.mxu0 0
    %4010 = vmatpush1.bf16.msra.mxu0 %v3908
    %4011 = vmatprep.subr.bf16.mxu0 0
    %4012 = vmatpush2.bf16.msra.mxu0 0
    %4013 = vmatprep.subr.bf16.mxu0 0
    %4014 = vmatpush2.bf16.msra.mxu0 0
    %4015 = vmatprep.subr.bf16.mxu0 0
    %4016 = vmatpush2.bf16.msra.mxu0 0
    %4017 = vmatprep.subr.bf16.mxu0 0
    %4018 = vmatpush2.bf16.msra.mxu0 0
    %4019 = vmatprep.subr.bf16.mxu0 0
    %4020 = vmatpush2.bf16.msra.mxu0 0
    %4021 = vmatprep.subr.bf16.mxu0 0
    %4022 = vmatpush2.bf16.msra.mxu0 0
    %4023 = vmatprep.subr.bf16.mxu0 0
    %4024 = vmatpush2.bf16.msra.mxu0 0
    %4025 = vmatprep.subr.bf16.mxu0 0
    %4026 = vmatpush2.bf16.msra.mxu0 0
    %4027 = vmatprep.mubr.bf16.mxu0 0
    %4028 = vmatmul.mubr.bf16.gmra.mxu0 %v3793
    %v4029 = vpop.f32.mrf.mxu0
    %v4030 = vadd.f32 0.0, %v4029
    %v4031 = vpop.f32.mrf.mxu0
    %v4032 = vpop.f32.mrf.mxu0
    %v4033 = vpop.f32.mrf.mxu0
    %4034 = vdwg.mxu0
    %v4067 = vunpack.c.l.b16 %v3642
    %v4068 = vunpack.c.h.b16 %v3642
    %v4069 = vunpack.c.l.b16 %v3643
    %v4070 = vunpack.c.l.b16 %v3644
    %v4071 = vunpack.c.h.b16 %v3644
    %v4072 = vunpack.c.l.b16 %v3645
    %v4073 = vunpack.c.l.b16 %v3646
    %v4074 = vunpack.c.h.b16 %v3646
    %v4075 = vunpack.c.l.b16 %v3647
    %v4076 = vunpack.c.l.b16 %v3648
    %v4077 = vunpack.c.h.b16 %v3648
    %v4078 = vunpack.c.l.b16 %v3649
    %v4079 = vunpack.c.l.b16 %v3650
    %v4080 = vunpack.c.h.b16 %v3650
    %v4081 = vunpack.c.l.b16 %v3651
    %v4082 = vunpack.c.l.b16 %v3652
    %v4083 = vunpack.c.h.b16 %v3652
    %v4084 = vunpack.c.l.b16 %v3653
    %v4085 = vunpack.c.l.b16 %v3654
    %v4086 = vunpack.c.h.b16 %v3654
    %v4087 = vunpack.c.l.b16 %v3655
    %v4088 = vunpack.c.l.b16 %v3656
    %v4089 = vunpack.c.h.b16 %v3656
    %v4090 = vunpack.c.l.b16 %v3657
    %v4091 = vunpack.c.l.b16 %v3658
    %v4092 = vunpack.c.h.b16 %v3658
    %v4093 = vunpack.c.l.b16 %v3659
    %v4094 = vunpack.c.l.b16 %v3660
    %v4095 = vunpack.c.h.b16 %v3660
    %v4096 = vunpack.c.l.b16 %v3661
    %v4097 = vunpack.c.l.b16 %v3662
    %v4098 = vunpack.c.h.b16 %v3662
    %v4099 = vunpack.c.l.b16 %v3663
    %v4100 = vunpack.c.l.b16 %v3664
    %v4101 = vunpack.c.h.b16 %v3664
    %v4102 = vunpack.c.l.b16 %v3665
    %v4103 = vunpack.c.l.b16 %v3666
    %v4104 = vunpack.c.h.b16 %v3666
    %v4105 = vunpack.c.l.b16 %v3667
    %v4106 = vunpack.c.l.b16 %v3668
    %v4107 = vunpack.c.h.b16 %v3668
    %v4108 = vunpack.c.l.b16 %v3669
    %v4109 = vunpack.c.l.b16 %v3670
    %v4110 = vunpack.c.h.b16 %v3670
    %v4111 = vunpack.c.l.b16 %v3671
    %v4112 = vunpack.c.l.b16 %v3672
    %v4113 = vunpack.c.h.b16 %v3672
    %v4114 = vunpack.c.l.b16 %v3673
    %v4115 = vpack.c.b16 %v4070, %v4067
    %v4116 = vpack.c.b16 %v4071, %v4068
    %v4117 = vpack.c.b16 %v4072, %v4069
    %v4118 = vpack.c.b16 %v4076, %v4073
    %v4119 = vpack.c.b16 %v4077, %v4074
    %v4120 = vpack.c.b16 %v4078, %v4075
    %v4121 = vpack.c.b16 %v4082, %v4079
    %v4122 = vpack.c.b16 %v4083, %v4080
    %v4123 = vpack.c.b16 %v4084, %v4081
    %v4124 = vpack.c.b16 %v4088, %v4085
    %v4125 = vpack.c.b16 %v4089, %v4086
    %v4126 = vpack.c.b16 %v4090, %v4087
    %v4127 = vpack.c.b16 %v4094, %v4091
    %v4128 = vpack.c.b16 %v4095, %v4092
    %v4129 = vpack.c.b16 %v4096, %v4093
    %v4130 = vpack.c.b16 %v4100, %v4097
    %v4131 = vpack.c.b16 %v4101, %v4098
    %v4132 = vpack.c.b16 %v4102, %v4099
    %v4133 = vpack.c.b16 %v4106, %v4103
    %v4134 = vpack.c.b16 %v4107, %v4104
    %v4135 = vpack.c.b16 %v4108, %v4105
    %v4136 = vpack.c.b16 %v4112, %v4109
    %v4137 = vpack.c.b16 %v4113, %v4110
    %v4138 = vpack.c.b16 %v4114, %v4111
    %4163 = vmatprep.subr.bf16.mxu0 %v4137
    %4164 = vmatpush1.bf16.msra.mxu0 %v4136
    %4165 = vmatprep.subr.bf16.mxu0 %v4134
    %4166 = vmatpush1.bf16.msra.mxu0 %v4133
    %4167 = vmatprep.subr.bf16.mxu0 %v4131
    %4168 = vmatpush1.bf16.msra.mxu0 %v4130
    %4169 = vmatprep.subr.bf16.mxu0 %v4128
    %4170 = vmatpush1.bf16.msra.mxu0 %v4127
    %4171 = vmatprep.subr.bf16.mxu0 %v4125
    %4172 = vmatpush1.bf16.msra.mxu0 %v4124
    %4173 = vmatprep.subr.bf16.mxu0 %v4122
    %4174 = vmatpush1.bf16.msra.mxu0 %v4121
    %4175 = vmatprep.subr.bf16.mxu0 %v4119
    %4176 = vmatpush1.bf16.msra.mxu0 %v4118
    %4177 = vmatprep.subr.bf16.mxu0 %v4116
    %4178 = vmatpush1.bf16.msra.mxu0 %v4115
    %4179 = vmatprep.subr.bf16.mxu0 0
    %4180 = vmatpush2.bf16.msra.mxu0 0
    %4181 = vmatprep.subr.bf16.mxu0 0
    %4182 = vmatpush2.bf16.msra.mxu0 0
    %4183 = vmatprep.subr.bf16.mxu0 0
    %4184 = vmatpush2.bf16.msra.mxu0 0
    %4185 = vmatprep.subr.bf16.mxu0 0
    %4186 = vmatpush2.bf16.msra.mxu0 0
    %4187 = vmatprep.subr.bf16.mxu0 0
    %4188 = vmatpush2.bf16.msra.mxu0 0
    %4189 = vmatprep.subr.bf16.mxu0 0
    %4190 = vmatpush2.bf16.msra.mxu0 0
    %4191 = vmatprep.subr.bf16.mxu0 0
    %4192 = vmatpush2.bf16.msra.mxu0 0
    %4193 = vmatprep.subr.bf16.mxu0 0
    %4194 = vmatpush2.bf16.msra.mxu0 0
    %4195 = vmatprep.mubr.bf16.mxu0 0
    %4196 = vmatmul.mubr.bf16.gmra.mxu0 %v3641
    %v4197 = vpop.f32.mrf.mxu0
    %v4198 = vadd.f32 %v3989, %v4197
    %v4199 = vpop.f32.mrf.mxu0
    %v4200 = vadd.f32 %v3991, %v4199
    %v4201 = vpop.f32.mrf.mxu0
    %v4202 = vpop.f32.mrf.mxu0
    %4203 = vdwg.mxu0
    %4204 = vmatprep.subr.bf16.mxu0 0
    %4205 = vmatpush1.bf16.msra.mxu0 %v4138
    %4206 = vmatprep.subr.bf16.mxu0 0
    %4207 = vmatpush1.bf16.msra.mxu0 %v4135
    %4208 = vmatprep.subr.bf16.mxu0 0
    %4209 = vmatpush1.bf16.msra.mxu0 %v4132
    %4210 = vmatprep.subr.bf16.mxu0 0
    %4211 = vmatpush1.bf16.msra.mxu0 %v4129
    %4212 = vmatprep.subr.bf16.mxu0 0
    %4213 = vmatpush1.bf16.msra.mxu0 %v4126
    %4214 = vmatprep.subr.bf16.mxu0 0
    %4215 = vmatpush1.bf16.msra.mxu0 %v4123
    %4216 = vmatprep.subr.bf16.mxu0 0
    %4217 = vmatpush1.bf16.msra.mxu0 %v4120
    %4218 = vmatprep.subr.bf16.mxu0 0
    %4219 = vmatpush1.bf16.msra.mxu0 %v4117
    %4220 = vmatprep.subr.bf16.mxu0 0
    %4221 = vmatpush2.bf16.msra.mxu0 0
    %4222 = vmatprep.subr.bf16.mxu0 0
    %4223 = vmatpush2.bf16.msra.mxu0 0
    %4224 = vmatprep.subr.bf16.mxu0 0
    %4225 = vmatpush2.bf16.msra.mxu0 0
    %4226 = vmatprep.subr.bf16.mxu0 0
    %4227 = vmatpush2.bf16.msra.mxu0 0
    %4228 = vmatprep.subr.bf16.mxu0 0
    %4229 = vmatpush2.bf16.msra.mxu0 0
    %4230 = vmatprep.subr.bf16.mxu0 0
    %4231 = vmatpush2.bf16.msra.mxu0 0
    %4232 = vmatprep.subr.bf16.mxu0 0
    %4233 = vmatpush2.bf16.msra.mxu0 0
    %4234 = vmatprep.subr.bf16.mxu0 0
    %4235 = vmatpush2.bf16.msra.mxu0 0
    %4236 = vmatprep.mubr.bf16.mxu0 0
    %4237 = vmatmul.mubr.bf16.gmra.mxu0 %v3641
    %v4238 = vpop.f32.mrf.mxu0
    %v4239 = vadd.f32 %v4030, %v4238
    %v4240 = vpop.f32.mrf.mxu0
    %v4241 = vpop.f32.mrf.mxu0
    %v4242 = vpop.f32.mrf.mxu0
    %4243 = vdwg.mxu0
    %v4245 = vlaneseq
    %v4246 = vshrl.u32 %v4245, 7
    %v4247 = vsub.s32 0, %v4246
    %v4248 = vrot.slane %v3445, %v4247
    %v4249 = vlaneseq
    %v4250 = vshrl.u32 %v4249, 7
    %v4251 = vsub.s32 1, %v4250
    %v4252 = vrot.slane %v3445, %v4251
    %v4253 = vlaneseq
    %v4254 = vshrl.u32 %v4253, 7
    %v4255 = vsub.s32 2, %v4254
    %v4256 = vrot.slane %v3445, %v4255
    %v4260 = vadd.f32 %v4198, %v4248
    %v4261 = vadd.f32 %v4200, %v4252
    %v4262 = vadd.f32 %v4239, %v4256
    %v4263 = vld [vmem:[#allocation16] sm:$0xff]
    %v4264 = vld [vmem:[#allocation16 + $0x8] sm:$0xf]
    %v4265 = vld [vmem:[#allocation16 + $0xc] sm:$0xff]
    %v4266 = vld [vmem:[#allocation16 + $0x14] sm:$0xf]
    %v4267 = vld [vmem:[#allocation16 + $0x18] sm:$0xff]
    %v4268 = vld [vmem:[#allocation16 + $0x20] sm:$0xf]
    %v4269 = vld [vmem:[#allocation16 + $0x24] sm:$0xff]
    %v4270 = vld [vmem:[#allocation16 + $0x2c] sm:$0xf]
    %v4271 = vld [vmem:[#allocation16 + $0x30] sm:$0xff]
    %v4272 = vld [vmem:[#allocation16 + $0x38] sm:$0xf]
    %v4273 = vld [vmem:[#allocation16 + $0x3c] sm:$0xff]
    %v4274 = vld [vmem:[#allocation16 + $0x44] sm:$0xf]
    %v4275 = vld [vmem:[#allocation16 + $0x48] sm:$0xff]
    %v4276 = vld [vmem:[#allocation16 + $0x50] sm:$0xf]
    %v4277 = vld [vmem:[#allocation16 + $0x54] sm:$0xff]
    %v4278 = vld [vmem:[#allocation16 + $0x5c] sm:$0xf]
    %v4279 = vld [vmem:[#allocation16 + $0x60] sm:$0xff]
    %v4280 = vld [vmem:[#allocation16 + $0x68] sm:$0xf]
    %v4281 = vld [vmem:[#allocation16 + $0x6c] sm:$0xff]
    %v4282 = vld [vmem:[#allocation16 + $0x74] sm:$0xf]
    %v4283 = vld [vmem:[#allocation16 + $0x78] sm:$0xff]
    %v4284 = vld [vmem:[#allocation16 + $0x80] sm:$0xf]
    %v4285 = vld [vmem:[#allocation16 + $0x84] sm:$0xff]
    %v4286 = vld [vmem:[#allocation16 + $0x8c] sm:$0xf]
    %v4287 = vld [vmem:[#allocation16 + $0x90] sm:$0xff]
    %v4288 = vld [vmem:[#allocation16 + $0x98] sm:$0xf]
    %v4289 = vld [vmem:[#allocation16 + $0x9c] sm:$0xff]
    %v4290 = vld [vmem:[#allocation16 + $0xa4] sm:$0xf]
    %v4291 = vld [vmem:[#allocation16 + $0xa8] sm:$0xff]
    %v4292 = vld [vmem:[#allocation16 + $0xb0] sm:$0xf]
    %v4293 = vld [vmem:[#allocation16 + $0xb4] sm:$0xff]
    %v4294 = vld [vmem:[#allocation16 + $0xbc] sm:$0xf]
    %v4296 = vlaneseq
    %v4297 = vshrl.u32 %v4296, 7
    %v4298 = vsub.s32 0, %v4297
    %v4299 = vrot.slane %v3446, %v4298
    %v4300 = vlaneseq
    %v4301 = vshrl.u32 %v4300, 7
    %v4302 = vsub.s32 1, %v4301
    %v4303 = vrot.slane %v3446, %v4302
    %v4304 = vlaneseq
    %v4305 = vshrl.u32 %v4304, 7
    %v4306 = vsub.s32 2, %v4305
    %v4307 = vrot.slane %v3446, %v4306
    %v4343 = vunpack.c.l.b16 %v4263
    %v4344 = vunpack.c.h.b16 %v4263
    %v4345 = vunpack.c.l.b16 %v4264
    %v4346 = vunpack.c.l.b16 %v4265
    %v4347 = vunpack.c.h.b16 %v4265
    %v4348 = vunpack.c.l.b16 %v4266
    %v4349 = vunpack.c.l.b16 %v4267
    %v4350 = vunpack.c.h.b16 %v4267
    %v4351 = vunpack.c.l.b16 %v4268
    %v4352 = vunpack.c.l.b16 %v4269
    %v4353 = vunpack.c.h.b16 %v4269
    %v4354 = vunpack.c.l.b16 %v4270
    %v4355 = vunpack.c.l.b16 %v4271
    %v4356 = vunpack.c.h.b16 %v4271
    %v4357 = vunpack.c.l.b16 %v4272
    %v4358 = vunpack.c.l.b16 %v4273
    %v4359 = vunpack.c.h.b16 %v4273
    %v4360 = vunpack.c.l.b16 %v4274
    %v4361 = vunpack.c.l.b16 %v4275
    %v4362 = vunpack.c.h.b16 %v4275
    %v4363 = vunpack.c.l.b16 %v4276
    %v4364 = vunpack.c.l.b16 %v4277
    %v4365 = vunpack.c.h.b16 %v4277
    %v4366 = vunpack.c.l.b16 %v4278
    %v4367 = vunpack.c.l.b16 %v4279
    %v4368 = vunpack.c.h.b16 %v4279
    %v4369 = vunpack.c.l.b16 %v4280
    %v4370 = vunpack.c.l.b16 %v4281
    %v4371 = vunpack.c.h.b16 %v4281
    %v4372 = vunpack.c.l.b16 %v4282
    %v4373 = vunpack.c.l.b16 %v4283
    %v4374 = vunpack.c.h.b16 %v4283
    %v4375 = vunpack.c.l.b16 %v4284
    %v4376 = vunpack.c.l.b16 %v4285
    %v4377 = vunpack.c.h.b16 %v4285
    %v4378 = vunpack.c.l.b16 %v4286
    %v4379 = vunpack.c.l.b16 %v4287
    %v4380 = vunpack.c.h.b16 %v4287
    %v4381 = vunpack.c.l.b16 %v4288
    %v4382 = vunpack.c.l.b16 %v4289
    %v4383 = vunpack.c.h.b16 %v4289
    %v4384 = vunpack.c.l.b16 %v4290
    %v4385 = vunpack.c.l.b16 %v4291
    %v4386 = vunpack.c.h.b16 %v4291
    %v4387 = vunpack.c.l.b16 %v4292
    %v4388 = vunpack.c.l.b16 %v4293
    %v4389 = vunpack.c.h.b16 %v4293
    %v4390 = vunpack.c.l.b16 %v4294
    %v4391 = vpack.c.b16 %v4346, %v4343
    %v4392 = vpack.c.b16 %v4347, %v4344
    %v4393 = vpack.c.b16 %v4348, %v4345
    %v4394 = vpack.c.b16 %v4352, %v4349
    %v4395 = vpack.c.b16 %v4353, %v4350
    %v4396 = vpack.c.b16 %v4354, %v4351
    %v4397 = vpack.c.b16 %v4358, %v4355
    %v4398 = vpack.c.b16 %v4359, %v4356
    %v4399 = vpack.c.b16 %v4360, %v4357
    %v4400 = vpack.c.b16 %v4364, %v4361
    %v4401 = vpack.c.b16 %v4365, %v4362
    %v4402 = vpack.c.b16 %v4366, %v4363
    %v4403 = vpack.c.b16 %v4370, %v4367
    %v4404 = vpack.c.b16 %v4371, %v4368
    %v4405 = vpack.c.b16 %v4372, %v4369
    %v4406 = vpack.c.b16 %v4376, %v4373
    %v4407 = vpack.c.b16 %v4377, %v4374
    %v4408 = vpack.c.b16 %v4378, %v4375
    %v4409 = vpack.c.b16 %v4382, %v4379
    %v4410 = vpack.c.b16 %v4383, %v4380
    %v4411 = vpack.c.b16 %v4384, %v4381
    %v4412 = vpack.c.b16 %v4388, %v4385
    %v4413 = vpack.c.b16 %v4389, %v4386
    %v4414 = vpack.c.b16 %v4390, %v4387
    %4439 = vmatprep.subr.bf16.mxu0 %v4413
    %4440 = vmatpush1.bf16.msra.mxu0 %v4412
    %4441 = vmatprep.subr.bf16.mxu0 %v4410
    %4442 = vmatpush1.bf16.msra.mxu0 %v4409
    %4443 = vmatprep.subr.bf16.mxu0 %v4407
    %4444 = vmatpush1.bf16.msra.mxu0 %v4406
    %4445 = vmatprep.subr.bf16.mxu0 %v4404
    %4446 = vmatpush1.bf16.msra.mxu0 %v4403
    %4447 = vmatprep.subr.bf16.mxu0 %v4401
    %4448 = vmatpush1.bf16.msra.mxu0 %v4400
    %4449 = vmatprep.subr.bf16.mxu0 %v4398
    %4450 = vmatpush1.bf16.msra.mxu0 %v4397
    %4451 = vmatprep.subr.bf16.mxu0 %v4395
    %4452 = vmatpush1.bf16.msra.mxu0 %v4394
    %4453 = vmatprep.subr.bf16.mxu0 %v4392
    %4454 = vmatpush1.bf16.msra.mxu0 %v4391
    %4455 = vmatprep.subr.bf16.mxu0 0
    %4456 = vmatpush2.bf16.msra.mxu0 0
    %4457 = vmatprep.subr.bf16.mxu0 0
    %4458 = vmatpush2.bf16.msra.mxu0 0
    %4459 = vmatprep.subr.bf16.mxu0 0
    %4460 = vmatpush2.bf16.msra.mxu0 0
    %4461 = vmatprep.subr.bf16.mxu0 0
    %4462 = vmatpush2.bf16.msra.mxu0 0
    %4463 = vmatprep.subr.bf16.mxu0 0
    %4464 = vmatpush2.bf16.msra.mxu0 0
    %4465 = vmatprep.subr.bf16.mxu0 0
    %4466 = vmatpush2.bf16.msra.mxu0 0
    %4467 = vmatprep.subr.bf16.mxu0 0
    %4468 = vmatpush2.bf16.msra.mxu0 0
    %4469 = vmatprep.subr.bf16.mxu0 0
    %4470 = vmatpush2.bf16.msra.mxu0 0
    %4471 = vmatprep.mubr.bf16.mxu0 0
    %4472 = vmatmul.mubr.bf16.gmra.mxu0 %v2984
    %v4473 = vpop.f32.mrf.mxu0
    %v4474 = vadd.f32 %v4299, %v4473
    %v4475 = vpop.f32.mrf.mxu0
    %v4476 = vadd.f32 %v4303, %v4475
    %v4477 = vpop.f32.mrf.mxu0
    %v4478 = vpop.f32.mrf.mxu0
    %4479 = vdwg.mxu0
    %4480 = vmatprep.subr.bf16.mxu0 0
    %4481 = vmatpush1.bf16.msra.mxu0 %v4414
    %4482 = vmatprep.subr.bf16.mxu0 0
    %4483 = vmatpush1.bf16.msra.mxu0 %v4411
    %4484 = vmatprep.subr.bf16.mxu0 0
    %4485 = vmatpush1.bf16.msra.mxu0 %v4408
    %4486 = vmatprep.subr.bf16.mxu0 0
    %4487 = vmatpush1.bf16.msra.mxu0 %v4405
    %4488 = vmatprep.subr.bf16.mxu0 0
    %4489 = vmatpush1.bf16.msra.mxu0 %v4402
    %4490 = vmatprep.subr.bf16.mxu0 0
    %4491 = vmatpush1.bf16.msra.mxu0 %v4399
    %4492 = vmatprep.subr.bf16.mxu0 0
    %4493 = vmatpush1.bf16.msra.mxu0 %v4396
    %4494 = vmatprep.subr.bf16.mxu0 0
    %4495 = vmatpush1.bf16.msra.mxu0 %v4393
    %4496 = vmatprep.subr.bf16.mxu0 0
    %4497 = vmatpush2.bf16.msra.mxu0 0
    %4498 = vmatprep.subr.bf16.mxu0 0
    %4499 = vmatpush2.bf16.msra.mxu0 0
    %4500 = vmatprep.subr.bf16.mxu0 0
    %4501 = vmatpush2.bf16.msra.mxu0 0
    %4502 = vmatprep.subr.bf16.mxu0 0
    %4503 = vmatpush2.bf16.msra.mxu0 0
    %4504 = vmatprep.subr.bf16.mxu0 0
    %4505 = vmatpush2.bf16.msra.mxu0 0
    %4506 = vmatprep.subr.bf16.mxu0 0
    %4507 = vmatpush2.bf16.msra.mxu0 0
    %4508 = vmatprep.subr.bf16.mxu0 0
    %4509 = vmatpush2.bf16.msra.mxu0 0
    %4510 = vmatprep.subr.bf16.mxu0 0
    %4511 = vmatpush2.bf16.msra.mxu0 0
    %4512 = vmatprep.mubr.bf16.mxu0 0
    %4513 = vmatmul.mubr.bf16.gmra.mxu0 %v2984
    %v4514 = vpop.f32.mrf.mxu0
    %v4515 = vadd.f32 %v4307, %v4514
    %v4516 = vpop.f32.mrf.mxu0
    %v4517 = vpop.f32.mrf.mxu0
    %v4518 = vpop.f32.mrf.mxu0
    %4519 = vdwg.mxu0
    %v4520 = vadd.f32 %v4260, %v4474
    %v4521 = vxor.u32 %v4520, 2147483648
    %v4522 = vmul.f32 %v4521, 1.442695
    %v4523 = vpow.pop %v4522
    %v4524 = vadd.f32 %v4523, 1.0
    %v4525 = vrcp.pop %v4524
    %v4526 = vmul.f32 1.0, %v4525
    %v4527 = vadd.f32 %v4261, %v4476
    %v4528 = vxor.u32 %v4527, 2147483648
    %v4529 = vmul.f32 %v4528, 1.442695
    %v4530 = vpow.pop %v4529
    %v4531 = vadd.f32 %v4530, 1.0
    %v4532 = vrcp.pop %v4531
    %v4533 = vmul.f32 1.0, %v4532
    %v4534 = vmul.f32 %v4526, %v4515
    %v4535 = vadd.f32 %v4262, %v4534
    %v4536 = vtanh.pop %v4535
    %v4537 = vsub.f32 1.0, %v4533
    %v4538 = vmul.f32 %v4537, %v4536
    %v4539 = vmul.f32 %v4533, %v2983
    %v4540 = vadd.f32 %v4538, %v4539
    %v4541 = vpack.c.bf16 %v4540, %v4540
    %v4542 = vld [vmem:[#allocation17] sm:$0xf]
    %v4543 = vld [vmem:[#allocation17 + $0x4] sm:$0xf]
    %v4544 = vld [vmem:[#allocation17 + $0x8] sm:$0xf]
    %v4545 = vld [vmem:[#allocation17 + $0xc] sm:$0xf]
    %v4546 = vld [vmem:[#allocation17 + $0x10] sm:$0xf]
    %v4547 = vld [vmem:[#allocation17 + $0x14] sm:$0xf]
    %v4548 = vld [vmem:[#allocation17 + $0x18] sm:$0xf]
    %v4549 = vld [vmem:[#allocation17 + $0x1c] sm:$0xf]
    %v4550 = vld [vmem:[#allocation17 + $0x20] sm:$0xf]
    %v4551 = vld [vmem:[#allocation17 + $0x24] sm:$0xf]
    %v4552 = vld [vmem:[#allocation17 + $0x28] sm:$0xf]
    %v4553 = vld [vmem:[#allocation17 + $0x2c] sm:$0xf]
    %v4554 = vld [vmem:[#allocation17 + $0x30] sm:$0xf]
    %v4555 = vld [vmem:[#allocation17 + $0x34] sm:$0xf]
    %v4556 = vld [vmem:[#allocation17 + $0x38] sm:$0xf]
    %v4557 = vld [vmem:[#allocation17 + $0x3c] sm:$0xf]
    %v4559 = vlaneseq
    %v4560 = vshrl.u32 %v4559, 7
    %v4561 = vsub.s32 0, %v4560
    %v4562 = vrot.slane %v3631, %v4561
    %v4580 = vunpack.c.l.b16 %v4542
    %v4581 = vunpack.c.l.b16 %v4543
    %v4582 = vunpack.c.l.b16 %v4544
    %v4583 = vunpack.c.l.b16 %v4545
    %v4584 = vunpack.c.l.b16 %v4546
    %v4585 = vunpack.c.l.b16 %v4547
    %v4586 = vunpack.c.l.b16 %v4548
    %v4587 = vunpack.c.l.b16 %v4549
    %v4588 = vunpack.c.l.b16 %v4550
    %v4589 = vunpack.c.l.b16 %v4551
    %v4590 = vunpack.c.l.b16 %v4552
    %v4591 = vunpack.c.l.b16 %v4553
    %v4592 = vunpack.c.l.b16 %v4554
    %v4593 = vunpack.c.l.b16 %v4555
    %v4594 = vunpack.c.l.b16 %v4556
    %v4595 = vunpack.c.l.b16 %v4557
    %v4596 = vpack.c.b16 %v4581, %v4580
    %v4597 = vpack.c.b16 %v4583, %v4582
    %v4598 = vpack.c.b16 %v4585, %v4584
    %v4599 = vpack.c.b16 %v4587, %v4586
    %v4600 = vpack.c.b16 %v4589, %v4588
    %v4601 = vpack.c.b16 %v4591, %v4590
    %v4602 = vpack.c.b16 %v4593, %v4592
    %v4603 = vpack.c.b16 %v4595, %v4594
    %4612 = vmatprep.subr.bf16.mxu0 0
    %4613 = vmatpush1.bf16.msra.mxu0 %v4603
    %4614 = vmatprep.subr.bf16.mxu0 0
    %4615 = vmatpush1.bf16.msra.mxu0 %v4602
    %4616 = vmatprep.subr.bf16.mxu0 0
    %4617 = vmatpush1.bf16.msra.mxu0 %v4601
    %4618 = vmatprep.subr.bf16.mxu0 0
    %4619 = vmatpush1.bf16.msra.mxu0 %v4600
    %4620 = vmatprep.subr.bf16.mxu0 0
    %4621 = vmatpush1.bf16.msra.mxu0 %v4599
    %4622 = vmatprep.subr.bf16.mxu0 0
    %4623 = vmatpush1.bf16.msra.mxu0 %v4598
    %4624 = vmatprep.subr.bf16.mxu0 0
    %4625 = vmatpush1.bf16.msra.mxu0 %v4597
    %4626 = vmatprep.subr.bf16.mxu0 0
    %4627 = vmatpush1.bf16.msra.mxu0 %v4596
    %4628 = vmatprep.subr.bf16.mxu0 0
    %4629 = vmatpush2.bf16.msra.mxu0 0
    %4630 = vmatprep.subr.bf16.mxu0 0
    %4631 = vmatpush2.bf16.msra.mxu0 0
    %4632 = vmatprep.subr.bf16.mxu0 0
    %4633 = vmatpush2.bf16.msra.mxu0 0
    %4634 = vmatprep.subr.bf16.mxu0 0
    %4635 = vmatpush2.bf16.msra.mxu0 0
    %4636 = vmatprep.subr.bf16.mxu0 0
    %4637 = vmatpush2.bf16.msra.mxu0 0
    %4638 = vmatprep.subr.bf16.mxu0 0
    %4639 = vmatpush2.bf16.msra.mxu0 0
    %4640 = vmatprep.subr.bf16.mxu0 0
    %4641 = vmatpush2.bf16.msra.mxu0 0
    %4642 = vmatprep.subr.bf16.mxu0 0
    %4643 = vmatpush2.bf16.msra.mxu0 0
    %4644 = vmatprep.mubr.bf16.mxu0 0
    %4645 = vmatmul.mubr.bf16.gmra.mxu0 %v4541
    %v4646 = vpop.f32.mrf.mxu0
    %v4647 = vadd.f32 %v4562, %v4646
    %v4648 = vpop.f32.mrf.mxu0
    %v4649 = vpop.f32.mrf.mxu0
    %v4650 = vpop.f32.mrf.mxu0
    %4651 = vdwg.mxu0
    %v4652 = vsel %vm3682, %v4647, -inf
    %4653 = vmax.xlane.f32.xlu0 %v4652
    %v4654 = vpop.xlane.xlu0 %4653
    %v4655 = vsub.f32 %v4647, %v4654
    %v4656 = vmul.f32 %v4655, 1.442695
    %v4657 = vpow.pop %v4656
    %v4658 = vsel %vm3682, %v4657, 0.0
    %4659 = vadd.xlane.f32.xlu0 %v4658
    %v4660 = vpop.xlane.xlu0 %4659
    %v4661 = vlog2.pop %v4660
    %v4662 = vmul.f32 %v4661, 0.6931472
    %v4663 = vadd.f32 %v4654, %v4662
    %v4664 = vsub.f32 %v4647, %v4663
    %vm4665 = vcmp.eq.f32.partialorder %v4647, %v4654
    %v4666 = vsel %vm4665, %v3634, 128
    %v4667 = vsel %vm3682, %v4666, 2147483647
    %v4668 = vand.u32 %v4667, 65535
    %v4669 = vshra.s32 %v4667, 16
    %v4670 = vcvt.s32.f32 %v4668
    %v4671 = vcvt.s32.f32 %v4669
    %4672 = vmin.xlane.f32.xlu0 %v4671
    %v4673 = vpop.xlane.xlu0 %4672
    %vm4674 = vcmp.eq.f32.partialorder %v4671, %v4673
    %v4675 = vsel %vm4674, %v4670, inf
    %4676 = vmin.xlane.f32.xlu0 %v4675
    %v4677 = vpop.xlane.xlu0 %4676
    %v4678 = vcvt.f32.s32 %v4677
    %v4679 = vcvt.f32.s32 %v4673
    %v4680 = vshll.u32 %v4679, 16
    %v4681 = vadd.s32 %v4680, %v4678
    %4682 = vst [vmem:[#allocation19] sm:$0x3] %v4664
    %vm4683 = vcmask 1024
    %4684 = vst.msk [vmem:[%s15] sm:$0x3] %vm4683, %v4681
    %vm4685 = vcmp.eq.s32.totalorder %v3634, %v4681
    %v4686 = vsel %vm4685, 1, 0
    %v4687 = vcvt.s32.f32 %v4686
    %v4688 = vpack.c.bf16 %v4687, %v4687
    %v4689 = vld [vmem:[#allocation4] sm:$0xff]
    %v4690 = vld [vmem:[#allocation4 + $0x8] sm:$0xf]
    %v4691 = vld [vmem:[#allocation4 + $0xc] sm:$0xff]
    %v4692 = vld [vmem:[#allocation4 + $0x14] sm:$0xf]
    %v4693 = vld [vmem:[#allocation4 + $0x18] sm:$0xff]
    %v4694 = vld [vmem:[#allocation4 + $0x20] sm:$0xf]
    %v4695 = vld [vmem:[#allocation4 + $0x24] sm:$0xff]
    %v4696 = vld [vmem:[#allocation4 + $0x2c] sm:$0xf]
    %v4697 = vld [vmem:[#allocation4 + $0x30] sm:$0xff]
    %v4698 = vld [vmem:[#allocation4 + $0x38] sm:$0xf]
    %v4699 = vld [vmem:[#allocation4 + $0x3c] sm:$0xff]
    %v4700 = vld [vmem:[#allocation4 + $0x44] sm:$0xf]
    %v4701 = vld [vmem:[#allocation4 + $0x48] sm:$0xff]
    %v4702 = vld [vmem:[#allocation4 + $0x50] sm:$0xf]
    %v4703 = vld [vmem:[#allocation4 + $0x54] sm:$0xff]
    %v4704 = vld [vmem:[#allocation4 + $0x5c] sm:$0xf]
    %v4705 = vld [vmem:[#allocation4 + $0x60] sm:$0xff]
    %v4706 = vld [vmem:[#allocation4 + $0x68] sm:$0xf]
    %v4707 = vld [vmem:[#allocation4 + $0x6c] sm:$0xff]
    %v4708 = vld [vmem:[#allocation4 + $0x74] sm:$0xf]
    %v4709 = vld [vmem:[#allocation4 + $0x78] sm:$0xff]
    %v4710 = vld [vmem:[#allocation4 + $0x80] sm:$0xf]
    %v4711 = vld [vmem:[#allocation4 + $0x84] sm:$0xff]
    %v4712 = vld [vmem:[#allocation4 + $0x8c] sm:$0xf]
    %v4713 = vld [vmem:[#allocation4 + $0x90] sm:$0xff]
    %v4714 = vld [vmem:[#allocation4 + $0x98] sm:$0xf]
    %v4715 = vld [vmem:[#allocation4 + $0x9c] sm:$0xff]
    %v4716 = vld [vmem:[#allocation4 + $0xa4] sm:$0xf]
    %v4717 = vld [vmem:[#allocation4 + $0xa8] sm:$0xff]
    %v4718 = vld [vmem:[#allocation4 + $0xb0] sm:$0xf]
    %v4719 = vld [vmem:[#allocation4 + $0xb4] sm:$0xff]
    %v4720 = vld [vmem:[#allocation4 + $0xbc] sm:$0xf]
    %v4721 = vmul.f32 %v3455, %v4540
    %v4722 = vmul.f32 %v3456, %v4540
    %v4723 = vmul.f32 %v3457, %v4540
    %v4724 = vmul.f32 %v3458, %v4540
    %v4725 = vmul.f32 %v3459, %v4540
    %v4726 = vmul.f32 %v3460, %v4540
    %v4727 = vmul.f32 %v3461, %v4540
    %v4728 = vmul.f32 %v3462, %v4540
    %v4729 = vsel %vm3682, %v4721, 0.0
    %4730 = vadd.xlane.f32.xlu0 %v4729
    %v4731 = vpop.xlane.xlu0 %4730
    %v4732 = vsel %vm3682, %v4722, 0.0
    %4733 = vadd.xlane.f32.xlu0 %v4732
    %v4734 = vpop.xlane.xlu0 %4733
    %v4735 = vsel %vm3682, %v4723, 0.0
    %4736 = vadd.xlane.f32.xlu0 %v4735
    %v4737 = vpop.xlane.xlu0 %4736
    %v4738 = vsel %vm3682, %v4724, 0.0
    %4739 = vadd.xlane.f32.xlu0 %v4738
    %v4740 = vpop.xlane.xlu0 %4739
    %v4741 = vsel %vm3682, %v4725, 0.0
    %4742 = vadd.xlane.f32.xlu0 %v4741
    %v4743 = vpop.xlane.xlu0 %4742
    %v4744 = vsel %vm3682, %v4726, 0.0
    %4745 = vadd.xlane.f32.xlu0 %v4744
    %v4746 = vpop.xlane.xlu0 %4745
    %v4747 = vsel %vm3682, %v4727, 0.0
    %4748 = vadd.xlane.f32.xlu0 %v4747
    %v4749 = vpop.xlane.xlu0 %4748
    %v4750 = vsel %vm3682, %v4728, 0.0
    %4751 = vadd.xlane.f32.xlu0 %v4750
    %v4752 = vpop.xlane.xlu0 %4751
    %v4753 = vsel %vm3682, %v4731, -inf
    %v4754 = vsel %vm3682, %v4734, -inf
    %v4755 = vsel %vm3682, %v4737, -inf
    %v4756 = vsel %vm3682, %v4740, -inf
    %v4757 = vsel %vm3682, %v4743, -inf
    %v4758 = vmax.f32 %v4753, %v4757
    %v4759 = vsel %vm3682, %v4746, -inf
    %v4760 = vmax.f32 %v4754, %v4759
    %v4761 = vsel %vm3682, %v4749, -inf
    %v4762 = vmax.f32 %v4755, %v4761
    %v4763 = vsel %vm3682, %v4752, -inf
    %v4764 = vmax.f32 %v4756, %v4763
    %v4765 = vmax.f32 %v4758, %v4760
    %v4766 = vmax.f32 %v4762, %v4764
    %v4767 = vmax.f32 %v4765, %v4766
    %v4768 = vsub.f32 %v4731, %v4767
    %v4769 = vsub.f32 %v4734, %v4767
    %v4770 = vsub.f32 %v4737, %v4767
    %v4771 = vsub.f32 %v4740, %v4767
    %v4772 = vsub.f32 %v4743, %v4767
    %v4773 = vsub.f32 %v4746, %v4767
    %v4774 = vsub.f32 %v4749, %v4767
    %v4775 = vsub.f32 %v4752, %v4767
    %v4776 = vmul.f32 %v4768, 1.442695
    %v4777 = vpow.pop %v4776
    %v4778 = vmul.f32 %v4769, 1.442695
    %v4779 = vpow.pop %v4778
    %v4780 = vmul.f32 %v4770, 1.442695
    %v4781 = vpow.pop %v4780
    %v4782 = vmul.f32 %v4771, 1.442695
    %v4783 = vpow.pop %v4782
    %v4784 = vmul.f32 %v4772, 1.442695
    %v4785 = vpow.pop %v4784
    %v4786 = vmul.f32 %v4773, 1.442695
    %v4787 = vpow.pop %v4786
    %v4788 = vmul.f32 %v4774, 1.442695
    %v4789 = vpow.pop %v4788
    %v4790 = vmul.f32 %v4775, 1.442695
    %v4791 = vpow.pop %v4790
    %v4792 = vsel %vm3682, %v4777, 0.0
    %v4793 = vsel %vm3682, %v4779, 0.0
    %v4794 = vadd.f32 %v4792, %v4793
    %v4795 = vsel %vm3682, %v4781, 0.0
    %v4796 = vadd.f32 %v4794, %v4795
    %v4797 = vsel %vm3682, %v4783, 0.0
    %v4798 = vadd.f32 %v4796, %v4797
    %v4799 = vsel %vm3682, %v4785, 0.0
    %v4800 = vadd.f32 %v4798, %v4799
    %v4801 = vsel %vm3682, %v4787, 0.0
    %v4802 = vadd.f32 %v4800, %v4801
    %v4803 = vsel %vm3682, %v4789, 0.0
    %v4804 = vadd.f32 %v4802, %v4803
    %v4805 = vsel %vm3682, %v4791, 0.0
    %v4806 = vadd.f32 %v4804, %v4805
    %v4807 = vrcp.pop %v4806
    %v4808 = vmul.f32 %v4777, %v4807
    %v4809 = vmul.f32 %v4779, %v4807
    %v4810 = vmul.f32 %v4781, %v4807
    %v4811 = vmul.f32 %v4783, %v4807
    %v4812 = vmul.f32 %v4785, %v4807
    %v4813 = vmul.f32 %v4787, %v4807
    %v4814 = vmul.f32 %v4789, %v4807
    %v4815 = vmul.f32 %v4791, %v4807
    %v4816 = vmul.f32 %v4808, %v3455
    %v4817 = vmul.f32 %v4809, %v3456
    %v4818 = vmul.f32 %v4810, %v3457
    %v4819 = vmul.f32 %v4811, %v3458
    %v4820 = vmul.f32 %v4812, %v3459
    %v4821 = vmul.f32 %v4813, %v3460
    %v4822 = vmul.f32 %v4814, %v3461
    %v4823 = vmul.f32 %v4815, %v3462
    %v4824 = vsel %vm3682, %v4816, 0.0
    %v4825 = vsel %vm3682, %v4817, 0.0
    %v4826 = vadd.f32 %v4824, %v4825
    %v4827 = vsel %vm3682, %v4818, 0.0
    %v4828 = vadd.f32 %v4826, %v4827
    %v4829 = vsel %vm3682, %v4819, 0.0
    %v4830 = vadd.f32 %v4828, %v4829
    %v4831 = vsel %vm3682, %v4820, 0.0
    %v4832 = vadd.f32 %v4830, %v4831
    %v4833 = vsel %vm3682, %v4821, 0.0
    %v4834 = vadd.f32 %v4832, %v4833
    %v4835 = vsel %vm3682, %v4822, 0.0
    %v4836 = vadd.f32 %v4834, %v4835
    %v4837 = vsel %vm3682, %v4823, 0.0
    %v4838 = vadd.f32 %v4836, %v4837
    %v4839 = vpack.c.bf16 %v4838, %v4838
    %v4840 = vld [vmem:[#allocation14] sm:$0xff]
    %v4841 = vld [vmem:[#allocation14 + $0x8] sm:$0xf]
    %v4842 = vld [vmem:[#allocation14 + $0xc] sm:$0xff]
    %v4843 = vld [vmem:[#allocation14 + $0x14] sm:$0xf]
    %v4844 = vld [vmem:[#allocation14 + $0x18] sm:$0xff]
    %v4845 = vld [vmem:[#allocation14 + $0x20] sm:$0xf]
    %v4846 = vld [vmem:[#allocation14 + $0x24] sm:$0xff]
    %v4847 = vld [vmem:[#allocation14 + $0x2c] sm:$0xf]
    %v4848 = vld [vmem:[#allocation14 + $0x30] sm:$0xff]
    %v4849 = vld [vmem:[#allocation14 + $0x38] sm:$0xf]
    %v4850 = vld [vmem:[#allocation14 + $0x3c] sm:$0xff]
    %v4851 = vld [vmem:[#allocation14 + $0x44] sm:$0xf]
    %v4852 = vld [vmem:[#allocation14 + $0x48] sm:$0xff]
    %v4853 = vld [vmem:[#allocation14 + $0x50] sm:$0xf]
    %v4854 = vld [vmem:[#allocation14 + $0x54] sm:$0xff]
    %v4855 = vld [vmem:[#allocation14 + $0x5c] sm:$0xf]
    %v4856 = vld [vmem:[#allocation14 + $0x60] sm:$0xff]
    %v4857 = vld [vmem:[#allocation14 + $0x68] sm:$0xf]
    %v4858 = vld [vmem:[#allocation14 + $0x6c] sm:$0xff]
    %v4859 = vld [vmem:[#allocation14 + $0x74] sm:$0xf]
    %v4860 = vld [vmem:[#allocation14 + $0x78] sm:$0xff]
    %v4861 = vld [vmem:[#allocation14 + $0x80] sm:$0xf]
    %v4862 = vld [vmem:[#allocation14 + $0x84] sm:$0xff]
    %v4863 = vld [vmem:[#allocation14 + $0x8c] sm:$0xf]
    %v4864 = vld [vmem:[#allocation14 + $0x90] sm:$0xff]
    %v4865 = vld [vmem:[#allocation14 + $0x98] sm:$0xf]
    %v4866 = vld [vmem:[#allocation14 + $0x9c] sm:$0xff]
    %v4867 = vld [vmem:[#allocation14 + $0xa4] sm:$0xf]
    %v4868 = vld [vmem:[#allocation14 + $0xa8] sm:$0xff]
    %v4869 = vld [vmem:[#allocation14 + $0xb0] sm:$0xf]
    %v4870 = vld [vmem:[#allocation14 + $0xb4] sm:$0xff]
    %v4871 = vld [vmem:[#allocation14 + $0xbc] sm:$0xf]
    %v4904 = vunpack.c.l.b16 %v4840
    %v4905 = vunpack.c.h.b16 %v4840
    %v4906 = vunpack.c.l.b16 %v4841
    %v4907 = vunpack.c.l.b16 %v4842
    %v4908 = vunpack.c.h.b16 %v4842
    %v4909 = vunpack.c.l.b16 %v4843
    %v4910 = vunpack.c.l.b16 %v4844
    %v4911 = vunpack.c.h.b16 %v4844
    %v4912 = vunpack.c.l.b16 %v4845
    %v4913 = vunpack.c.l.b16 %v4846
    %v4914 = vunpack.c.h.b16 %v4846
    %v4915 = vunpack.c.l.b16 %v4847
    %v4916 = vunpack.c.l.b16 %v4848
    %v4917 = vunpack.c.h.b16 %v4848
    %v4918 = vunpack.c.l.b16 %v4849
    %v4919 = vunpack.c.l.b16 %v4850
    %v4920 = vunpack.c.h.b16 %v4850
    %v4921 = vunpack.c.l.b16 %v4851
    %v4922 = vunpack.c.l.b16 %v4852
    %v4923 = vunpack.c.h.b16 %v4852
    %v4924 = vunpack.c.l.b16 %v4853
    %v4925 = vunpack.c.l.b16 %v4854
    %v4926 = vunpack.c.h.b16 %v4854
    %v4927 = vunpack.c.l.b16 %v4855
    %v4928 = vunpack.c.l.b16 %v4856
    %v4929 = vunpack.c.h.b16 %v4856
    %v4930 = vunpack.c.l.b16 %v4857
    %v4931 = vunpack.c.l.b16 %v4858
    %v4932 = vunpack.c.h.b16 %v4858
    %v4933 = vunpack.c.l.b16 %v4859
    %v4934 = vunpack.c.l.b16 %v4860
    %v4935 = vunpack.c.h.b16 %v4860
    %v4936 = vunpack.c.l.b16 %v4861
    %v4937 = vunpack.c.l.b16 %v4862
    %v4938 = vunpack.c.h.b16 %v4862
    %v4939 = vunpack.c.l.b16 %v4863
    %v4940 = vunpack.c.l.b16 %v4864
    %v4941 = vunpack.c.h.b16 %v4864
    %v4942 = vunpack.c.l.b16 %v4865
    %v4943 = vunpack.c.l.b16 %v4866
    %v4944 = vunpack.c.h.b16 %v4866
    %v4945 = vunpack.c.l.b16 %v4867
    %v4946 = vunpack.c.l.b16 %v4868
    %v4947 = vunpack.c.h.b16 %v4868
    %v4948 = vunpack.c.l.b16 %v4869
    %v4949 = vunpack.c.l.b16 %v4870
    %v4950 = vunpack.c.h.b16 %v4870
    %v4951 = vunpack.c.l.b16 %v4871
    %v4952 = vpack.c.b16 %v4907, %v4904
    %v4953 = vpack.c.b16 %v4908, %v4905
    %v4954 = vpack.c.b16 %v4909, %v4906
    %v4955 = vpack.c.b16 %v4913, %v4910
    %v4956 = vpack.c.b16 %v4914, %v4911
    %v4957 = vpack.c.b16 %v4915, %v4912
    %v4958 = vpack.c.b16 %v4919, %v4916
    %v4959 = vpack.c.b16 %v4920, %v4917
    %v4960 = vpack.c.b16 %v4921, %v4918
    %v4961 = vpack.c.b16 %v4925, %v4922
    %v4962 = vpack.c.b16 %v4926, %v4923
    %v4963 = vpack.c.b16 %v4927, %v4924
    %v4964 = vpack.c.b16 %v4931, %v4928
    %v4965 = vpack.c.b16 %v4932, %v4929
    %v4966 = vpack.c.b16 %v4933, %v4930
    %v4967 = vpack.c.b16 %v4937, %v4934
    %v4968 = vpack.c.b16 %v4938, %v4935
    %v4969 = vpack.c.b16 %v4939, %v4936
    %v4970 = vpack.c.b16 %v4943, %v4940
    %v4971 = vpack.c.b16 %v4944, %v4941
    %v4972 = vpack.c.b16 %v4945, %v4942
    %v4973 = vpack.c.b16 %v4949, %v4946
    %v4974 = vpack.c.b16 %v4950, %v4947
    %v4975 = vpack.c.b16 %v4951, %v4948
    %5000 = vmatprep.subr.bf16.mxu0 %v4974
    %5001 = vmatpush1.bf16.msra.mxu0 %v4973
    %5002 = vmatprep.subr.bf16.mxu0 %v4971
    %5003 = vmatpush1.bf16.msra.mxu0 %v4970
    %5004 = vmatprep.subr.bf16.mxu0 %v4968
    %5005 = vmatpush1.bf16.msra.mxu0 %v4967
    %5006 = vmatprep.subr.bf16.mxu0 %v4965
    %5007 = vmatpush1.bf16.msra.mxu0 %v4964
    %5008 = vmatprep.subr.bf16.mxu0 %v4962
    %5009 = vmatpush1.bf16.msra.mxu0 %v4961
    %5010 = vmatprep.subr.bf16.mxu0 %v4959
    %5011 = vmatpush1.bf16.msra.mxu0 %v4958
    %5012 = vmatprep.subr.bf16.mxu0 %v4956
    %5013 = vmatpush1.bf16.msra.mxu0 %v4955
    %5014 = vmatprep.subr.bf16.mxu0 %v4953
    %5015 = vmatpush1.bf16.msra.mxu0 %v4952
    %5016 = vmatprep.subr.bf16.mxu0 0
    %5017 = vmatpush2.bf16.msra.mxu0 0
    %5018 = vmatprep.subr.bf16.mxu0 0
    %5019 = vmatpush2.bf16.msra.mxu0 0
    %5020 = vmatprep.subr.bf16.mxu0 0
    %5021 = vmatpush2.bf16.msra.mxu0 0
    %5022 = vmatprep.subr.bf16.mxu0 0
    %5023 = vmatpush2.bf16.msra.mxu0 0
    %5024 = vmatprep.subr.bf16.mxu0 0
    %5025 = vmatpush2.bf16.msra.mxu0 0
    %5026 = vmatprep.subr.bf16.mxu0 0
    %5027 = vmatpush2.bf16.msra.mxu0 0
    %5028 = vmatprep.subr.bf16.mxu0 0
    %5029 = vmatpush2.bf16.msra.mxu0 0
    %5030 = vmatprep.subr.bf16.mxu0 0
    %5031 = vmatpush2.bf16.msra.mxu0 0
    %5032 = vmatprep.mubr.bf16.mxu0 0
    %5033 = vmatmul.mubr.bf16.gmra.mxu0 %v4839
    %v5034 = vpop.f32.mrf.mxu0
    %v5035 = vadd.f32 0.0, %v5034
    %v5036 = vpop.f32.mrf.mxu0
    %v5037 = vadd.f32 0.0, %v5036
    %v5038 = vpop.f32.mrf.mxu0
    %v5039 = vpop.f32.mrf.mxu0
    %5040 = vdwg.mxu0
    %5041 = vmatprep.subr.bf16.mxu0 0
    %5042 = vmatpush1.bf16.msra.mxu0 %v4975
    %5043 = vmatprep.subr.bf16.mxu0 0
    %5044 = vmatpush1.bf16.msra.mxu0 %v4972
    %5045 = vmatprep.subr.bf16.mxu0 0
    %5046 = vmatpush1.bf16.msra.mxu0 %v4969
    %5047 = vmatprep.subr.bf16.mxu0 0
    %5048 = vmatpush1.bf16.msra.mxu0 %v4966
    %5049 = vmatprep.subr.bf16.mxu0 0
    %5050 = vmatpush1.bf16.msra.mxu0 %v4963
    %5051 = vmatprep.subr.bf16.mxu0 0
    %5052 = vmatpush1.bf16.msra.mxu0 %v4960
    %5053 = vmatprep.subr.bf16.mxu0 0
    %5054 = vmatpush1.bf16.msra.mxu0 %v4957
    %5055 = vmatprep.subr.bf16.mxu0 0
    %5056 = vmatpush1.bf16.msra.mxu0 %v4954
    %5057 = vmatprep.subr.bf16.mxu0 0
    %5058 = vmatpush2.bf16.msra.mxu0 0
    %5059 = vmatprep.subr.bf16.mxu0 0
    %5060 = vmatpush2.bf16.msra.mxu0 0
    %5061 = vmatprep.subr.bf16.mxu0 0
    %5062 = vmatpush2.bf16.msra.mxu0 0
    %5063 = vmatprep.subr.bf16.mxu0 0
    %5064 = vmatpush2.bf16.msra.mxu0 0
    %5065 = vmatprep.subr.bf16.mxu0 0
    %5066 = vmatpush2.bf16.msra.mxu0 0
    %5067 = vmatprep.subr.bf16.mxu0 0
    %5068 = vmatpush2.bf16.msra.mxu0 0
    %5069 = vmatprep.subr.bf16.mxu0 0
    %5070 = vmatpush2.bf16.msra.mxu0 0
    %5071 = vmatprep.subr.bf16.mxu0 0
    %5072 = vmatpush2.bf16.msra.mxu0 0
    %5073 = vmatprep.mubr.bf16.mxu0 0
    %5074 = vmatmul.mubr.bf16.gmra.mxu0 %v4839
    %v5075 = vpop.f32.mrf.mxu0
    %v5076 = vadd.f32 0.0, %v5075
    %v5077 = vpop.f32.mrf.mxu0
    %v5078 = vpop.f32.mrf.mxu0
    %v5079 = vpop.f32.mrf.mxu0
    %5080 = vdwg.mxu0
    %v5113 = vunpack.c.l.b16 %v4689
    %v5114 = vunpack.c.h.b16 %v4689
    %v5115 = vunpack.c.l.b16 %v4690
    %v5116 = vunpack.c.l.b16 %v4691
    %v5117 = vunpack.c.h.b16 %v4691
    %v5118 = vunpack.c.l.b16 %v4692
    %v5119 = vunpack.c.l.b16 %v4693
    %v5120 = vunpack.c.h.b16 %v4693
    %v5121 = vunpack.c.l.b16 %v4694
    %v5122 = vunpack.c.l.b16 %v4695
    %v5123 = vunpack.c.h.b16 %v4695
    %v5124 = vunpack.c.l.b16 %v4696
    %v5125 = vunpack.c.l.b16 %v4697
    %v5126 = vunpack.c.h.b16 %v4697
    %v5127 = vunpack.c.l.b16 %v4698
    %v5128 = vunpack.c.l.b16 %v4699
    %v5129 = vunpack.c.h.b16 %v4699
    %v5130 = vunpack.c.l.b16 %v4700
    %v5131 = vunpack.c.l.b16 %v4701
    %v5132 = vunpack.c.h.b16 %v4701
    %v5133 = vunpack.c.l.b16 %v4702
    %v5134 = vunpack.c.l.b16 %v4703
    %v5135 = vunpack.c.h.b16 %v4703
    %v5136 = vunpack.c.l.b16 %v4704
    %v5137 = vunpack.c.l.b16 %v4705
    %v5138 = vunpack.c.h.b16 %v4705
    %v5139 = vunpack.c.l.b16 %v4706
    %v5140 = vunpack.c.l.b16 %v4707
    %v5141 = vunpack.c.h.b16 %v4707
    %v5142 = vunpack.c.l.b16 %v4708
    %v5143 = vunpack.c.l.b16 %v4709
    %v5144 = vunpack.c.h.b16 %v4709
    %v5145 = vunpack.c.l.b16 %v4710
    %v5146 = vunpack.c.l.b16 %v4711
    %v5147 = vunpack.c.h.b16 %v4711
    %v5148 = vunpack.c.l.b16 %v4712
    %v5149 = vunpack.c.l.b16 %v4713
    %v5150 = vunpack.c.h.b16 %v4713
    %v5151 = vunpack.c.l.b16 %v4714
    %v5152 = vunpack.c.l.b16 %v4715
    %v5153 = vunpack.c.h.b16 %v4715
    %v5154 = vunpack.c.l.b16 %v4716
    %v5155 = vunpack.c.l.b16 %v4717
    %v5156 = vunpack.c.h.b16 %v4717
    %v5157 = vunpack.c.l.b16 %v4718
    %v5158 = vunpack.c.l.b16 %v4719
    %v5159 = vunpack.c.h.b16 %v4719
    %v5160 = vunpack.c.l.b16 %v4720
    %v5161 = vpack.c.b16 %v5116, %v5113
    %v5162 = vpack.c.b16 %v5117, %v5114
    %v5163 = vpack.c.b16 %v5118, %v5115
    %v5164 = vpack.c.b16 %v5122, %v5119
    %v5165 = vpack.c.b16 %v5123, %v5120
    %v5166 = vpack.c.b16 %v5124, %v5121
    %v5167 = vpack.c.b16 %v5128, %v5125
    %v5168 = vpack.c.b16 %v5129, %v5126
    %v5169 = vpack.c.b16 %v5130, %v5127
    %v5170 = vpack.c.b16 %v5134, %v5131
    %v5171 = vpack.c.b16 %v5135, %v5132
    %v5172 = vpack.c.b16 %v5136, %v5133
    %v5173 = vpack.c.b16 %v5140, %v5137
    %v5174 = vpack.c.b16 %v5141, %v5138
    %v5175 = vpack.c.b16 %v5142, %v5139
    %v5176 = vpack.c.b16 %v5146, %v5143
    %v5177 = vpack.c.b16 %v5147, %v5144
    %v5178 = vpack.c.b16 %v5148, %v5145
    %v5179 = vpack.c.b16 %v5152, %v5149
    %v5180 = vpack.c.b16 %v5153, %v5150
    %v5181 = vpack.c.b16 %v5154, %v5151
    %v5182 = vpack.c.b16 %v5158, %v5155
    %v5183 = vpack.c.b16 %v5159, %v5156
    %v5184 = vpack.c.b16 %v5160, %v5157
    %5209 = vmatprep.subr.bf16.mxu0 %v5183
    %5210 = vmatpush1.bf16.msra.mxu0 %v5182
    %5211 = vmatprep.subr.bf16.mxu0 %v5180
    %5212 = vmatpush1.bf16.msra.mxu0 %v5179
    %5213 = vmatprep.subr.bf16.mxu0 %v5177
    %5214 = vmatpush1.bf16.msra.mxu0 %v5176
    %5215 = vmatprep.subr.bf16.mxu0 %v5174
    %5216 = vmatpush1.bf16.msra.mxu0 %v5173
    %5217 = vmatprep.subr.bf16.mxu0 %v5171
    %5218 = vmatpush1.bf16.msra.mxu0 %v5170
    %5219 = vmatprep.subr.bf16.mxu0 %v5168
    %5220 = vmatpush1.bf16.msra.mxu0 %v5167
    %5221 = vmatprep.subr.bf16.mxu0 %v5165
    %5222 = vmatpush1.bf16.msra.mxu0 %v5164
    %5223 = vmatprep.subr.bf16.mxu0 %v5162
    %5224 = vmatpush1.bf16.msra.mxu0 %v5161
    %5225 = vmatprep.subr.bf16.mxu0 0
    %5226 = vmatpush2.bf16.msra.mxu0 0
    %5227 = vmatprep.subr.bf16.mxu0 0
    %5228 = vmatpush2.bf16.msra.mxu0 0
    %5229 = vmatprep.subr.bf16.mxu0 0
    %5230 = vmatpush2.bf16.msra.mxu0 0
    %5231 = vmatprep.subr.bf16.mxu0 0
    %5232 = vmatpush2.bf16.msra.mxu0 0
    %5233 = vmatprep.subr.bf16.mxu0 0
    %5234 = vmatpush2.bf16.msra.mxu0 0
    %5235 = vmatprep.subr.bf16.mxu0 0
    %5236 = vmatpush2.bf16.msra.mxu0 0
    %5237 = vmatprep.subr.bf16.mxu0 0
    %5238 = vmatpush2.bf16.msra.mxu0 0
    %5239 = vmatprep.subr.bf16.mxu0 0
    %5240 = vmatpush2.bf16.msra.mxu0 0
    %5241 = vmatprep.mubr.bf16.mxu0 0
    %5242 = vmatmul.mubr.bf16.gmra.mxu0 %v4688
    %v5243 = vpop.f32.mrf.mxu0
    %v5244 = vadd.f32 %v5035, %v5243
    %v5245 = vpop.f32.mrf.mxu0
    %v5246 = vadd.f32 %v5037, %v5245
    %v5247 = vpop.f32.mrf.mxu0
    %v5248 = vpop.f32.mrf.mxu0
    %5249 = vdwg.mxu0
    %5250 = vmatprep.subr.bf16.mxu0 0
    %5251 = vmatpush1.bf16.msra.mxu0 %v5184
    %5252 = vmatprep.subr.bf16.mxu0 0
    %5253 = vmatpush1.bf16.msra.mxu0 %v5181
    %5254 = vmatprep.subr.bf16.mxu0 0
    %5255 = vmatpush1.bf16.msra.mxu0 %v5178
    %5256 = vmatprep.subr.bf16.mxu0 0
    %5257 = vmatpush1.bf16.msra.mxu0 %v5175
    %5258 = vmatprep.subr.bf16.mxu0 0
    %5259 = vmatpush1.bf16.msra.mxu0 %v5172
    %5260 = vmatprep.subr.bf16.mxu0 0
    %5261 = vmatpush1.bf16.msra.mxu0 %v5169
    %5262 = vmatprep.subr.bf16.mxu0 0
    %5263 = vmatpush1.bf16.msra.mxu0 %v5166
    %5264 = vmatprep.subr.bf16.mxu0 0
    %5265 = vmatpush1.bf16.msra.mxu0 %v5163
    %5266 = vmatprep.subr.bf16.mxu0 0
    %5267 = vmatpush2.bf16.msra.mxu0 0
    %5268 = vmatprep.subr.bf16.mxu0 0
    %5269 = vmatpush2.bf16.msra.mxu0 0
    %5270 = vmatprep.subr.bf16.mxu0 0
    %5271 = vmatpush2.bf16.msra.mxu0 0
    %5272 = vmatprep.subr.bf16.mxu0 0
    %5273 = vmatpush2.bf16.msra.mxu0 0
    %5274 = vmatprep.subr.bf16.mxu0 0
    %5275 = vmatpush2.bf16.msra.mxu0 0
    %5276 = vmatprep.subr.bf16.mxu0 0
    %5277 = vmatpush2.bf16.msra.mxu0 0
    %5278 = vmatprep.subr.bf16.mxu0 0
    %5279 = vmatpush2.bf16.msra.mxu0 0
    %5280 = vmatprep.subr.bf16.mxu0 0
    %5281 = vmatpush2.bf16.msra.mxu0 0
    %5282 = vmatprep.mubr.bf16.mxu0 0
    %5283 = vmatmul.mubr.bf16.gmra.mxu0 %v4688
    %v5284 = vpop.f32.mrf.mxu0
    %v5285 = vadd.f32 %v5076, %v5284
    %v5286 = vpop.f32.mrf.mxu0
    %v5287 = vpop.f32.mrf.mxu0
    %v5288 = vpop.f32.mrf.mxu0
    %5289 = vdwg.mxu0
    %v5290 = vadd.f32 %v5244, %v4248
    %v5291 = vadd.f32 %v5246, %v4252
    %v5292 = vadd.f32 %v5285, %v4256
    %v5293 = vld [vmem:[#allocation16] sm:$0xff]
    %v5294 = vld [vmem:[#allocation16 + $0x8] sm:$0xf]
    %v5295 = vld [vmem:[#allocation16 + $0xc] sm:$0xff]
    %v5296 = vld [vmem:[#allocation16 + $0x14] sm:$0xf]
    %v5297 = vld [vmem:[#allocation16 + $0x18] sm:$0xff]
    %v5298 = vld [vmem:[#allocation16 + $0x20] sm:$0xf]
    %v5299 = vld [vmem:[#allocation16 + $0x24] sm:$0xff]
    %v5300 = vld [vmem:[#allocation16 + $0x2c] sm:$0xf]
    %v5301 = vld [vmem:[#allocation16 + $0x30] sm:$0xff]
    %v5302 = vld [vmem:[#allocation16 + $0x38] sm:$0xf]
    %v5303 = vld [vmem:[#allocation16 + $0x3c] sm:$0xff]
    %v5304 = vld [vmem:[#allocation16 + $0x44] sm:$0xf]
    %v5305 = vld [vmem:[#allocation16 + $0x48] sm:$0xff]
    %v5306 = vld [vmem:[#allocation16 + $0x50] sm:$0xf]
    %v5307 = vld [vmem:[#allocation16 + $0x54] sm:$0xff]
    %v5308 = vld [vmem:[#allocation16 + $0x5c] sm:$0xf]
    %v5309 = vld [vmem:[#allocation16 + $0x60] sm:$0xff]
    %v5310 = vld [vmem:[#allocation16 + $0x68] sm:$0xf]
    %v5311 = vld [vmem:[#allocation16 + $0x6c] sm:$0xff]
    %v5312 = vld [vmem:[#allocation16 + $0x74] sm:$0xf]
    %v5313 = vld [vmem:[#allocation16 + $0x78] sm:$0xff]
    %v5314 = vld [vmem:[#allocation16 + $0x80] sm:$0xf]
    %v5315 = vld [vmem:[#allocation16 + $0x84] sm:$0xff]
    %v5316 = vld [vmem:[#allocation16 + $0x8c] sm:$0xf]
    %v5317 = vld [vmem:[#allocation16 + $0x90] sm:$0xff]
    %v5318 = vld [vmem:[#allocation16 + $0x98] sm:$0xf]
    %v5319 = vld [vmem:[#allocation16 + $0x9c] sm:$0xff]
    %v5320 = vld [vmem:[#allocation16 + $0xa4] sm:$0xf]
    %v5321 = vld [vmem:[#allocation16 + $0xa8] sm:$0xff]
    %v5322 = vld [vmem:[#allocation16 + $0xb0] sm:$0xf]
    %v5323 = vld [vmem:[#allocation16 + $0xb4] sm:$0xff]
    %v5324 = vld [vmem:[#allocation16 + $0xbc] sm:$0xf]
    %v5357 = vunpack.c.l.b16 %v5293
    %v5358 = vunpack.c.h.b16 %v5293
    %v5359 = vunpack.c.l.b16 %v5294
    %v5360 = vunpack.c.l.b16 %v5295
    %v5361 = vunpack.c.h.b16 %v5295
    %v5362 = vunpack.c.l.b16 %v5296
    %v5363 = vunpack.c.l.b16 %v5297
    %v5364 = vunpack.c.h.b16 %v5297
    %v5365 = vunpack.c.l.b16 %v5298
    %v5366 = vunpack.c.l.b16 %v5299
    %v5367 = vunpack.c.h.b16 %v5299
    %v5368 = vunpack.c.l.b16 %v5300
    %v5369 = vunpack.c.l.b16 %v5301
    %v5370 = vunpack.c.h.b16 %v5301
    %v5371 = vunpack.c.l.b16 %v5302
    %v5372 = vunpack.c.l.b16 %v5303
    %v5373 = vunpack.c.h.b16 %v5303
    %v5374 = vunpack.c.l.b16 %v5304
    %v5375 = vunpack.c.l.b16 %v5305
    %v5376 = vunpack.c.h.b16 %v5305
    %v5377 = vunpack.c.l.b16 %v5306
    %v5378 = vunpack.c.l.b16 %v5307
    %v5379 = vunpack.c.h.b16 %v5307
    %v5380 = vunpack.c.l.b16 %v5308
    %v5381 = vunpack.c.l.b16 %v5309
    %v5382 = vunpack.c.h.b16 %v5309
    %v5383 = vunpack.c.l.b16 %v5310
    %v5384 = vunpack.c.l.b16 %v5311
    %v5385 = vunpack.c.h.b16 %v5311
    %v5386 = vunpack.c.l.b16 %v5312
    %v5387 = vunpack.c.l.b16 %v5313
    %v5388 = vunpack.c.h.b16 %v5313
    %v5389 = vunpack.c.l.b16 %v5314
    %v5390 = vunpack.c.l.b16 %v5315
    %v5391 = vunpack.c.h.b16 %v5315
    %v5392 = vunpack.c.l.b16 %v5316
    %v5393 = vunpack.c.l.b16 %v5317
    %v5394 = vunpack.c.h.b16 %v5317
    %v5395 = vunpack.c.l.b16 %v5318
    %v5396 = vunpack.c.l.b16 %v5319
    %v5397 = vunpack.c.h.b16 %v5319
    %v5398 = vunpack.c.l.b16 %v5320
    %v5399 = vunpack.c.l.b16 %v5321
    %v5400 = vunpack.c.h.b16 %v5321
    %v5401 = vunpack.c.l.b16 %v5322
    %v5402 = vunpack.c.l.b16 %v5323
    %v5403 = vunpack.c.h.b16 %v5323
    %v5404 = vunpack.c.l.b16 %v5324
    %v5405 = vpack.c.b16 %v5360, %v5357
    %v5406 = vpack.c.b16 %v5361, %v5358
    %v5407 = vpack.c.b16 %v5362, %v5359
    %v5408 = vpack.c.b16 %v5366, %v5363
    %v5409 = vpack.c.b16 %v5367, %v5364
    %v5410 = vpack.c.b16 %v5368, %v5365
    %v5411 = vpack.c.b16 %v5372, %v5369
    %v5412 = vpack.c.b16 %v5373, %v5370
    %v5413 = vpack.c.b16 %v5374, %v5371
    %v5414 = vpack.c.b16 %v5378, %v5375
    %v5415 = vpack.c.b16 %v5379, %v5376
    %v5416 = vpack.c.b16 %v5380, %v5377
    %v5417 = vpack.c.b16 %v5384, %v5381
    %v5418 = vpack.c.b16 %v5385, %v5382
    %v5419 = vpack.c.b16 %v5386, %v5383
    %v5420 = vpack.c.b16 %v5390, %v5387
    %v5421 = vpack.c.b16 %v5391, %v5388
    %v5422 = vpack.c.b16 %v5392, %v5389
    %v5423 = vpack.c.b16 %v5396, %v5393
    %v5424 = vpack.c.b16 %v5397, %v5394
    %v5425 = vpack.c.b16 %v5398, %v5395
    %v5426 = vpack.c.b16 %v5402, %v5399
    %v5427 = vpack.c.b16 %v5403, %v5400
    %v5428 = vpack.c.b16 %v5404, %v5401
    %5453 = vmatprep.subr.bf16.mxu0 %v5427
    %5454 = vmatpush1.bf16.msra.mxu0 %v5426
    %5455 = vmatprep.subr.bf16.mxu0 %v5424
    %5456 = vmatpush1.bf16.msra.mxu0 %v5423
    %5457 = vmatprep.subr.bf16.mxu0 %v5421
    %5458 = vmatpush1.bf16.msra.mxu0 %v5420
    %5459 = vmatprep.subr.bf16.mxu0 %v5418
    %5460 = vmatpush1.bf16.msra.mxu0 %v5417
    %5461 = vmatprep.subr.bf16.mxu0 %v5415
    %5462 = vmatpush1.bf16.msra.mxu0 %v5414
    %5463 = vmatprep.subr.bf16.mxu0 %v5412
    %5464 = vmatpush1.bf16.msra.mxu0 %v5411
    %5465 = vmatprep.subr.bf16.mxu0 %v5409
    %5466 = vmatpush1.bf16.msra.mxu0 %v5408
    %5467 = vmatprep.subr.bf16.mxu0 %v5406
    %5468 = vmatpush1.bf16.msra.mxu0 %v5405
    %5469 = vmatprep.subr.bf16.mxu0 0
    %5470 = vmatpush2.bf16.msra.mxu0 0
    %5471 = vmatprep.subr.bf16.mxu0 0
    %5472 = vmatpush2.bf16.msra.mxu0 0
    %5473 = vmatprep.subr.bf16.mxu0 0
    %5474 = vmatpush2.bf16.msra.mxu0 0
    %5475 = vmatprep.subr.bf16.mxu0 0
    %5476 = vmatpush2.bf16.msra.mxu0 0
    %5477 = vmatprep.subr.bf16.mxu0 0
    %5478 = vmatpush2.bf16.msra.mxu0 0
    %5479 = vmatprep.subr.bf16.mxu0 0
    %5480 = vmatpush2.bf16.msra.mxu0 0
    %5481 = vmatprep.subr.bf16.mxu0 0
    %5482 = vmatpush2.bf16.msra.mxu0 0
    %5483 = vmatprep.subr.bf16.mxu0 0
    %5484 = vmatpush2.bf16.msra.mxu0 0
    %5485 = vmatprep.mubr.bf16.mxu0 0
    %5486 = vmatmul.mubr.bf16.gmra.mxu0 %v4541
    %v5487 = vpop.f32.mrf.mxu0
    %v5488 = vadd.f32 %v4299, %v5487
    %v5489 = vpop.f32.mrf.mxu0
    %v5490 = vadd.f32 %v4303, %v5489
    %v5491 = vpop.f32.mrf.mxu0
    %v5492 = vpop.f32.mrf.mxu0
    %5493 = vdwg.mxu0
    %5494 = vmatprep.subr.bf16.mxu0 0
    %5495 = vmatpush1.bf16.msra.mxu0 %v5428
    %5496 = vmatprep.subr.bf16.mxu0 0
    %5497 = vmatpush1.bf16.msra.mxu0 %v5425
    %5498 = vmatprep.subr.bf16.mxu0 0
    %5499 = vmatpush1.bf16.msra.mxu0 %v5422
    %5500 = vmatprep.subr.bf16.mxu0 0
    %5501 = vmatpush1.bf16.msra.mxu0 %v5419
    %5502 = vmatprep.subr.bf16.mxu0 0
    %5503 = vmatpush1.bf16.msra.mxu0 %v5416
    %5504 = vmatprep.subr.bf16.mxu0 0
    %5505 = vmatpush1.bf16.msra.mxu0 %v5413
    %5506 = vmatprep.subr.bf16.mxu0 0
    %5507 = vmatpush1.bf16.msra.mxu0 %v5410
    %5508 = vmatprep.subr.bf16.mxu0 0
    %5509 = vmatpush1.bf16.msra.mxu0 %v5407
    %5510 = vmatprep.subr.bf16.mxu0 0
    %5511 = vmatpush2.bf16.msra.mxu0 0
    %5512 = vmatprep.subr.bf16.mxu0 0
    %5513 = vmatpush2.bf16.msra.mxu0 0
    %5514 = vmatprep.subr.bf16.mxu0 0
    %5515 = vmatpush2.bf16.msra.mxu0 0
    %5516 = vmatprep.subr.bf16.mxu0 0
    %5517 = vmatpush2.bf16.msra.mxu0 0
    %5518 = vmatprep.subr.bf16.mxu0 0
    %5519 = vmatpush2.bf16.msra.mxu0 0
    %5520 = vmatprep.subr.bf16.mxu0 0
    %5521 = vmatpush2.bf16.msra.mxu0 0
    %5522 = vmatprep.subr.bf16.mxu0 0
    %5523 = vmatpush2.bf16.msra.mxu0 0
    %5524 = vmatprep.subr.bf16.mxu0 0
    %5525 = vmatpush2.bf16.msra.mxu0 0
    %5526 = vmatprep.mubr.bf16.mxu0 0
    %5527 = vmatmul.mubr.bf16.gmra.mxu0 %v4541
    %v5528 = vpop.f32.mrf.mxu0
    %v5529 = vadd.f32 %v4307, %v5528
    %v5530 = vpop.f32.mrf.mxu0
    %v5531 = vpop.f32.mrf.mxu0
    %v5532 = vpop.f32.mrf.mxu0
    %5533 = vdwg.mxu0
    %v5534 = vadd.f32 %v5290, %v5488
    %v5535 = vxor.u32 %v5534, 2147483648
    %v5536 = vmul.f32 %v5535, 1.442695
    %v5537 = vpow.pop %v5536
    %v5538 = vadd.f32 %v5537, 1.0
    %v5539 = vrcp.pop %v5538
    %v5540 = vmul.f32 1.0, %v5539
    %v5541 = vadd.f32 %v5291, %v5490
    %v5542 = vxor.u32 %v5541, 2147483648
    %v5543 = vmul.f32 %v5542, 1.442695
    %v5544 = vpow.pop %v5543
    %v5545 = vadd.f32 %v5544, 1.0
    %v5546 = vrcp.pop %v5545
    %v5547 = vmul.f32 1.0, %v5546
    %v5548 = vmul.f32 %v5540, %v5529
    %v5549 = vadd.f32 %v5292, %v5548
    %v5550 = vtanh.pop %v5549
    %v5551 = vsub.f32 1.0, %v5547
    %v5552 = vmul.f32 %v5551, %v5550
    %v5553 = vmul.f32 %v5547, %v4540
    %v5554 = vadd.f32 %v5552, %v5553
    %v5555 = vpack.c.bf16 %v5554, %v5554
    %v5556 = vld [vmem:[#allocation17] sm:$0xf]
    %v5557 = vld [vmem:[#allocation17 + $0x4] sm:$0xf]
    %v5558 = vld [vmem:[#allocation17 + $0x8] sm:$0xf]
    %v5559 = vld [vmem:[#allocation17 + $0xc] sm:$0xf]
    %v5560 = vld [vmem:[#allocation17 + $0x10] sm:$0xf]
    %v5561 = vld [vmem:[#allocation17 + $0x14] sm:$0xf]
    %v5562 = vld [vmem:[#allocation17 + $0x18] sm:$0xf]
    %v5563 = vld [vmem:[#allocation17 + $0x1c] sm:$0xf]
    %v5564 = vld [vmem:[#allocation17 + $0x20] sm:$0xf]
    %v5565 = vld [vmem:[#allocation17 + $0x24] sm:$0xf]
    %v5566 = vld [vmem:[#allocation17 + $0x28] sm:$0xf]
    %v5567 = vld [vmem:[#allocation17 + $0x2c] sm:$0xf]
    %v5568 = vld [vmem:[#allocation17 + $0x30] sm:$0xf]
    %v5569 = vld [vmem:[#allocation17 + $0x34] sm:$0xf]
    %v5570 = vld [vmem:[#allocation17 + $0x38] sm:$0xf]
    %v5571 = vld [vmem:[#allocation17 + $0x3c] sm:$0xf]
    %v5588 = vunpack.c.l.b16 %v5556
    %v5589 = vunpack.c.l.b16 %v5557
    %v5590 = vunpack.c.l.b16 %v5558
    %v5591 = vunpack.c.l.b16 %v5559
    %v5592 = vunpack.c.l.b16 %v5560
    %v5593 = vunpack.c.l.b16 %v5561
    %v5594 = vunpack.c.l.b16 %v5562
    %v5595 = vunpack.c.l.b16 %v5563
    %v5596 = vunpack.c.l.b16 %v5564
    %v5597 = vunpack.c.l.b16 %v5565
    %v5598 = vunpack.c.l.b16 %v5566
    %v5599 = vunpack.c.l.b16 %v5567
    %v5600 = vunpack.c.l.b16 %v5568
    %v5601 = vunpack.c.l.b16 %v5569
    %v5602 = vunpack.c.l.b16 %v5570
    %v5603 = vunpack.c.l.b16 %v5571
    %v5604 = vpack.c.b16 %v5589, %v5588
    %v5605 = vpack.c.b16 %v5591, %v5590
    %v5606 = vpack.c.b16 %v5593, %v5592
    %v5607 = vpack.c.b16 %v5595, %v5594
    %v5608 = vpack.c.b16 %v5597, %v5596
    %v5609 = vpack.c.b16 %v5599, %v5598
    %v5610 = vpack.c.b16 %v5601, %v5600
    %v5611 = vpack.c.b16 %v5603, %v5602
    %5620 = vmatprep.subr.bf16.mxu0 0
    %5621 = vmatpush1.bf16.msra.mxu0 %v5611
    %5622 = vmatprep.subr.bf16.mxu0 0
    %5623 = vmatpush1.bf16.msra.mxu0 %v5610
    %5624 = vmatprep.subr.bf16.mxu0 0
    %5625 = vmatpush1.bf16.msra.mxu0 %v5609
    %5626 = vmatprep.subr.bf16.mxu0 0
    %5627 = vmatpush1.bf16.msra.mxu0 %v5608
    %5628 = vmatprep.subr.bf16.mxu0 0
    %5629 = vmatpush1.bf16.msra.mxu0 %v5607
    %5630 = vmatprep.subr.bf16.mxu0 0
    %5631 = vmatpush1.bf16.msra.mxu0 %v5606
    %5632 = vmatprep.subr.bf16.mxu0 0
    %5633 = vmatpush1.bf16.msra.mxu0 %v5605
    %5634 = vmatprep.subr.bf16.mxu0 0
    %5635 = vmatpush1.bf16.msra.mxu0 %v5604
    %5636 = vmatprep.subr.bf16.mxu0 0
    %5637 = vmatpush2.bf16.msra.mxu0 0
    %5638 = vmatprep.subr.bf16.mxu0 0
    %5639 = vmatpush2.bf16.msra.mxu0 0
    %5640 = vmatprep.subr.bf16.mxu0 0
    %5641 = vmatpush2.bf16.msra.mxu0 0
    %5642 = vmatprep.subr.bf16.mxu0 0
    %5643 = vmatpush2.bf16.msra.mxu0 0
    %5644 = vmatprep.subr.bf16.mxu0 0
    %5645 = vmatpush2.bf16.msra.mxu0 0
    %5646 = vmatprep.subr.bf16.mxu0 0
    %5647 = vmatpush2.bf16.msra.mxu0 0
    %5648 = vmatprep.subr.bf16.mxu0 0
    %5649 = vmatpush2.bf16.msra.mxu0 0
    %5650 = vmatprep.subr.bf16.mxu0 0
    %5651 = vmatpush2.bf16.msra.mxu0 0
    %5652 = vmatprep.mubr.bf16.mxu0 0
    %5653 = vmatmul.mubr.bf16.gmra.mxu0 %v5555
    %v5654 = vpop.f32.mrf.mxu0
    %v5655 = vadd.f32 %v4562, %v5654
    %v5656 = vpop.f32.mrf.mxu0
    %v5657 = vpop.f32.mrf.mxu0
    %v5658 = vpop.f32.mrf.mxu0
    %5659 = vdwg.mxu0
    %v5660 = vsel %vm3682, %v5655, -inf
    %5661 = vmax.xlane.f32.xlu0 %v5660
    %v5662 = vpop.xlane.xlu0 %5661
    %v5663 = vsub.f32 %v5655, %v5662
    %v5664 = vmul.f32 %v5663, 1.442695
    %v5665 = vpow.pop %v5664
    %v5666 = vsel %vm3682, %v5665, 0.0
    %5667 = vadd.xlane.f32.xlu0 %v5666
    %v5668 = vpop.xlane.xlu0 %5667
    %v5669 = vlog2.pop %v5668
    %v5670 = vmul.f32 %v5669, 0.6931472
    %v5671 = vadd.f32 %v5662, %v5670
    %v5672 = vsub.f32 %v5655, %v5671
    %vm5673 = vcmp.eq.f32.partialorder %v5655, %v5662
    %v5674 = vsel %vm5673, %v3634, 128
    %v5675 = vsel %vm3682, %v5674, 2147483647
    %v5676 = vand.u32 %v5675, 65535
    %v5677 = vshra.s32 %v5675, 16
    %v5678 = vcvt.s32.f32 %v5676
    %v5679 = vcvt.s32.f32 %v5677
    %5680 = vmin.xlane.f32.xlu0 %v5679
    %v5681 = vpop.xlane.xlu0 %5680
    %vm5682 = vcmp.eq.f32.partialorder %v5679, %v5681
    %v5683 = vsel %vm5682, %v5678, inf
    %5684 = vmin.xlane.f32.xlu0 %v5683
    %v5685 = vpop.xlane.xlu0 %5684
    %v5686 = vcvt.f32.s32 %v5685
    %v5687 = vcvt.f32.s32 %v5681
    %v5688 = vshll.u32 %v5687, 16
    %v5689 = vadd.s32 %v5688, %v5686
    %s5690 = scalar_lea.vmem [#allocation19], 2
    %5691 = vst [vmem:[%s5690] sm:$0x3] %v5672
    %s5692 = scalar_lea.vmem %s15, 2
    %5693 = vst.msk [vmem:[%s5692] sm:$0x3] %vm4683, %v5689
    %vm5694 = vcmp.eq.s32.totalorder %v3634, %v5689
    %v5695 = vsel %vm5694, 1, 0
    %v5696 = vcvt.s32.f32 %v5695
    %v5697 = vpack.c.bf16 %v5696, %v5696
    %v5698 = vld [vmem:[#allocation4] sm:$0xff]
    %v5699 = vld [vmem:[#allocation4 + $0x8] sm:$0xf]
    %v5700 = vld [vmem:[#allocation4 + $0xc] sm:$0xff]
    %v5701 = vld [vmem:[#allocation4 + $0x14] sm:$0xf]
    %v5702 = vld [vmem:[#allocation4 + $0x18] sm:$0xff]
    %v5703 = vld [vmem:[#allocation4 + $0x20] sm:$0xf]
    %v5704 = vld [vmem:[#allocation4 + $0x24] sm:$0xff]
    %v5705 = vld [vmem:[#allocation4 + $0x2c] sm:$0xf]
    %v5706 = vld [vmem:[#allocation4 + $0x30] sm:$0xff]
    %v5707 = vld [vmem:[#allocation4 + $0x38] sm:$0xf]
    %v5708 = vld [vmem:[#allocation4 + $0x3c] sm:$0xff]
    %v5709 = vld [vmem:[#allocation4 + $0x44] sm:$0xf]
    %v5710 = vld [vmem:[#allocation4 + $0x48] sm:$0xff]
    %v5711 = vld [vmem:[#allocation4 + $0x50] sm:$0xf]
    %v5712 = vld [vmem:[#allocation4 + $0x54] sm:$0xff]
    %v5713 = vld [vmem:[#allocation4 + $0x5c] sm:$0xf]
    %v5714 = vld [vmem:[#allocation4 + $0x60] sm:$0xff]
    %v5715 = vld [vmem:[#allocation4 + $0x68] sm:$0xf]
    %v5716 = vld [vmem:[#allocation4 + $0x6c] sm:$0xff]
    %v5717 = vld [vmem:[#allocation4 + $0x74] sm:$0xf]
    %v5718 = vld [vmem:[#allocation4 + $0x78] sm:$0xff]
    %v5719 = vld [vmem:[#allocation4 + $0x80] sm:$0xf]
    %v5720 = vld [vmem:[#allocation4 + $0x84] sm:$0xff]
    %v5721 = vld [vmem:[#allocation4 + $0x8c] sm:$0xf]
    %v5722 = vld [vmem:[#allocation4 + $0x90] sm:$0xff]
    %v5723 = vld [vmem:[#allocation4 + $0x98] sm:$0xf]
    %v5724 = vld [vmem:[#allocation4 + $0x9c] sm:$0xff]
    %v5725 = vld [vmem:[#allocation4 + $0xa4] sm:$0xf]
    %v5726 = vld [vmem:[#allocation4 + $0xa8] sm:$0xff]
    %v5727 = vld [vmem:[#allocation4 + $0xb0] sm:$0xf]
    %v5728 = vld [vmem:[#allocation4 + $0xb4] sm:$0xff]
    %v5729 = vld [vmem:[#allocation4 + $0xbc] sm:$0xf]
    %v5730 = vmul.f32 %v3455, %v5554
    %v5731 = vmul.f32 %v3456, %v5554
    %v5732 = vmul.f32 %v3457, %v5554
    %v5733 = vmul.f32 %v3458, %v5554
    %v5734 = vmul.f32 %v3459, %v5554
    %v5735 = vmul.f32 %v3460, %v5554
    %v5736 = vmul.f32 %v3461, %v5554
    %v5737 = vmul.f32 %v3462, %v5554
    %v5738 = vsel %vm3682, %v5730, 0.0
    %5739 = vadd.xlane.f32.xlu0 %v5738
    %v5740 = vpop.xlane.xlu0 %5739
    %v5741 = vsel %vm3682, %v5731, 0.0
    %5742 = vadd.xlane.f32.xlu0 %v5741
    %v5743 = vpop.xlane.xlu0 %5742
    %v5744 = vsel %vm3682, %v5732, 0.0
    %5745 = vadd.xlane.f32.xlu0 %v5744
    %v5746 = vpop.xlane.xlu0 %5745
    %v5747 = vsel %vm3682, %v5733, 0.0
    %5748 = vadd.xlane.f32.xlu0 %v5747
    %v5749 = vpop.xlane.xlu0 %5748
    %v5750 = vsel %vm3682, %v5734, 0.0
    %5751 = vadd.xlane.f32.xlu0 %v5750
    %v5752 = vpop.xlane.xlu0 %5751
    %v5753 = vsel %vm3682, %v5735, 0.0
    %5754 = vadd.xlane.f32.xlu0 %v5753
    %v5755 = vpop.xlane.xlu0 %5754
    %v5756 = vsel %vm3682, %v5736, 0.0
    %5757 = vadd.xlane.f32.xlu0 %v5756
    %v5758 = vpop.xlane.xlu0 %5757
    %v5759 = vsel %vm3682, %v5737, 0.0
    %5760 = vadd.xlane.f32.xlu0 %v5759
    %v5761 = vpop.xlane.xlu0 %5760
    %v5762 = vsel %vm3682, %v5740, -inf
    %v5763 = vsel %vm3682, %v5743, -inf
    %v5764 = vsel %vm3682, %v5746, -inf
    %v5765 = vsel %vm3682, %v5749, -inf
    %v5766 = vsel %vm3682, %v5752, -inf
    %v5767 = vmax.f32 %v5762, %v5766
    %v5768 = vsel %vm3682, %v5755, -inf
    %v5769 = vmax.f32 %v5763, %v5768
    %v5770 = vsel %vm3682, %v5758, -inf
    %v5771 = vmax.f32 %v5764, %v5770
    %v5772 = vsel %vm3682, %v5761, -inf
    %v5773 = vmax.f32 %v5765, %v5772
    %v5774 = vmax.f32 %v5767, %v5769
    %v5775 = vmax.f32 %v5771, %v5773
    %v5776 = vmax.f32 %v5774, %v5775
    %v5777 = vsub.f32 %v5740, %v5776
    %v5778 = vsub.f32 %v5743, %v5776
    %v5779 = vsub.f32 %v5746, %v5776
    %v5780 = vsub.f32 %v5749, %v5776
    %v5781 = vsub.f32 %v5752, %v5776
    %v5782 = vsub.f32 %v5755, %v5776
    %v5783 = vsub.f32 %v5758, %v5776
    %v5784 = vsub.f32 %v5761, %v5776
    %v5785 = vmul.f32 %v5777, 1.442695
    %v5786 = vpow.pop %v5785
    %v5787 = vmul.f32 %v5778, 1.442695
    %v5788 = vpow.pop %v5787
    %v5789 = vmul.f32 %v5779, 1.442695
    %v5790 = vpow.pop %v5789
    %v5791 = vmul.f32 %v5780, 1.442695
    %v5792 = vpow.pop %v5791
    %v5793 = vmul.f32 %v5781, 1.442695
    %v5794 = vpow.pop %v5793
    %v5795 = vmul.f32 %v5782, 1.442695
    %v5796 = vpow.pop %v5795
    %v5797 = vmul.f32 %v5783, 1.442695
    %v5798 = vpow.pop %v5797
    %v5799 = vmul.f32 %v5784, 1.442695
    %v5800 = vpow.pop %v5799
    %v5801 = vsel %vm3682, %v5786, 0.0
    %v5802 = vsel %vm3682, %v5788, 0.0
    %v5803 = vadd.f32 %v5801, %v5802
    %v5804 = vsel %vm3682, %v5790, 0.0
    %v5805 = vadd.f32 %v5803, %v5804
    %v5806 = vsel %vm3682, %v5792, 0.0
    %v5807 = vadd.f32 %v5805, %v5806
    %v5808 = vsel %vm3682, %v5794, 0.0
    %v5809 = vadd.f32 %v5807, %v5808
    %v5810 = vsel %vm3682, %v5796, 0.0
    %v5811 = vadd.f32 %v5809, %v5810
    %v5812 = vsel %vm3682, %v5798, 0.0
    %v5813 = vadd.f32 %v5811, %v5812
    %v5814 = vsel %vm3682, %v5800, 0.0
    %v5815 = vadd.f32 %v5813, %v5814
    %v5816 = vrcp.pop %v5815
    %v5817 = vmul.f32 %v5786, %v5816
    %v5818 = vmul.f32 %v5788, %v5816
    %v5819 = vmul.f32 %v5790, %v5816
    %v5820 = vmul.f32 %v5792, %v5816
    %v5821 = vmul.f32 %v5794, %v5816
    %v5822 = vmul.f32 %v5796, %v5816
    %v5823 = vmul.f32 %v5798, %v5816
    %v5824 = vmul.f32 %v5800, %v5816
    %v5825 = vmul.f32 %v5817, %v3455
    %v5826 = vmul.f32 %v5818, %v3456
    %v5827 = vmul.f32 %v5819, %v3457
    %v5828 = vmul.f32 %v5820, %v3458
    %v5829 = vmul.f32 %v5821, %v3459
    %v5830 = vmul.f32 %v5822, %v3460
    %v5831 = vmul.f32 %v5823, %v3461
    %v5832 = vmul.f32 %v5824, %v3462
    %v5833 = vsel %vm3682, %v5825, 0.0
    %v5834 = vsel %vm3682, %v5826, 0.0
    %v5835 = vadd.f32 %v5833, %v5834
    %v5836 = vsel %vm3682, %v5827, 0.0
    %v5837 = vadd.f32 %v5835, %v5836
    %v5838 = vsel %vm3682, %v5828, 0.0
    %v5839 = vadd.f32 %v5837, %v5838
    %v5840 = vsel %vm3682, %v5829, 0.0
    %v5841 = vadd.f32 %v5839, %v5840
    %v5842 = vsel %vm3682, %v5830, 0.0
    %v5843 = vadd.f32 %v5841, %v5842
    %v5844 = vsel %vm3682, %v5831, 0.0
    %v5845 = vadd.f32 %v5843, %v5844
    %v5846 = vsel %vm3682, %v5832, 0.0
    %v5847 = vadd.f32 %v5845, %v5846
    %v5848 = vpack.c.bf16 %v5847, %v5847
    %v5849 = vld [vmem:[#allocation14] sm:$0xff]
    %v5850 = vld [vmem:[#allocation14 + $0x8] sm:$0xf]
    %v5851 = vld [vmem:[#allocation14 + $0xc] sm:$0xff]
    %v5852 = vld [vmem:[#allocation14 + $0x14] sm:$0xf]
    %v5853 = vld [vmem:[#allocation14 + $0x18] sm:$0xff]
    %v5854 = vld [vmem:[#allocation14 + $0x20] sm:$0xf]
    %v5855 = vld [vmem:[#allocation14 + $0x24] sm:$0xff]
    %v5856 = vld [vmem:[#allocation14 + $0x2c] sm:$0xf]
    %v5857 = vld [vmem:[#allocation14 + $0x30] sm:$0xff]
    %v5858 = vld [vmem:[#allocation14 + $0x38] sm:$0xf]
    %v5859 = vld [vmem:[#allocation14 + $0x3c] sm:$0xff]
    %v5860 = vld [vmem:[#allocation14 + $0x44] sm:$0xf]
    %v5861 = vld [vmem:[#allocation14 + $0x48] sm:$0xff]
    %v5862 = vld [vmem:[#allocation14 + $0x50] sm:$0xf]
    %v5863 = vld [vmem:[#allocation14 + $0x54] sm:$0xff]
    %v5864 = vld [vmem:[#allocation14 + $0x5c] sm:$0xf]
    %v5865 = vld [vmem:[#allocation14 + $0x60] sm:$0xff]
    %v5866 = vld [vmem:[#allocation14 + $0x68] sm:$0xf]
    %v5867 = vld [vmem:[#allocation14 + $0x6c] sm:$0xff]
    %v5868 = vld [vmem:[#allocation14 + $0x74] sm:$0xf]
    %v5869 = vld [vmem:[#allocation14 + $0x78] sm:$0xff]
    %v5870 = vld [vmem:[#allocation14 + $0x80] sm:$0xf]
    %v5871 = vld [vmem:[#allocation14 + $0x84] sm:$0xff]
    %v5872 = vld [vmem:[#allocation14 + $0x8c] sm:$0xf]
    %v5873 = vld [vmem:[#allocation14 + $0x90] sm:$0xff]
    %v5874 = vld [vmem:[#allocation14 + $0x98] sm:$0xf]
    %v5875 = vld [vmem:[#allocation14 + $0x9c] sm:$0xff]
    %v5876 = vld [vmem:[#allocation14 + $0xa4] sm:$0xf]
    %v5877 = vld [vmem:[#allocation14 + $0xa8] sm:$0xff]
    %v5878 = vld [vmem:[#allocation14 + $0xb0] sm:$0xf]
    %v5879 = vld [vmem:[#allocation14 + $0xb4] sm:$0xff]
    %v5880 = vld [vmem:[#allocation14 + $0xbc] sm:$0xf]
    %v5913 = vunpack.c.l.b16 %v5849
    %v5914 = vunpack.c.h.b16 %v5849
    %v5915 = vunpack.c.l.b16 %v5850
    %v5916 = vunpack.c.l.b16 %v5851
    %v5917 = vunpack.c.h.b16 %v5851
    %v5918 = vunpack.c.l.b16 %v5852
    %v5919 = vunpack.c.l.b16 %v5853
    %v5920 = vunpack.c.h.b16 %v5853
    %v5921 = vunpack.c.l.b16 %v5854
    %v5922 = vunpack.c.l.b16 %v5855
    %v5923 = vunpack.c.h.b16 %v5855
    %v5924 = vunpack.c.l.b16 %v5856
    %v5925 = vunpack.c.l.b16 %v5857
    %v5926 = vunpack.c.h.b16 %v5857
    %v5927 = vunpack.c.l.b16 %v5858
    %v5928 = vunpack.c.l.b16 %v5859
    %v5929 = vunpack.c.h.b16 %v5859
    %v5930 = vunpack.c.l.b16 %v5860
    %v5931 = vunpack.c.l.b16 %v5861
    %v5932 = vunpack.c.h.b16 %v5861
    %v5933 = vunpack.c.l.b16 %v5862
    %v5934 = vunpack.c.l.b16 %v5863
    %v5935 = vunpack.c.h.b16 %v5863
    %v5936 = vunpack.c.l.b16 %v5864
    %v5937 = vunpack.c.l.b16 %v5865
    %v5938 = vunpack.c.h.b16 %v5865
    %v5939 = vunpack.c.l.b16 %v5866
    %v5940 = vunpack.c.l.b16 %v5867
    %v5941 = vunpack.c.h.b16 %v5867
    %v5942 = vunpack.c.l.b16 %v5868
    %v5943 = vunpack.c.l.b16 %v5869
    %v5944 = vunpack.c.h.b16 %v5869
    %v5945 = vunpack.c.l.b16 %v5870
    %v5946 = vunpack.c.l.b16 %v5871
    %v5947 = vunpack.c.h.b16 %v5871
    %v5948 = vunpack.c.l.b16 %v5872
    %v5949 = vunpack.c.l.b16 %v5873
    %v5950 = vunpack.c.h.b16 %v5873
    %v5951 = vunpack.c.l.b16 %v5874
    %v5952 = vunpack.c.l.b16 %v5875
    %v5953 = vunpack.c.h.b16 %v5875
    %v5954 = vunpack.c.l.b16 %v5876
    %v5955 = vunpack.c.l.b16 %v5877
    %v5956 = vunpack.c.h.b16 %v5877
    %v5957 = vunpack.c.l.b16 %v5878
    %v5958 = vunpack.c.l.b16 %v5879
    %v5959 = vunpack.c.h.b16 %v5879
    %v5960 = vunpack.c.l.b16 %v5880
    %v5961 = vpack.c.b16 %v5916, %v5913
    %v5962 = vpack.c.b16 %v5917, %v5914
    %v5963 = vpack.c.b16 %v5918, %v5915
    %v5964 = vpack.c.b16 %v5922, %v5919
    %v5965 = vpack.c.b16 %v5923, %v5920
    %v5966 = vpack.c.b16 %v5924, %v5921
    %v5967 = vpack.c.b16 %v5928, %v5925
    %v5968 = vpack.c.b16 %v5929, %v5926
    %v5969 = vpack.c.b16 %v5930, %v5927
    %v5970 = vpack.c.b16 %v5934, %v5931
    %v5971 = vpack.c.b16 %v5935, %v5932
    %v5972 = vpack.c.b16 %v5936, %v5933
    %v5973 = vpack.c.b16 %v5940, %v5937
    %v5974 = vpack.c.b16 %v5941, %v5938
    %v5975 = vpack.c.b16 %v5942, %v5939
    %v5976 = vpack.c.b16 %v5946, %v5943
    %v5977 = vpack.c.b16 %v5947, %v5944
    %v5978 = vpack.c.b16 %v5948, %v5945
    %v5979 = vpack.c.b16 %v5952, %v5949
    %v5980 = vpack.c.b16 %v5953, %v5950
    %v5981 = vpack.c.b16 %v5954, %v5951
    %v5982 = vpack.c.b16 %v5958, %v5955
    %v5983 = vpack.c.b16 %v5959, %v5956
    %v5984 = vpack.c.b16 %v5960, %v5957
    %6009 = vmatprep.subr.bf16.mxu0 %v5983
    %6010 = vmatpush1.bf16.msra.mxu0 %v5982
    %6011 = vmatprep.subr.bf16.mxu0 %v5980
    %6012 = vmatpush1.bf16.msra.mxu0 %v5979
    %6013 = vmatprep.subr.bf16.mxu0 %v5977
    %6014 = vmatpush1.bf16.msra.mxu0 %v5976
    %6015 = vmatprep.subr.bf16.mxu0 %v5974
    %6016 = vmatpush1.bf16.msra.mxu0 %v5973
    %6017 = vmatprep.subr.bf16.mxu0 %v5971
    %6018 = vmatpush1.bf16.msra.mxu0 %v5970
    %6019 = vmatprep.subr.bf16.mxu0 %v5968
    %6020 = vmatpush1.bf16.msra.mxu0 %v5967
    %6021 = vmatprep.subr.bf16.mxu0 %v5965
    %6022 = vmatpush1.bf16.msra.mxu0 %v5964
    %6023 = vmatprep.subr.bf16.mxu0 %v5962
    %6024 = vmatpush1.bf16.msra.mxu0 %v5961
    %6025 = vmatprep.subr.bf16.mxu0 0
    %6026 = vmatpush2.bf16.msra.mxu0 0
    %6027 = vmatprep.subr.bf16.mxu0 0
    %6028 = vmatpush2.bf16.msra.mxu0 0
    %6029 = vmatprep.subr.bf16.mxu0 0
    %6030 = vmatpush2.bf16.msra.mxu0 0
    %6031 = vmatprep.subr.bf16.mxu0 0
    %6032 = vmatpush2.bf16.msra.mxu0 0
    %6033 = vmatprep.subr.bf16.mxu0 0
    %6034 = vmatpush2.bf16.msra.mxu0 0
    %6035 = vmatprep.subr.bf16.mxu0 0
    %6036 = vmatpush2.bf16.msra.mxu0 0
    %6037 = vmatprep.subr.bf16.mxu0 0
    %6038 = vmatpush2.bf16.msra.mxu0 0
    %6039 = vmatprep.subr.bf16.mxu0 0
    %6040 = vmatpush2.bf16.msra.mxu0 0
    %6041 = vmatprep.mubr.bf16.mxu0 0
    %6042 = vmatmul.mubr.bf16.gmra.mxu0 %v5848
    %v6043 = vpop.f32.mrf.mxu0
    %v6044 = vadd.f32 0.0, %v6043
    %v6045 = vpop.f32.mrf.mxu0
    %v6046 = vadd.f32 0.0, %v6045
    %v6047 = vpop.f32.mrf.mxu0
    %v6048 = vpop.f32.mrf.mxu0
    %6049 = vdwg.mxu0
    %6050 = vmatprep.subr.bf16.mxu0 0
    %6051 = vmatpush1.bf16.msra.mxu0 %v5984
    %6052 = vmatprep.subr.bf16.mxu0 0
    %6053 = vmatpush1.bf16.msra.mxu0 %v5981
    %6054 = vmatprep.subr.bf16.mxu0 0
    %6055 = vmatpush1.bf16.msra.mxu0 %v5978
    %6056 = vmatprep.subr.bf16.mxu0 0
    %6057 = vmatpush1.bf16.msra.mxu0 %v5975
    %6058 = vmatprep.subr.bf16.mxu0 0
    %6059 = vmatpush1.bf16.msra.mxu0 %v5972
    %6060 = vmatprep.subr.bf16.mxu0 0
    %6061 = vmatpush1.bf16.msra.mxu0 %v5969
    %6062 = vmatprep.subr.bf16.mxu0 0
    %6063 = vmatpush1.bf16.msra.mxu0 %v5966
    %6064 = vmatprep.subr.bf16.mxu0 0
    %6065 = vmatpush1.bf16.msra.mxu0 %v5963
    %6066 = vmatprep.subr.bf16.mxu0 0
    %6067 = vmatpush2.bf16.msra.mxu0 0
    %6068 = vmatprep.subr.bf16.mxu0 0
    %6069 = vmatpush2.bf16.msra.mxu0 0
    %6070 = vmatprep.subr.bf16.mxu0 0
    %6071 = vmatpush2.bf16.msra.mxu0 0
    %6072 = vmatprep.subr.bf16.mxu0 0
    %6073 = vmatpush2.bf16.msra.mxu0 0
    %6074 = vmatprep.subr.bf16.mxu0 0
    %6075 = vmatpush2.bf16.msra.mxu0 0
    %6076 = vmatprep.subr.bf16.mxu0 0
    %6077 = vmatpush2.bf16.msra.mxu0 0
    %6078 = vmatprep.subr.bf16.mxu0 0
    %6079 = vmatpush2.bf16.msra.mxu0 0
    %6080 = vmatprep.subr.bf16.mxu0 0
    %6081 = vmatpush2.bf16.msra.mxu0 0
    %6082 = vmatprep.mubr.bf16.mxu0 0
    %6083 = vmatmul.mubr.bf16.gmra.mxu0 %v5848
    %v6084 = vpop.f32.mrf.mxu0
    %v6085 = vadd.f32 0.0, %v6084
    %v6086 = vpop.f32.mrf.mxu0
    %v6087 = vpop.f32.mrf.mxu0
    %v6088 = vpop.f32.mrf.mxu0
    %6089 = vdwg.mxu0
    %v6122 = vunpack.c.l.b16 %v5698
    %v6123 = vunpack.c.h.b16 %v5698
    %v6124 = vunpack.c.l.b16 %v5699
    %v6125 = vunpack.c.l.b16 %v5700
    %v6126 = vunpack.c.h.b16 %v5700
    %v6127 = vunpack.c.l.b16 %v5701
    %v6128 = vunpack.c.l.b16 %v5702
    %v6129 = vunpack.c.h.b16 %v5702
    %v6130 = vunpack.c.l.b16 %v5703
    %v6131 = vunpack.c.l.b16 %v5704
    %v6132 = vunpack.c.h.b16 %v5704
    %v6133 = vunpack.c.l.b16 %v5705
    %v6134 = vunpack.c.l.b16 %v5706
    %v6135 = vunpack.c.h.b16 %v5706
    %v6136 = vunpack.c.l.b16 %v5707
    %v6137 = vunpack.c.l.b16 %v5708
    %v6138 = vunpack.c.h.b16 %v5708
    %v6139 = vunpack.c.l.b16 %v5709
    %v6140 = vunpack.c.l.b16 %v5710
    %v6141 = vunpack.c.h.b16 %v5710
    %v6142 = vunpack.c.l.b16 %v5711
    %v6143 = vunpack.c.l.b16 %v5712
    %v6144 = vunpack.c.h.b16 %v5712
    %v6145 = vunpack.c.l.b16 %v5713
    %v6146 = vunpack.c.l.b16 %v5714
    %v6147 = vunpack.c.h.b16 %v5714
    %v6148 = vunpack.c.l.b16 %v5715
    %v6149 = vunpack.c.l.b16 %v5716
    %v6150 = vunpack.c.h.b16 %v5716
    %v6151 = vunpack.c.l.b16 %v5717
    %v6152 = vunpack.c.l.b16 %v5718
    %v6153 = vunpack.c.h.b16 %v5718
    %v6154 = vunpack.c.l.b16 %v5719
    %v6155 = vunpack.c.l.b16 %v5720
    %v6156 = vunpack.c.h.b16 %v5720
    %v6157 = vunpack.c.l.b16 %v5721
    %v6158 = vunpack.c.l.b16 %v5722
    %v6159 = vunpack.c.h.b16 %v5722
    %v6160 = vunpack.c.l.b16 %v5723
    %v6161 = vunpack.c.l.b16 %v5724
    %v6162 = vunpack.c.h.b16 %v5724
    %v6163 = vunpack.c.l.b16 %v5725
    %v6164 = vunpack.c.l.b16 %v5726
    %v6165 = vunpack.c.h.b16 %v5726
    %v6166 = vunpack.c.l.b16 %v5727
    %v6167 = vunpack.c.l.b16 %v5728
    %v6168 = vunpack.c.h.b16 %v5728
    %v6169 = vunpack.c.l.b16 %v5729
    %v6170 = vpack.c.b16 %v6125, %v6122
    %v6171 = vpack.c.b16 %v6126, %v6123
    %v6172 = vpack.c.b16 %v6127, %v6124
    %v6173 = vpack.c.b16 %v6131, %v6128
    %v6174 = vpack.c.b16 %v6132, %v6129
    %v6175 = vpack.c.b16 %v6133, %v6130
    %v6176 = vpack.c.b16 %v6137, %v6134
    %v6177 = vpack.c.b16 %v6138, %v6135
    %v6178 = vpack.c.b16 %v6139, %v6136
    %v6179 = vpack.c.b16 %v6143, %v6140
    %v6180 = vpack.c.b16 %v6144, %v6141
    %v6181 = vpack.c.b16 %v6145, %v6142
    %v6182 = vpack.c.b16 %v6149, %v6146
    %v6183 = vpack.c.b16 %v6150, %v6147
    %v6184 = vpack.c.b16 %v6151, %v6148
    %v6185 = vpack.c.b16 %v6155, %v6152
    %v6186 = vpack.c.b16 %v6156, %v6153
    %v6187 = vpack.c.b16 %v6157, %v6154
    %v6188 = vpack.c.b16 %v6161, %v6158
    %v6189 = vpack.c.b16 %v6162, %v6159
    %v6190 = vpack.c.b16 %v6163, %v6160
    %v6191 = vpack.c.b16 %v6167, %v6164
    %v6192 = vpack.c.b16 %v6168, %v6165
    %v6193 = vpack.c.b16 %v6169, %v6166
    %6218 = vmatprep.subr.bf16.mxu0 %v6192
    %6219 = vmatpush1.bf16.msra.mxu0 %v6191
    %6220 = vmatprep.subr.bf16.mxu0 %v6189
    %6221 = vmatpush1.bf16.msra.mxu0 %v6188
    %6222 = vmatprep.subr.bf16.mxu0 %v6186
    %6223 = vmatpush1.bf16.msra.mxu0 %v6185
    %6224 = vmatprep.subr.bf16.mxu0 %v6183
    %6225 = vmatpush1.bf16.msra.mxu0 %v6182
    %6226 = vmatprep.subr.bf16.mxu0 %v6180
    %6227 = vmatpush1.bf16.msra.mxu0 %v6179
    %6228 = vmatprep.subr.bf16.mxu0 %v6177
    %6229 = vmatpush1.bf16.msra.mxu0 %v6176
    %6230 = vmatprep.subr.bf16.mxu0 %v6174
    %6231 = vmatpush1.bf16.msra.mxu0 %v6173
    %6232 = vmatprep.subr.bf16.mxu0 %v6171
    %6233 = vmatpush1.bf16.msra.mxu0 %v6170
    %6234 = vmatprep.subr.bf16.mxu0 0
    %6235 = vmatpush2.bf16.msra.mxu0 0
    %6236 = vmatprep.subr.bf16.mxu0 0
    %6237 = vmatpush2.bf16.msra.mxu0 0
    %6238 = vmatprep.subr.bf16.mxu0 0
    %6239 = vmatpush2.bf16.msra.mxu0 0
    %6240 = vmatprep.subr.bf16.mxu0 0
    %6241 = vmatpush2.bf16.msra.mxu0 0
    %6242 = vmatprep.subr.bf16.mxu0 0
    %6243 = vmatpush2.bf16.msra.mxu0 0
    %6244 = vmatprep.subr.bf16.mxu0 0
    %6245 = vmatpush2.bf16.msra.mxu0 0
    %6246 = vmatprep.subr.bf16.mxu0 0
    %6247 = vmatpush2.bf16.msra.mxu0 0
    %6248 = vmatprep.subr.bf16.mxu0 0
    %6249 = vmatpush2.bf16.msra.mxu0 0
    %6250 = vmatprep.mubr.bf16.mxu0 0
    %6251 = vmatmul.mubr.bf16.gmra.mxu0 %v5697
    %v6252 = vpop.f32.mrf.mxu0
    %v6253 = vadd.f32 %v6044, %v6252
    %v6254 = vpop.f32.mrf.mxu0
    %v6255 = vadd.f32 %v6046, %v6254
    %v6256 = vpop.f32.mrf.mxu0
    %v6257 = vpop.f32.mrf.mxu0
    %6258 = vdwg.mxu0
    %6259 = vmatprep.subr.bf16.mxu0 0
    %6260 = vmatpush1.bf16.msra.mxu0 %v6193
    %6261 = vmatprep.subr.bf16.mxu0 0
    %6262 = vmatpush1.bf16.msra.mxu0 %v6190
    %6263 = vmatprep.subr.bf16.mxu0 0
    %6264 = vmatpush1.bf16.msra.mxu0 %v6187
    %6265 = vmatprep.subr.bf16.mxu0 0
    %6266 = vmatpush1.bf16.msra.mxu0 %v6184
    %6267 = vmatprep.subr.bf16.mxu0 0
    %6268 = vmatpush1.bf16.msra.mxu0 %v6181
    %6269 = vmatprep.subr.bf16.mxu0 0
    %6270 = vmatpush1.bf16.msra.mxu0 %v6178
    %6271 = vmatprep.subr.bf16.mxu0 0
    %6272 = vmatpush1.bf16.msra.mxu0 %v6175
    %6273 = vmatprep.subr.bf16.mxu0 0
    %6274 = vmatpush1.bf16.msra.mxu0 %v6172
    %6275 = vmatprep.subr.bf16.mxu0 0
    %6276 = vmatpush2.bf16.msra.mxu0 0
    %6277 = vmatprep.subr.bf16.mxu0 0
    %6278 = vmatpush2.bf16.msra.mxu0 0
    %6279 = vmatprep.subr.bf16.mxu0 0
    %6280 = vmatpush2.bf16.msra.mxu0 0
    %6281 = vmatprep.subr.bf16.mxu0 0
    %6282 = vmatpush2.bf16.msra.mxu0 0
    %6283 = vmatprep.subr.bf16.mxu0 0
    %6284 = vmatpush2.bf16.msra.mxu0 0
    %6285 = vmatprep.subr.bf16.mxu0 0
    %6286 = vmatpush2.bf16.msra.mxu0 0
    %6287 = vmatprep.subr.bf16.mxu0 0
    %6288 = vmatpush2.bf16.msra.mxu0 0
    %6289 = vmatprep.subr.bf16.mxu0 0
    %6290 = vmatpush2.bf16.msra.mxu0 0
    %6291 = vmatprep.mubr.bf16.mxu0 0
    %6292 = vmatmul.mubr.bf16.gmra.mxu0 %v5697
    %v6293 = vpop.f32.mrf.mxu0
    %v6294 = vadd.f32 %v6085, %v6293
    %v6295 = vpop.f32.mrf.mxu0
    %v6296 = vpop.f32.mrf.mxu0
    %v6297 = vpop.f32.mrf.mxu0
    %6298 = vdwg.mxu0
    %v6299 = vadd.f32 %v6253, %v4248
    %v6300 = vadd.f32 %v6255, %v4252
    %v6301 = vadd.f32 %v6294, %v4256
    %v6302 = vld [vmem:[#allocation16] sm:$0xff]
    %v6303 = vld [vmem:[#allocation16 + $0x8] sm:$0xf]
    %v6304 = vld [vmem:[#allocation16 + $0xc] sm:$0xff]
    %v6305 = vld [vmem:[#allocation16 + $0x14] sm:$0xf]
    %v6306 = vld [vmem:[#allocation16 + $0x18] sm:$0xff]
    %v6307 = vld [vmem:[#allocation16 + $0x20] sm:$0xf]
    %v6308 = vld [vmem:[#allocation16 + $0x24] sm:$0xff]
    %v6309 = vld [vmem:[#allocation16 + $0x2c] sm:$0xf]
    %v6310 = vld [vmem:[#allocation16 + $0x30] sm:$0xff]
    %v6311 = vld [vmem:[#allocation16 + $0x38] sm:$0xf]
    %v6312 = vld [vmem:[#allocation16 + $0x3c] sm:$0xff]
    %v6313 = vld [vmem:[#allocation16 + $0x44] sm:$0xf]
    %v6314 = vld [vmem:[#allocation16 + $0x48] sm:$0xff]
    %v6315 = vld [vmem:[#allocation16 + $0x50] sm:$0xf]
    %v6316 = vld [vmem:[#allocation16 + $0x54] sm:$0xff]
    %v6317 = vld [vmem:[#allocation16 + $0x5c] sm:$0xf]
    %v6318 = vld [vmem:[#allocation16 + $0x60] sm:$0xff]
    %v6319 = vld [vmem:[#allocation16 + $0x68] sm:$0xf]
    %v6320 = vld [vmem:[#allocation16 + $0x6c] sm:$0xff]
    %v6321 = vld [vmem:[#allocation16 + $0x74] sm:$0xf]
    %v6322 = vld [vmem:[#allocation16 + $0x78] sm:$0xff]
    %v6323 = vld [vmem:[#allocation16 + $0x80] sm:$0xf]
    %v6324 = vld [vmem:[#allocation16 + $0x84] sm:$0xff]
    %v6325 = vld [vmem:[#allocation16 + $0x8c] sm:$0xf]
    %v6326 = vld [vmem:[#allocation16 + $0x90] sm:$0xff]
    %v6327 = vld [vmem:[#allocation16 + $0x98] sm:$0xf]
    %v6328 = vld [vmem:[#allocation16 + $0x9c] sm:$0xff]
    %v6329 = vld [vmem:[#allocation16 + $0xa4] sm:$0xf]
    %v6330 = vld [vmem:[#allocation16 + $0xa8] sm:$0xff]
    %v6331 = vld [vmem:[#allocation16 + $0xb0] sm:$0xf]
    %v6332 = vld [vmem:[#allocation16 + $0xb4] sm:$0xff]
    %v6333 = vld [vmem:[#allocation16 + $0xbc] sm:$0xf]
    %v6366 = vunpack.c.l.b16 %v6302
    %v6367 = vunpack.c.h.b16 %v6302
    %v6368 = vunpack.c.l.b16 %v6303
    %v6369 = vunpack.c.l.b16 %v6304
    %v6370 = vunpack.c.h.b16 %v6304
    %v6371 = vunpack.c.l.b16 %v6305
    %v6372 = vunpack.c.l.b16 %v6306
    %v6373 = vunpack.c.h.b16 %v6306
    %v6374 = vunpack.c.l.b16 %v6307
    %v6375 = vunpack.c.l.b16 %v6308
    %v6376 = vunpack.c.h.b16 %v6308
    %v6377 = vunpack.c.l.b16 %v6309
    %v6378 = vunpack.c.l.b16 %v6310
    %v6379 = vunpack.c.h.b16 %v6310
    %v6380 = vunpack.c.l.b16 %v6311
    %v6381 = vunpack.c.l.b16 %v6312
    %v6382 = vunpack.c.h.b16 %v6312
    %v6383 = vunpack.c.l.b16 %v6313
    %v6384 = vunpack.c.l.b16 %v6314
    %v6385 = vunpack.c.h.b16 %v6314
    %v6386 = vunpack.c.l.b16 %v6315
    %v6387 = vunpack.c.l.b16 %v6316
    %v6388 = vunpack.c.h.b16 %v6316
    %v6389 = vunpack.c.l.b16 %v6317
    %v6390 = vunpack.c.l.b16 %v6318
    %v6391 = vunpack.c.h.b16 %v6318
    %v6392 = vunpack.c.l.b16 %v6319
    %v6393 = vunpack.c.l.b16 %v6320
    %v6394 = vunpack.c.h.b16 %v6320
    %v6395 = vunpack.c.l.b16 %v6321
    %v6396 = vunpack.c.l.b16 %v6322
    %v6397 = vunpack.c.h.b16 %v6322
    %v6398 = vunpack.c.l.b16 %v6323
    %v6399 = vunpack.c.l.b16 %v6324
    %v6400 = vunpack.c.h.b16 %v6324
    %v6401 = vunpack.c.l.b16 %v6325
    %v6402 = vunpack.c.l.b16 %v6326
    %v6403 = vunpack.c.h.b16 %v6326
    %v6404 = vunpack.c.l.b16 %v6327
    %v6405 = vunpack.c.l.b16 %v6328
    %v6406 = vunpack.c.h.b16 %v6328
    %v6407 = vunpack.c.l.b16 %v6329
    %v6408 = vunpack.c.l.b16 %v6330
    %v6409 = vunpack.c.h.b16 %v6330
    %v6410 = vunpack.c.l.b16 %v6331
    %v6411 = vunpack.c.l.b16 %v6332
    %v6412 = vunpack.c.h.b16 %v6332
    %v6413 = vunpack.c.l.b16 %v6333
    %v6414 = vpack.c.b16 %v6369, %v6366
    %v6415 = vpack.c.b16 %v6370, %v6367
    %v6416 = vpack.c.b16 %v6371, %v6368
    %v6417 = vpack.c.b16 %v6375, %v6372
    %v6418 = vpack.c.b16 %v6376, %v6373
    %v6419 = vpack.c.b16 %v6377, %v6374
    %v6420 = vpack.c.b16 %v6381, %v6378
    %v6421 = vpack.c.b16 %v6382, %v6379
    %v6422 = vpack.c.b16 %v6383, %v6380
    %v6423 = vpack.c.b16 %v6387, %v6384
    %v6424 = vpack.c.b16 %v6388, %v6385
    %v6425 = vpack.c.b16 %v6389, %v6386
    %v6426 = vpack.c.b16 %v6393, %v6390
    %v6427 = vpack.c.b16 %v6394, %v6391
    %v6428 = vpack.c.b16 %v6395, %v6392
    %v6429 = vpack.c.b16 %v6399, %v6396
    %v6430 = vpack.c.b16 %v6400, %v6397
    %v6431 = vpack.c.b16 %v6401, %v6398
    %v6432 = vpack.c.b16 %v6405, %v6402
    %v6433 = vpack.c.b16 %v6406, %v6403
    %v6434 = vpack.c.b16 %v6407, %v6404
    %v6435 = vpack.c.b16 %v6411, %v6408
    %v6436 = vpack.c.b16 %v6412, %v6409
    %v6437 = vpack.c.b16 %v6413, %v6410
    %6462 = vmatprep.subr.bf16.mxu0 %v6436
    %6463 = vmatpush1.bf16.msra.mxu0 %v6435
    %6464 = vmatprep.subr.bf16.mxu0 %v6433
    %6465 = vmatpush1.bf16.msra.mxu0 %v6432
    %6466 = vmatprep.subr.bf16.mxu0 %v6430
    %6467 = vmatpush1.bf16.msra.mxu0 %v6429
    %6468 = vmatprep.subr.bf16.mxu0 %v6427
    %6469 = vmatpush1.bf16.msra.mxu0 %v6426
    %6470 = vmatprep.subr.bf16.mxu0 %v6424
    %6471 = vmatpush1.bf16.msra.mxu0 %v6423
    %6472 = vmatprep.subr.bf16.mxu0 %v6421
    %6473 = vmatpush1.bf16.msra.mxu0 %v6420
    %6474 = vmatprep.subr.bf16.mxu0 %v6418
    %6475 = vmatpush1.bf16.msra.mxu0 %v6417
    %6476 = vmatprep.subr.bf16.mxu0 %v6415
    %6477 = vmatpush1.bf16.msra.mxu0 %v6414
    %6478 = vmatprep.subr.bf16.mxu0 0
    %6479 = vmatpush2.bf16.msra.mxu0 0
    %6480 = vmatprep.subr.bf16.mxu0 0
    %6481 = vmatpush2.bf16.msra.mxu0 0
    %6482 = vmatprep.subr.bf16.mxu0 0
    %6483 = vmatpush2.bf16.msra.mxu0 0
    %6484 = vmatprep.subr.bf16.mxu0 0
    %6485 = vmatpush2.bf16.msra.mxu0 0
    %6486 = vmatprep.subr.bf16.mxu0 0
    %6487 = vmatpush2.bf16.msra.mxu0 0
    %6488 = vmatprep.subr.bf16.mxu0 0
    %6489 = vmatpush2.bf16.msra.mxu0 0
    %6490 = vmatprep.subr.bf16.mxu0 0
    %6491 = vmatpush2.bf16.msra.mxu0 0
    %6492 = vmatprep.subr.bf16.mxu0 0
    %6493 = vmatpush2.bf16.msra.mxu0 0
    %6494 = vmatprep.mubr.bf16.mxu0 0
    %6495 = vmatmul.mubr.bf16.gmra.mxu0 %v5555
    %v6496 = vpop.f32.mrf.mxu0
    %v6497 = vadd.f32 %v4299, %v6496
    %v6498 = vpop.f32.mrf.mxu0
    %v6499 = vadd.f32 %v4303, %v6498
    %v6500 = vpop.f32.mrf.mxu0
    %v6501 = vpop.f32.mrf.mxu0
    %6502 = vdwg.mxu0
    %6503 = vmatprep.subr.bf16.mxu0 0
    %6504 = vmatpush1.bf16.msra.mxu0 %v6437
    %6505 = vmatprep.subr.bf16.mxu0 0
    %6506 = vmatpush1.bf16.msra.mxu0 %v6434
    %6507 = vmatprep.subr.bf16.mxu0 0
    %6508 = vmatpush1.bf16.msra.mxu0 %v6431
    %6509 = vmatprep.subr.bf16.mxu0 0
    %6510 = vmatpush1.bf16.msra.mxu0 %v6428
    %6511 = vmatprep.subr.bf16.mxu0 0
    %6512 = vmatpush1.bf16.msra.mxu0 %v6425
    %6513 = vmatprep.subr.bf16.mxu0 0
    %6514 = vmatpush1.bf16.msra.mxu0 %v6422
    %6515 = vmatprep.subr.bf16.mxu0 0
    %6516 = vmatpush1.bf16.msra.mxu0 %v6419
    %6517 = vmatprep.subr.bf16.mxu0 0
    %6518 = vmatpush1.bf16.msra.mxu0 %v6416
    %6519 = vmatprep.subr.bf16.mxu0 0
    %6520 = vmatpush2.bf16.msra.mxu0 0
    %6521 = vmatprep.subr.bf16.mxu0 0
    %6522 = vmatpush2.bf16.msra.mxu0 0
    %6523 = vmatprep.subr.bf16.mxu0 0
    %6524 = vmatpush2.bf16.msra.mxu0 0
    %6525 = vmatprep.subr.bf16.mxu0 0
    %6526 = vmatpush2.bf16.msra.mxu0 0
    %6527 = vmatprep.subr.bf16.mxu0 0
    %6528 = vmatpush2.bf16.msra.mxu0 0
    %6529 = vmatprep.subr.bf16.mxu0 0
    %6530 = vmatpush2.bf16.msra.mxu0 0
    %6531 = vmatprep.subr.bf16.mxu0 0
    %6532 = vmatpush2.bf16.msra.mxu0 0
    %6533 = vmatprep.subr.bf16.mxu0 0
    %6534 = vmatpush2.bf16.msra.mxu0 0
    %6535 = vmatprep.mubr.bf16.mxu0 0
    %6536 = vmatmul.mubr.bf16.gmra.mxu0 %v5555
    %v6537 = vpop.f32.mrf.mxu0
    %v6538 = vadd.f32 %v4307, %v6537
    %v6539 = vpop.f32.mrf.mxu0
    %v6540 = vpop.f32.mrf.mxu0
    %v6541 = vpop.f32.mrf.mxu0
    %6542 = vdwg.mxu0
    %v6543 = vadd.f32 %v6299, %v6497
    %v6544 = vxor.u32 %v6543, 2147483648
    %v6545 = vmul.f32 %v6544, 1.442695
    %v6546 = vpow.pop %v6545
    %v6547 = vadd.f32 %v6546, 1.0
    %v6548 = vrcp.pop %v6547
    %v6549 = vmul.f32 1.0, %v6548
    %v6550 = vadd.f32 %v6300, %v6499
    %v6551 = vxor.u32 %v6550, 2147483648
    %v6552 = vmul.f32 %v6551, 1.442695
    %v6553 = vpow.pop %v6552
    %v6554 = vadd.f32 %v6553, 1.0
    %v6555 = vrcp.pop %v6554
    %v6556 = vmul.f32 1.0, %v6555
    %v6557 = vmul.f32 %v6549, %v6538
    %v6558 = vadd.f32 %v6301, %v6557
    %v6559 = vtanh.pop %v6558
    %v6560 = vsub.f32 1.0, %v6556
    %v6561 = vmul.f32 %v6560, %v6559
    %v6562 = vmul.f32 %v6556, %v5554
    %v6563 = vadd.f32 %v6561, %v6562
    %v6564 = vpack.c.bf16 %v6563, %v6563
    %v6565 = vld [vmem:[#allocation17] sm:$0xf]
    %v6566 = vld [vmem:[#allocation17 + $0x4] sm:$0xf]
    %v6567 = vld [vmem:[#allocation17 + $0x8] sm:$0xf]
    %v6568 = vld [vmem:[#allocation17 + $0xc] sm:$0xf]
    %v6569 = vld [vmem:[#allocation17 + $0x10] sm:$0xf]
    %v6570 = vld [vmem:[#allocation17 + $0x14] sm:$0xf]
    %v6571 = vld [vmem:[#allocation17 + $0x18] sm:$0xf]
    %v6572 = vld [vmem:[#allocation17 + $0x1c] sm:$0xf]
    %v6573 = vld [vmem:[#allocation17 + $0x20] sm:$0xf]
    %v6574 = vld [vmem:[#allocation17 + $0x24] sm:$0xf]
    %v6575 = vld [vmem:[#allocation17 + $0x28] sm:$0xf]
    %v6576 = vld [vmem:[#allocation17 + $0x2c] sm:$0xf]
    %v6577 = vld [vmem:[#allocation17 + $0x30] sm:$0xf]
    %v6578 = vld [vmem:[#allocation17 + $0x34] sm:$0xf]
    %v6579 = vld [vmem:[#allocation17 + $0x38] sm:$0xf]
    %v6580 = vld [vmem:[#allocation17 + $0x3c] sm:$0xf]
    %v6597 = vunpack.c.l.b16 %v6565
    %v6598 = vunpack.c.l.b16 %v6566
    %v6599 = vunpack.c.l.b16 %v6567
    %v6600 = vunpack.c.l.b16 %v6568
    %v6601 = vunpack.c.l.b16 %v6569
    %v6602 = vunpack.c.l.b16 %v6570
    %v6603 = vunpack.c.l.b16 %v6571
    %v6604 = vunpack.c.l.b16 %v6572
    %v6605 = vunpack.c.l.b16 %v6573
    %v6606 = vunpack.c.l.b16 %v6574
    %v6607 = vunpack.c.l.b16 %v6575
    %v6608 = vunpack.c.l.b16 %v6576
    %v6609 = vunpack.c.l.b16 %v6577
    %v6610 = vunpack.c.l.b16 %v6578
    %v6611 = vunpack.c.l.b16 %v6579
    %v6612 = vunpack.c.l.b16 %v6580
    %v6613 = vpack.c.b16 %v6598, %v6597
    %v6614 = vpack.c.b16 %v6600, %v6599
    %v6615 = vpack.c.b16 %v6602, %v6601
    %v6616 = vpack.c.b16 %v6604, %v6603
    %v6617 = vpack.c.b16 %v6606, %v6605
    %v6618 = vpack.c.b16 %v6608, %v6607
    %v6619 = vpack.c.b16 %v6610, %v6609
    %v6620 = vpack.c.b16 %v6612, %v6611
    %6629 = vmatprep.subr.bf16.mxu0 0
    %6630 = vmatpush1.bf16.msra.mxu0 %v6620
    %6631 = vmatprep.subr.bf16.mxu0 0
    %6632 = vmatpush1.bf16.msra.mxu0 %v6619
    %6633 = vmatprep.subr.bf16.mxu0 0
    %6634 = vmatpush1.bf16.msra.mxu0 %v6618
    %6635 = vmatprep.subr.bf16.mxu0 0
    %6636 = vmatpush1.bf16.msra.mxu0 %v6617
    %6637 = vmatprep.subr.bf16.mxu0 0
    %6638 = vmatpush1.bf16.msra.mxu0 %v6616
    %6639 = vmatprep.subr.bf16.mxu0 0
    %6640 = vmatpush1.bf16.msra.mxu0 %v6615
    %6641 = vmatprep.subr.bf16.mxu0 0
    %6642 = vmatpush1.bf16.msra.mxu0 %v6614
    %6643 = vmatprep.subr.bf16.mxu0 0
    %6644 = vmatpush1.bf16.msra.mxu0 %v6613
    %6645 = vmatprep.subr.bf16.mxu0 0
    %6646 = vmatpush2.bf16.msra.mxu0 0
    %6647 = vmatprep.subr.bf16.mxu0 0
    %6648 = vmatpush2.bf16.msra.mxu0 0
    %6649 = vmatprep.subr.bf16.mxu0 0
    %6650 = vmatpush2.bf16.msra.mxu0 0
    %6651 = vmatprep.subr.bf16.mxu0 0
    %6652 = vmatpush2.bf16.msra.mxu0 0
    %6653 = vmatprep.subr.bf16.mxu0 0
    %6654 = vmatpush2.bf16.msra.mxu0 0
    %6655 = vmatprep.subr.bf16.mxu0 0
    %6656 = vmatpush2.bf16.msra.mxu0 0
    %6657 = vmatprep.subr.bf16.mxu0 0
    %6658 = vmatpush2.bf16.msra.mxu0 0
    %6659 = vmatprep.subr.bf16.mxu0 0
    %6660 = vmatpush2.bf16.msra.mxu0 0
    %6661 = vmatprep.mubr.bf16.mxu0 0
    %6662 = vmatmul.mubr.bf16.gmra.mxu0 %v6564
    %v6663 = vpop.f32.mrf.mxu0
    %v6664 = vadd.f32 %v4562, %v6663
    %v6665 = vpop.f32.mrf.mxu0
    %v6666 = vpop.f32.mrf.mxu0
    %v6667 = vpop.f32.mrf.mxu0
    %6668 = vdwg.mxu0
    %v6669 = vsel %vm3682, %v6664, -inf
    %6670 = vmax.xlane.f32.xlu0 %v6669
    %v6671 = vpop.xlane.xlu0 %6670
    %v6672 = vsub.f32 %v6664, %v6671
    %v6673 = vmul.f32 %v6672, 1.442695
    %v6674 = vpow.pop %v6673
    %v6675 = vsel %vm3682, %v6674, 0.0
    %6676 = vadd.xlane.f32.xlu0 %v6675
    %v6677 = vpop.xlane.xlu0 %6676
    %v6678 = vlog2.pop %v6677
    %v6679 = vmul.f32 %v6678, 0.6931472
    %v6680 = vadd.f32 %v6671, %v6679
    %v6681 = vsub.f32 %v6664, %v6680
    %vm6682 = vcmp.eq.f32.partialorder %v6664, %v6671
    %v6683 = vsel %vm6682, %v3634, 128
    %v6684 = vsel %vm3682, %v6683, 2147483647
    %v6685 = vand.u32 %v6684, 65535
    %v6686 = vshra.s32 %v6684, 16
    %v6687 = vcvt.s32.f32 %v6685
    %v6688 = vcvt.s32.f32 %v6686
    %6689 = vmin.xlane.f32.xlu0 %v6688
    %v6690 = vpop.xlane.xlu0 %6689
    %vm6691 = vcmp.eq.f32.partialorder %v6688, %v6690
    %v6692 = vsel %vm6691, %v6687, inf
    %6693 = vmin.xlane.f32.xlu0 %v6692
    %v6694 = vpop.xlane.xlu0 %6693
    %v6695 = vcvt.f32.s32 %v6694
    %v6696 = vcvt.f32.s32 %v6690
    %v6697 = vshll.u32 %v6696, 16
    %v6698 = vadd.s32 %v6697, %v6695
    %s6699 = scalar_lea.vmem [#allocation19], 4
    %6700 = vst [vmem:[%s6699] sm:$0x3] %v6681
    %s6701 = scalar_lea.vmem %s15, 4
    %6702 = vst.msk [vmem:[%s6701] sm:$0x3] %vm4683, %v6698
    %vm6703 = vcmp.eq.s32.totalorder %v3634, %v6698
    %v6704 = vsel %vm6703, 1, 0
    %v6705 = vcvt.s32.f32 %v6704
    %v6706 = vpack.c.bf16 %v6705, %v6705
    %v6707 = vld [vmem:[#allocation4] sm:$0xff]
    %v6708 = vld [vmem:[#allocation4 + $0x8] sm:$0xf]
    %v6709 = vld [vmem:[#allocation4 + $0xc] sm:$0xff]
    %v6710 = vld [vmem:[#allocation4 + $0x14] sm:$0xf]
    %v6711 = vld [vmem:[#allocation4 + $0x18] sm:$0xff]
    %v6712 = vld [vmem:[#allocation4 + $0x20] sm:$0xf]
    %v6713 = vld [vmem:[#allocation4 + $0x24] sm:$0xff]
    %v6714 = vld [vmem:[#allocation4 + $0x2c] sm:$0xf]
    %v6715 = vld [vmem:[#allocation4 + $0x30] sm:$0xff]
    %v6716 = vld [vmem:[#allocation4 + $0x38] sm:$0xf]
    %v6717 = vld [vmem:[#allocation4 + $0x3c] sm:$0xff]
    %v6718 = vld [vmem:[#allocation4 + $0x44] sm:$0xf]
    %v6719 = vld [vmem:[#allocation4 + $0x48] sm:$0xff]
    %v6720 = vld [vmem:[#allocation4 + $0x50] sm:$0xf]
    %v6721 = vld [vmem:[#allocation4 + $0x54] sm:$0xff]
    %v6722 = vld [vmem:[#allocation4 + $0x5c] sm:$0xf]
    %v6723 = vld [vmem:[#allocation4 + $0x60] sm:$0xff]
    %v6724 = vld [vmem:[#allocation4 + $0x68] sm:$0xf]
    %v6725 = vld [vmem:[#allocation4 + $0x6c] sm:$0xff]
    %v6726 = vld [vmem:[#allocation4 + $0x74] sm:$0xf]
    %v6727 = vld [vmem:[#allocation4 + $0x78] sm:$0xff]
    %v6728 = vld [vmem:[#allocation4 + $0x80] sm:$0xf]
    %v6729 = vld [vmem:[#allocation4 + $0x84] sm:$0xff]
    %v6730 = vld [vmem:[#allocation4 + $0x8c] sm:$0xf]
    %v6731 = vld [vmem:[#allocation4 + $0x90] sm:$0xff]
    %v6732 = vld [vmem:[#allocation4 + $0x98] sm:$0xf]
    %v6733 = vld [vmem:[#allocation4 + $0x9c] sm:$0xff]
    %v6734 = vld [vmem:[#allocation4 + $0xa4] sm:$0xf]
    %v6735 = vld [vmem:[#allocation4 + $0xa8] sm:$0xff]
    %v6736 = vld [vmem:[#allocation4 + $0xb0] sm:$0xf]
    %v6737 = vld [vmem:[#allocation4 + $0xb4] sm:$0xff]
    %v6738 = vld [vmem:[#allocation4 + $0xbc] sm:$0xf]
    %v6739 = vmul.f32 %v3455, %v6563
    %v6740 = vmul.f32 %v3456, %v6563
    %v6741 = vmul.f32 %v3457, %v6563
    %v6742 = vmul.f32 %v3458, %v6563
    %v6743 = vmul.f32 %v3459, %v6563
    %v6744 = vmul.f32 %v3460, %v6563
    %v6745 = vmul.f32 %v3461, %v6563
    %v6746 = vmul.f32 %v3462, %v6563
    %v6747 = vsel %vm3682, %v6739, 0.0
    %6748 = vadd.xlane.f32.xlu0 %v6747
    %v6749 = vpop.xlane.xlu0 %6748
    %v6750 = vsel %vm3682, %v6740, 0.0
    %6751 = vadd.xlane.f32.xlu0 %v6750
    %v6752 = vpop.xlane.xlu0 %6751
    %v6753 = vsel %vm3682, %v6741, 0.0
    %6754 = vadd.xlane.f32.xlu0 %v6753
    %v6755 = vpop.xlane.xlu0 %6754
    %v6756 = vsel %vm3682, %v6742, 0.0
    %6757 = vadd.xlane.f32.xlu0 %v6756
    %v6758 = vpop.xlane.xlu0 %6757
    %v6759 = vsel %vm3682, %v6743, 0.0
    %6760 = vadd.xlane.f32.xlu0 %v6759
    %v6761 = vpop.xlane.xlu0 %6760
    %v6762 = vsel %vm3682, %v6744, 0.0
    %6763 = vadd.xlane.f32.xlu0 %v6762
    %v6764 = vpop.xlane.xlu0 %6763
    %v6765 = vsel %vm3682, %v6745, 0.0
    %6766 = vadd.xlane.f32.xlu0 %v6765
    %v6767 = vpop.xlane.xlu0 %6766
    %v6768 = vsel %vm3682, %v6746, 0.0
    %6769 = vadd.xlane.f32.xlu0 %v6768
    %v6770 = vpop.xlane.xlu0 %6769
    %v6771 = vsel %vm3682, %v6749, -inf
    %v6772 = vsel %vm3682, %v6752, -inf
    %v6773 = vsel %vm3682, %v6755, -inf
    %v6774 = vsel %vm3682, %v6758, -inf
    %v6775 = vsel %vm3682, %v6761, -inf
    %v6776 = vmax.f32 %v6771, %v6775
    %v6777 = vsel %vm3682, %v6764, -inf
    %v6778 = vmax.f32 %v6772, %v6777
    %v6779 = vsel %vm3682, %v6767, -inf
    %v6780 = vmax.f32 %v6773, %v6779
    %v6781 = vsel %vm3682, %v6770, -inf
    %v6782 = vmax.f32 %v6774, %v6781
    %v6783 = vmax.f32 %v6776, %v6778
    %v6784 = vmax.f32 %v6780, %v6782
    %v6785 = vmax.f32 %v6783, %v6784
    %v6786 = vsub.f32 %v6749, %v6785
    %v6787 = vsub.f32 %v6752, %v6785
    %v6788 = vsub.f32 %v6755, %v6785
    %v6789 = vsub.f32 %v6758, %v6785
    %v6790 = vsub.f32 %v6761, %v6785
    %v6791 = vsub.f32 %v6764, %v6785
    %v6792 = vsub.f32 %v6767, %v6785
    %v6793 = vsub.f32 %v6770, %v6785
    %v6794 = vmul.f32 %v6786, 1.442695
    %v6795 = vpow.pop %v6794
    %v6796 = vmul.f32 %v6787, 1.442695
    %v6797 = vpow.pop %v6796
    %v6798 = vmul.f32 %v6788, 1.442695
    %v6799 = vpow.pop %v6798
    %v6800 = vmul.f32 %v6789, 1.442695
    %v6801 = vpow.pop %v6800
    %v6802 = vmul.f32 %v6790, 1.442695
    %v6803 = vpow.pop %v6802
    %v6804 = vmul.f32 %v6791, 1.442695
    %v6805 = vpow.pop %v6804
    %v6806 = vmul.f32 %v6792, 1.442695
    %v6807 = vpow.pop %v6806
    %v6808 = vmul.f32 %v6793, 1.442695
    %v6809 = vpow.pop %v6808
    %v6810 = vsel %vm3682, %v6795, 0.0
    %v6811 = vsel %vm3682, %v6797, 0.0
    %v6812 = vadd.f32 %v6810, %v6811
    %v6813 = vsel %vm3682, %v6799, 0.0
    %v6814 = vadd.f32 %v6812, %v6813
    %v6815 = vsel %vm3682, %v6801, 0.0
    %v6816 = vadd.f32 %v6814, %v6815
    %v6817 = vsel %vm3682, %v6803, 0.0
    %v6818 = vadd.f32 %v6816, %v6817
    %v6819 = vsel %vm3682, %v6805, 0.0
    %v6820 = vadd.f32 %v6818, %v6819
    %v6821 = vsel %vm3682, %v6807, 0.0
    %v6822 = vadd.f32 %v6820, %v6821
    %v6823 = vsel %vm3682, %v6809, 0.0
    %v6824 = vadd.f32 %v6822, %v6823
    %v6825 = vrcp.pop %v6824
    %v6826 = vmul.f32 %v6795, %v6825
    %v6827 = vmul.f32 %v6797, %v6825
    %v6828 = vmul.f32 %v6799, %v6825
    %v6829 = vmul.f32 %v6801, %v6825
    %v6830 = vmul.f32 %v6803, %v6825
    %v6831 = vmul.f32 %v6805, %v6825
    %v6832 = vmul.f32 %v6807, %v6825
    %v6833 = vmul.f32 %v6809, %v6825
    %v6834 = vmul.f32 %v6826, %v3455
    %v6835 = vmul.f32 %v6827, %v3456
    %v6836 = vmul.f32 %v6828, %v3457
    %v6837 = vmul.f32 %v6829, %v3458
    %v6838 = vmul.f32 %v6830, %v3459
    %v6839 = vmul.f32 %v6831, %v3460
    %v6840 = vmul.f32 %v6832, %v3461
    %v6841 = vmul.f32 %v6833, %v3462
    %v6842 = vsel %vm3682, %v6834, 0.0
    %v6843 = vsel %vm3682, %v6835, 0.0
    %v6844 = vadd.f32 %v6842, %v6843
    %v6845 = vsel %vm3682, %v6836, 0.0
    %v6846 = vadd.f32 %v6844, %v6845
    %v6847 = vsel %vm3682, %v6837, 0.0
    %v6848 = vadd.f32 %v6846, %v6847
    %v6849 = vsel %vm3682, %v6838, 0.0
    %v6850 = vadd.f32 %v6848, %v6849
    %v6851 = vsel %vm3682, %v6839, 0.0
    %v6852 = vadd.f32 %v6850, %v6851
    %v6853 = vsel %vm3682, %v6840, 0.0
    %v6854 = vadd.f32 %v6852, %v6853
    %v6855 = vsel %vm3682, %v6841, 0.0
    %v6856 = vadd.f32 %v6854, %v6855
    %v6857 = vpack.c.bf16 %v6856, %v6856
    %v6858 = vld [vmem:[#allocation14] sm:$0xff]
    %v6859 = vld [vmem:[#allocation14 + $0x8] sm:$0xf]
    %v6860 = vld [vmem:[#allocation14 + $0xc] sm:$0xff]
    %v6861 = vld [vmem:[#allocation14 + $0x14] sm:$0xf]
    %v6862 = vld [vmem:[#allocation14 + $0x18] sm:$0xff]
    %v6863 = vld [vmem:[#allocation14 + $0x20] sm:$0xf]
    %v6864 = vld [vmem:[#allocation14 + $0x24] sm:$0xff]
    %v6865 = vld [vmem:[#allocation14 + $0x2c] sm:$0xf]
    %v6866 = vld [vmem:[#allocation14 + $0x30] sm:$0xff]
    %v6867 = vld [vmem:[#allocation14 + $0x38] sm:$0xf]
    %v6868 = vld [vmem:[#allocation14 + $0x3c] sm:$0xff]
    %v6869 = vld [vmem:[#allocation14 + $0x44] sm:$0xf]
    %v6870 = vld [vmem:[#allocation14 + $0x48] sm:$0xff]
    %v6871 = vld [vmem:[#allocation14 + $0x50] sm:$0xf]
    %v6872 = vld [vmem:[#allocation14 + $0x54] sm:$0xff]
    %v6873 = vld [vmem:[#allocation14 + $0x5c] sm:$0xf]
    %v6874 = vld [vmem:[#allocation14 + $0x60] sm:$0xff]
    %v6875 = vld [vmem:[#allocation14 + $0x68] sm:$0xf]
    %v6876 = vld [vmem:[#allocation14 + $0x6c] sm:$0xff]
    %v6877 = vld [vmem:[#allocation14 + $0x74] sm:$0xf]
    %v6878 = vld [vmem:[#allocation14 + $0x78] sm:$0xff]
    %v6879 = vld [vmem:[#allocation14 + $0x80] sm:$0xf]
    %v6880 = vld [vmem:[#allocation14 + $0x84] sm:$0xff]
    %v6881 = vld [vmem:[#allocation14 + $0x8c] sm:$0xf]
    %v6882 = vld [vmem:[#allocation14 + $0x90] sm:$0xff]
    %v6883 = vld [vmem:[#allocation14 + $0x98] sm:$0xf]
    %v6884 = vld [vmem:[#allocation14 + $0x9c] sm:$0xff]
    %v6885 = vld [vmem:[#allocation14 + $0xa4] sm:$0xf]
    %v6886 = vld [vmem:[#allocation14 + $0xa8] sm:$0xff]
    %v6887 = vld [vmem:[#allocation14 + $0xb0] sm:$0xf]
    %v6888 = vld [vmem:[#allocation14 + $0xb4] sm:$0xff]
    %v6889 = vld [vmem:[#allocation14 + $0xbc] sm:$0xf]
    %v6922 = vunpack.c.l.b16 %v6858
    %v6923 = vunpack.c.h.b16 %v6858
    %v6924 = vunpack.c.l.b16 %v6859
    %v6925 = vunpack.c.l.b16 %v6860
    %v6926 = vunpack.c.h.b16 %v6860
    %v6927 = vunpack.c.l.b16 %v6861
    %v6928 = vunpack.c.l.b16 %v6862
    %v6929 = vunpack.c.h.b16 %v6862
    %v6930 = vunpack.c.l.b16 %v6863
    %v6931 = vunpack.c.l.b16 %v6864
    %v6932 = vunpack.c.h.b16 %v6864
    %v6933 = vunpack.c.l.b16 %v6865
    %v6934 = vunpack.c.l.b16 %v6866
    %v6935 = vunpack.c.h.b16 %v6866
    %v6936 = vunpack.c.l.b16 %v6867
    %v6937 = vunpack.c.l.b16 %v6868
    %v6938 = vunpack.c.h.b16 %v6868
    %v6939 = vunpack.c.l.b16 %v6869
    %v6940 = vunpack.c.l.b16 %v6870
    %v6941 = vunpack.c.h.b16 %v6870
    %v6942 = vunpack.c.l.b16 %v6871
    %v6943 = vunpack.c.l.b16 %v6872
    %v6944 = vunpack.c.h.b16 %v6872
    %v6945 = vunpack.c.l.b16 %v6873
    %v6946 = vunpack.c.l.b16 %v6874
    %v6947 = vunpack.c.h.b16 %v6874
    %v6948 = vunpack.c.l.b16 %v6875
    %v6949 = vunpack.c.l.b16 %v6876
    %v6950 = vunpack.c.h.b16 %v6876
    %v6951 = vunpack.c.l.b16 %v6877
    %v6952 = vunpack.c.l.b16 %v6878
    %v6953 = vunpack.c.h.b16 %v6878
    %v6954 = vunpack.c.l.b16 %v6879
    %v6955 = vunpack.c.l.b16 %v6880
    %v6956 = vunpack.c.h.b16 %v6880
    %v6957 = vunpack.c.l.b16 %v6881
    %v6958 = vunpack.c.l.b16 %v6882
    %v6959 = vunpack.c.h.b16 %v6882
    %v6960 = vunpack.c.l.b16 %v6883
    %v6961 = vunpack.c.l.b16 %v6884
    %v6962 = vunpack.c.h.b16 %v6884
    %v6963 = vunpack.c.l.b16 %v6885
    %v6964 = vunpack.c.l.b16 %v6886
    %v6965 = vunpack.c.h.b16 %v6886
    %v6966 = vunpack.c.l.b16 %v6887
    %v6967 = vunpack.c.l.b16 %v6888
    %v6968 = vunpack.c.h.b16 %v6888
    %v6969 = vunpack.c.l.b16 %v6889
    %v6970 = vpack.c.b16 %v6925, %v6922
    %v6971 = vpack.c.b16 %v6926, %v6923
    %v6972 = vpack.c.b16 %v6927, %v6924
    %v6973 = vpack.c.b16 %v6931, %v6928
    %v6974 = vpack.c.b16 %v6932, %v6929
    %v6975 = vpack.c.b16 %v6933, %v6930
    %v6976 = vpack.c.b16 %v6937, %v6934
    %v6977 = vpack.c.b16 %v6938, %v6935
    %v6978 = vpack.c.b16 %v6939, %v6936
    %v6979 = vpack.c.b16 %v6943, %v6940
    %v6980 = vpack.c.b16 %v6944, %v6941
    %v6981 = vpack.c.b16 %v6945, %v6942
    %v6982 = vpack.c.b16 %v6949, %v6946
    %v6983 = vpack.c.b16 %v6950, %v6947
    %v6984 = vpack.c.b16 %v6951, %v6948
    %v6985 = vpack.c.b16 %v6955, %v6952
    %v6986 = vpack.c.b16 %v6956, %v6953
    %v6987 = vpack.c.b16 %v6957, %v6954
    %v6988 = vpack.c.b16 %v6961, %v6958
    %v6989 = vpack.c.b16 %v6962, %v6959
    %v6990 = vpack.c.b16 %v6963, %v6960
    %v6991 = vpack.c.b16 %v6967, %v6964
    %v6992 = vpack.c.b16 %v6968, %v6965
    %v6993 = vpack.c.b16 %v6969, %v6966
    %7018 = vmatprep.subr.bf16.mxu0 %v6992
    %7019 = vmatpush1.bf16.msra.mxu0 %v6991
    %7020 = vmatprep.subr.bf16.mxu0 %v6989
    %7021 = vmatpush1.bf16.msra.mxu0 %v6988
    %7022 = vmatprep.subr.bf16.mxu0 %v6986
    %7023 = vmatpush1.bf16.msra.mxu0 %v6985
    %7024 = vmatprep.subr.bf16.mxu0 %v6983
    %7025 = vmatpush1.bf16.msra.mxu0 %v6982
    %7026 = vmatprep.subr.bf16.mxu0 %v6980
    %7027 = vmatpush1.bf16.msra.mxu0 %v6979
    %7028 = vmatprep.subr.bf16.mxu0 %v6977
    %7029 = vmatpush1.bf16.msra.mxu0 %v6976
    %7030 = vmatprep.subr.bf16.mxu0 %v6974
    %7031 = vmatpush1.bf16.msra.mxu0 %v6973
    %7032 = vmatprep.subr.bf16.mxu0 %v6971
    %7033 = vmatpush1.bf16.msra.mxu0 %v6970
    %7034 = vmatprep.subr.bf16.mxu0 0
    %7035 = vmatpush2.bf16.msra.mxu0 0
    %7036 = vmatprep.subr.bf16.mxu0 0
    %7037 = vmatpush2.bf16.msra.mxu0 0
    %7038 = vmatprep.subr.bf16.mxu0 0
    %7039 = vmatpush2.bf16.msra.mxu0 0
    %7040 = vmatprep.subr.bf16.mxu0 0
    %7041 = vmatpush2.bf16.msra.mxu0 0
    %7042 = vmatprep.subr.bf16.mxu0 0
    %7043 = vmatpush2.bf16.msra.mxu0 0
    %7044 = vmatprep.subr.bf16.mxu0 0
    %7045 = vmatpush2.bf16.msra.mxu0 0
    %7046 = vmatprep.subr.bf16.mxu0 0
    %7047 = vmatpush2.bf16.msra.mxu0 0
    %7048 = vmatprep.subr.bf16.mxu0 0
    %7049 = vmatpush2.bf16.msra.mxu0 0
    %7050 = vmatprep.mubr.bf16.mxu0 0
    %7051 = vmatmul.mubr.bf16.gmra.mxu0 %v6857
    %v7052 = vpop.f32.mrf.mxu0
    %v7053 = vadd.f32 0.0, %v7052
    %v7054 = vpop.f32.mrf.mxu0
    %v7055 = vadd.f32 0.0, %v7054
    %v7056 = vpop.f32.mrf.mxu0
    %v7057 = vpop.f32.mrf.mxu0
    %7058 = vdwg.mxu0
    %7059 = vmatprep.subr.bf16.mxu0 0
    %7060 = vmatpush1.bf16.msra.mxu0 %v6993
    %7061 = vmatprep.subr.bf16.mxu0 0
    %7062 = vmatpush1.bf16.msra.mxu0 %v6990
    %7063 = vmatprep.subr.bf16.mxu0 0
    %7064 = vmatpush1.bf16.msra.mxu0 %v6987
    %7065 = vmatprep.subr.bf16.mxu0 0
    %7066 = vmatpush1.bf16.msra.mxu0 %v6984
    %7067 = vmatprep.subr.bf16.mxu0 0
    %7068 = vmatpush1.bf16.msra.mxu0 %v6981
    %7069 = vmatprep.subr.bf16.mxu0 0
    %7070 = vmatpush1.bf16.msra.mxu0 %v6978
    %7071 = vmatprep.subr.bf16.mxu0 0
    %7072 = vmatpush1.bf16.msra.mxu0 %v6975
    %7073 = vmatprep.subr.bf16.mxu0 0
    %7074 = vmatpush1.bf16.msra.mxu0 %v6972
    %7075 = vmatprep.subr.bf16.mxu0 0
    %7076 = vmatpush2.bf16.msra.mxu0 0
    %7077 = vmatprep.subr.bf16.mxu0 0
    %7078 = vmatpush2.bf16.msra.mxu0 0
    %7079 = vmatprep.subr.bf16.mxu0 0
    %7080 = vmatpush2.bf16.msra.mxu0 0
    %7081 = vmatprep.subr.bf16.mxu0 0
    %7082 = vmatpush2.bf16.msra.mxu0 0
    %7083 = vmatprep.subr.bf16.mxu0 0
    %7084 = vmatpush2.bf16.msra.mxu0 0
    %7085 = vmatprep.subr.bf16.mxu0 0
    %7086 = vmatpush2.bf16.msra.mxu0 0
    %7087 = vmatprep.subr.bf16.mxu0 0
    %7088 = vmatpush2.bf16.msra.mxu0 0
    %7089 = vmatprep.subr.bf16.mxu0 0
    %7090 = vmatpush2.bf16.msra.mxu0 0
    %7091 = vmatprep.mubr.bf16.mxu0 0
    %7092 = vmatmul.mubr.bf16.gmra.mxu0 %v6857
    %v7093 = vpop.f32.mrf.mxu0
    %v7094 = vadd.f32 0.0, %v7093
    %v7095 = vpop.f32.mrf.mxu0
    %v7096 = vpop.f32.mrf.mxu0
    %v7097 = vpop.f32.mrf.mxu0
    %7098 = vdwg.mxu0
    %v7131 = vunpack.c.l.b16 %v6707
    %v7132 = vunpack.c.h.b16 %v6707
    %v7133 = vunpack.c.l.b16 %v6708
    %v7134 = vunpack.c.l.b16 %v6709
    %v7135 = vunpack.c.h.b16 %v6709
    %v7136 = vunpack.c.l.b16 %v6710
    %v7137 = vunpack.c.l.b16 %v6711
    %v7138 = vunpack.c.h.b16 %v6711
    %v7139 = vunpack.c.l.b16 %v6712
    %v7140 = vunpack.c.l.b16 %v6713
    %v7141 = vunpack.c.h.b16 %v6713
    %v7142 = vunpack.c.l.b16 %v6714
    %v7143 = vunpack.c.l.b16 %v6715
    %v7144 = vunpack.c.h.b16 %v6715
    %v7145 = vunpack.c.l.b16 %v6716
    %v7146 = vunpack.c.l.b16 %v6717
    %v7147 = vunpack.c.h.b16 %v6717
    %v7148 = vunpack.c.l.b16 %v6718
    %v7149 = vunpack.c.l.b16 %v6719
    %v7150 = vunpack.c.h.b16 %v6719
    %v7151 = vunpack.c.l.b16 %v6720
    %v7152 = vunpack.c.l.b16 %v6721
    %v7153 = vunpack.c.h.b16 %v6721
    %v7154 = vunpack.c.l.b16 %v6722
    %v7155 = vunpack.c.l.b16 %v6723
    %v7156 = vunpack.c.h.b16 %v6723
    %v7157 = vunpack.c.l.b16 %v6724
    %v7158 = vunpack.c.l.b16 %v6725
    %v7159 = vunpack.c.h.b16 %v6725
    %v7160 = vunpack.c.l.b16 %v6726
    %v7161 = vunpack.c.l.b16 %v6727
    %v7162 = vunpack.c.h.b16 %v6727
    %v7163 = vunpack.c.l.b16 %v6728
    %v7164 = vunpack.c.l.b16 %v6729
    %v7165 = vunpack.c.h.b16 %v6729
    %v7166 = vunpack.c.l.b16 %v6730
    %v7167 = vunpack.c.l.b16 %v6731
    %v7168 = vunpack.c.h.b16 %v6731
    %v7169 = vunpack.c.l.b16 %v6732
    %v7170 = vunpack.c.l.b16 %v6733
    %v7171 = vunpack.c.h.b16 %v6733
    %v7172 = vunpack.c.l.b16 %v6734
    %v7173 = vunpack.c.l.b16 %v6735
    %v7174 = vunpack.c.h.b16 %v6735
    %v7175 = vunpack.c.l.b16 %v6736
    %v7176 = vunpack.c.l.b16 %v6737
    %v7177 = vunpack.c.h.b16 %v6737
    %v7178 = vunpack.c.l.b16 %v6738
    %v7179 = vpack.c.b16 %v7134, %v7131
    %v7180 = vpack.c.b16 %v7135, %v7132
    %v7181 = vpack.c.b16 %v7136, %v7133
    %v7182 = vpack.c.b16 %v7140, %v7137
    %v7183 = vpack.c.b16 %v7141, %v7138
    %v7184 = vpack.c.b16 %v7142, %v7139
    %v7185 = vpack.c.b16 %v7146, %v7143
    %v7186 = vpack.c.b16 %v7147, %v7144
    %v7187 = vpack.c.b16 %v7148, %v7145
    %v7188 = vpack.c.b16 %v7152, %v7149
    %v7189 = vpack.c.b16 %v7153, %v7150
    %v7190 = vpack.c.b16 %v7154, %v7151
    %v7191 = vpack.c.b16 %v7158, %v7155
    %v7192 = vpack.c.b16 %v7159, %v7156
    %v7193 = vpack.c.b16 %v7160, %v7157
    %v7194 = vpack.c.b16 %v7164, %v7161
    %v7195 = vpack.c.b16 %v7165, %v7162
    %v7196 = vpack.c.b16 %v7166, %v7163
    %v7197 = vpack.c.b16 %v7170, %v7167
    %v7198 = vpack.c.b16 %v7171, %v7168
    %v7199 = vpack.c.b16 %v7172, %v7169
    %v7200 = vpack.c.b16 %v7176, %v7173
    %v7201 = vpack.c.b16 %v7177, %v7174
    %v7202 = vpack.c.b16 %v7178, %v7175
    %7227 = vmatprep.subr.bf16.mxu0 %v7201
    %7228 = vmatpush1.bf16.msra.mxu0 %v7200
    %7229 = vmatprep.subr.bf16.mxu0 %v7198
    %7230 = vmatpush1.bf16.msra.mxu0 %v7197
    %7231 = vmatprep.subr.bf16.mxu0 %v7195
    %7232 = vmatpush1.bf16.msra.mxu0 %v7194
    %7233 = vmatprep.subr.bf16.mxu0 %v7192
    %7234 = vmatpush1.bf16.msra.mxu0 %v7191
    %7235 = vmatprep.subr.bf16.mxu0 %v7189
    %7236 = vmatpush1.bf16.msra.mxu0 %v7188
    %7237 = vmatprep.subr.bf16.mxu0 %v7186
    %7238 = vmatpush1.bf16.msra.mxu0 %v7185
    %7239 = vmatprep.subr.bf16.mxu0 %v7183
    %7240 = vmatpush1.bf16.msra.mxu0 %v7182
    %7241 = vmatprep.subr.bf16.mxu0 %v7180
    %7242 = vmatpush1.bf16.msra.mxu0 %v7179
    %7243 = vmatprep.subr.bf16.mxu0 0
    %7244 = vmatpush2.bf16.msra.mxu0 0
    %7245 = vmatprep.subr.bf16.mxu0 0
    %7246 = vmatpush2.bf16.msra.mxu0 0
    %7247 = vmatprep.subr.bf16.mxu0 0
    %7248 = vmatpush2.bf16.msra.mxu0 0
    %7249 = vmatprep.subr.bf16.mxu0 0
    %7250 = vmatpush2.bf16.msra.mxu0 0
    %7251 = vmatprep.subr.bf16.mxu0 0
    %7252 = vmatpush2.bf16.msra.mxu0 0
    %7253 = vmatprep.subr.bf16.mxu0 0
    %7254 = vmatpush2.bf16.msra.mxu0 0
    %7255 = vmatprep.subr.bf16.mxu0 0
    %7256 = vmatpush2.bf16.msra.mxu0 0
    %7257 = vmatprep.subr.bf16.mxu0 0
    %7258 = vmatpush2.bf16.msra.mxu0 0
    %7259 = vmatprep.mubr.bf16.mxu0 0
    %7260 = vmatmul.mubr.bf16.gmra.mxu0 %v6706
    %v7261 = vpop.f32.mrf.mxu0
    %v7262 = vadd.f32 %v7053, %v7261
    %v7263 = vpop.f32.mrf.mxu0
    %v7264 = vadd.f32 %v7055, %v7263
    %v7265 = vpop.f32.mrf.mxu0
    %v7266 = vpop.f32.mrf.mxu0
    %7267 = vdwg.mxu0
    %7268 = vmatprep.subr.bf16.mxu0 0
    %7269 = vmatpush1.bf16.msra.mxu0 %v7202
    %7270 = vmatprep.subr.bf16.mxu0 0
    %7271 = vmatpush1.bf16.msra.mxu0 %v7199
    %7272 = vmatprep.subr.bf16.mxu0 0
    %7273 = vmatpush1.bf16.msra.mxu0 %v7196
    %7274 = vmatprep.subr.bf16.mxu0 0
    %7275 = vmatpush1.bf16.msra.mxu0 %v7193
    %7276 = vmatprep.subr.bf16.mxu0 0
    %7277 = vmatpush1.bf16.msra.mxu0 %v7190
    %7278 = vmatprep.subr.bf16.mxu0 0
    %7279 = vmatpush1.bf16.msra.mxu0 %v7187
    %7280 = vmatprep.subr.bf16.mxu0 0
    %7281 = vmatpush1.bf16.msra.mxu0 %v7184
    %7282 = vmatprep.subr.bf16.mxu0 0
    %7283 = vmatpush1.bf16.msra.mxu0 %v7181
    %7284 = vmatprep.subr.bf16.mxu0 0
    %7285 = vmatpush2.bf16.msra.mxu0 0
    %7286 = vmatprep.subr.bf16.mxu0 0
    %7287 = vmatpush2.bf16.msra.mxu0 0
    %7288 = vmatprep.subr.bf16.mxu0 0
    %7289 = vmatpush2.bf16.msra.mxu0 0
    %7290 = vmatprep.subr.bf16.mxu0 0
    %7291 = vmatpush2.bf16.msra.mxu0 0
    %7292 = vmatprep.subr.bf16.mxu0 0
    %7293 = vmatpush2.bf16.msra.mxu0 0
    %7294 = vmatprep.subr.bf16.mxu0 0
    %7295 = vmatpush2.bf16.msra.mxu0 0
    %7296 = vmatprep.subr.bf16.mxu0 0
    %7297 = vmatpush2.bf16.msra.mxu0 0
    %7298 = vmatprep.subr.bf16.mxu0 0
    %7299 = vmatpush2.bf16.msra.mxu0 0
    %7300 = vmatprep.mubr.bf16.mxu0 0
    %7301 = vmatmul.mubr.bf16.gmra.mxu0 %v6706
    %v7302 = vpop.f32.mrf.mxu0
    %v7303 = vadd.f32 %v7094, %v7302
    %v7304 = vpop.f32.mrf.mxu0
    %v7305 = vpop.f32.mrf.mxu0
    %v7306 = vpop.f32.mrf.mxu0
    %7307 = vdwg.mxu0
    %v7308 = vadd.f32 %v7262, %v4248
    %v7309 = vadd.f32 %v7264, %v4252
    %v7310 = vadd.f32 %v7303, %v4256
    %v7311 = vld [vmem:[#allocation16] sm:$0xff]
    %v7312 = vld [vmem:[#allocation16 + $0x8] sm:$0xf]
    %v7313 = vld [vmem:[#allocation16 + $0xc] sm:$0xff]
    %v7314 = vld [vmem:[#allocation16 + $0x14] sm:$0xf]
    %v7315 = vld [vmem:[#allocation16 + $0x18] sm:$0xff]
    %v7316 = vld [vmem:[#allocation16 + $0x20] sm:$0xf]
    %v7317 = vld [vmem:[#allocation16 + $0x24] sm:$0xff]
    %v7318 = vld [vmem:[#allocation16 + $0x2c] sm:$0xf]
    %v7319 = vld [vmem:[#allocation16 + $0x30] sm:$0xff]
    %v7320 = vld [vmem:[#allocation16 + $0x38] sm:$0xf]
    %v7321 = vld [vmem:[#allocation16 + $0x3c] sm:$0xff]
    %v7322 = vld [vmem:[#allocation16 + $0x44] sm:$0xf]
    %v7323 = vld [vmem:[#allocation16 + $0x48] sm:$0xff]
    %v7324 = vld [vmem:[#allocation16 + $0x50] sm:$0xf]
    %v7325 = vld [vmem:[#allocation16 + $0x54] sm:$0xff]
    %v7326 = vld [vmem:[#allocation16 + $0x5c] sm:$0xf]
    %v7327 = vld [vmem:[#allocation16 + $0x60] sm:$0xff]
    %v7328 = vld [vmem:[#allocation16 + $0x68] sm:$0xf]
    %v7329 = vld [vmem:[#allocation16 + $0x6c] sm:$0xff]
    %v7330 = vld [vmem:[#allocation16 + $0x74] sm:$0xf]
    %v7331 = vld [vmem:[#allocation16 + $0x78] sm:$0xff]
    %v7332 = vld [vmem:[#allocation16 + $0x80] sm:$0xf]
    %v7333 = vld [vmem:[#allocation16 + $0x84] sm:$0xff]
    %v7334 = vld [vmem:[#allocation16 + $0x8c] sm:$0xf]
    %v7335 = vld [vmem:[#allocation16 + $0x90] sm:$0xff]
    %v7336 = vld [vmem:[#allocation16 + $0x98] sm:$0xf]
    %v7337 = vld [vmem:[#allocation16 + $0x9c] sm:$0xff]
    %v7338 = vld [vmem:[#allocation16 + $0xa4] sm:$0xf]
    %v7339 = vld [vmem:[#allocation16 + $0xa8] sm:$0xff]
    %v7340 = vld [vmem:[#allocation16 + $0xb0] sm:$0xf]
    %v7341 = vld [vmem:[#allocation16 + $0xb4] sm:$0xff]
    %v7342 = vld [vmem:[#allocation16 + $0xbc] sm:$0xf]
    %v7375 = vunpack.c.l.b16 %v7311
    %v7376 = vunpack.c.h.b16 %v7311
    %v7377 = vunpack.c.l.b16 %v7312
    %v7378 = vunpack.c.l.b16 %v7313
    %v7379 = vunpack.c.h.b16 %v7313
    %v7380 = vunpack.c.l.b16 %v7314
    %v7381 = vunpack.c.l.b16 %v7315
    %v7382 = vunpack.c.h.b16 %v7315
    %v7383 = vunpack.c.l.b16 %v7316
    %v7384 = vunpack.c.l.b16 %v7317
    %v7385 = vunpack.c.h.b16 %v7317
    %v7386 = vunpack.c.l.b16 %v7318
    %v7387 = vunpack.c.l.b16 %v7319
    %v7388 = vunpack.c.h.b16 %v7319
    %v7389 = vunpack.c.l.b16 %v7320
    %v7390 = vunpack.c.l.b16 %v7321
    %v7391 = vunpack.c.h.b16 %v7321
    %v7392 = vunpack.c.l.b16 %v7322
    %v7393 = vunpack.c.l.b16 %v7323
    %v7394 = vunpack.c.h.b16 %v7323
    %v7395 = vunpack.c.l.b16 %v7324
    %v7396 = vunpack.c.l.b16 %v7325
    %v7397 = vunpack.c.h.b16 %v7325
    %v7398 = vunpack.c.l.b16 %v7326
    %v7399 = vunpack.c.l.b16 %v7327
    %v7400 = vunpack.c.h.b16 %v7327
    %v7401 = vunpack.c.l.b16 %v7328
    %v7402 = vunpack.c.l.b16 %v7329
    %v7403 = vunpack.c.h.b16 %v7329
    %v7404 = vunpack.c.l.b16 %v7330
    %v7405 = vunpack.c.l.b16 %v7331
    %v7406 = vunpack.c.h.b16 %v7331
    %v7407 = vunpack.c.l.b16 %v7332
    %v7408 = vunpack.c.l.b16 %v7333
    %v7409 = vunpack.c.h.b16 %v7333
    %v7410 = vunpack.c.l.b16 %v7334
    %v7411 = vunpack.c.l.b16 %v7335
    %v7412 = vunpack.c.h.b16 %v7335
    %v7413 = vunpack.c.l.b16 %v7336
    %v7414 = vunpack.c.l.b16 %v7337
    %v7415 = vunpack.c.h.b16 %v7337
    %v7416 = vunpack.c.l.b16 %v7338
    %v7417 = vunpack.c.l.b16 %v7339
    %v7418 = vunpack.c.h.b16 %v7339
    %v7419 = vunpack.c.l.b16 %v7340
    %v7420 = vunpack.c.l.b16 %v7341
    %v7421 = vunpack.c.h.b16 %v7341
    %v7422 = vunpack.c.l.b16 %v7342
    %v7423 = vpack.c.b16 %v7378, %v7375
    %v7424 = vpack.c.b16 %v7379, %v7376
    %v7425 = vpack.c.b16 %v7380, %v7377
    %v7426 = vpack.c.b16 %v7384, %v7381
    %v7427 = vpack.c.b16 %v7385, %v7382
    %v7428 = vpack.c.b16 %v7386, %v7383
    %v7429 = vpack.c.b16 %v7390, %v7387
    %v7430 = vpack.c.b16 %v7391, %v7388
    %v7431 = vpack.c.b16 %v7392, %v7389
    %v7432 = vpack.c.b16 %v7396, %v7393
    %v7433 = vpack.c.b16 %v7397, %v7394
    %v7434 = vpack.c.b16 %v7398, %v7395
    %v7435 = vpack.c.b16 %v7402, %v7399
    %v7436 = vpack.c.b16 %v7403, %v7400
    %v7437 = vpack.c.b16 %v7404, %v7401
    %v7438 = vpack.c.b16 %v7408, %v7405
    %v7439 = vpack.c.b16 %v7409, %v7406
    %v7440 = vpack.c.b16 %v7410, %v7407
    %v7441 = vpack.c.b16 %v7414, %v7411
    %v7442 = vpack.c.b16 %v7415, %v7412
    %v7443 = vpack.c.b16 %v7416, %v7413
    %v7444 = vpack.c.b16 %v7420, %v7417
    %v7445 = vpack.c.b16 %v7421, %v7418
    %v7446 = vpack.c.b16 %v7422, %v7419
    %7471 = vmatprep.subr.bf16.mxu0 %v7445
    %7472 = vmatpush1.bf16.msra.mxu0 %v7444
    %7473 = vmatprep.subr.bf16.mxu0 %v7442
    %7474 = vmatpush1.bf16.msra.mxu0 %v7441
    %7475 = vmatprep.subr.bf16.mxu0 %v7439
    %7476 = vmatpush1.bf16.msra.mxu0 %v7438
    %7477 = vmatprep.subr.bf16.mxu0 %v7436
    %7478 = vmatpush1.bf16.msra.mxu0 %v7435
    %7479 = vmatprep.subr.bf16.mxu0 %v7433
    %7480 = vmatpush1.bf16.msra.mxu0 %v7432
    %7481 = vmatprep.subr.bf16.mxu0 %v7430
    %7482 = vmatpush1.bf16.msra.mxu0 %v7429
    %7483 = vmatprep.subr.bf16.mxu0 %v7427
    %7484 = vmatpush1.bf16.msra.mxu0 %v7426
    %7485 = vmatprep.subr.bf16.mxu0 %v7424
    %7486 = vmatpush1.bf16.msra.mxu0 %v7423
    %7487 = vmatprep.subr.bf16.mxu0 0
    %7488 = vmatpush2.bf16.msra.mxu0 0
    %7489 = vmatprep.subr.bf16.mxu0 0
    %7490 = vmatpush2.bf16.msra.mxu0 0
    %7491 = vmatprep.subr.bf16.mxu0 0
    %7492 = vmatpush2.bf16.msra.mxu0 0
    %7493 = vmatprep.subr.bf16.mxu0 0
    %7494 = vmatpush2.bf16.msra.mxu0 0
    %7495 = vmatprep.subr.bf16.mxu0 0
    %7496 = vmatpush2.bf16.msra.mxu0 0
    %7497 = vmatprep.subr.bf16.mxu0 0
    %7498 = vmatpush2.bf16.msra.mxu0 0
    %7499 = vmatprep.subr.bf16.mxu0 0
    %7500 = vmatpush2.bf16.msra.mxu0 0
    %7501 = vmatprep.subr.bf16.mxu0 0
    %7502 = vmatpush2.bf16.msra.mxu0 0
    %7503 = vmatprep.mubr.bf16.mxu0 0
    %7504 = vmatmul.mubr.bf16.gmra.mxu0 %v6564
    %v7505 = vpop.f32.mrf.mxu0
    %v7506 = vadd.f32 %v4299, %v7505
    %v7507 = vpop.f32.mrf.mxu0
    %v7508 = vadd.f32 %v4303, %v7507
    %v7509 = vpop.f32.mrf.mxu0
    %v7510 = vpop.f32.mrf.mxu0
    %7511 = vdwg.mxu0
    %7512 = vmatprep.subr.bf16.mxu0 0
    %7513 = vmatpush1.bf16.msra.mxu0 %v7446
    %7514 = vmatprep.subr.bf16.mxu0 0
    %7515 = vmatpush1.bf16.msra.mxu0 %v7443
    %7516 = vmatprep.subr.bf16.mxu0 0
    %7517 = vmatpush1.bf16.msra.mxu0 %v7440
    %7518 = vmatprep.subr.bf16.mxu0 0
    %7519 = vmatpush1.bf16.msra.mxu0 %v7437
    %7520 = vmatprep.subr.bf16.mxu0 0
    %7521 = vmatpush1.bf16.msra.mxu0 %v7434
    %7522 = vmatprep.subr.bf16.mxu0 0
    %7523 = vmatpush1.bf16.msra.mxu0 %v7431
    %7524 = vmatprep.subr.bf16.mxu0 0
    %7525 = vmatpush1.bf16.msra.mxu0 %v7428
    %7526 = vmatprep.subr.bf16.mxu0 0
    %7527 = vmatpush1.bf16.msra.mxu0 %v7425
    %7528 = vmatprep.subr.bf16.mxu0 0
    %7529 = vmatpush2.bf16.msra.mxu0 0
    %7530 = vmatprep.subr.bf16.mxu0 0
    %7531 = vmatpush2.bf16.msra.mxu0 0
    %7532 = vmatprep.subr.bf16.mxu0 0
    %7533 = vmatpush2.bf16.msra.mxu0 0
    %7534 = vmatprep.subr.bf16.mxu0 0
    %7535 = vmatpush2.bf16.msra.mxu0 0
    %7536 = vmatprep.subr.bf16.mxu0 0
    %7537 = vmatpush2.bf16.msra.mxu0 0
    %7538 = vmatprep.subr.bf16.mxu0 0
    %7539 = vmatpush2.bf16.msra.mxu0 0
    %7540 = vmatprep.subr.bf16.mxu0 0
    %7541 = vmatpush2.bf16.msra.mxu0 0
    %7542 = vmatprep.subr.bf16.mxu0 0
    %7543 = vmatpush2.bf16.msra.mxu0 0
    %7544 = vmatprep.mubr.bf16.mxu0 0
    %7545 = vmatmul.mubr.bf16.gmra.mxu0 %v6564
    %v7546 = vpop.f32.mrf.mxu0
    %v7547 = vadd.f32 %v4307, %v7546
    %v7548 = vpop.f32.mrf.mxu0
    %v7549 = vpop.f32.mrf.mxu0
    %v7550 = vpop.f32.mrf.mxu0
    %7551 = vdwg.mxu0
    %v7552 = vadd.f32 %v7308, %v7506
    %v7553 = vxor.u32 %v7552, 2147483648
    %v7554 = vmul.f32 %v7553, 1.442695
    %v7555 = vpow.pop %v7554
    %v7556 = vadd.f32 %v7555, 1.0
    %v7557 = vrcp.pop %v7556
    %v7558 = vmul.f32 1.0, %v7557
    %v7559 = vadd.f32 %v7309, %v7508
    %v7560 = vxor.u32 %v7559, 2147483648
    %v7561 = vmul.f32 %v7560, 1.442695
    %v7562 = vpow.pop %v7561
    %v7563 = vadd.f32 %v7562, 1.0
    %v7564 = vrcp.pop %v7563
    %v7565 = vmul.f32 1.0, %v7564
    %v7566 = vmul.f32 %v7558, %v7547
    %v7567 = vadd.f32 %v7310, %v7566
    %v7568 = vtanh.pop %v7567
    %v7569 = vsub.f32 1.0, %v7565
    %v7570 = vmul.f32 %v7569, %v7568
    %v7571 = vmul.f32 %v7565, %v6563
    %v7572 = vadd.f32 %v7570, %v7571
    %v7573 = vpack.c.bf16 %v7572, %v7572
    %v7574 = vld [vmem:[#allocation17] sm:$0xf]
    %v7575 = vld [vmem:[#allocation17 + $0x4] sm:$0xf]
    %v7576 = vld [vmem:[#allocation17 + $0x8] sm:$0xf]
    %v7577 = vld [vmem:[#allocation17 + $0xc] sm:$0xf]
    %v7578 = vld [vmem:[#allocation17 + $0x10] sm:$0xf]
    %v7579 = vld [vmem:[#allocation17 + $0x14] sm:$0xf]
    %v7580 = vld [vmem:[#allocation17 + $0x18] sm:$0xf]
    %v7581 = vld [vmem:[#allocation17 + $0x1c] sm:$0xf]
    %v7582 = vld [vmem:[#allocation17 + $0x20] sm:$0xf]
    %v7583 = vld [vmem:[#allocation17 + $0x24] sm:$0xf]
    %v7584 = vld [vmem:[#allocation17 + $0x28] sm:$0xf]
    %v7585 = vld [vmem:[#allocation17 + $0x2c] sm:$0xf]
    %v7586 = vld [vmem:[#allocation17 + $0x30] sm:$0xf]
    %v7587 = vld [vmem:[#allocation17 + $0x34] sm:$0xf]
    %v7588 = vld [vmem:[#allocation17 + $0x38] sm:$0xf]
    %v7589 = vld [vmem:[#allocation17 + $0x3c] sm:$0xf]
    %v7606 = vunpack.c.l.b16 %v7574
    %v7607 = vunpack.c.l.b16 %v7575
    %v7608 = vunpack.c.l.b16 %v7576
    %v7609 = vunpack.c.l.b16 %v7577
    %v7610 = vunpack.c.l.b16 %v7578
    %v7611 = vunpack.c.l.b16 %v7579
    %v7612 = vunpack.c.l.b16 %v7580
    %v7613 = vunpack.c.l.b16 %v7581
    %v7614 = vunpack.c.l.b16 %v7582
    %v7615 = vunpack.c.l.b16 %v7583
    %v7616 = vunpack.c.l.b16 %v7584
    %v7617 = vunpack.c.l.b16 %v7585
    %v7618 = vunpack.c.l.b16 %v7586
    %v7619 = vunpack.c.l.b16 %v7587
    %v7620 = vunpack.c.l.b16 %v7588
    %v7621 = vunpack.c.l.b16 %v7589
    %v7622 = vpack.c.b16 %v7607, %v7606
    %v7623 = vpack.c.b16 %v7609, %v7608
    %v7624 = vpack.c.b16 %v7611, %v7610
    %v7625 = vpack.c.b16 %v7613, %v7612
    %v7626 = vpack.c.b16 %v7615, %v7614
    %v7627 = vpack.c.b16 %v7617, %v7616
    %v7628 = vpack.c.b16 %v7619, %v7618
    %v7629 = vpack.c.b16 %v7621, %v7620
    %7638 = vmatprep.subr.bf16.mxu0 0
    %7639 = vmatpush1.bf16.msra.mxu0 %v7629
    %7640 = vmatprep.subr.bf16.mxu0 0
    %7641 = vmatpush1.bf16.msra.mxu0 %v7628
    %7642 = vmatprep.subr.bf16.mxu0 0
    %7643 = vmatpush1.bf16.msra.mxu0 %v7627
    %7644 = vmatprep.subr.bf16.mxu0 0
    %7645 = vmatpush1.bf16.msra.mxu0 %v7626
    %7646 = vmatprep.subr.bf16.mxu0 0
    %7647 = vmatpush1.bf16.msra.mxu0 %v7625
    %7648 = vmatprep.subr.bf16.mxu0 0
    %7649 = vmatpush1.bf16.msra.mxu0 %v7624
    %7650 = vmatprep.subr.bf16.mxu0 0
    %7651 = vmatpush1.bf16.msra.mxu0 %v7623
    %7652 = vmatprep.subr.bf16.mxu0 0
    %7653 = vmatpush1.bf16.msra.mxu0 %v7622
    %7654 = vmatprep.subr.bf16.mxu0 0
    %7655 = vmatpush2.bf16.msra.mxu0 0
    %7656 = vmatprep.subr.bf16.mxu0 0
    %7657 = vmatpush2.bf16.msra.mxu0 0
    %7658 = vmatprep.subr.bf16.mxu0 0
    %7659 = vmatpush2.bf16.msra.mxu0 0
    %7660 = vmatprep.subr.bf16.mxu0 0
    %7661 = vmatpush2.bf16.msra.mxu0 0
    %7662 = vmatprep.subr.bf16.mxu0 0
    %7663 = vmatpush2.bf16.msra.mxu0 0
    %7664 = vmatprep.subr.bf16.mxu0 0
    %7665 = vmatpush2.bf16.msra.mxu0 0
    %7666 = vmatprep.subr.bf16.mxu0 0
    %7667 = vmatpush2.bf16.msra.mxu0 0
    %7668 = vmatprep.subr.bf16.mxu0 0
    %7669 = vmatpush2.bf16.msra.mxu0 0
    %7670 = vmatprep.mubr.bf16.mxu0 0
    %7671 = vmatmul.mubr.bf16.gmra.mxu0 %v7573
    %v7672 = vpop.f32.mrf.mxu0
    %v7673 = vadd.f32 %v4562, %v7672
    %v7674 = vpop.f32.mrf.mxu0
    %v7675 = vpop.f32.mrf.mxu0
    %v7676 = vpop.f32.mrf.mxu0
    %7677 = vdwg.mxu0
    %v7678 = vsel %vm3682, %v7673, -inf
    %7679 = vmax.xlane.f32.xlu0 %v7678
    %v7680 = vpop.xlane.xlu0 %7679
    %v7681 = vsub.f32 %v7673, %v7680
    %v7682 = vmul.f32 %v7681, 1.442695
    %v7683 = vpow.pop %v7682
    %v7684 = vsel %vm3682, %v7683, 0.0
    %7685 = vadd.xlane.f32.xlu0 %v7684
    %v7686 = vpop.xlane.xlu0 %7685
    %v7687 = vlog2.pop %v7686
    %v7688 = vmul.f32 %v7687, 0.6931472
    %v7689 = vadd.f32 %v7680, %v7688
    %v7690 = vsub.f32 %v7673, %v7689
    %vm7691 = vcmp.eq.f32.partialorder %v7673, %v7680
    %v7692 = vsel %vm7691, %v3634, 128
    %v7693 = vsel %vm3682, %v7692, 2147483647
    %v7694 = vand.u32 %v7693, 65535
    %v7695 = vshra.s32 %v7693, 16
    %v7696 = vcvt.s32.f32 %v7694
    %v7697 = vcvt.s32.f32 %v7695
    %7698 = vmin.xlane.f32.xlu0 %v7697
    %v7699 = vpop.xlane.xlu0 %7698
    %vm7700 = vcmp.eq.f32.partialorder %v7697, %v7699
    %v7701 = vsel %vm7700, %v7696, inf
    %7702 = vmin.xlane.f32.xlu0 %v7701
    %v7703 = vpop.xlane.xlu0 %7702
    %v7704 = vcvt.f32.s32 %v7703
    %v7705 = vcvt.f32.s32 %v7699
    %v7706 = vshll.u32 %v7705, 16
    %v7707 = vadd.s32 %v7706, %v7704
    %s7708 = scalar_lea.vmem [#allocation19], 6
    %7709 = vst [vmem:[%s7708] sm:$0x3] %v7690
    %s7710 = scalar_lea.vmem %s15, 6
    %7711 = vst.msk [vmem:[%s7710] sm:$0x3] %vm4683, %v7707
    %vm7712 = vcmp.eq.s32.totalorder %v3634, %v7707
    %v7713 = vsel %vm7712, 1, 0
    %v7714 = vcvt.s32.f32 %v7713
    %v7715 = vpack.c.bf16 %v7714, %v7714
    %v7716 = vld [vmem:[#allocation4] sm:$0xff]
    %v7717 = vld [vmem:[#allocation4 + $0x8] sm:$0xf]
    %v7718 = vld [vmem:[#allocation4 + $0xc] sm:$0xff]
    %v7719 = vld [vmem:[#allocation4 + $0x14] sm:$0xf]
    %v7720 = vld [vmem:[#allocation4 + $0x18] sm:$0xff]
    %v7721 = vld [vmem:[#allocation4 + $0x20] sm:$0xf]
    %v7722 = vld [vmem:[#allocation4 + $0x24] sm:$0xff]
    %v7723 = vld [vmem:[#allocation4 + $0x2c] sm:$0xf]
    %v7724 = vld [vmem:[#allocation4 + $0x30] sm:$0xff]
    %v7725 = vld [vmem:[#allocation4 + $0x38] sm:$0xf]
    %v7726 = vld [vmem:[#allocation4 + $0x3c] sm:$0xff]
    %v7727 = vld [vmem:[#allocation4 + $0x44] sm:$0xf]
    %v7728 = vld [vmem:[#allocation4 + $0x48] sm:$0xff]
    %v7729 = vld [vmem:[#allocation4 + $0x50] sm:$0xf]
    %v7730 = vld [vmem:[#allocation4 + $0x54] sm:$0xff]
    %v7731 = vld [vmem:[#allocation4 + $0x5c] sm:$0xf]
    %v7732 = vld [vmem:[#allocation4 + $0x60] sm:$0xff]
    %v7733 = vld [vmem:[#allocation4 + $0x68] sm:$0xf]
    %v7734 = vld [vmem:[#allocation4 + $0x6c] sm:$0xff]
    %v7735 = vld [vmem:[#allocation4 + $0x74] sm:$0xf]
    %v7736 = vld [vmem:[#allocation4 + $0x78] sm:$0xff]
    %v7737 = vld [vmem:[#allocation4 + $0x80] sm:$0xf]
    %v7738 = vld [vmem:[#allocation4 + $0x84] sm:$0xff]
    %v7739 = vld [vmem:[#allocation4 + $0x8c] sm:$0xf]
    %v7740 = vld [vmem:[#allocation4 + $0x90] sm:$0xff]
    %v7741 = vld [vmem:[#allocation4 + $0x98] sm:$0xf]
    %v7742 = vld [vmem:[#allocation4 + $0x9c] sm:$0xff]
    %v7743 = vld [vmem:[#allocation4 + $0xa4] sm:$0xf]
    %v7744 = vld [vmem:[#allocation4 + $0xa8] sm:$0xff]
    %v7745 = vld [vmem:[#allocation4 + $0xb0] sm:$0xf]
    %v7746 = vld [vmem:[#allocation4 + $0xb4] sm:$0xff]
    %v7747 = vld [vmem:[#allocation4 + $0xbc] sm:$0xf]
    %v7748 = vmul.f32 %v3455, %v7572
    %v7749 = vmul.f32 %v3456, %v7572
    %v7750 = vmul.f32 %v3457, %v7572
    %v7751 = vmul.f32 %v3458, %v7572
    %v7752 = vmul.f32 %v3459, %v7572
    %v7753 = vmul.f32 %v3460, %v7572
    %v7754 = vmul.f32 %v3461, %v7572
    %v7755 = vmul.f32 %v3462, %v7572
    %v7756 = vsel %vm3682, %v7748, 0.0
    %7757 = vadd.xlane.f32.xlu0 %v7756
    %v7758 = vpop.xlane.xlu0 %7757
    %v7759 = vsel %vm3682, %v7749, 0.0
    %7760 = vadd.xlane.f32.xlu0 %v7759
    %v7761 = vpop.xlane.xlu0 %7760
    %v7762 = vsel %vm3682, %v7750, 0.0
    %7763 = vadd.xlane.f32.xlu0 %v7762
    %v7764 = vpop.xlane.xlu0 %7763
    %v7765 = vsel %vm3682, %v7751, 0.0
    %7766 = vadd.xlane.f32.xlu0 %v7765
    %v7767 = vpop.xlane.xlu0 %7766
    %v7768 = vsel %vm3682, %v7752, 0.0
    %7769 = vadd.xlane.f32.xlu0 %v7768
    %v7770 = vpop.xlane.xlu0 %7769
    %v7771 = vsel %vm3682, %v7753, 0.0
    %7772 = vadd.xlane.f32.xlu0 %v7771
    %v7773 = vpop.xlane.xlu0 %7772
    %v7774 = vsel %vm3682, %v7754, 0.0
    %7775 = vadd.xlane.f32.xlu0 %v7774
    %v7776 = vpop.xlane.xlu0 %7775
    %v7777 = vsel %vm3682, %v7755, 0.0
    %7778 = vadd.xlane.f32.xlu0 %v7777
    %v7779 = vpop.xlane.xlu0 %7778
    %v7780 = vsel %vm3682, %v7758, -inf
    %v7781 = vsel %vm3682, %v7761, -inf
    %v7782 = vsel %vm3682, %v7764, -inf
    %v7783 = vsel %vm3682, %v7767, -inf
    %v7784 = vsel %vm3682, %v7770, -inf
    %v7785 = vmax.f32 %v7780, %v7784
    %v7786 = vsel %vm3682, %v7773, -inf
    %v7787 = vmax.f32 %v7781, %v7786
    %v7788 = vsel %vm3682, %v7776, -inf
    %v7789 = vmax.f32 %v7782, %v7788
    %v7790 = vsel %vm3682, %v7779, -inf
    %v7791 = vmax.f32 %v7783, %v7790
    %v7792 = vmax.f32 %v7785, %v7787
    %v7793 = vmax.f32 %v7789, %v7791
    %v7794 = vmax.f32 %v7792, %v7793
    %v7795 = vsub.f32 %v7758, %v7794
    %v7796 = vsub.f32 %v7761, %v7794
    %v7797 = vsub.f32 %v7764, %v7794
    %v7798 = vsub.f32 %v7767, %v7794
    %v7799 = vsub.f32 %v7770, %v7794
    %v7800 = vsub.f32 %v7773, %v7794
    %v7801 = vsub.f32 %v7776, %v7794
    %v7802 = vsub.f32 %v7779, %v7794
    %v7803 = vmul.f32 %v7795, 1.442695
    %v7804 = vpow.pop %v7803
    %v7805 = vmul.f32 %v7796, 1.442695
    %v7806 = vpow.pop %v7805
    %v7807 = vmul.f32 %v7797, 1.442695
    %v7808 = vpow.pop %v7807
    %v7809 = vmul.f32 %v7798, 1.442695
    %v7810 = vpow.pop %v7809
    %v7811 = vmul.f32 %v7799, 1.442695
    %v7812 = vpow.pop %v7811
    %v7813 = vmul.f32 %v7800, 1.442695
    %v7814 = vpow.pop %v7813
    %v7815 = vmul.f32 %v7801, 1.442695
    %v7816 = vpow.pop %v7815
    %v7817 = vmul.f32 %v7802, 1.442695
    %v7818 = vpow.pop %v7817
    %v7819 = vsel %vm3682, %v7804, 0.0
    %v7820 = vsel %vm3682, %v7806, 0.0
    %v7821 = vadd.f32 %v7819, %v7820
    %v7822 = vsel %vm3682, %v7808, 0.0
    %v7823 = vadd.f32 %v7821, %v7822
    %v7824 = vsel %vm3682, %v7810, 0.0
    %v7825 = vadd.f32 %v7823, %v7824
    %v7826 = vsel %vm3682, %v7812, 0.0
    %v7827 = vadd.f32 %v7825, %v7826
    %v7828 = vsel %vm3682, %v7814, 0.0
    %v7829 = vadd.f32 %v7827, %v7828
    %v7830 = vsel %vm3682, %v7816, 0.0
    %v7831 = vadd.f32 %v7829, %v7830
    %v7832 = vsel %vm3682, %v7818, 0.0
    %v7833 = vadd.f32 %v7831, %v7832
    %v7834 = vrcp.pop %v7833
    %v7835 = vmul.f32 %v7804, %v7834
    %v7836 = vmul.f32 %v7806, %v7834
    %v7837 = vmul.f32 %v7808, %v7834
    %v7838 = vmul.f32 %v7810, %v7834
    %v7839 = vmul.f32 %v7812, %v7834
    %v7840 = vmul.f32 %v7814, %v7834
    %v7841 = vmul.f32 %v7816, %v7834
    %v7842 = vmul.f32 %v7818, %v7834
    %v7843 = vmul.f32 %v7835, %v3455
    %v7844 = vmul.f32 %v7836, %v3456
    %v7845 = vmul.f32 %v7837, %v3457
    %v7846 = vmul.f32 %v7838, %v3458
    %v7847 = vmul.f32 %v7839, %v3459
    %v7848 = vmul.f32 %v7840, %v3460
    %v7849 = vmul.f32 %v7841, %v3461
    %v7850 = vmul.f32 %v7842, %v3462
    %v7851 = vsel %vm3682, %v7843, 0.0
    %v7852 = vsel %vm3682, %v7844, 0.0
    %v7853 = vadd.f32 %v7851, %v7852
    %v7854 = vsel %vm3682, %v7845, 0.0
    %v7855 = vadd.f32 %v7853, %v7854
    %v7856 = vsel %vm3682, %v7846, 0.0
    %v7857 = vadd.f32 %v7855, %v7856
    %v7858 = vsel %vm3682, %v7847, 0.0
    %v7859 = vadd.f32 %v7857, %v7858
    %v7860 = vsel %vm3682, %v7848, 0.0
    %v7861 = vadd.f32 %v7859, %v7860
    %v7862 = vsel %vm3682, %v7849, 0.0
    %v7863 = vadd.f32 %v7861, %v7862
    %v7864 = vsel %vm3682, %v7850, 0.0
    %v7865 = vadd.f32 %v7863, %v7864
    %v7866 = vpack.c.bf16 %v7865, %v7865
    %v7867 = vld [vmem:[#allocation14] sm:$0xff]
    %v7868 = vld [vmem:[#allocation14 + $0x8] sm:$0xf]
    %v7869 = vld [vmem:[#allocation14 + $0xc] sm:$0xff]
    %v7870 = vld [vmem:[#allocation14 + $0x14] sm:$0xf]
    %v7871 = vld [vmem:[#allocation14 + $0x18] sm:$0xff]
    %v7872 = vld [vmem:[#allocation14 + $0x20] sm:$0xf]
    %v7873 = vld [vmem:[#allocation14 + $0x24] sm:$0xff]
    %v7874 = vld [vmem:[#allocation14 + $0x2c] sm:$0xf]
    %v7875 = vld [vmem:[#allocation14 + $0x30] sm:$0xff]
    %v7876 = vld [vmem:[#allocation14 + $0x38] sm:$0xf]
    %v7877 = vld [vmem:[#allocation14 + $0x3c] sm:$0xff]
    %v7878 = vld [vmem:[#allocation14 + $0x44] sm:$0xf]
    %v7879 = vld [vmem:[#allocation14 + $0x48] sm:$0xff]
    %v7880 = vld [vmem:[#allocation14 + $0x50] sm:$0xf]
    %v7881 = vld [vmem:[#allocation14 + $0x54] sm:$0xff]
    %v7882 = vld [vmem:[#allocation14 + $0x5c] sm:$0xf]
    %v7883 = vld [vmem:[#allocation14 + $0x60] sm:$0xff]
    %v7884 = vld [vmem:[#allocation14 + $0x68] sm:$0xf]
    %v7885 = vld [vmem:[#allocation14 + $0x6c] sm:$0xff]
    %v7886 = vld [vmem:[#allocation14 + $0x74] sm:$0xf]
    %v7887 = vld [vmem:[#allocation14 + $0x78] sm:$0xff]
    %v7888 = vld [vmem:[#allocation14 + $0x80] sm:$0xf]
    %v7889 = vld [vmem:[#allocation14 + $0x84] sm:$0xff]
    %v7890 = vld [vmem:[#allocation14 + $0x8c] sm:$0xf]
    %v7891 = vld [vmem:[#allocation14 + $0x90] sm:$0xff]
    %v7892 = vld [vmem:[#allocation14 + $0x98] sm:$0xf]
    %v7893 = vld [vmem:[#allocation14 + $0x9c] sm:$0xff]
    %v7894 = vld [vmem:[#allocation14 + $0xa4] sm:$0xf]
    %v7895 = vld [vmem:[#allocation14 + $0xa8] sm:$0xff]
    %v7896 = vld [vmem:[#allocation14 + $0xb0] sm:$0xf]
    %v7897 = vld [vmem:[#allocation14 + $0xb4] sm:$0xff]
    %v7898 = vld [vmem:[#allocation14 + $0xbc] sm:$0xf]
    %v7931 = vunpack.c.l.b16 %v7867
    %v7932 = vunpack.c.h.b16 %v7867
    %v7933 = vunpack.c.l.b16 %v7868
    %v7934 = vunpack.c.l.b16 %v7869
    %v7935 = vunpack.c.h.b16 %v7869
    %v7936 = vunpack.c.l.b16 %v7870
    %v7937 = vunpack.c.l.b16 %v7871
    %v7938 = vunpack.c.h.b16 %v7871
    %v7939 = vunpack.c.l.b16 %v7872
    %v7940 = vunpack.c.l.b16 %v7873
    %v7941 = vunpack.c.h.b16 %v7873
    %v7942 = vunpack.c.l.b16 %v7874
    %v7943 = vunpack.c.l.b16 %v7875
    %v7944 = vunpack.c.h.b16 %v7875
    %v7945 = vunpack.c.l.b16 %v7876
    %v7946 = vunpack.c.l.b16 %v7877
    %v7947 = vunpack.c.h.b16 %v7877
    %v7948 = vunpack.c.l.b16 %v7878
    %v7949 = vunpack.c.l.b16 %v7879
    %v7950 = vunpack.c.h.b16 %v7879
    %v7951 = vunpack.c.l.b16 %v7880
    %v7952 = vunpack.c.l.b16 %v7881
    %v7953 = vunpack.c.h.b16 %v7881
    %v7954 = vunpack.c.l.b16 %v7882
    %v7955 = vunpack.c.l.b16 %v7883
    %v7956 = vunpack.c.h.b16 %v7883
    %v7957 = vunpack.c.l.b16 %v7884
    %v7958 = vunpack.c.l.b16 %v7885
    %v7959 = vunpack.c.h.b16 %v7885
    %v7960 = vunpack.c.l.b16 %v7886
    %v7961 = vunpack.c.l.b16 %v7887
    %v7962 = vunpack.c.h.b16 %v7887
    %v7963 = vunpack.c.l.b16 %v7888
    %v7964 = vunpack.c.l.b16 %v7889
    %v7965 = vunpack.c.h.b16 %v7889
    %v7966 = vunpack.c.l.b16 %v7890
    %v7967 = vunpack.c.l.b16 %v7891
    %v7968 = vunpack.c.h.b16 %v7891
    %v7969 = vunpack.c.l.b16 %v7892
    %v7970 = vunpack.c.l.b16 %v7893
    %v7971 = vunpack.c.h.b16 %v7893
    %v7972 = vunpack.c.l.b16 %v7894
    %v7973 = vunpack.c.l.b16 %v7895
    %v7974 = vunpack.c.h.b16 %v7895
    %v7975 = vunpack.c.l.b16 %v7896
    %v7976 = vunpack.c.l.b16 %v7897
    %v7977 = vunpack.c.h.b16 %v7897
    %v7978 = vunpack.c.l.b16 %v7898
    %v7979 = vpack.c.b16 %v7934, %v7931
    %v7980 = vpack.c.b16 %v7935, %v7932
    %v7981 = vpack.c.b16 %v7936, %v7933
    %v7982 = vpack.c.b16 %v7940, %v7937
    %v7983 = vpack.c.b16 %v7941, %v7938
    %v7984 = vpack.c.b16 %v7942, %v7939
    %v7985 = vpack.c.b16 %v7946, %v7943
    %v7986 = vpack.c.b16 %v7947, %v7944
    %v7987 = vpack.c.b16 %v7948, %v7945
    %v7988 = vpack.c.b16 %v7952, %v7949
    %v7989 = vpack.c.b16 %v7953, %v7950
    %v7990 = vpack.c.b16 %v7954, %v7951
    %v7991 = vpack.c.b16 %v7958, %v7955
    %v7992 = vpack.c.b16 %v7959, %v7956
    %v7993 = vpack.c.b16 %v7960, %v7957
    %v7994 = vpack.c.b16 %v7964, %v7961
    %v7995 = vpack.c.b16 %v7965, %v7962
    %v7996 = vpack.c.b16 %v7966, %v7963
    %v7997 = vpack.c.b16 %v7970, %v7967
    %v7998 = vpack.c.b16 %v7971, %v7968
    %v7999 = vpack.c.b16 %v7972, %v7969
    %v8000 = vpack.c.b16 %v7976, %v7973
    %v8001 = vpack.c.b16 %v7977, %v7974
    %v8002 = vpack.c.b16 %v7978, %v7975
    %8027 = vmatprep.subr.bf16.mxu0 %v8001
    %8028 = vmatpush1.bf16.msra.mxu0 %v8000
    %8029 = vmatprep.subr.bf16.mxu0 %v7998
    %8030 = vmatpush1.bf16.msra.mxu0 %v7997
    %8031 = vmatprep.subr.bf16.mxu0 %v7995
    %8032 = vmatpush1.bf16.msra.mxu0 %v7994
    %8033 = vmatprep.subr.bf16.mxu0 %v7992
    %8034 = vmatpush1.bf16.msra.mxu0 %v7991
    %8035 = vmatprep.subr.bf16.mxu0 %v7989
    %8036 = vmatpush1.bf16.msra.mxu0 %v7988
    %8037 = vmatprep.subr.bf16.mxu0 %v7986
    %8038 = vmatpush1.bf16.msra.mxu0 %v7985
    %8039 = vmatprep.subr.bf16.mxu0 %v7983
    %8040 = vmatpush1.bf16.msra.mxu0 %v7982
    %8041 = vmatprep.subr.bf16.mxu0 %v7980
    %8042 = vmatpush1.bf16.msra.mxu0 %v7979
    %8043 = vmatprep.subr.bf16.mxu0 0
    %8044 = vmatpush2.bf16.msra.mxu0 0
    %8045 = vmatprep.subr.bf16.mxu0 0
    %8046 = vmatpush2.bf16.msra.mxu0 0
    %8047 = vmatprep.subr.bf16.mxu0 0
    %8048 = vmatpush2.bf16.msra.mxu0 0
    %8049 = vmatprep.subr.bf16.mxu0 0
    %8050 = vmatpush2.bf16.msra.mxu0 0
    %8051 = vmatprep.subr.bf16.mxu0 0
    %8052 = vmatpush2.bf16.msra.mxu0 0
    %8053 = vmatprep.subr.bf16.mxu0 0
    %8054 = vmatpush2.bf16.msra.mxu0 0
    %8055 = vmatprep.subr.bf16.mxu0 0
    %8056 = vmatpush2.bf16.msra.mxu0 0
    %8057 = vmatprep.subr.bf16.mxu0 0
    %8058 = vmatpush2.bf16.msra.mxu0 0
    %8059 = vmatprep.mubr.bf16.mxu0 0
    %8060 = vmatmul.mubr.bf16.gmra.mxu0 %v7866
    %v8061 = vpop.f32.mrf.mxu0
    %v8062 = vadd.f32 0.0, %v8061
    %v8063 = vpop.f32.mrf.mxu0
    %v8064 = vadd.f32 0.0, %v8063
    %v8065 = vpop.f32.mrf.mxu0
    %v8066 = vpop.f32.mrf.mxu0
    %8067 = vdwg.mxu0
    %8068 = vmatprep.subr.bf16.mxu0 0
    %8069 = vmatpush1.bf16.msra.mxu0 %v8002
    %8070 = vmatprep.subr.bf16.mxu0 0
    %8071 = vmatpush1.bf16.msra.mxu0 %v7999
    %8072 = vmatprep.subr.bf16.mxu0 0
    %8073 = vmatpush1.bf16.msra.mxu0 %v7996
    %8074 = vmatprep.subr.bf16.mxu0 0
    %8075 = vmatpush1.bf16.msra.mxu0 %v7993
    %8076 = vmatprep.subr.bf16.mxu0 0
    %8077 = vmatpush1.bf16.msra.mxu0 %v7990
    %8078 = vmatprep.subr.bf16.mxu0 0
    %8079 = vmatpush1.bf16.msra.mxu0 %v7987
    %8080 = vmatprep.subr.bf16.mxu0 0
    %8081 = vmatpush1.bf16.msra.mxu0 %v7984
    %8082 = vmatprep.subr.bf16.mxu0 0
    %8083 = vmatpush1.bf16.msra.mxu0 %v7981
    %8084 = vmatprep.subr.bf16.mxu0 0
    %8085 = vmatpush2.bf16.msra.mxu0 0
    %8086 = vmatprep.subr.bf16.mxu0 0
    %8087 = vmatpush2.bf16.msra.mxu0 0
    %8088 = vmatprep.subr.bf16.mxu0 0
    %8089 = vmatpush2.bf16.msra.mxu0 0
    %8090 = vmatprep.subr.bf16.mxu0 0
    %8091 = vmatpush2.bf16.msra.mxu0 0
    %8092 = vmatprep.subr.bf16.mxu0 0
    %8093 = vmatpush2.bf16.msra.mxu0 0
    %8094 = vmatprep.subr.bf16.mxu0 0
    %8095 = vmatpush2.bf16.msra.mxu0 0
    %8096 = vmatprep.subr.bf16.mxu0 0
    %8097 = vmatpush2.bf16.msra.mxu0 0
    %8098 = vmatprep.subr.bf16.mxu0 0
    %8099 = vmatpush2.bf16.msra.mxu0 0
    %8100 = vmatprep.mubr.bf16.mxu0 0
    %8101 = vmatmul.mubr.bf16.gmra.mxu0 %v7866
    %v8102 = vpop.f32.mrf.mxu0
    %v8103 = vadd.f32 0.0, %v8102
    %v8104 = vpop.f32.mrf.mxu0
    %v8105 = vpop.f32.mrf.mxu0
    %v8106 = vpop.f32.mrf.mxu0
    %8107 = vdwg.mxu0
    %v8140 = vunpack.c.l.b16 %v7716
    %v8141 = vunpack.c.h.b16 %v7716
    %v8142 = vunpack.c.l.b16 %v7717
    %v8143 = vunpack.c.l.b16 %v7718
    %v8144 = vunpack.c.h.b16 %v7718
    %v8145 = vunpack.c.l.b16 %v7719
    %v8146 = vunpack.c.l.b16 %v7720
    %v8147 = vunpack.c.h.b16 %v7720
    %v8148 = vunpack.c.l.b16 %v7721
    %v8149 = vunpack.c.l.b16 %v7722
    %v8150 = vunpack.c.h.b16 %v7722
    %v8151 = vunpack.c.l.b16 %v7723
    %v8152 = vunpack.c.l.b16 %v7724
    %v8153 = vunpack.c.h.b16 %v7724
    %v8154 = vunpack.c.l.b16 %v7725
    %v8155 = vunpack.c.l.b16 %v7726
    %v8156 = vunpack.c.h.b16 %v7726
    %v8157 = vunpack.c.l.b16 %v7727
    %v8158 = vunpack.c.l.b16 %v7728
    %v8159 = vunpack.c.h.b16 %v7728
    %v8160 = vunpack.c.l.b16 %v7729
    %v8161 = vunpack.c.l.b16 %v7730
    %v8162 = vunpack.c.h.b16 %v7730
    %v8163 = vunpack.c.l.b16 %v7731
    %v8164 = vunpack.c.l.b16 %v7732
    %v8165 = vunpack.c.h.b16 %v7732
    %v8166 = vunpack.c.l.b16 %v7733
    %v8167 = vunpack.c.l.b16 %v7734
    %v8168 = vunpack.c.h.b16 %v7734
    %v8169 = vunpack.c.l.b16 %v7735
    %v8170 = vunpack.c.l.b16 %v7736
    %v8171 = vunpack.c.h.b16 %v7736
    %v8172 = vunpack.c.l.b16 %v7737
    %v8173 = vunpack.c.l.b16 %v7738
    %v8174 = vunpack.c.h.b16 %v7738
    %v8175 = vunpack.c.l.b16 %v7739
    %v8176 = vunpack.c.l.b16 %v7740
    %v8177 = vunpack.c.h.b16 %v7740
    %v8178 = vunpack.c.l.b16 %v7741
    %v8179 = vunpack.c.l.b16 %v7742
    %v8180 = vunpack.c.h.b16 %v7742
    %v8181 = vunpack.c.l.b16 %v7743
    %v8182 = vunpack.c.l.b16 %v7744
    %v8183 = vunpack.c.h.b16 %v7744
    %v8184 = vunpack.c.l.b16 %v7745
    %v8185 = vunpack.c.l.b16 %v7746
    %v8186 = vunpack.c.h.b16 %v7746
    %v8187 = vunpack.c.l.b16 %v7747
    %v8188 = vpack.c.b16 %v8143, %v8140
    %v8189 = vpack.c.b16 %v8144, %v8141
    %v8190 = vpack.c.b16 %v8145, %v8142
    %v8191 = vpack.c.b16 %v8149, %v8146
    %v8192 = vpack.c.b16 %v8150, %v8147
    %v8193 = vpack.c.b16 %v8151, %v8148
    %v8194 = vpack.c.b16 %v8155, %v8152
    %v8195 = vpack.c.b16 %v8156, %v8153
    %v8196 = vpack.c.b16 %v8157, %v8154
    %v8197 = vpack.c.b16 %v8161, %v8158
    %v8198 = vpack.c.b16 %v8162, %v8159
    %v8199 = vpack.c.b16 %v8163, %v8160
    %v8200 = vpack.c.b16 %v8167, %v8164
    %v8201 = vpack.c.b16 %v8168, %v8165
    %v8202 = vpack.c.b16 %v8169, %v8166
    %v8203 = vpack.c.b16 %v8173, %v8170
    %v8204 = vpack.c.b16 %v8174, %v8171
    %v8205 = vpack.c.b16 %v8175, %v8172
    %v8206 = vpack.c.b16 %v8179, %v8176
    %v8207 = vpack.c.b16 %v8180, %v8177
    %v8208 = vpack.c.b16 %v8181, %v8178
    %v8209 = vpack.c.b16 %v8185, %v8182
    %v8210 = vpack.c.b16 %v8186, %v8183
    %v8211 = vpack.c.b16 %v8187, %v8184
    %8236 = vmatprep.subr.bf16.mxu0 %v8210
    %8237 = vmatpush1.bf16.msra.mxu0 %v8209
    %8238 = vmatprep.subr.bf16.mxu0 %v8207
    %8239 = vmatpush1.bf16.msra.mxu0 %v8206
    %8240 = vmatprep.subr.bf16.mxu0 %v8204
    %8241 = vmatpush1.bf16.msra.mxu0 %v8203
    %8242 = vmatprep.subr.bf16.mxu0 %v8201
    %8243 = vmatpush1.bf16.msra.mxu0 %v8200
    %8244 = vmatprep.subr.bf16.mxu0 %v8198
    %8245 = vmatpush1.bf16.msra.mxu0 %v8197
    %8246 = vmatprep.subr.bf16.mxu0 %v8195
    %8247 = vmatpush1.bf16.msra.mxu0 %v8194
    %8248 = vmatprep.subr.bf16.mxu0 %v8192
    %8249 = vmatpush1.bf16.msra.mxu0 %v8191
    %8250 = vmatprep.subr.bf16.mxu0 %v8189
    %8251 = vmatpush1.bf16.msra.mxu0 %v8188
    %8252 = vmatprep.subr.bf16.mxu0 0
    %8253 = vmatpush2.bf16.msra.mxu0 0
    %8254 = vmatprep.subr.bf16.mxu0 0
    %8255 = vmatpush2.bf16.msra.mxu0 0
    %8256 = vmatprep.subr.bf16.mxu0 0
    %8257 = vmatpush2.bf16.msra.mxu0 0
    %8258 = vmatprep.subr.bf16.mxu0 0
    %8259 = vmatpush2.bf16.msra.mxu0 0
    %8260 = vmatprep.subr.bf16.mxu0 0
    %8261 = vmatpush2.bf16.msra.mxu0 0
    %8262 = vmatprep.subr.bf16.mxu0 0
    %8263 = vmatpush2.bf16.msra.mxu0 0
    %8264 = vmatprep.subr.bf16.mxu0 0
    %8265 = vmatpush2.bf16.msra.mxu0 0
    %8266 = vmatprep.subr.bf16.mxu0 0
    %8267 = vmatpush2.bf16.msra.mxu0 0
    %8268 = vmatprep.mubr.bf16.mxu0 0
    %8269 = vmatmul.mubr.bf16.gmra.mxu0 %v7715
    %v8270 = vpop.f32.mrf.mxu0
    %v8271 = vadd.f32 %v8062, %v8270
    %v8272 = vpop.f32.mrf.mxu0
    %v8273 = vadd.f32 %v8064, %v8272
    %v8274 = vpop.f32.mrf.mxu0
    %v8275 = vpop.f32.mrf.mxu0
    %8276 = vdwg.mxu0
    %8277 = vmatprep.subr.bf16.mxu0 0
    %8278 = vmatpush1.bf16.msra.mxu0 %v8211
    %8279 = vmatprep.subr.bf16.mxu0 0
    %8280 = vmatpush1.bf16.msra.mxu0 %v8208
    %8281 = vmatprep.subr.bf16.mxu0 0
    %8282 = vmatpush1.bf16.msra.mxu0 %v8205
    %8283 = vmatprep.subr.bf16.mxu0 0
    %8284 = vmatpush1.bf16.msra.mxu0 %v8202
    %8285 = vmatprep.subr.bf16.mxu0 0
    %8286 = vmatpush1.bf16.msra.mxu0 %v8199
    %8287 = vmatprep.subr.bf16.mxu0 0
    %8288 = vmatpush1.bf16.msra.mxu0 %v8196
    %8289 = vmatprep.subr.bf16.mxu0 0
    %8290 = vmatpush1.bf16.msra.mxu0 %v8193
    %8291 = vmatprep.subr.bf16.mxu0 0
    %8292 = vmatpush1.bf16.msra.mxu0 %v8190
    %8293 = vmatprep.subr.bf16.mxu0 0
    %8294 = vmatpush2.bf16.msra.mxu0 0
    %8295 = vmatprep.subr.bf16.mxu0 0
    %8296 = vmatpush2.bf16.msra.mxu0 0
    %8297 = vmatprep.subr.bf16.mxu0 0
    %8298 = vmatpush2.bf16.msra.mxu0 0
    %8299 = vmatprep.subr.bf16.mxu0 0
    %8300 = vmatpush2.bf16.msra.mxu0 0
    %8301 = vmatprep.subr.bf16.mxu0 0
    %8302 = vmatpush2.bf16.msra.mxu0 0
    %8303 = vmatprep.subr.bf16.mxu0 0
    %8304 = vmatpush2.bf16.msra.mxu0 0
    %8305 = vmatprep.subr.bf16.mxu0 0
    %8306 = vmatpush2.bf16.msra.mxu0 0
    %8307 = vmatprep.subr.bf16.mxu0 0
    %8308 = vmatpush2.bf16.msra.mxu0 0
    %8309 = vmatprep.mubr.bf16.mxu0 0
    %8310 = vmatmul.mubr.bf16.gmra.mxu0 %v7715
    %v8311 = vpop.f32.mrf.mxu0
    %v8312 = vadd.f32 %v8103, %v8311
    %v8313 = vpop.f32.mrf.mxu0
    %v8314 = vpop.f32.mrf.mxu0
    %v8315 = vpop.f32.mrf.mxu0
    %8316 = vdwg.mxu0
    %v8317 = vadd.f32 %v8271, %v4248
    %v8318 = vadd.f32 %v8273, %v4252
    %v8319 = vadd.f32 %v8312, %v4256
    %v8320 = vld [vmem:[#allocation16] sm:$0xff]
    %v8321 = vld [vmem:[#allocation16 + $0x8] sm:$0xf]
    %v8322 = vld [vmem:[#allocation16 + $0xc] sm:$0xff]
    %v8323 = vld [vmem:[#allocation16 + $0x14] sm:$0xf]
    %v8324 = vld [vmem:[#allocation16 + $0x18] sm:$0xff]
    %v8325 = vld [vmem:[#allocation16 + $0x20] sm:$0xf]
    %v8326 = vld [vmem:[#allocation16 + $0x24] sm:$0xff]
    %v8327 = vld [vmem:[#allocation16 + $0x2c] sm:$0xf]
    %v8328 = vld [vmem:[#allocation16 + $0x30] sm:$0xff]
    %v8329 = vld [vmem:[#allocation16 + $0x38] sm:$0xf]
    %v8330 = vld [vmem:[#allocation16 + $0x3c] sm:$0xff]
    %v8331 = vld [vmem:[#allocation16 + $0x44] sm:$0xf]
    %v8332 = vld [vmem:[#allocation16 + $0x48] sm:$0xff]
    %v8333 = vld [vmem:[#allocation16 + $0x50] sm:$0xf]
    %v8334 = vld [vmem:[#allocation16 + $0x54] sm:$0xff]
    %v8335 = vld [vmem:[#allocation16 + $0x5c] sm:$0xf]
    %v8336 = vld [vmem:[#allocation16 + $0x60] sm:$0xff]
    %v8337 = vld [vmem:[#allocation16 + $0x68] sm:$0xf]
    %v8338 = vld [vmem:[#allocation16 + $0x6c] sm:$0xff]
    %v8339 = vld [vmem:[#allocation16 + $0x74] sm:$0xf]
    %v8340 = vld [vmem:[#allocation16 + $0x78] sm:$0xff]
    %v8341 = vld [vmem:[#allocation16 + $0x80] sm:$0xf]
    %v8342 = vld [vmem:[#allocation16 + $0x84] sm:$0xff]
    %v8343 = vld [vmem:[#allocation16 + $0x8c] sm:$0xf]
    %v8344 = vld [vmem:[#allocation16 + $0x90] sm:$0xff]
    %v8345 = vld [vmem:[#allocation16 + $0x98] sm:$0xf]
    %v8346 = vld [vmem:[#allocation16 + $0x9c] sm:$0xff]
    %v8347 = vld [vmem:[#allocation16 + $0xa4] sm:$0xf]
    %v8348 = vld [vmem:[#allocation16 + $0xa8] sm:$0xff]
    %v8349 = vld [vmem:[#allocation16 + $0xb0] sm:$0xf]
    %v8350 = vld [vmem:[#allocation16 + $0xb4] sm:$0xff]
    %v8351 = vld [vmem:[#allocation16 + $0xbc] sm:$0xf]
    %v8384 = vunpack.c.l.b16 %v8320
    %v8385 = vunpack.c.h.b16 %v8320
    %v8386 = vunpack.c.l.b16 %v8321
    %v8387 = vunpack.c.l.b16 %v8322
    %v8388 = vunpack.c.h.b16 %v8322
    %v8389 = vunpack.c.l.b16 %v8323
    %v8390 = vunpack.c.l.b16 %v8324
    %v8391 = vunpack.c.h.b16 %v8324
    %v8392 = vunpack.c.l.b16 %v8325
    %v8393 = vunpack.c.l.b16 %v8326
    %v8394 = vunpack.c.h.b16 %v8326
    %v8395 = vunpack.c.l.b16 %v8327
    %v8396 = vunpack.c.l.b16 %v8328
    %v8397 = vunpack.c.h.b16 %v8328
    %v8398 = vunpack.c.l.b16 %v8329
    %v8399 = vunpack.c.l.b16 %v8330
    %v8400 = vunpack.c.h.b16 %v8330
    %v8401 = vunpack.c.l.b16 %v8331
    %v8402 = vunpack.c.l.b16 %v8332
    %v8403 = vunpack.c.h.b16 %v8332
    %v8404 = vunpack.c.l.b16 %v8333
    %v8405 = vunpack.c.l.b16 %v8334
    %v8406 = vunpack.c.h.b16 %v8334
    %v8407 = vunpack.c.l.b16 %v8335
    %v8408 = vunpack.c.l.b16 %v8336
    %v8409 = vunpack.c.h.b16 %v8336
    %v8410 = vunpack.c.l.b16 %v8337
    %v8411 = vunpack.c.l.b16 %v8338
    %v8412 = vunpack.c.h.b16 %v8338
    %v8413 = vunpack.c.l.b16 %v8339
    %v8414 = vunpack.c.l.b16 %v8340
    %v8415 = vunpack.c.h.b16 %v8340
    %v8416 = vunpack.c.l.b16 %v8341
    %v8417 = vunpack.c.l.b16 %v8342
    %v8418 = vunpack.c.h.b16 %v8342
    %v8419 = vunpack.c.l.b16 %v8343
    %v8420 = vunpack.c.l.b16 %v8344
    %v8421 = vunpack.c.h.b16 %v8344
    %v8422 = vunpack.c.l.b16 %v8345
    %v8423 = vunpack.c.l.b16 %v8346
    %v8424 = vunpack.c.h.b16 %v8346
    %v8425 = vunpack.c.l.b16 %v8347
    %v8426 = vunpack.c.l.b16 %v8348
    %v8427 = vunpack.c.h.b16 %v8348
    %v8428 = vunpack.c.l.b16 %v8349
    %v8429 = vunpack.c.l.b16 %v8350
    %v8430 = vunpack.c.h.b16 %v8350
    %v8431 = vunpack.c.l.b16 %v8351
    %v8432 = vpack.c.b16 %v8387, %v8384
    %v8433 = vpack.c.b16 %v8388, %v8385
    %v8434 = vpack.c.b16 %v8389, %v8386
    %v8435 = vpack.c.b16 %v8393, %v8390
    %v8436 = vpack.c.b16 %v8394, %v8391
    %v8437 = vpack.c.b16 %v8395, %v8392
    %v8438 = vpack.c.b16 %v8399, %v8396
    %v8439 = vpack.c.b16 %v8400, %v8397
    %v8440 = vpack.c.b16 %v8401, %v8398
    %v8441 = vpack.c.b16 %v8405, %v8402
    %v8442 = vpack.c.b16 %v8406, %v8403
    %v8443 = vpack.c.b16 %v8407, %v8404
    %v8444 = vpack.c.b16 %v8411, %v8408
    %v8445 = vpack.c.b16 %v8412, %v8409
    %v8446 = vpack.c.b16 %v8413, %v8410
    %v8447 = vpack.c.b16 %v8417, %v8414
    %v8448 = vpack.c.b16 %v8418, %v8415
    %v8449 = vpack.c.b16 %v8419, %v8416
    %v8450 = vpack.c.b16 %v8423, %v8420
    %v8451 = vpack.c.b16 %v8424, %v8421
    %v8452 = vpack.c.b16 %v8425, %v8422
    %v8453 = vpack.c.b16 %v8429, %v8426
    %v8454 = vpack.c.b16 %v8430, %v8427
    %v8455 = vpack.c.b16 %v8431, %v8428
    %8480 = vmatprep.subr.bf16.mxu0 %v8454
    %8481 = vmatpush1.bf16.msra.mxu0 %v8453
    %8482 = vmatprep.subr.bf16.mxu0 %v8451
    %8483 = vmatpush1.bf16.msra.mxu0 %v8450
    %8484 = vmatprep.subr.bf16.mxu0 %v8448
    %8485 = vmatpush1.bf16.msra.mxu0 %v8447
    %8486 = vmatprep.subr.bf16.mxu0 %v8445
    %8487 = vmatpush1.bf16.msra.mxu0 %v8444
    %8488 = vmatprep.subr.bf16.mxu0 %v8442
    %8489 = vmatpush1.bf16.msra.mxu0 %v8441
    %8490 = vmatprep.subr.bf16.mxu0 %v8439
    %8491 = vmatpush1.bf16.msra.mxu0 %v8438
    %8492 = vmatprep.subr.bf16.mxu0 %v8436
    %8493 = vmatpush1.bf16.msra.mxu0 %v8435
    %8494 = vmatprep.subr.bf16.mxu0 %v8433
    %8495 = vmatpush1.bf16.msra.mxu0 %v8432
    %8496 = vmatprep.subr.bf16.mxu0 0
    %8497 = vmatpush2.bf16.msra.mxu0 0
    %8498 = vmatprep.subr.bf16.mxu0 0
    %8499 = vmatpush2.bf16.msra.mxu0 0
    %8500 = vmatprep.subr.bf16.mxu0 0
    %8501 = vmatpush2.bf16.msra.mxu0 0
    %8502 = vmatprep.subr.bf16.mxu0 0
    %8503 = vmatpush2.bf16.msra.mxu0 0
    %8504 = vmatprep.subr.bf16.mxu0 0
    %8505 = vmatpush2.bf16.msra.mxu0 0
    %8506 = vmatprep.subr.bf16.mxu0 0
    %8507 = vmatpush2.bf16.msra.mxu0 0
    %8508 = vmatprep.subr.bf16.mxu0 0
    %8509 = vmatpush2.bf16.msra.mxu0 0
    %8510 = vmatprep.subr.bf16.mxu0 0
    %8511 = vmatpush2.bf16.msra.mxu0 0
    %8512 = vmatprep.mubr.bf16.mxu0 0
    %8513 = vmatmul.mubr.bf16.gmra.mxu0 %v7573
    %v8514 = vpop.f32.mrf.mxu0
    %v8515 = vadd.f32 %v4299, %v8514
    %v8516 = vpop.f32.mrf.mxu0
    %v8517 = vadd.f32 %v4303, %v8516
    %v8518 = vpop.f32.mrf.mxu0
    %v8519 = vpop.f32.mrf.mxu0
    %8520 = vdwg.mxu0
    %8521 = vmatprep.subr.bf16.mxu0 0
    %8522 = vmatpush1.bf16.msra.mxu0 %v8455
    %8523 = vmatprep.subr.bf16.mxu0 0
    %8524 = vmatpush1.bf16.msra.mxu0 %v8452
    %8525 = vmatprep.subr.bf16.mxu0 0
    %8526 = vmatpush1.bf16.msra.mxu0 %v8449
    %8527 = vmatprep.subr.bf16.mxu0 0
    %8528 = vmatpush1.bf16.msra.mxu0 %v8446
    %8529 = vmatprep.subr.bf16.mxu0 0
    %8530 = vmatpush1.bf16.msra.mxu0 %v8443
    %8531 = vmatprep.subr.bf16.mxu0 0
    %8532 = vmatpush1.bf16.msra.mxu0 %v8440
    %8533 = vmatprep.subr.bf16.mxu0 0
    %8534 = vmatpush1.bf16.msra.mxu0 %v8437
    %8535 = vmatprep.subr.bf16.mxu0 0
    %8536 = vmatpush1.bf16.msra.mxu0 %v8434
    %8537 = vmatprep.subr.bf16.mxu0 0
    %8538 = vmatpush2.bf16.msra.mxu0 0
    %8539 = vmatprep.subr.bf16.mxu0 0
    %8540 = vmatpush2.bf16.msra.mxu0 0
    %8541 = vmatprep.subr.bf16.mxu0 0
    %8542 = vmatpush2.bf16.msra.mxu0 0
    %8543 = vmatprep.subr.bf16.mxu0 0
    %8544 = vmatpush2.bf16.msra.mxu0 0
    %8545 = vmatprep.subr.bf16.mxu0 0
    %8546 = vmatpush2.bf16.msra.mxu0 0
    %8547 = vmatprep.subr.bf16.mxu0 0
    %8548 = vmatpush2.bf16.msra.mxu0 0
    %8549 = vmatprep.subr.bf16.mxu0 0
    %8550 = vmatpush2.bf16.msra.mxu0 0
    %8551 = vmatprep.subr.bf16.mxu0 0
    %8552 = vmatpush2.bf16.msra.mxu0 0
    %8553 = vmatprep.mubr.bf16.mxu0 0
    %8554 = vmatmul.mubr.bf16.gmra.mxu0 %v7573
    %v8555 = vpop.f32.mrf.mxu0
    %v8556 = vadd.f32 %v4307, %v8555
    %v8557 = vpop.f32.mrf.mxu0
    %v8558 = vpop.f32.mrf.mxu0
    %v8559 = vpop.f32.mrf.mxu0
    %8560 = vdwg.mxu0
    %v8561 = vadd.f32 %v8317, %v8515
    %v8562 = vxor.u32 %v8561, 2147483648
    %v8563 = vmul.f32 %v8562, 1.442695
    %v8564 = vpow.pop %v8563
    %v8565 = vadd.f32 %v8564, 1.0
    %v8566 = vrcp.pop %v8565
    %v8567 = vmul.f32 1.0, %v8566
    %v8568 = vadd.f32 %v8318, %v8517
    %v8569 = vxor.u32 %v8568, 2147483648
    %v8570 = vmul.f32 %v8569, 1.442695
    %v8571 = vpow.pop %v8570
    %v8572 = vadd.f32 %v8571, 1.0
    %v8573 = vrcp.pop %v8572
    %v8574 = vmul.f32 1.0, %v8573
    %v8575 = vmul.f32 %v8567, %v8556
    %v8576 = vadd.f32 %v8319, %v8575
    %v8577 = vtanh.pop %v8576
    %v8578 = vsub.f32 1.0, %v8574
    %v8579 = vmul.f32 %v8578, %v8577
    %v8580 = vmul.f32 %v8574, %v7572
    %v8581 = vadd.f32 %v8579, %v8580
    %v8582 = vpack.c.bf16 %v8581, %v8581
    %v8583 = vld [vmem:[#allocation17] sm:$0xf]
    %v8584 = vld [vmem:[#allocation17 + $0x4] sm:$0xf]
    %v8585 = vld [vmem:[#allocation17 + $0x8] sm:$0xf]
    %v8586 = vld [vmem:[#allocation17 + $0xc] sm:$0xf]
    %v8587 = vld [vmem:[#allocation17 + $0x10] sm:$0xf]
    %v8588 = vld [vmem:[#allocation17 + $0x14] sm:$0xf]
    %v8589 = vld [vmem:[#allocation17 + $0x18] sm:$0xf]
    %v8590 = vld [vmem:[#allocation17 + $0x1c] sm:$0xf]
    %v8591 = vld [vmem:[#allocation17 + $0x20] sm:$0xf]
    %v8592 = vld [vmem:[#allocation17 + $0x24] sm:$0xf]
    %v8593 = vld [vmem:[#allocation17 + $0x28] sm:$0xf]
    %v8594 = vld [vmem:[#allocation17 + $0x2c] sm:$0xf]
    %v8595 = vld [vmem:[#allocation17 + $0x30] sm:$0xf]
    %v8596 = vld [vmem:[#allocation17 + $0x34] sm:$0xf]
    %v8597 = vld [vmem:[#allocation17 + $0x38] sm:$0xf]
    %v8598 = vld [vmem:[#allocation17 + $0x3c] sm:$0xf]
    %v8615 = vunpack.c.l.b16 %v8583
    %v8616 = vunpack.c.l.b16 %v8584
    %v8617 = vunpack.c.l.b16 %v8585
    %v8618 = vunpack.c.l.b16 %v8586
    %v8619 = vunpack.c.l.b16 %v8587
    %v8620 = vunpack.c.l.b16 %v8588
    %v8621 = vunpack.c.l.b16 %v8589
    %v8622 = vunpack.c.l.b16 %v8590
    %v8623 = vunpack.c.l.b16 %v8591
    %v8624 = vunpack.c.l.b16 %v8592
    %v8625 = vunpack.c.l.b16 %v8593
    %v8626 = vunpack.c.l.b16 %v8594
    %v8627 = vunpack.c.l.b16 %v8595
    %v8628 = vunpack.c.l.b16 %v8596
    %v8629 = vunpack.c.l.b16 %v8597
    %v8630 = vunpack.c.l.b16 %v8598
    %v8631 = vpack.c.b16 %v8616, %v8615
    %v8632 = vpack.c.b16 %v8618, %v8617
    %v8633 = vpack.c.b16 %v8620, %v8619
    %v8634 = vpack.c.b16 %v8622, %v8621
    %v8635 = vpack.c.b16 %v8624, %v8623
    %v8636 = vpack.c.b16 %v8626, %v8625
    %v8637 = vpack.c.b16 %v8628, %v8627
    %v8638 = vpack.c.b16 %v8630, %v8629
    %8647 = vmatprep.subr.bf16.mxu0 0
    %8648 = vmatpush1.bf16.msra.mxu0 %v8638
    %8649 = vmatprep.subr.bf16.mxu0 0
    %8650 = vmatpush1.bf16.msra.mxu0 %v8637
    %8651 = vmatprep.subr.bf16.mxu0 0
    %8652 = vmatpush1.bf16.msra.mxu0 %v8636
    %8653 = vmatprep.subr.bf16.mxu0 0
    %8654 = vmatpush1.bf16.msra.mxu0 %v8635
    %8655 = vmatprep.subr.bf16.mxu0 0
    %8656 = vmatpush1.bf16.msra.mxu0 %v8634
    %8657 = vmatprep.subr.bf16.mxu0 0
    %8658 = vmatpush1.bf16.msra.mxu0 %v8633
    %8659 = vmatprep.subr.bf16.mxu0 0
    %8660 = vmatpush1.bf16.msra.mxu0 %v8632
    %8661 = vmatprep.subr.bf16.mxu0 0
    %8662 = vmatpush1.bf16.msra.mxu0 %v8631
    %8663 = vmatprep.subr.bf16.mxu0 0
    %8664 = vmatpush2.bf16.msra.mxu0 0
    %8665 = vmatprep.subr.bf16.mxu0 0
    %8666 = vmatpush2.bf16.msra.mxu0 0
    %8667 = vmatprep.subr.bf16.mxu0 0
    %8668 = vmatpush2.bf16.msra.mxu0 0
    %8669 = vmatprep.subr.bf16.mxu0 0
    %8670 = vmatpush2.bf16.msra.mxu0 0
    %8671 = vmatprep.subr.bf16.mxu0 0
    %8672 = vmatpush2.bf16.msra.mxu0 0
    %8673 = vmatprep.subr.bf16.mxu0 0
    %8674 = vmatpush2.bf16.msra.mxu0 0
    %8675 = vmatprep.subr.bf16.mxu0 0
    %8676 = vmatpush2.bf16.msra.mxu0 0
    %8677 = vmatprep.subr.bf16.mxu0 0
    %8678 = vmatpush2.bf16.msra.mxu0 0
    %8679 = vmatprep.mubr.bf16.mxu0 0
    %8680 = vmatmul.mubr.bf16.gmra.mxu0 %v8582
    %v8681 = vpop.f32.mrf.mxu0
    %v8682 = vadd.f32 %v4562, %v8681
    %v8683 = vpop.f32.mrf.mxu0
    %v8684 = vpop.f32.mrf.mxu0
    %v8685 = vpop.f32.mrf.mxu0
    %8686 = vdwg.mxu0
    %v8687 = vsel %vm3682, %v8682, -inf
    %8688 = vmax.xlane.f32.xlu0 %v8687
    %v8689 = vpop.xlane.xlu0 %8688
    %v8690 = vsub.f32 %v8682, %v8689
    %v8691 = vmul.f32 %v8690, 1.442695
    %v8692 = vpow.pop %v8691
    %v8693 = vsel %vm3682, %v8692, 0.0
    %8694 = vadd.xlane.f32.xlu0 %v8693
    %v8695 = vpop.xlane.xlu0 %8694
    %v8696 = vlog2.pop %v8695
    %v8697 = vmul.f32 %v8696, 0.6931472
    %v8698 = vadd.f32 %v8689, %v8697
    %v8699 = vsub.f32 %v8682, %v8698
    %vm8700 = vcmp.eq.f32.partialorder %v8682, %v8689
    %v8701 = vsel %vm8700, %v3634, 128
    %v8702 = vsel %vm3682, %v8701, 2147483647
    %v8703 = vand.u32 %v8702, 65535
    %v8704 = vshra.s32 %v8702, 16
    %v8705 = vcvt.s32.f32 %v8703
    %v8706 = vcvt.s32.f32 %v8704
    %8707 = vmin.xlane.f32.xlu0 %v8706
    %v8708 = vpop.xlane.xlu0 %8707
    %vm8709 = vcmp.eq.f32.partialorder %v8706, %v8708
    %v8710 = vsel %vm8709, %v8705, inf
    %8711 = vmin.xlane.f32.xlu0 %v8710
    %v8712 = vpop.xlane.xlu0 %8711
    %v8713 = vcvt.f32.s32 %v8712
    %v8714 = vcvt.f32.s32 %v8708
    %v8715 = vshll.u32 %v8714, 16
    %v8716 = vadd.s32 %v8715, %v8713
    %s8717 = scalar_lea.vmem [#allocation19], 8
    %8718 = vst [vmem:[%s8717] sm:$0x3] %v8699
    %s8719 = scalar_lea.vmem %s15, 8
    %8720 = vst.msk [vmem:[%s8719] sm:$0x3] %vm4683, %v8716
    %vm8721 = vcmp.eq.s32.totalorder %v3634, %v8716
    %v8722 = vsel %vm8721, 1, 0
    %v8723 = vcvt.s32.f32 %v8722
    %v8724 = vpack.c.bf16 %v8723, %v8723
    %v8725 = vld [vmem:[#allocation4] sm:$0xff]
    %v8726 = vld [vmem:[#allocation4 + $0x8] sm:$0xf]
    %v8727 = vld [vmem:[#allocation4 + $0xc] sm:$0xff]
    %v8728 = vld [vmem:[#allocation4 + $0x14] sm:$0xf]
    %v8729 = vld [vmem:[#allocation4 + $0x18] sm:$0xff]
    %v8730 = vld [vmem:[#allocation4 + $0x20] sm:$0xf]
    %v8731 = vld [vmem:[#allocation4 + $0x24] sm:$0xff]
    %v8732 = vld [vmem:[#allocation4 + $0x2c] sm:$0xf]
    %v8733 = vld [vmem:[#allocation4 + $0x30] sm:$0xff]
    %v8734 = vld [vmem:[#allocation4 + $0x38] sm:$0xf]
    %v8735 = vld [vmem:[#allocation4 + $0x3c] sm:$0xff]
    %v8736 = vld [vmem:[#allocation4 + $0x44] sm:$0xf]
    %v8737 = vld [vmem:[#allocation4 + $0x48] sm:$0xff]
    %v8738 = vld [vmem:[#allocation4 + $0x50] sm:$0xf]
    %v8739 = vld [vmem:[#allocation4 + $0x54] sm:$0xff]
    %v8740 = vld [vmem:[#allocation4 + $0x5c] sm:$0xf]
    %v8741 = vld [vmem:[#allocation4 + $0x60] sm:$0xff]
    %v8742 = vld [vmem:[#allocation4 + $0x68] sm:$0xf]
    %v8743 = vld [vmem:[#allocation4 + $0x6c] sm:$0xff]
    %v8744 = vld [vmem:[#allocation4 + $0x74] sm:$0xf]
    %v8745 = vld [vmem:[#allocation4 + $0x78] sm:$0xff]
    %v8746 = vld [vmem:[#allocation4 + $0x80] sm:$0xf]
    %v8747 = vld [vmem:[#allocation4 + $0x84] sm:$0xff]
    %v8748 = vld [vmem:[#allocation4 + $0x8c] sm:$0xf]
    %v8749 = vld [vmem:[#allocation4 + $0x90] sm:$0xff]
    %v8750 = vld [vmem:[#allocation4 + $0x98] sm:$0xf]
    %v8751 = vld [vmem:[#allocation4 + $0x9c] sm:$0xff]
    %v8752 = vld [vmem:[#allocation4 + $0xa4] sm:$0xf]
    %v8753 = vld [vmem:[#allocation4 + $0xa8] sm:$0xff]
    %v8754 = vld [vmem:[#allocation4 + $0xb0] sm:$0xf]
    %v8755 = vld [vmem:[#allocation4 + $0xb4] sm:$0xff]
    %v8756 = vld [vmem:[#allocation4 + $0xbc] sm:$0xf]
    %v8757 = vmul.f32 %v3455, %v8581
    %v8758 = vmul.f32 %v3456, %v8581
    %v8759 = vmul.f32 %v3457, %v8581
    %v8760 = vmul.f32 %v3458, %v8581
    %v8761 = vmul.f32 %v3459, %v8581
    %v8762 = vmul.f32 %v3460, %v8581
    %v8763 = vmul.f32 %v3461, %v8581
    %v8764 = vmul.f32 %v3462, %v8581
    %v8765 = vsel %vm3682, %v8757, 0.0
    %8766 = vadd.xlane.f32.xlu0 %v8765
    %v8767 = vpop.xlane.xlu0 %8766
    %v8768 = vsel %vm3682, %v8758, 0.0
    %8769 = vadd.xlane.f32.xlu0 %v8768
    %v8770 = vpop.xlane.xlu0 %8769
    %v8771 = vsel %vm3682, %v8759, 0.0
    %8772 = vadd.xlane.f32.xlu0 %v8771
    %v8773 = vpop.xlane.xlu0 %8772
    %v8774 = vsel %vm3682, %v8760, 0.0
    %8775 = vadd.xlane.f32.xlu0 %v8774
    %v8776 = vpop.xlane.xlu0 %8775
    %v8777 = vsel %vm3682, %v8761, 0.0
    %8778 = vadd.xlane.f32.xlu0 %v8777
    %v8779 = vpop.xlane.xlu0 %8778
    %v8780 = vsel %vm3682, %v8762, 0.0
    %8781 = vadd.xlane.f32.xlu0 %v8780
    %v8782 = vpop.xlane.xlu0 %8781
    %v8783 = vsel %vm3682, %v8763, 0.0
    %8784 = vadd.xlane.f32.xlu0 %v8783
    %v8785 = vpop.xlane.xlu0 %8784
    %v8786 = vsel %vm3682, %v8764, 0.0
    %8787 = vadd.xlane.f32.xlu0 %v8786
    %v8788 = vpop.xlane.xlu0 %8787
    %v8789 = vsel %vm3682, %v8767, -inf
    %v8790 = vsel %vm3682, %v8770, -inf
    %v8791 = vsel %vm3682, %v8773, -inf
    %v8792 = vsel %vm3682, %v8776, -inf
    %v8793 = vsel %vm3682, %v8779, -inf
    %v8794 = vmax.f32 %v8789, %v8793
    %v8795 = vsel %vm3682, %v8782, -inf
    %v8796 = vmax.f32 %v8790, %v8795
    %v8797 = vsel %vm3682, %v8785, -inf
    %v8798 = vmax.f32 %v8791, %v8797
    %v8799 = vsel %vm3682, %v8788, -inf
    %v8800 = vmax.f32 %v8792, %v8799
    %v8801 = vmax.f32 %v8794, %v8796
    %v8802 = vmax.f32 %v8798, %v8800
    %v8803 = vmax.f32 %v8801, %v8802
    %v8804 = vsub.f32 %v8767, %v8803
    %v8805 = vsub.f32 %v8770, %v8803
    %v8806 = vsub.f32 %v8773, %v8803
    %v8807 = vsub.f32 %v8776, %v8803
    %v8808 = vsub.f32 %v8779, %v8803
    %v8809 = vsub.f32 %v8782, %v8803
    %v8810 = vsub.f32 %v8785, %v8803
    %v8811 = vsub.f32 %v8788, %v8803
    %v8812 = vmul.f32 %v8804, 1.442695
    %v8813 = vpow.pop %v8812
    %v8814 = vmul.f32 %v8805, 1.442695
    %v8815 = vpow.pop %v8814
    %v8816 = vmul.f32 %v8806, 1.442695
    %v8817 = vpow.pop %v8816
    %v8818 = vmul.f32 %v8807, 1.442695
    %v8819 = vpow.pop %v8818
    %v8820 = vmul.f32 %v8808, 1.442695
    %v8821 = vpow.pop %v8820
    %v8822 = vmul.f32 %v8809, 1.442695
    %v8823 = vpow.pop %v8822
    %v8824 = vmul.f32 %v8810, 1.442695
    %v8825 = vpow.pop %v8824
    %v8826 = vmul.f32 %v8811, 1.442695
    %v8827 = vpow.pop %v8826
    %v8828 = vsel %vm3682, %v8813, 0.0
    %v8829 = vsel %vm3682, %v8815, 0.0
    %v8830 = vadd.f32 %v8828, %v8829
    %v8831 = vsel %vm3682, %v8817, 0.0
    %v8832 = vadd.f32 %v8830, %v8831
    %v8833 = vsel %vm3682, %v8819, 0.0
    %v8834 = vadd.f32 %v8832, %v8833
    %v8835 = vsel %vm3682, %v8821, 0.0
    %v8836 = vadd.f32 %v8834, %v8835
    %v8837 = vsel %vm3682, %v8823, 0.0
    %v8838 = vadd.f32 %v8836, %v8837
    %v8839 = vsel %vm3682, %v8825, 0.0
    %v8840 = vadd.f32 %v8838, %v8839
    %v8841 = vsel %vm3682, %v8827, 0.0
    %v8842 = vadd.f32 %v8840, %v8841
    %v8843 = vrcp.pop %v8842
    %v8844 = vmul.f32 %v8813, %v8843
    %v8845 = vmul.f32 %v8815, %v8843
    %v8846 = vmul.f32 %v8817, %v8843
    %v8847 = vmul.f32 %v8819, %v8843
    %v8848 = vmul.f32 %v8821, %v8843
    %v8849 = vmul.f32 %v8823, %v8843
    %v8850 = vmul.f32 %v8825, %v8843
    %v8851 = vmul.f32 %v8827, %v8843
    %v8852 = vmul.f32 %v8844, %v3455
    %v8853 = vmul.f32 %v8845, %v3456
    %v8854 = vmul.f32 %v8846, %v3457
    %v8855 = vmul.f32 %v8847, %v3458
    %v8856 = vmul.f32 %v8848, %v3459
    %v8857 = vmul.f32 %v8849, %v3460
    %v8858 = vmul.f32 %v8850, %v3461
    %v8859 = vmul.f32 %v8851, %v3462
    %v8860 = vsel %vm3682, %v8852, 0.0
    %v8861 = vsel %vm3682, %v8853, 0.0
    %v8862 = vadd.f32 %v8860, %v8861
    %v8863 = vsel %vm3682, %v8854, 0.0
    %v8864 = vadd.f32 %v8862, %v8863
    %v8865 = vsel %vm3682, %v8855, 0.0
    %v8866 = vadd.f32 %v8864, %v8865
    %v8867 = vsel %vm3682, %v8856, 0.0
    %v8868 = vadd.f32 %v8866, %v8867
    %v8869 = vsel %vm3682, %v8857, 0.0
    %v8870 = vadd.f32 %v8868, %v8869
    %v8871 = vsel %vm3682, %v8858, 0.0
    %v8872 = vadd.f32 %v8870, %v8871
    %v8873 = vsel %vm3682, %v8859, 0.0
    %v8874 = vadd.f32 %v8872, %v8873
    %v8875 = vpack.c.bf16 %v8874, %v8874
    %v8876 = vld [vmem:[#allocation14] sm:$0xff]
    %v8877 = vld [vmem:[#allocation14 + $0x8] sm:$0xf]
    %v8878 = vld [vmem:[#allocation14 + $0xc] sm:$0xff]
    %v8879 = vld [vmem:[#allocation14 + $0x14] sm:$0xf]
    %v8880 = vld [vmem:[#allocation14 + $0x18] sm:$0xff]
    %v8881 = vld [vmem:[#allocation14 + $0x20] sm:$0xf]
    %v8882 = vld [vmem:[#allocation14 + $0x24] sm:$0xff]
    %v8883 = vld [vmem:[#allocation14 + $0x2c] sm:$0xf]
    %v8884 = vld [vmem:[#allocation14 + $0x30] sm:$0xff]
    %v8885 = vld [vmem:[#allocation14 + $0x38] sm:$0xf]
    %v8886 = vld [vmem:[#allocation14 + $0x3c] sm:$0xff]
    %v8887 = vld [vmem:[#allocation14 + $0x44] sm:$0xf]
    %v8888 = vld [vmem:[#allocation14 + $0x48] sm:$0xff]
    %v8889 = vld [vmem:[#allocation14 + $0x50] sm:$0xf]
    %v8890 = vld [vmem:[#allocation14 + $0x54] sm:$0xff]
    %v8891 = vld [vmem:[#allocation14 + $0x5c] sm:$0xf]
    %v8892 = vld [vmem:[#allocation14 + $0x60] sm:$0xff]
    %v8893 = vld [vmem:[#allocation14 + $0x68] sm:$0xf]
    %v8894 = vld [vmem:[#allocation14 + $0x6c] sm:$0xff]
    %v8895 = vld [vmem:[#allocation14 + $0x74] sm:$0xf]
    %v8896 = vld [vmem:[#allocation14 + $0x78] sm:$0xff]
    %v8897 = vld [vmem:[#allocation14 + $0x80] sm:$0xf]
    %v8898 = vld [vmem:[#allocation14 + $0x84] sm:$0xff]
    %v8899 = vld [vmem:[#allocation14 + $0x8c] sm:$0xf]
    %v8900 = vld [vmem:[#allocation14 + $0x90] sm:$0xff]
    %v8901 = vld [vmem:[#allocation14 + $0x98] sm:$0xf]
    %v8902 = vld [vmem:[#allocation14 + $0x9c] sm:$0xff]
    %v8903 = vld [vmem:[#allocation14 + $0xa4] sm:$0xf]
    %v8904 = vld [vmem:[#allocation14 + $0xa8] sm:$0xff]
    %v8905 = vld [vmem:[#allocation14 + $0xb0] sm:$0xf]
    %v8906 = vld [vmem:[#allocation14 + $0xb4] sm:$0xff]
    %v8907 = vld [vmem:[#allocation14 + $0xbc] sm:$0xf]
    %v8940 = vunpack.c.l.b16 %v8876
    %v8941 = vunpack.c.h.b16 %v8876
    %v8942 = vunpack.c.l.b16 %v8877
    %v8943 = vunpack.c.l.b16 %v8878
    %v8944 = vunpack.c.h.b16 %v8878
    %v8945 = vunpack.c.l.b16 %v8879
    %v8946 = vunpack.c.l.b16 %v8880
    %v8947 = vunpack.c.h.b16 %v8880
    %v8948 = vunpack.c.l.b16 %v8881
    %v8949 = vunpack.c.l.b16 %v8882
    %v8950 = vunpack.c.h.b16 %v8882
    %v8951 = vunpack.c.l.b16 %v8883
    %v8952 = vunpack.c.l.b16 %v8884
    %v8953 = vunpack.c.h.b16 %v8884
    %v8954 = vunpack.c.l.b16 %v8885
    %v8955 = vunpack.c.l.b16 %v8886
    %v8956 = vunpack.c.h.b16 %v8886
    %v8957 = vunpack.c.l.b16 %v8887
    %v8958 = vunpack.c.l.b16 %v8888
    %v8959 = vunpack.c.h.b16 %v8888
    %v8960 = vunpack.c.l.b16 %v8889
    %v8961 = vunpack.c.l.b16 %v8890
    %v8962 = vunpack.c.h.b16 %v8890
    %v8963 = vunpack.c.l.b16 %v8891
    %v8964 = vunpack.c.l.b16 %v8892
    %v8965 = vunpack.c.h.b16 %v8892
    %v8966 = vunpack.c.l.b16 %v8893
    %v8967 = vunpack.c.l.b16 %v8894
    %v8968 = vunpack.c.h.b16 %v8894
    %v8969 = vunpack.c.l.b16 %v8895
    %v8970 = vunpack.c.l.b16 %v8896
    %v8971 = vunpack.c.h.b16 %v8896
    %v8972 = vunpack.c.l.b16 %v8897
    %v8973 = vunpack.c.l.b16 %v8898
    %v8974 = vunpack.c.h.b16 %v8898
    %v8975 = vunpack.c.l.b16 %v8899
    %v8976 = vunpack.c.l.b16 %v8900
    %v8977 = vunpack.c.h.b16 %v8900
    %v8978 = vunpack.c.l.b16 %v8901
    %v8979 = vunpack.c.l.b16 %v8902
    %v8980 = vunpack.c.h.b16 %v8902
    %v8981 = vunpack.c.l.b16 %v8903
    %v8982 = vunpack.c.l.b16 %v8904
    %v8983 = vunpack.c.h.b16 %v8904
    %v8984 = vunpack.c.l.b16 %v8905
    %v8985 = vunpack.c.l.b16 %v8906
    %v8986 = vunpack.c.h.b16 %v8906
    %v8987 = vunpack.c.l.b16 %v8907
    %v8988 = vpack.c.b16 %v8943, %v8940
    %v8989 = vpack.c.b16 %v8944, %v8941
    %v8990 = vpack.c.b16 %v8945, %v8942
    %v8991 = vpack.c.b16 %v8949, %v8946
    %v8992 = vpack.c.b16 %v8950, %v8947
    %v8993 = vpack.c.b16 %v8951, %v8948
    %v8994 = vpack.c.b16 %v8955, %v8952
    %v8995 = vpack.c.b16 %v8956, %v8953
    %v8996 = vpack.c.b16 %v8957, %v8954
    %v8997 = vpack.c.b16 %v8961, %v8958
    %v8998 = vpack.c.b16 %v8962, %v8959
    %v8999 = vpack.c.b16 %v8963, %v8960
    %v9000 = vpack.c.b16 %v8967, %v8964
    %v9001 = vpack.c.b16 %v8968, %v8965
    %v9002 = vpack.c.b16 %v8969, %v8966
    %v9003 = vpack.c.b16 %v8973, %v8970
    %v9004 = vpack.c.b16 %v8974, %v8971
    %v9005 = vpack.c.b16 %v8975, %v8972
    %v9006 = vpack.c.b16 %v8979, %v8976
    %v9007 = vpack.c.b16 %v8980, %v8977
    %v9008 = vpack.c.b16 %v8981, %v8978
    %v9009 = vpack.c.b16 %v8985, %v8982
    %v9010 = vpack.c.b16 %v8986, %v8983
    %v9011 = vpack.c.b16 %v8987, %v8984
    %9036 = vmatprep.subr.bf16.mxu0 %v9010
    %9037 = vmatpush1.bf16.msra.mxu0 %v9009
    %9038 = vmatprep.subr.bf16.mxu0 %v9007
    %9039 = vmatpush1.bf16.msra.mxu0 %v9006
    %9040 = vmatprep.subr.bf16.mxu0 %v9004
    %9041 = vmatpush1.bf16.msra.mxu0 %v9003
    %9042 = vmatprep.subr.bf16.mxu0 %v9001
    %9043 = vmatpush1.bf16.msra.mxu0 %v9000
    %9044 = vmatprep.subr.bf16.mxu0 %v8998
    %9045 = vmatpush1.bf16.msra.mxu0 %v8997
    %9046 = vmatprep.subr.bf16.mxu0 %v8995
    %9047 = vmatpush1.bf16.msra.mxu0 %v8994
    %9048 = vmatprep.subr.bf16.mxu0 %v8992
    %9049 = vmatpush1.bf16.msra.mxu0 %v8991
    %9050 = vmatprep.subr.bf16.mxu0 %v8989
    %9051 = vmatpush1.bf16.msra.mxu0 %v8988
    %9052 = vmatprep.subr.bf16.mxu0 0
    %9053 = vmatpush2.bf16.msra.mxu0 0
    %9054 = vmatprep.subr.bf16.mxu0 0
    %9055 = vmatpush2.bf16.msra.mxu0 0
    %9056 = vmatprep.subr.bf16.mxu0 0
    %9057 = vmatpush2.bf16.msra.mxu0 0
    %9058 = vmatprep.subr.bf16.mxu0 0
    %9059 = vmatpush2.bf16.msra.mxu0 0
    %9060 = vmatprep.subr.bf16.mxu0 0
    %9061 = vmatpush2.bf16.msra.mxu0 0
    %9062 = vmatprep.subr.bf16.mxu0 0
    %9063 = vmatpush2.bf16.msra.mxu0 0
    %9064 = vmatprep.subr.bf16.mxu0 0
    %9065 = vmatpush2.bf16.msra.mxu0 0
    %9066 = vmatprep.subr.bf16.mxu0 0
    %9067 = vmatpush2.bf16.msra.mxu0 0
    %9068 = vmatprep.mubr.bf16.mxu0 0
    %9069 = vmatmul.mubr.bf16.gmra.mxu0 %v8875
    %v9070 = vpop.f32.mrf.mxu0
    %v9071 = vadd.f32 0.0, %v9070
    %v9072 = vpop.f32.mrf.mxu0
    %v9073 = vadd.f32 0.0, %v9072
    %v9074 = vpop.f32.mrf.mxu0
    %v9075 = vpop.f32.mrf.mxu0
    %9076 = vdwg.mxu0
    %9077 = vmatprep.subr.bf16.mxu0 0
    %9078 = vmatpush1.bf16.msra.mxu0 %v9011
    %9079 = vmatprep.subr.bf16.mxu0 0
    %9080 = vmatpush1.bf16.msra.mxu0 %v9008
    %9081 = vmatprep.subr.bf16.mxu0 0
    %9082 = vmatpush1.bf16.msra.mxu0 %v9005
    %9083 = vmatprep.subr.bf16.mxu0 0
    %9084 = vmatpush1.bf16.msra.mxu0 %v9002
    %9085 = vmatprep.subr.bf16.mxu0 0
    %9086 = vmatpush1.bf16.msra.mxu0 %v8999
    %9087 = vmatprep.subr.bf16.mxu0 0
    %9088 = vmatpush1.bf16.msra.mxu0 %v8996
    %9089 = vmatprep.subr.bf16.mxu0 0
    %9090 = vmatpush1.bf16.msra.mxu0 %v8993
    %9091 = vmatprep.subr.bf16.mxu0 0
    %9092 = vmatpush1.bf16.msra.mxu0 %v8990
    %9093 = vmatprep.subr.bf16.mxu0 0
    %9094 = vmatpush2.bf16.msra.mxu0 0
    %9095 = vmatprep.subr.bf16.mxu0 0
    %9096 = vmatpush2.bf16.msra.mxu0 0
    %9097 = vmatprep.subr.bf16.mxu0 0
    %9098 = vmatpush2.bf16.msra.mxu0 0
    %9099 = vmatprep.subr.bf16.mxu0 0
    %9100 = vmatpush2.bf16.msra.mxu0 0
    %9101 = vmatprep.subr.bf16.mxu0 0
    %9102 = vmatpush2.bf16.msra.mxu0 0
    %9103 = vmatprep.subr.bf16.mxu0 0
    %9104 = vmatpush2.bf16.msra.mxu0 0
    %9105 = vmatprep.subr.bf16.mxu0 0
    %9106 = vmatpush2.bf16.msra.mxu0 0
    %9107 = vmatprep.subr.bf16.mxu0 0
    %9108 = vmatpush2.bf16.msra.mxu0 0
    %9109 = vmatprep.mubr.bf16.mxu0 0
    %9110 = vmatmul.mubr.bf16.gmra.mxu0 %v8875
    %v9111 = vpop.f32.mrf.mxu0
    %v9112 = vadd.f32 0.0, %v9111
    %v9113 = vpop.f32.mrf.mxu0
    %v9114 = vpop.f32.mrf.mxu0
    %v9115 = vpop.f32.mrf.mxu0
    %9116 = vdwg.mxu0
    %v9149 = vunpack.c.l.b16 %v8725
    %v9150 = vunpack.c.h.b16 %v8725
    %v9151 = vunpack.c.l.b16 %v8726
    %v9152 = vunpack.c.l.b16 %v8727
    %v9153 = vunpack.c.h.b16 %v8727
    %v9154 = vunpack.c.l.b16 %v8728
    %v9155 = vunpack.c.l.b16 %v8729
    %v9156 = vunpack.c.h.b16 %v8729
    %v9157 = vunpack.c.l.b16 %v8730
    %v9158 = vunpack.c.l.b16 %v8731
    %v9159 = vunpack.c.h.b16 %v8731
    %v9160 = vunpack.c.l.b16 %v8732
    %v9161 = vunpack.c.l.b16 %v8733
    %v9162 = vunpack.c.h.b16 %v8733
    %v9163 = vunpack.c.l.b16 %v8734
    %v9164 = vunpack.c.l.b16 %v8735
    %v9165 = vunpack.c.h.b16 %v8735
    %v9166 = vunpack.c.l.b16 %v8736
    %v9167 = vunpack.c.l.b16 %v8737
    %v9168 = vunpack.c.h.b16 %v8737
    %v9169 = vunpack.c.l.b16 %v8738
    %v9170 = vunpack.c.l.b16 %v8739
    %v9171 = vunpack.c.h.b16 %v8739
    %v9172 = vunpack.c.l.b16 %v8740
    %v9173 = vunpack.c.l.b16 %v8741
    %v9174 = vunpack.c.h.b16 %v8741
    %v9175 = vunpack.c.l.b16 %v8742
    %v9176 = vunpack.c.l.b16 %v8743
    %v9177 = vunpack.c.h.b16 %v8743
    %v9178 = vunpack.c.l.b16 %v8744
    %v9179 = vunpack.c.l.b16 %v8745
    %v9180 = vunpack.c.h.b16 %v8745
    %v9181 = vunpack.c.l.b16 %v8746
    %v9182 = vunpack.c.l.b16 %v8747
    %v9183 = vunpack.c.h.b16 %v8747
    %v9184 = vunpack.c.l.b16 %v8748
    %v9185 = vunpack.c.l.b16 %v8749
    %v9186 = vunpack.c.h.b16 %v8749
    %v9187 = vunpack.c.l.b16 %v8750
    %v9188 = vunpack.c.l.b16 %v8751
    %v9189 = vunpack.c.h.b16 %v8751
    %v9190 = vunpack.c.l.b16 %v8752
    %v9191 = vunpack.c.l.b16 %v8753
    %v9192 = vunpack.c.h.b16 %v8753
    %v9193 = vunpack.c.l.b16 %v8754
    %v9194 = vunpack.c.l.b16 %v8755
    %v9195 = vunpack.c.h.b16 %v8755
    %v9196 = vunpack.c.l.b16 %v8756
    %v9197 = vpack.c.b16 %v9152, %v9149
    %v9198 = vpack.c.b16 %v9153, %v9150
    %v9199 = vpack.c.b16 %v9154, %v9151
    %v9200 = vpack.c.b16 %v9158, %v9155
    %v9201 = vpack.c.b16 %v9159, %v9156
    %v9202 = vpack.c.b16 %v9160, %v9157
    %v9203 = vpack.c.b16 %v9164, %v9161
    %v9204 = vpack.c.b16 %v9165, %v9162
    %v9205 = vpack.c.b16 %v9166, %v9163
    %v9206 = vpack.c.b16 %v9170, %v9167
    %v9207 = vpack.c.b16 %v9171, %v9168
    %v9208 = vpack.c.b16 %v9172, %v9169
    %v9209 = vpack.c.b16 %v9176, %v9173
    %v9210 = vpack.c.b16 %v9177, %v9174
    %v9211 = vpack.c.b16 %v9178, %v9175
    %v9212 = vpack.c.b16 %v9182, %v9179
    %v9213 = vpack.c.b16 %v9183, %v9180
    %v9214 = vpack.c.b16 %v9184, %v9181
    %v9215 = vpack.c.b16 %v9188, %v9185
    %v9216 = vpack.c.b16 %v9189, %v9186
    %v9217 = vpack.c.b16 %v9190, %v9187
    %v9218 = vpack.c.b16 %v9194, %v9191
    %v9219 = vpack.c.b16 %v9195, %v9192
    %v9220 = vpack.c.b16 %v9196, %v9193
    %9245 = vmatprep.subr.bf16.mxu0 %v9219
    %9246 = vmatpush1.bf16.msra.mxu0 %v9218
    %9247 = vmatprep.subr.bf16.mxu0 %v9216
    %9248 = vmatpush1.bf16.msra.mxu0 %v9215
    %9249 = vmatprep.subr.bf16.mxu0 %v9213
    %9250 = vmatpush1.bf16.msra.mxu0 %v9212
    %9251 = vmatprep.subr.bf16.mxu0 %v9210
    %9252 = vmatpush1.bf16.msra.mxu0 %v9209
    %9253 = vmatprep.subr.bf16.mxu0 %v9207
    %9254 = vmatpush1.bf16.msra.mxu0 %v9206
    %9255 = vmatprep.subr.bf16.mxu0 %v9204
    %9256 = vmatpush1.bf16.msra.mxu0 %v9203
    %9257 = vmatprep.subr.bf16.mxu0 %v9201
    %9258 = vmatpush1.bf16.msra.mxu0 %v9200
    %9259 = vmatprep.subr.bf16.mxu0 %v9198
    %9260 = vmatpush1.bf16.msra.mxu0 %v9197
    %9261 = vmatprep.subr.bf16.mxu0 0
    %9262 = vmatpush2.bf16.msra.mxu0 0
    %9263 = vmatprep.subr.bf16.mxu0 0
    %9264 = vmatpush2.bf16.msra.mxu0 0
    %9265 = vmatprep.subr.bf16.mxu0 0
    %9266 = vmatpush2.bf16.msra.mxu0 0
    %9267 = vmatprep.subr.bf16.mxu0 0
    %9268 = vmatpush2.bf16.msra.mxu0 0
    %9269 = vmatprep.subr.bf16.mxu0 0
    %9270 = vmatpush2.bf16.msra.mxu0 0
    %9271 = vmatprep.subr.bf16.mxu0 0
    %9272 = vmatpush2.bf16.msra.mxu0 0
    %9273 = vmatprep.subr.bf16.mxu0 0
    %9274 = vmatpush2.bf16.msra.mxu0 0
    %9275 = vmatprep.subr.bf16.mxu0 0
    %9276 = vmatpush2.bf16.msra.mxu0 0
    %9277 = vmatprep.mubr.bf16.mxu0 0
    %9278 = vmatmul.mubr.bf16.gmra.mxu0 %v8724
    %v9279 = vpop.f32.mrf.mxu0
    %v9280 = vadd.f32 %v9071, %v9279
    %v9281 = vpop.f32.mrf.mxu0
    %v9282 = vadd.f32 %v9073, %v9281
    %v9283 = vpop.f32.mrf.mxu0
    %v9284 = vpop.f32.mrf.mxu0
    %9285 = vdwg.mxu0
    %9286 = vmatprep.subr.bf16.mxu0 0
    %9287 = vmatpush1.bf16.msra.mxu0 %v9220
    %9288 = vmatprep.subr.bf16.mxu0 0
    %9289 = vmatpush1.bf16.msra.mxu0 %v9217
    %9290 = vmatprep.subr.bf16.mxu0 0
    %9291 = vmatpush1.bf16.msra.mxu0 %v9214
    %9292 = vmatprep.subr.bf16.mxu0 0
    %9293 = vmatpush1.bf16.msra.mxu0 %v9211
    %9294 = vmatprep.subr.bf16.mxu0 0
    %9295 = vmatpush1.bf16.msra.mxu0 %v9208
    %9296 = vmatprep.subr.bf16.mxu0 0
    %9297 = vmatpush1.bf16.msra.mxu0 %v9205
    %9298 = vmatprep.subr.bf16.mxu0 0
    %9299 = vmatpush1.bf16.msra.mxu0 %v9202
    %9300 = vmatprep.subr.bf16.mxu0 0
    %9301 = vmatpush1.bf16.msra.mxu0 %v9199
    %9302 = vmatprep.subr.bf16.mxu0 0
    %9303 = vmatpush2.bf16.msra.mxu0 0
    %9304 = vmatprep.subr.bf16.mxu0 0
    %9305 = vmatpush2.bf16.msra.mxu0 0
    %9306 = vmatprep.subr.bf16.mxu0 0
    %9307 = vmatpush2.bf16.msra.mxu0 0
    %9308 = vmatprep.subr.bf16.mxu0 0
    %9309 = vmatpush2.bf16.msra.mxu0 0
    %9310 = vmatprep.subr.bf16.mxu0 0
    %9311 = vmatpush2.bf16.msra.mxu0 0
    %9312 = vmatprep.subr.bf16.mxu0 0
    %9313 = vmatpush2.bf16.msra.mxu0 0
    %9314 = vmatprep.subr.bf16.mxu0 0
    %9315 = vmatpush2.bf16.msra.mxu0 0
    %9316 = vmatprep.subr.bf16.mxu0 0
    %9317 = vmatpush2.bf16.msra.mxu0 0
    %9318 = vmatprep.mubr.bf16.mxu0 0
    %9319 = vmatmul.mubr.bf16.gmra.mxu0 %v8724
    %v9320 = vpop.f32.mrf.mxu0
    %v9321 = vadd.f32 %v9112, %v9320
    %v9322 = vpop.f32.mrf.mxu0
    %v9323 = vpop.f32.mrf.mxu0
    %v9324 = vpop.f32.mrf.mxu0
    %9325 = vdwg.mxu0
    %v9326 = vadd.f32 %v9280, %v4248
    %v9327 = vadd.f32 %v9282, %v4252
    %v9328 = vadd.f32 %v9321, %v4256
    %v9329 = vld [vmem:[#allocation16] sm:$0xff]
    %v9330 = vld [vmem:[#allocation16 + $0x8] sm:$0xf]
    %v9331 = vld [vmem:[#allocation16 + $0xc] sm:$0xff]
    %v9332 = vld [vmem:[#allocation16 + $0x14] sm:$0xf]
    %v9333 = vld [vmem:[#allocation16 + $0x18] sm:$0xff]
    %v9334 = vld [vmem:[#allocation16 + $0x20] sm:$0xf]
    %v9335 = vld [vmem:[#allocation16 + $0x24] sm:$0xff]
    %v9336 = vld [vmem:[#allocation16 + $0x2c] sm:$0xf]
    %v9337 = vld [vmem:[#allocation16 + $0x30] sm:$0xff]
    %v9338 = vld [vmem:[#allocation16 + $0x38] sm:$0xf]
    %v9339 = vld [vmem:[#allocation16 + $0x3c] sm:$0xff]
    %v9340 = vld [vmem:[#allocation16 + $0x44] sm:$0xf]
    %v9341 = vld [vmem:[#allocation16 + $0x48] sm:$0xff]
    %v9342 = vld [vmem:[#allocation16 + $0x50] sm:$0xf]
    %v9343 = vld [vmem:[#allocation16 + $0x54] sm:$0xff]
    %v9344 = vld [vmem:[#allocation16 + $0x5c] sm:$0xf]
    %v9345 = vld [vmem:[#allocation16 + $0x60] sm:$0xff]
    %v9346 = vld [vmem:[#allocation16 + $0x68] sm:$0xf]
    %v9347 = vld [vmem:[#allocation16 + $0x6c] sm:$0xff]
    %v9348 = vld [vmem:[#allocation16 + $0x74] sm:$0xf]
    %v9349 = vld [vmem:[#allocation16 + $0x78] sm:$0xff]
    %v9350 = vld [vmem:[#allocation16 + $0x80] sm:$0xf]
    %v9351 = vld [vmem:[#allocation16 + $0x84] sm:$0xff]
    %v9352 = vld [vmem:[#allocation16 + $0x8c] sm:$0xf]
    %v9353 = vld [vmem:[#allocation16 + $0x90] sm:$0xff]
    %v9354 = vld [vmem:[#allocation16 + $0x98] sm:$0xf]
    %v9355 = vld [vmem:[#allocation16 + $0x9c] sm:$0xff]
    %v9356 = vld [vmem:[#allocation16 + $0xa4] sm:$0xf]
    %v9357 = vld [vmem:[#allocation16 + $0xa8] sm:$0xff]
    %v9358 = vld [vmem:[#allocation16 + $0xb0] sm:$0xf]
    %v9359 = vld [vmem:[#allocation16 + $0xb4] sm:$0xff]
    %v9360 = vld [vmem:[#allocation16 + $0xbc] sm:$0xf]
    %v9393 = vunpack.c.l.b16 %v9329
    %v9394 = vunpack.c.h.b16 %v9329
    %v9395 = vunpack.c.l.b16 %v9330
    %v9396 = vunpack.c.l.b16 %v9331
    %v9397 = vunpack.c.h.b16 %v9331
    %v9398 = vunpack.c.l.b16 %v9332
    %v9399 = vunpack.c.l.b16 %v9333
    %v9400 = vunpack.c.h.b16 %v9333
    %v9401 = vunpack.c.l.b16 %v9334
    %v9402 = vunpack.c.l.b16 %v9335
    %v9403 = vunpack.c.h.b16 %v9335
    %v9404 = vunpack.c.l.b16 %v9336
    %v9405 = vunpack.c.l.b16 %v9337
    %v9406 = vunpack.c.h.b16 %v9337
    %v9407 = vunpack.c.l.b16 %v9338
    %v9408 = vunpack.c.l.b16 %v9339
    %v9409 = vunpack.c.h.b16 %v9339
    %v9410 = vunpack.c.l.b16 %v9340
    %v9411 = vunpack.c.l.b16 %v9341
    %v9412 = vunpack.c.h.b16 %v9341
    %v9413 = vunpack.c.l.b16 %v9342
    %v9414 = vunpack.c.l.b16 %v9343
    %v9415 = vunpack.c.h.b16 %v9343
    %v9416 = vunpack.c.l.b16 %v9344
    %v9417 = vunpack.c.l.b16 %v9345
    %v9418 = vunpack.c.h.b16 %v9345
    %v9419 = vunpack.c.l.b16 %v9346
    %v9420 = vunpack.c.l.b16 %v9347
    %v9421 = vunpack.c.h.b16 %v9347
    %v9422 = vunpack.c.l.b16 %v9348
    %v9423 = vunpack.c.l.b16 %v9349
    %v9424 = vunpack.c.h.b16 %v9349
    %v9425 = vunpack.c.l.b16 %v9350
    %v9426 = vunpack.c.l.b16 %v9351
    %v9427 = vunpack.c.h.b16 %v9351
    %v9428 = vunpack.c.l.b16 %v9352
    %v9429 = vunpack.c.l.b16 %v9353
    %v9430 = vunpack.c.h.b16 %v9353
    %v9431 = vunpack.c.l.b16 %v9354
    %v9432 = vunpack.c.l.b16 %v9355
    %v9433 = vunpack.c.h.b16 %v9355
    %v9434 = vunpack.c.l.b16 %v9356
    %v9435 = vunpack.c.l.b16 %v9357
    %v9436 = vunpack.c.h.b16 %v9357
    %v9437 = vunpack.c.l.b16 %v9358
    %v9438 = vunpack.c.l.b16 %v9359
    %v9439 = vunpack.c.h.b16 %v9359
    %v9440 = vunpack.c.l.b16 %v9360
    %v9441 = vpack.c.b16 %v9396, %v9393
    %v9442 = vpack.c.b16 %v9397, %v9394
    %v9443 = vpack.c.b16 %v9398, %v9395
    %v9444 = vpack.c.b16 %v9402, %v9399
    %v9445 = vpack.c.b16 %v9403, %v9400
    %v9446 = vpack.c.b16 %v9404, %v9401
    %v9447 = vpack.c.b16 %v9408, %v9405
    %v9448 = vpack.c.b16 %v9409, %v9406
    %v9449 = vpack.c.b16 %v9410, %v9407
    %v9450 = vpack.c.b16 %v9414, %v9411
    %v9451 = vpack.c.b16 %v9415, %v9412
    %v9452 = vpack.c.b16 %v9416, %v9413
    %v9453 = vpack.c.b16 %v9420, %v9417
    %v9454 = vpack.c.b16 %v9421, %v9418
    %v9455 = vpack.c.b16 %v9422, %v9419
    %v9456 = vpack.c.b16 %v9426, %v9423
    %v9457 = vpack.c.b16 %v9427, %v9424
    %v9458 = vpack.c.b16 %v9428, %v9425
    %v9459 = vpack.c.b16 %v9432, %v9429
    %v9460 = vpack.c.b16 %v9433, %v9430
    %v9461 = vpack.c.b16 %v9434, %v9431
    %v9462 = vpack.c.b16 %v9438, %v9435
    %v9463 = vpack.c.b16 %v9439, %v9436
    %v9464 = vpack.c.b16 %v9440, %v9437
    %9489 = vmatprep.subr.bf16.mxu0 %v9463
    %9490 = vmatpush1.bf16.msra.mxu0 %v9462
    %9491 = vmatprep.subr.bf16.mxu0 %v9460
    %9492 = vmatpush1.bf16.msra.mxu0 %v9459
    %9493 = vmatprep.subr.bf16.mxu0 %v9457
    %9494 = vmatpush1.bf16.msra.mxu0 %v9456
    %9495 = vmatprep.subr.bf16.mxu0 %v9454
    %9496 = vmatpush1.bf16.msra.mxu0 %v9453
    %9497 = vmatprep.subr.bf16.mxu0 %v9451
    %9498 = vmatpush1.bf16.msra.mxu0 %v9450
    %9499 = vmatprep.subr.bf16.mxu0 %v9448
    %9500 = vmatpush1.bf16.msra.mxu0 %v9447
    %9501 = vmatprep.subr.bf16.mxu0 %v9445
    %9502 = vmatpush1.bf16.msra.mxu0 %v9444
    %9503 = vmatprep.subr.bf16.mxu0 %v9442
    %9504 = vmatpush1.bf16.msra.mxu0 %v9441
    %9505 = vmatprep.subr.bf16.mxu0 0
    %9506 = vmatpush2.bf16.msra.mxu0 0
    %9507 = vmatprep.subr.bf16.mxu0 0
    %9508 = vmatpush2.bf16.msra.mxu0 0
    %9509 = vmatprep.subr.bf16.mxu0 0
    %9510 = vmatpush2.bf16.msra.mxu0 0
    %9511 = vmatprep.subr.bf16.mxu0 0
    %9512 = vmatpush2.bf16.msra.mxu0 0
    %9513 = vmatprep.subr.bf16.mxu0 0
    %9514 = vmatpush2.bf16.msra.mxu0 0
    %9515 = vmatprep.subr.bf16.mxu0 0
    %9516 = vmatpush2.bf16.msra.mxu0 0
    %9517 = vmatprep.subr.bf16.mxu0 0
    %9518 = vmatpush2.bf16.msra.mxu0 0
    %9519 = vmatprep.subr.bf16.mxu0 0
    %9520 = vmatpush2.bf16.msra.mxu0 0
    %9521 = vmatprep.mubr.bf16.mxu0 0
    %9522 = vmatmul.mubr.bf16.gmra.mxu0 %v8582
    %v9523 = vpop.f32.mrf.mxu0
    %v9524 = vadd.f32 %v4299, %v9523
    %v9525 = vpop.f32.mrf.mxu0
    %v9526 = vadd.f32 %v4303, %v9525
    %v9527 = vpop.f32.mrf.mxu0
    %v9528 = vpop.f32.mrf.mxu0
    %9529 = vdwg.mxu0
    %9530 = vmatprep.subr.bf16.mxu0 0
    %9531 = vmatpush1.bf16.msra.mxu0 %v9464
    %9532 = vmatprep.subr.bf16.mxu0 0
    %9533 = vmatpush1.bf16.msra.mxu0 %v9461
    %9534 = vmatprep.subr.bf16.mxu0 0
    %9535 = vmatpush1.bf16.msra.mxu0 %v9458
    %9536 = vmatprep.subr.bf16.mxu0 0
    %9537 = vmatpush1.bf16.msra.mxu0 %v9455
    %9538 = vmatprep.subr.bf16.mxu0 0
    %9539 = vmatpush1.bf16.msra.mxu0 %v9452
    %9540 = vmatprep.subr.bf16.mxu0 0
    %9541 = vmatpush1.bf16.msra.mxu0 %v9449
    %9542 = vmatprep.subr.bf16.mxu0 0
    %9543 = vmatpush1.bf16.msra.mxu0 %v9446
    %9544 = vmatprep.subr.bf16.mxu0 0
    %9545 = vmatpush1.bf16.msra.mxu0 %v9443
    %9546 = vmatprep.subr.bf16.mxu0 0
    %9547 = vmatpush2.bf16.msra.mxu0 0
    %9548 = vmatprep.subr.bf16.mxu0 0
    %9549 = vmatpush2.bf16.msra.mxu0 0
    %9550 = vmatprep.subr.bf16.mxu0 0
    %9551 = vmatpush2.bf16.msra.mxu0 0
    %9552 = vmatprep.subr.bf16.mxu0 0
    %9553 = vmatpush2.bf16.msra.mxu0 0
    %9554 = vmatprep.subr.bf16.mxu0 0
    %9555 = vmatpush2.bf16.msra.mxu0 0
    %9556 = vmatprep.subr.bf16.mxu0 0
    %9557 = vmatpush2.bf16.msra.mxu0 0
    %9558 = vmatprep.subr.bf16.mxu0 0
    %9559 = vmatpush2.bf16.msra.mxu0 0
    %9560 = vmatprep.subr.bf16.mxu0 0
    %9561 = vmatpush2.bf16.msra.mxu0 0
    %9562 = vmatprep.mubr.bf16.mxu0 0
    %9563 = vmatmul.mubr.bf16.gmra.mxu0 %v8582
    %v9564 = vpop.f32.mrf.mxu0
    %v9565 = vadd.f32 %v4307, %v9564
    %v9566 = vpop.f32.mrf.mxu0
    %v9567 = vpop.f32.mrf.mxu0
    %v9568 = vpop.f32.mrf.mxu0
    %9569 = vdwg.mxu0
    %v9570 = vadd.f32 %v9326, %v9524
    %v9571 = vxor.u32 %v9570, 2147483648
    %v9572 = vmul.f32 %v9571, 1.442695
    %v9573 = vpow.pop %v9572
    %v9574 = vadd.f32 %v9573, 1.0
    %v9575 = vrcp.pop %v9574
    %v9576 = vmul.f32 1.0, %v9575
    %v9577 = vadd.f32 %v9327, %v9526
    %v9578 = vxor.u32 %v9577, 2147483648
    %v9579 = vmul.f32 %v9578, 1.442695
    %v9580 = vpow.pop %v9579
    %v9581 = vadd.f32 %v9580, 1.0
    %v9582 = vrcp.pop %v9581
    %v9583 = vmul.f32 1.0, %v9582
    %v9584 = vmul.f32 %v9576, %v9565
    %v9585 = vadd.f32 %v9328, %v9584
    %v9586 = vtanh.pop %v9585
    %v9587 = vsub.f32 1.0, %v9583
    %v9588 = vmul.f32 %v9587, %v9586
    %v9589 = vmul.f32 %v9583, %v8581
    %v9590 = vadd.f32 %v9588, %v9589
    %v9591 = vpack.c.bf16 %v9590, %v9590
    %v9592 = vld [vmem:[#allocation17] sm:$0xf]
    %v9593 = vld [vmem:[#allocation17 + $0x4] sm:$0xf]
    %v9594 = vld [vmem:[#allocation17 + $0x8] sm:$0xf]
    %v9595 = vld [vmem:[#allocation17 + $0xc] sm:$0xf]
    %v9596 = vld [vmem:[#allocation17 + $0x10] sm:$0xf]
    %v9597 = vld [vmem:[#allocation17 + $0x14] sm:$0xf]
    %v9598 = vld [vmem:[#allocation17 + $0x18] sm:$0xf]
    %v9599 = vld [vmem:[#allocation17 + $0x1c] sm:$0xf]
    %v9600 = vld [vmem:[#allocation17 + $0x20] sm:$0xf]
    %v9601 = vld [vmem:[#allocation17 + $0x24] sm:$0xf]
    %v9602 = vld [vmem:[#allocation17 + $0x28] sm:$0xf]
    %v9603 = vld [vmem:[#allocation17 + $0x2c] sm:$0xf]
    %v9604 = vld [vmem:[#allocation17 + $0x30] sm:$0xf]
    %v9605 = vld [vmem:[#allocation17 + $0x34] sm:$0xf]
    %v9606 = vld [vmem:[#allocation17 + $0x38] sm:$0xf]
    %v9607 = vld [vmem:[#allocation17 + $0x3c] sm:$0xf]
    %v9624 = vunpack.c.l.b16 %v9592
    %v9625 = vunpack.c.l.b16 %v9593
    %v9626 = vunpack.c.l.b16 %v9594
    %v9627 = vunpack.c.l.b16 %v9595
    %v9628 = vunpack.c.l.b16 %v9596
    %v9629 = vunpack.c.l.b16 %v9597
    %v9630 = vunpack.c.l.b16 %v9598
    %v9631 = vunpack.c.l.b16 %v9599
    %v9632 = vunpack.c.l.b16 %v9600
    %v9633 = vunpack.c.l.b16 %v9601
    %v9634 = vunpack.c.l.b16 %v9602
    %v9635 = vunpack.c.l.b16 %v9603
    %v9636 = vunpack.c.l.b16 %v9604
    %v9637 = vunpack.c.l.b16 %v9605
    %v9638 = vunpack.c.l.b16 %v9606
    %v9639 = vunpack.c.l.b16 %v9607
    %v9640 = vpack.c.b16 %v9625, %v9624
    %v9641 = vpack.c.b16 %v9627, %v9626
    %v9642 = vpack.c.b16 %v9629, %v9628
    %v9643 = vpack.c.b16 %v9631, %v9630
    %v9644 = vpack.c.b16 %v9633, %v9632
    %v9645 = vpack.c.b16 %v9635, %v9634
    %v9646 = vpack.c.b16 %v9637, %v9636
    %v9647 = vpack.c.b16 %v9639, %v9638
    %9656 = vmatprep.subr.bf16.mxu0 0
    %9657 = vmatpush1.bf16.msra.mxu0 %v9647
    %9658 = vmatprep.subr.bf16.mxu0 0
    %9659 = vmatpush1.bf16.msra.mxu0 %v9646
    %9660 = vmatprep.subr.bf16.mxu0 0
    %9661 = vmatpush1.bf16.msra.mxu0 %v9645
    %9662 = vmatprep.subr.bf16.mxu0 0
    %9663 = vmatpush1.bf16.msra.mxu0 %v9644
    %9664 = vmatprep.subr.bf16.mxu0 0
    %9665 = vmatpush1.bf16.msra.mxu0 %v9643
    %9666 = vmatprep.subr.bf16.mxu0 0
    %9667 = vmatpush1.bf16.msra.mxu0 %v9642
    %9668 = vmatprep.subr.bf16.mxu0 0
    %9669 = vmatpush1.bf16.msra.mxu0 %v9641
    %9670 = vmatprep.subr.bf16.mxu0 0
    %9671 = vmatpush1.bf16.msra.mxu0 %v9640
    %9672 = vmatprep.subr.bf16.mxu0 0
    %9673 = vmatpush2.bf16.msra.mxu0 0
    %9674 = vmatprep.subr.bf16.mxu0 0
    %9675 = vmatpush2.bf16.msra.mxu0 0
    %9676 = vmatprep.subr.bf16.mxu0 0
    %9677 = vmatpush2.bf16.msra.mxu0 0
    %9678 = vmatprep.subr.bf16.mxu0 0
    %9679 = vmatpush2.bf16.msra.mxu0 0
    %9680 = vmatprep.subr.bf16.mxu0 0
    %9681 = vmatpush2.bf16.msra.mxu0 0
    %9682 = vmatprep.subr.bf16.mxu0 0
    %9683 = vmatpush2.bf16.msra.mxu0 0
    %9684 = vmatprep.subr.bf16.mxu0 0
    %9685 = vmatpush2.bf16.msra.mxu0 0
    %9686 = vmatprep.subr.bf16.mxu0 0
    %9687 = vmatpush2.bf16.msra.mxu0 0
    %9688 = vmatprep.mubr.bf16.mxu0 0
    %9689 = vmatmul.mubr.bf16.gmra.mxu0 %v9591
    %v9690 = vpop.f32.mrf.mxu0
    %v9691 = vadd.f32 %v4562, %v9690
    %v9692 = vpop.f32.mrf.mxu0
    %v9693 = vpop.f32.mrf.mxu0
    %v9694 = vpop.f32.mrf.mxu0
    %9695 = vdwg.mxu0
    %v9696 = vsel %vm3682, %v9691, -inf
    %9697 = vmax.xlane.f32.xlu0 %v9696
    %v9698 = vpop.xlane.xlu0 %9697
    %v9699 = vsub.f32 %v9691, %v9698
    %v9700 = vmul.f32 %v9699, 1.442695
    %v9701 = vpow.pop %v9700
    %v9702 = vsel %vm3682, %v9701, 0.0
    %9703 = vadd.xlane.f32.xlu0 %v9702
    %v9704 = vpop.xlane.xlu0 %9703
    %v9705 = vlog2.pop %v9704
    %v9706 = vmul.f32 %v9705, 0.6931472
    %v9707 = vadd.f32 %v9698, %v9706
    %v9708 = vsub.f32 %v9691, %v9707
    %vm9709 = vcmp.eq.f32.partialorder %v9691, %v9698
    %v9710 = vsel %vm9709, %v3634, 128
    %v9711 = vsel %vm3682, %v9710, 2147483647
    %v9712 = vand.u32 %v9711, 65535
    %v9713 = vshra.s32 %v9711, 16
    %v9714 = vcvt.s32.f32 %v9712
    %v9715 = vcvt.s32.f32 %v9713
    %9716 = vmin.xlane.f32.xlu0 %v9715
    %v9717 = vpop.xlane.xlu0 %9716
    %vm9718 = vcmp.eq.f32.partialorder %v9715, %v9717
    %v9719 = vsel %vm9718, %v9714, inf
    %9720 = vmin.xlane.f32.xlu0 %v9719
    %v9721 = vpop.xlane.xlu0 %9720
    %v9722 = vcvt.f32.s32 %v9721
    %v9723 = vcvt.f32.s32 %v9717
    %v9724 = vshll.u32 %v9723, 16
    %v9725 = vadd.s32 %v9724, %v9722
    %s9726 = scalar_lea.vmem [#allocation19], 10
    %9727 = vst [vmem:[%s9726] sm:$0x3] %v9708
    %s9728 = scalar_lea.vmem %s15, 10
    %9729 = vst.msk [vmem:[%s9728] sm:$0x3] %vm4683, %v9725
    // Predicated region
    $region90: #{tpu_custom_call.1} parent=1 // pred_check
      _
    $region91: #{tpu_custom_call.1} parent=1 // pred_check_branch
      %9731 = sbr.rel (0) target = $region93
    $region92: #{tpu_custom_call.1} parent=1 // pred_region
      %s9733 = ssub.s32 192, 192
      %9734 = vsyncadd [#allocation7], %s9733
      %s9735 = sshll.u32 [#allocation19], 4
      %s9736 = int_to_ptr.vmem [resolvable:$true] %s9735
      %9741 = dma.vmem_to_hbm [thread:$0]  %s9736, 192, %s14, [#allocation7], 32, 32, 2
    $region93: #{tpu_custom_call.1} parent=1 // pred_fallthru
      _
    // Predicated region
    $region94: #{tpu_custom_call.1} parent=1 // pred_check
      _
    $region95: #{tpu_custom_call.1} parent=1 // pred_check_branch
      %9743 = sbr.rel (0) target = $region97
    $region96: #{tpu_custom_call.1} parent=1 // pred_region
      _
    $region97: #{tpu_custom_call.1} parent=1 // pred_fallthru
      _
    // Predicated region
    $region98: #{tpu_custom_call.1} parent=1 // pred_check
      _
    $region99: #{tpu_custom_call.1} parent=1 // pred_check_branch
      %9745 = sbr.rel (0) target = $region101
    $region100: #{tpu_custom_call.1} parent=1 // pred_region
      %9746 = dma.done [#allocation7], 192
    $region101: #{tpu_custom_call.1} parent=1 // pred_fallthru
      _
    // Predicated region
    $region102: #{tpu_custom_call.1} parent=1 // pred_check
      _
    $region103: #{tpu_custom_call.1} parent=1 // pred_check_branch
      %9748 = sbr.rel (0) target = $region105
    $region104: #{tpu_custom_call.1} parent=1 // pred_region
      _
    $region105: #{tpu_custom_call.1} parent=1 // pred_fallthru
      _
    %9749 = vsyncpa [#allocation6], 1
    %9750 = vsyncpa [#allocation9], 1
    %9751 = vsyncpa [#allocation12], 1
    %9752 = vsyncpa [#allocation15], 1
    %9753 = vsyncpa [#allocation18], 1
    %9754 = vsyncpa [#allocation7], 1

</llo_original>
